<compile_context>
chip_gen: v7x
topology: tpu7x:2x2x1
jax: 0.10.0
libtpu: 0.0.40
codegen_flags: <defaults>
</compile_context>

<pallas_src>
import jax
import jax.numpy as jnp
import numpy as np
from jax import lax
from jax.experimental import pallas as pl
from jax.experimental.pallas import tpu as pltpu

_TAPS = tuple((kh, kw) for kh in range(3) for kw in range(3))


def _write_padded(pad_ref, interior, H, W, C):
    """pad_ref[(H+2, W+2, C)] <- zero 1-wide halo + interior.

    W-halo is built in registers (zero-column concat) so the interior store is
    full-width and sublane-aligned; only two thin zero-row stores remain."""
    body = jnp.concatenate(
        [jnp.zeros((H, 1, C), pad_ref.dtype),
         interior.astype(pad_ref.dtype),
         jnp.zeros((H, 1, C), pad_ref.dtype)], axis=1)           # (H, W+2, C)
    pad_ref[1:H + 1, :, :] = body
    zrow = jnp.zeros((1, W + 2, C), pad_ref.dtype)
    pad_ref[0:1, :, :] = zrow
    pad_ref[H + 1:H + 2, :, :] = zrow


def _conv3x3(pad_ref, w_ref, H, W, C, center=None):
    """3x3 'SAME' conv as 9 accumulating MXU matmuls on shifted bf16 slabs
    (no im2col scratch). w_ref is (9*C, Cout); acc is f32."""
    M = H * W
    Cout = w_ref.shape[-1]
    acc = jnp.zeros((M, Cout), jnp.float32)
    for t, (kh, kw) in enumerate(_TAPS):
        if center is not None and (kh, kw) == (1, 1):
            slab = center                                        # reuse interior
        else:
            slab = pad_ref[kh:kh + H, kw:kw + W, :].reshape(M, C)
        acc = acc + jnp.dot(slab, w_ref[t * C:(t + 1) * C, :],
                            preferred_element_type=jnp.float32)
    return acc


def fe_head_kernel(x_ref, w1_ref, s1_ref, b1_ref,
                   wh_ref, bh_ref,
                   wc1_ref, sc1_ref, bc1_ref,
                   wc2_ref, bc2_ref,
                   wl_ref, bl_ref,
                   heads_ref, count_ref,
                   xpad_ref, ypad_ref):
    _, H, W, Cin = x_ref.shape       # per-image block (1, H, W, Cin)
    Cm = s1_ref.shape[-1]            # out_chs of the main conv (32)
    Cc = bc1_ref.shape[-1]           # counter channels (10)
    M = H * W

    # ---- main 3x3 conv (9 accumulating matmuls), folded BN1 + ReLU ----
    _write_padded(xpad_ref, x_ref[0], H, W, Cin)
    c1 = _conv3x3(xpad_ref, w1_ref, H, W, Cin)                   # (M, Cm) f32
    x1 = jnp.maximum(c1 * s1_ref[...] + b1_ref[...], 0.0)        # BN + ReLU

    # ---- write padded x1 once (bf16); heads + counter conv read from VMEM ----
    _write_padded(ypad_ref, x1.reshape(H, W, Cm), H, W, Cm)
    y_int = ypad_ref[1:H + 1, 1:W + 1, :].reshape(M, Cm)         # bf16 interior

    # ---- seg + ins heads: two 1x1 convs fused into ONE matmul ----
    heads_ref[0] = jnp.dot(y_int, wh_ref[...],
                           preferred_element_type=jnp.float32) + bh_ref[...]

    # ---- counter branch: 3x3 conv -> BN -> LeakyReLU(0.01) -> 1x1 conv ----
    cc1 = _conv3x3(ypad_ref, wc1_ref, H, W, Cm, center=y_int)    # (M, Cc) f32
    z = cc1 * sc1_ref[...] + bc1_ref[...]
    z = jnp.maximum(z, 0.01 * z)                                 # LeakyReLU
    cc2 = jnp.dot(z.astype(jnp.bfloat16), wc2_ref[...],
                  preferred_element_type=jnp.float32) + bc2_ref[...]

    # ---- AdaptiveAvgPool2d((1,1)) -> Linear(Cc -> 1) -> Sigmoid ----
    pooled = jnp.mean(cc2, axis=0, keepdims=True)                # (1, Cc)
    logit = jnp.sum(pooled * wl_ref[...], axis=-1, keepdims=True) + bl_ref[...]
    count_ref[...] = (1.0 / (1.0 + jnp.exp(-logit))).reshape(1, 1, 1)


def fe_head_pallas(x_nhwc, params):
    N, H, W, Cin = x_nhwc.shape
    Cm = params['s1'].shape[-1]
    Ch = params['wh'].shape[-1]
    M = H * W

    def resident(a):
        return pl.BlockSpec(a.shape, lambda n, _r=a.ndim: (0,) * _r)

    weights = (params['w1'], params['s1'], params['b1'],
               params['wh'], params['bh'],
               params['wc1'], params['sc1'], params['bc1'],
               params['wc2'], params['bc2'],
               params['wl'], params['bl'])
    in_arrays = (x_nhwc,) + weights

    in_specs = ([pl.BlockSpec((1, H, W, Cin), lambda n: (n, 0, 0, 0))]
                + [resident(a) for a in weights])

    heads, count = pl.pallas_call(
        fe_head_kernel,
        out_shape=(jax.ShapeDtypeStruct((N, M, Ch), jnp.float32),
                   jax.ShapeDtypeStruct((N, 1, 1), jnp.float32)),
        grid_spec=pltpu.PrefetchScalarGridSpec(
            num_scalar_prefetch=0,
            grid=(N,),                                   # batch axis -> 2 TCs on v7x
            in_specs=in_specs,
            out_specs=(pl.BlockSpec((1, M, Ch), lambda n: (n, 0, 0)),
                       pl.BlockSpec((1, 1, 1), lambda n: (n, 0, 0))),
            scratch_shapes=[
                pltpu.VMEM((H + 2, W + 2, Cin), jnp.bfloat16),   # padded x  (per image)
                pltpu.VMEM((H + 2, W + 2, Cm), jnp.bfloat16),    # padded x1 (per image)
            ]),
        compiler_params=pltpu.CompilerParams(
            dimension_semantics=("parallel",),
            vmem_limit_bytes=32 * 1024 * 1024),
    )(*in_arrays)

    heads = heads.reshape(N, H, W, Ch)       # channel split / reshape = wrapper plumbing
    seg = heads[..., :2]
    ins = heads[..., 2:]
    return seg, ins, count[:, :, 0]


def prepare_params(raw, eps=1e-5):
    """Fold BN (eval mode) + conv biases, reshape weights for the matmul kernel."""
    w1_hwio = jnp.transpose(raw['w_main'], (2, 3, 1, 0))          # (3,3,Cin,Cm)
    Cin, Cm = w1_hwio.shape[2], w1_hwio.shape[3]
    s1 = raw['g1'] / jnp.sqrt(raw['v1'] + eps)
    b1 = raw['be1'] + s1 * (raw['b_main'] - raw['m1'])            # conv bias folded in

    w_seg = jnp.transpose(raw['w_seg'][:, :, 0, 0])               # (Cm, 2)
    w_ins = jnp.transpose(raw['w_ins'][:, :, 0, 0])               # (Cm, 10)
    wh = jnp.concatenate([w_seg, w_ins], axis=1)                  # fused 1x1 heads
    bh = jnp.concatenate([raw['b_seg'], raw['b_ins']], axis=0)

    wc1_hwio = jnp.transpose(raw['w_c1'], (2, 3, 1, 0))           # (3,3,Cm,10)
    Cc = wc1_hwio.shape[3]
    sc1 = raw['gc'] / jnp.sqrt(raw['vc'] + eps)
    bc1 = raw['bec'] + sc1 * (raw['b_c1'] - raw['mc'])

    wc2 = jnp.transpose(raw['w_c2'][:, :, 0, 0])                  # (10, 10) in->out

    return dict(
        w1=w1_hwio.reshape(9 * Cin, Cm).astype(jnp.bfloat16),
        s1=s1.reshape(1, Cm), b1=b1.reshape(1, Cm),
        wh=wh.astype(jnp.bfloat16), bh=bh.reshape(1, -1),
        wc1=wc1_hwio.reshape(9 * Cm, Cc).astype(jnp.bfloat16),
        sc1=sc1.reshape(1, Cc), bc1=bc1.reshape(1, Cc),
        wc2=wc2.astype(jnp.bfloat16), bc2=raw['b_c2'].reshape(1, Cc),
        wl=raw['w_lin'],                                          # (1, Cc)
        bl=raw['b_lin'].reshape(1, 1),
    )


def fe_head_reference(x, raw, eps=1e-5):
    """Pure-JAX f32 reference of the PyTorch forward (NHWC)."""
    w1_hwio = jnp.transpose(raw['w_main'], (2, 3, 1, 0))
    c1 = lax.conv_general_dilated(
        x, w1_hwio, (1, 1), 'SAME',
        dimension_numbers=('NHWC', 'HWIO', 'NHWC')) + raw['b_main']
    x1 = (c1 - raw['m1']) / jnp.sqrt(raw['v1'] + eps) * raw['g1'] + raw['be1']
    x1 = jnp.maximum(x1, 0.0)

    w_seg = jnp.transpose(raw['w_seg'][:, :, 0, 0])
    w_ins = jnp.transpose(raw['w_ins'][:, :, 0, 0])
    seg = jnp.einsum('nhwc,cd->nhwd', x1, w_seg) + raw['b_seg']
    ins = jnp.einsum('nhwc,cd->nhwd', x1, w_ins) + raw['b_ins']

    wc1_hwio = jnp.transpose(raw['w_c1'], (2, 3, 1, 0))
    cc1 = lax.conv_general_dilated(
        x1, wc1_hwio, (1, 1), 'SAME',
        dimension_numbers=('NHWC', 'HWIO', 'NHWC')) + raw['b_c1']
    z = (cc1 - raw['mc']) / jnp.sqrt(raw['vc'] + eps) * raw['gc'] + raw['bec']
    z = jnp.maximum(z, 0.01 * z)
    wc2 = jnp.transpose(raw['w_c2'][:, :, 0, 0])
    cc2 = jnp.einsum('nhwc,cd->nhwd', z, wc2) + raw['b_c2']

    pooled = jnp.mean(cc2, axis=(1, 2))                           # (N, 10)
    count = jax.nn.sigmoid(pooled @ raw['w_lin'].T + raw['b_lin'])
    return seg, ins, count


if __name__ == "__main__":
    N, H, W = 2, 16, 16
    in_chs, out_chs = 64, 32        # feHead defaults
    eps = 1e-5

    key = jax.random.PRNGKey(0)
    ks = iter(jax.random.split(key, 32))
    nrm = lambda shape, s: s * jax.random.normal(next(ks), shape, jnp.float32)

    x_nchw = jax.random.normal(next(ks), (N, in_chs, H, W), jnp.float32)
    x_nhwc = jnp.transpose(x_nchw, (0, 2, 3, 1))

    raw = dict(
        # feHead.conv: Conv3x3(in->out) + BatchNorm2d(out) + ReLU
        w_main=nrm((out_chs, in_chs, 3, 3), 0.05), b_main=nrm((out_chs,), 0.1),
        g1=1.0 + nrm((out_chs,), 0.1), be1=nrm((out_chs,), 0.1),
        m1=nrm((out_chs,), 0.1),
        v1=0.5 + jax.random.uniform(next(ks), (out_chs,), jnp.float32),
        # instanceSegmenationHead: 1x1 convs (seg: out->2, ins: out->10)
        w_seg=nrm((2, out_chs, 1, 1), 0.1), b_seg=nrm((2,), 0.1),
        w_ins=nrm((10, out_chs, 1, 1), 0.1), b_ins=nrm((10,), 0.1),
        # InstanceCounter.cnn: Conv3x3(out->10)+BN+LeakyReLU, Conv1x1(10->10), GAP
        w_c1=nrm((10, out_chs, 3, 3), 0.05), b_c1=nrm((10,), 0.1),
        gc=1.0 + nrm((10,), 0.1), bec=nrm((10,), 0.1),
        mc=nrm((10,), 0.1),
        vc=0.5 + jax.random.uniform(next(ks), (10,), jnp.float32),
        w_c2=nrm((10, 10, 1, 1), 0.2), b_c2=nrm((10,), 0.1),
        # InstanceCounter.output: Linear(10->1) + Sigmoid
        w_lin=nrm((1, 10), 0.2), b_lin=nrm((1,), 0.1),
    )

    params = prepare_params(raw, eps)
    seg, ins, count = fe_head_pallas(x_nhwc, params)
    seg, ins, count = jax.block_until_ready((seg, ins, count))

    seg_r, ins_r, count_r = fe_head_reference(x_nhwc, raw, eps)
    seg_r, ins_r, count_r = jax.block_until_ready((seg_r, ins_r, count_r))

    assert seg.shape == (N, H, W, 2)
    assert ins.shape == (N, H, W, 10)
    assert count.shape == (N, 1)
    # bf16 MXU inputs with f32 accumulation -> compare at bf16-level tolerance
    assert np.allclose(np.asarray(seg), np.asarray(seg_r), atol=3e-2, rtol=3e-2)
    assert np.allclose(np.asarray(ins), np.asarray(ins_r), atol=3e-2, rtol=3e-2)
    assert np.allclose(np.asarray(count), np.asarray(count_r), atol=1e-2, rtol=1e-2)
    print("KERNEL_OK")
</pallas_src>

<mosaic_0001>
module attributes {stable_mosaic.version = 11 : i64} {
  func.func @fe_head_kernel(%arg0: i32, %arg1: memref<1x16x16x64xf32, #tpu.memory_space<vmem>>, %arg2: memref<576x32xbf16, #tpu.memory_space<vmem>>, %arg3: memref<1x32xf32, #tpu.memory_space<vmem>>, %arg4: memref<1x32xf32, #tpu.memory_space<vmem>>, %arg5: memref<32x12xbf16, #tpu.memory_space<vmem>>, %arg6: memref<1x12xf32, #tpu.memory_space<vmem>>, %arg7: memref<288x10xbf16, #tpu.memory_space<vmem>>, %arg8: memref<1x10xf32, #tpu.memory_space<vmem>>, %arg9: memref<1x10xf32, #tpu.memory_space<vmem>>, %arg10: memref<10x10xbf16, #tpu.memory_space<vmem>>, %arg11: memref<1x10xf32, #tpu.memory_space<vmem>>, %arg12: memref<1x10xf32, #tpu.memory_space<vmem>>, %arg13: memref<1x1xf32, #tpu.memory_space<vmem>>, %arg14: memref<1x256x12xf32, #tpu.memory_space<vmem>>, %arg15: memref<1x1x1xf32, #tpu.memory_space<vmem>>, %arg16: memref<18x18x64xbf16, #tpu.memory_space<vmem>>, %arg17: memref<18x18x32xbf16, #tpu.memory_space<vmem>>) attributes {dimension_semantics = [#tpu.dimension_semantics<parallel>], iteration_bounds = array<i64: 2>, scalar_prefetch = 0 : i64, scratch_operands = 2 : i64, tpu.core_type = #tpu.core_type<tc>, window_params = [{transform_indices = @transform_0, window_bounds = array<i64: 1, 16, 16, 64>}, {pipeline_mode = #tpu.pipeline_mode<synchronous>, transform_indices = @transform_1, window_bounds = array<i64: 576, 32>}, {pipeline_mode = #tpu.pipeline_mode<synchronous>, transform_indices = @transform_2, window_bounds = array<i64: 1, 32>}, {pipeline_mode = #tpu.pipeline_mode<synchronous>, transform_indices = @transform_3, window_bounds = array<i64: 1, 32>}, {pipeline_mode = #tpu.pipeline_mode<synchronous>, transform_indices = @transform_4, window_bounds = array<i64: 32, 12>}, {pipeline_mode = #tpu.pipeline_mode<synchronous>, transform_indices = @transform_5, window_bounds = array<i64: 1, 12>}, {pipeline_mode = #tpu.pipeline_mode<synchronous>, transform_indices = @transform_6, window_bounds = array<i64: 288, 10>}, {pipeline_mode = #tpu.pipeline_mode<synchronous>, transform_indices = @transform_7, window_bounds = array<i64: 1, 10>}, {pipeline_mode = #tpu.pipeline_mode<synchronous>, transform_indices = @transform_8, window_bounds = array<i64: 1, 10>}, {pipeline_mode = #tpu.pipeline_mode<synchronous>, transform_indices = @transform_9, window_bounds = array<i64: 10, 10>}, {pipeline_mode = #tpu.pipeline_mode<synchronous>, transform_indices = @transform_10, window_bounds = array<i64: 1, 10>}, {pipeline_mode = #tpu.pipeline_mode<synchronous>, transform_indices = @transform_11, window_bounds = array<i64: 1, 10>}, {pipeline_mode = #tpu.pipeline_mode<synchronous>, transform_indices = @transform_12, window_bounds = array<i64: 1, 1>}, {transform_indices = @transform_13, window_bounds = array<i64: 1, 256, 12>}, {transform_indices = @transform_14, window_bounds = array<i64: 1, 1, 1>}]} {
    %c0 = arith.constant 0 : index
    %c0_0 = arith.constant 0 : index
    %c0_1 = arith.constant 0 : index
    %c0_2 = arith.constant 0 : index
    %0 = vector.load %arg1[%c0, %c0_0, %c0_1, %c0_2] : memref<1x16x16x64xf32, #tpu.memory_space<vmem>>, vector<1x16x16x64xf32>
    %1 = vector.shape_cast %0 : vector<1x16x16x64xf32> to vector<16x16x64xf32>
    %cst = arith.constant 0.000000e+00 : bf16
    %2 = vector.broadcast %cst : bf16 to vector<16x1x64xbf16>
    %3 = arith.truncf %1 : vector<16x16x64xf32> to vector<16x16x64xbf16>
    %cst_3 = arith.constant 0.000000e+00 : bf16
    %4 = vector.broadcast %cst_3 : bf16 to vector<16x1x64xbf16>
    %5 = tpu.concatenate %2, %3, %4 in 1 : vector<16x1x64xbf16>, vector<16x16x64xbf16>, vector<16x1x64xbf16> -> vector<16x18x64xbf16>
    %c1 = arith.constant 1 : index
    %c0_4 = arith.constant 0 : index
    %c0_5 = arith.constant 0 : index
    %6 = vector.load %arg16[%c1, %c0_4, %c0_5] : memref<18x18x64xbf16, #tpu.memory_space<vmem>>, vector<16x18x64xbf16>
    tpu.vector_store %arg16[%c1, %c0_4, %c0_5], %5 {strides = array<i32>} : memref<18x18x64xbf16, #tpu.memory_space<vmem>>, vector<16x18x64xbf16>,
    %cst_6 = arith.constant 0.000000e+00 : bf16
    %7 = vector.broadcast %cst_6 : bf16 to vector<1x18x64xbf16>
    %c0_7 = arith.constant 0 : index
    %c0_8 = arith.constant 0 : index
    %c0_9 = arith.constant 0 : index
    %8 = vector.load %arg16[%c0_7, %c0_8, %c0_9] : memref<18x18x64xbf16, #tpu.memory_space<vmem>>, vector<1x18x64xbf16>
    tpu.vector_store %arg16[%c0_7, %c0_8, %c0_9], %7 {strides = array<i32>} : memref<18x18x64xbf16, #tpu.memory_space<vmem>>, vector<1x18x64xbf16>,
    %c17 = arith.constant 17 : index
    %c0_10 = arith.constant 0 : index
    %c0_11 = arith.constant 0 : index
    %9 = vector.load %arg16[%c17, %c0_10, %c0_11] : memref<18x18x64xbf16, #tpu.memory_space<vmem>>, vector<1x18x64xbf16>
    tpu.vector_store %arg16[%c17, %c0_10, %c0_11], %7 {strides = array<i32>} : memref<18x18x64xbf16, #tpu.memory_space<vmem>>, vector<1x18x64xbf16>,
    %cst_12 = arith.constant 0.000000e+00 : f32
    %10 = vector.broadcast %cst_12 : f32 to vector<256x32xf32>
    %c0_13 = arith.constant 0 : index
    %c0_14 = arith.constant 0 : index
    %c0_15 = arith.constant 0 : index
    %11 = vector.load %arg16[%c0_13, %c0_14, %c0_15] : memref<18x18x64xbf16, #tpu.memory_space<vmem>>, vector<16x16x64xbf16>
    %12 = vector.shape_cast %11 : vector<16x16x64xbf16> to vector<256x64xbf16>
    %c0_16 = arith.constant 0 : index
    %c0_17 = arith.constant 0 : index
    %13 = vector.load %arg2[%c0_16, %c0_17] : memref<576x32xbf16, #tpu.memory_space<vmem>>, vector<64x32xbf16>
    %cst_18 = arith.constant dense<0.000000e+00> : vector<256x32xf32>
    %14 = tpu.matmul %12, %13, %cst_18 {dimension_numbers = #tpu.dot_dimension_numbers<[1], [0], [0], [1], [0, 0, 1, 1], [], []>} : vector<256x64xbf16>, vector<64x32xbf16>, vector<256x32xf32> -> vector<256x32xf32>
    %15 = arith.addf %10, %14 : vector<256x32xf32>
    %c0_19 = arith.constant 0 : index
    %c1_20 = arith.constant 1 : index
    %c0_21 = arith.constant 0 : index
    %16 = vector.load %arg16[%c0_19, %c1_20, %c0_21] : memref<18x18x64xbf16, #tpu.memory_space<vmem>>, vector<16x16x64xbf16>
    %17 = vector.shape_cast %16 : vector<16x16x64xbf16> to vector<256x64xbf16>
    %c64 = arith.constant 64 : index
    %c0_22 = arith.constant 0 : index
    %18 = vector.load %arg2[%c64, %c0_22] : memref<576x32xbf16, #tpu.memory_space<vmem>>, vector<64x32xbf16>
    %cst_23 = arith.constant dense<0.000000e+00> : vector<256x32xf32>
    %19 = tpu.matmul %17, %18, %cst_23 {dimension_numbers = #tpu.dot_dimension_numbers<[1], [0], [0], [1], [0, 0, 1, 1], [], []>} : vector<256x64xbf16>, vector<64x32xbf16>, vector<256x32xf32> -> vector<256x32xf32>
    %20 = arith.addf %15, %19 : vector<256x32xf32>
    %c0_24 = arith.constant 0 : index
    %c2 = arith.constant 2 : index
    %c0_25 = arith.constant 0 : index
    %21 = vector.load %arg16[%c0_24, %c2, %c0_25] : memref<18x18x64xbf16, #tpu.memory_space<vmem>>, vector<16x16x64xbf16>
    %22 = vector.shape_cast %21 : vector<16x16x64xbf16> to vector<256x64xbf16>
    %c128 = arith.constant 128 : index
    %c0_26 = arith.constant 0 : index
    %23 = vector.load %arg2[%c128, %c0_26] : memref<576x32xbf16, #tpu.memory_space<vmem>>, vector<64x32xbf16>
    %cst_27 = arith.constant dense<0.000000e+00> : vector<256x32xf32>
    %24 = tpu.matmul %22, %23, %cst_27 {dimension_numbers = #tpu.dot_dimension_numbers<[1], [0], [0], [1], [0, 0, 1, 1], [], []>} : vector<256x64xbf16>, vector<64x32xbf16>, vector<256x32xf32> -> vector<256x32xf32>
    %25 = arith.addf %20, %24 : vector<256x32xf32>
    %c1_28 = arith.constant 1 : index
    %c0_29 = arith.constant 0 : index
    %c0_30 = arith.constant 0 : index
    %26 = vector.load %arg16[%c1_28, %c0_29, %c0_30] : memref<18x18x64xbf16, #tpu.memory_space<vmem>>, vector<16x16x64xbf16>
    %27 = vector.shape_cast %26 : vector<16x16x64xbf16> to vector<256x64xbf16>
    %c192 = arith.constant 192 : index
    %c0_31 = arith.constant 0 : index
    %28 = vector.load %arg2[%c192, %c0_31] : memref<576x32xbf16, #tpu.memory_space<vmem>>, vector<64x32xbf16>
    %cst_32 = arith.constant dense<0.000000e+00> : vector<256x32xf32>
    %29 = tpu.matmul %27, %28, %cst_32 {dimension_numbers = #tpu.dot_dimension_numbers<[1], [0], [0], [1], [0, 0, 1, 1], [], []>} : vector<256x64xbf16>, vector<64x32xbf16>, vector<256x32xf32> -> vector<256x32xf32>
    %30 = arith.addf %25, %29 : vector<256x32xf32>
    %c1_33 = arith.constant 1 : index
    %c1_34 = arith.constant 1 : index
    %c0_35 = arith.constant 0 : index
    %31 = vector.load %arg16[%c1_33, %c1_34, %c0_35] : memref<18x18x64xbf16, #tpu.memory_space<vmem>>, vector<16x16x64xbf16>
    %32 = vector.shape_cast %31 : vector<16x16x64xbf16> to vector<256x64xbf16>
    %c256 = arith.constant 256 : index
    %c0_36 = arith.constant 0 : index
    %33 = vector.load %arg2[%c256, %c0_36] : memref<576x32xbf16, #tpu.memory_space<vmem>>, vector<64x32xbf16>
    %cst_37 = arith.constant dense<0.000000e+00> : vector<256x32xf32>
    %34 = tpu.matmul %32, %33, %cst_37 {dimension_numbers = #tpu.dot_dimension_numbers<[1], [0], [0], [1], [0, 0, 1, 1], [], []>} : vector<256x64xbf16>, vector<64x32xbf16>, vector<256x32xf32> -> vector<256x32xf32>
    %35 = arith.addf %30, %34 : vector<256x32xf32>
    %c1_38 = arith.constant 1 : index
    %c2_39 = arith.constant 2 : index
    %c0_40 = arith.constant 0 : index
    %36 = vector.load %arg16[%c1_38, %c2_39, %c0_40] : memref<18x18x64xbf16, #tpu.memory_space<vmem>>, vector<16x16x64xbf16>
    %37 = vector.shape_cast %36 : vector<16x16x64xbf16> to vector<256x64xbf16>
    %c320 = arith.constant 320 : index
    %c0_41 = arith.constant 0 : index
    %38 = vector.load %arg2[%c320, %c0_41] : memref<576x32xbf16, #tpu.memory_space<vmem>>, vector<64x32xbf16>
    %cst_42 = arith.constant dense<0.000000e+00> : vector<256x32xf32>
    %39 = tpu.matmul %37, %38, %cst_42 {dimension_numbers = #tpu.dot_dimension_numbers<[1], [0], [0], [1], [0, 0, 1, 1], [], []>} : vector<256x64xbf16>, vector<64x32xbf16>, vector<256x32xf32> -> vector<256x32xf32>
    %40 = arith.addf %35, %39 : vector<256x32xf32>
    %c2_43 = arith.constant 2 : index
    %c0_44 = arith.constant 0 : index
    %c0_45 = arith.constant 0 : index
    %41 = vector.load %arg16[%c2_43, %c0_44, %c0_45] : memref<18x18x64xbf16, #tpu.memory_space<vmem>>, vector<16x16x64xbf16>
    %42 = vector.shape_cast %41 : vector<16x16x64xbf16> to vector<256x64xbf16>
    %c384 = arith.constant 384 : index
    %c0_46 = arith.constant 0 : index
    %43 = vector.load %arg2[%c384, %c0_46] : memref<576x32xbf16, #tpu.memory_space<vmem>>, vector<64x32xbf16>
    %cst_47 = arith.constant dense<0.000000e+00> : vector<256x32xf32>
    %44 = tpu.matmul %42, %43, %cst_47 {dimension_numbers = #tpu.dot_dimension_numbers<[1], [0], [0], [1], [0, 0, 1, 1], [], []>} : vector<256x64xbf16>, vector<64x32xbf16>, vector<256x32xf32> -> vector<256x32xf32>
    %45 = arith.addf %40, %44 : vector<256x32xf32>
    %c2_48 = arith.constant 2 : index
    %c1_49 = arith.constant 1 : index
    %c0_50 = arith.constant 0 : index
    %46 = vector.load %arg16[%c2_48, %c1_49, %c0_50] : memref<18x18x64xbf16, #tpu.memory_space<vmem>>, vector<16x16x64xbf16>
    %47 = vector.shape_cast %46 : vector<16x16x64xbf16> to vector<256x64xbf16>
    %c448 = arith.constant 448 : index
    %c0_51 = arith.constant 0 : index
    %48 = vector.load %arg2[%c448, %c0_51] : memref<576x32xbf16, #tpu.memory_space<vmem>>, vector<64x32xbf16>
    %cst_52 = arith.constant dense<0.000000e+00> : vector<256x32xf32>
    %49 = tpu.matmul %47, %48, %cst_52 {dimension_numbers = #tpu.dot_dimension_numbers<[1], [0], [0], [1], [0, 0, 1, 1], [], []>} : vector<256x64xbf16>, vector<64x32xbf16>, vector<256x32xf32> -> vector<256x32xf32>
    %50 = arith.addf %45, %49 : vector<256x32xf32>
    %c2_53 = arith.constant 2 : index
    %c2_54 = arith.constant 2 : index
    %c0_55 = arith.constant 0 : index
    %51 = vector.load %arg16[%c2_53, %c2_54, %c0_55] : memref<18x18x64xbf16, #tpu.memory_space<vmem>>, vector<16x16x64xbf16>
    %52 = vector.shape_cast %51 : vector<16x16x64xbf16> to vector<256x64xbf16>
    %c512 = arith.constant 512 : index
    %c0_56 = arith.constant 0 : index
    %53 = vector.load %arg2[%c512, %c0_56] : memref<576x32xbf16, #tpu.memory_space<vmem>>, vector<64x32xbf16>
    %cst_57 = arith.constant dense<0.000000e+00> : vector<256x32xf32>
    %54 = tpu.matmul %52, %53, %cst_57 {dimension_numbers = #tpu.dot_dimension_numbers<[1], [0], [0], [1], [0, 0, 1, 1], [], []>} : vector<256x64xbf16>, vector<64x32xbf16>, vector<256x32xf32> -> vector<256x32xf32>
    %55 = arith.addf %50, %54 : vector<256x32xf32>
    %c0_58 = arith.constant 0 : index
    %c0_59 = arith.constant 0 : index
    %56 = vector.load %arg3[%c0_58, %c0_59] : memref<1x32xf32, #tpu.memory_space<vmem>>, vector<1x32xf32>
    %57 = vector.broadcast %56 : vector<1x32xf32> to vector<256x32xf32>
    %58 = arith.mulf %55, %57 : vector<256x32xf32>
    %c0_60 = arith.constant 0 : index
    %c0_61 = arith.constant 0 : index
    %59 = vector.load %arg4[%c0_60, %c0_61] : memref<1x32xf32, #tpu.memory_space<vmem>>, vector<1x32xf32>
    %60 = vector.broadcast %59 : vector<1x32xf32> to vector<256x32xf32>
    %61 = arith.addf %58, %60 : vector<256x32xf32>
    %cst_62 = arith.constant 0.000000e+00 : f32
    %62 = vector.broadcast %cst_62 : f32 to vector<256x32xf32>
    %63 = arith.maximumf %61, %62 : vector<256x32xf32>
    %64 = vector.shape_cast %63 : vector<256x32xf32> to vector<16x16x32xf32>
    %cst_63 = arith.constant 0.000000e+00 : bf16
    %65 = vector.broadcast %cst_63 : bf16 to vector<16x1x32xbf16>
    %66 = arith.truncf %64 : vector<16x16x32xf32> to vector<16x16x32xbf16>
    %cst_64 = arith.constant 0.000000e+00 : bf16
    %67 = vector.broadcast %cst_64 : bf16 to vector<16x1x32xbf16>
    %68 = tpu.concatenate %65, %66, %67 in 1 : vector<16x1x32xbf16>, vector<16x16x32xbf16>, vector<16x1x32xbf16> -> vector<16x18x32xbf16>
    %c1_65 = arith.constant 1 : index
    %c0_66 = arith.constant 0 : index
    %c0_67 = arith.constant 0 : index
    %69 = vector.load %arg17[%c1_65, %c0_66, %c0_67] : memref<18x18x32xbf16, #tpu.memory_space<vmem>>, vector<16x18x32xbf16>
    tpu.vector_store %arg17[%c1_65, %c0_66, %c0_67], %68 {strides = array<i32>} : memref<18x18x32xbf16, #tpu.memory_space<vmem>>, vector<16x18x32xbf16>,
    %cst_68 = arith.constant 0.000000e+00 : bf16
    %70 = vector.broadcast %cst_68 : bf16 to vector<1x18x32xbf16>
    %c0_69 = arith.constant 0 : index
    %c0_70 = arith.constant 0 : index
    %c0_71 = arith.constant 0 : index
    %71 = vector.load %arg17[%c0_69, %c0_70, %c0_71] : memref<18x18x32xbf16, #tpu.memory_space<vmem>>, vector<1x18x32xbf16>
    tpu.vector_store %arg17[%c0_69, %c0_70, %c0_71], %70 {strides = array<i32>} : memref<18x18x32xbf16, #tpu.memory_space<vmem>>, vector<1x18x32xbf16>,
    %c17_72 = arith.constant 17 : index
    %c0_73 = arith.constant 0 : index
    %c0_74 = arith.constant 0 : index
    %72 = vector.load %arg17[%c17_72, %c0_73, %c0_74] : memref<18x18x32xbf16, #tpu.memory_space<vmem>>, vector<1x18x32xbf16>
    tpu.vector_store %arg17[%c17_72, %c0_73, %c0_74], %70 {strides = array<i32>} : memref<18x18x32xbf16, #tpu.memory_space<vmem>>, vector<1x18x32xbf16>,
    %c1_75 = arith.constant 1 : index
    %c1_76 = arith.constant 1 : index
    %c0_77 = arith.constant 0 : index
    %73 = vector.load %arg17[%c1_75, %c1_76, %c0_77] : memref<18x18x32xbf16, #tpu.memory_space<vmem>>, vector<16x16x32xbf16>
    %74 = vector.shape_cast %73 : vector<16x16x32xbf16> to vector<256x32xbf16>
    %c0_78 = arith.constant 0 : index
    %c0_79 = arith.constant 0 : index
    %75 = vector.load %arg5[%c0_78, %c0_79] : memref<32x12xbf16, #tpu.memory_space<vmem>>, vector<32x12xbf16>
    %cst_80 = arith.constant dense<0.000000e+00> : vector<256x12xf32>
    %76 = tpu.matmul %74, %75, %cst_80 {dimension_numbers = #tpu.dot_dimension_numbers<[1], [0], [0], [1], [0, 0, 1, 1], [], []>} : vector<256x32xbf16>, vector<32x12xbf16>, vector<256x12xf32> -> vector<256x12xf32>
    %c0_81 = arith.constant 0 : index
    %c0_82 = arith.constant 0 : index
    %77 = vector.load %arg6[%c0_81, %c0_82] : memref<1x12xf32, #tpu.memory_space<vmem>>, vector<1x12xf32>
    %78 = vector.broadcast %77 : vector<1x12xf32> to vector<256x12xf32>
    %79 = arith.addf %76, %78 : vector<256x12xf32>
    %c0_83 = arith.constant 0 : index
    %c0_84 = arith.constant 0 : index
    %c0_85 = arith.constant 0 : index
    %80 = vector.load %arg14[%c0_83, %c0_84, %c0_85] : memref<1x256x12xf32, #tpu.memory_space<vmem>>, vector<1x256x12xf32>
    %81 = vector.shape_cast %80 : vector<1x256x12xf32> to vector<256x12xf32>
    %82 = vector.shape_cast %79 : vector<256x12xf32> to vector<1x256x12xf32>
    tpu.vector_store %arg14[%c0_83, %c0_84, %c0_85], %82 {strides = array<i32>} : memref<1x256x12xf32, #tpu.memory_space<vmem>>, vector<1x256x12xf32>,
    %cst_86 = arith.constant 0.000000e+00 : f32
    %83 = vector.broadcast %cst_86 : f32 to vector<256x10xf32>
    %c0_87 = arith.constant 0 : index
    %c0_88 = arith.constant 0 : index
    %c0_89 = arith.constant 0 : index
    %84 = vector.load %arg17[%c0_87, %c0_88, %c0_89] : memref<18x18x32xbf16, #tpu.memory_space<vmem>>, vector<16x16x32xbf16>
    %85 = vector.shape_cast %84 : vector<16x16x32xbf16> to vector<256x32xbf16>
    %c0_90 = arith.constant 0 : index
    %c0_91 = arith.constant 0 : index
    %86 = vector.load %arg7[%c0_90, %c0_91] : memref<288x10xbf16, #tpu.memory_space<vmem>>, vector<32x10xbf16>
    %cst_92 = arith.constant dense<0.000000e+00> : vector<256x10xf32>
    %87 = tpu.matmul %85, %86, %cst_92 {dimension_numbers = #tpu.dot_dimension_numbers<[1], [0], [0], [1], [0, 0, 1, 1], [], []>} : vector<256x32xbf16>, vector<32x10xbf16>, vector<256x10xf32> -> vector<256x10xf32>
    %88 = arith.addf %83, %87 : vector<256x10xf32>
    %c0_93 = arith.constant 0 : index
    %c1_94 = arith.constant 1 : index
    %c0_95 = arith.constant 0 : index
    %89 = vector.load %arg17[%c0_93, %c1_94, %c0_95] : memref<18x18x32xbf16, #tpu.memory_space<vmem>>, vector<16x16x32xbf16>
    %90 = vector.shape_cast %89 : vector<16x16x32xbf16> to vector<256x32xbf16>
    %c32 = arith.constant 32 : index
    %c0_96 = arith.constant 0 : index
    %91 = vector.load %arg7[%c32, %c0_96] : memref<288x10xbf16, #tpu.memory_space<vmem>>, vector<32x10xbf16>
    %cst_97 = arith.constant dense<0.000000e+00> : vector<256x10xf32>
    %92 = tpu.matmul %90, %91, %cst_97 {dimension_numbers = #tpu.dot_dimension_numbers<[1], [0], [0], [1], [0, 0, 1, 1], [], []>} : vector<256x32xbf16>, vector<32x10xbf16>, vector<256x10xf32> -> vector<256x10xf32>
    %93 = arith.addf %88, %92 : vector<256x10xf32>
    %c0_98 = arith.constant 0 : index
    %c2_99 = arith.constant 2 : index
    %c0_100 = arith.constant 0 : index
    %94 = vector.load %arg17[%c0_98, %c2_99, %c0_100] : memref<18x18x32xbf16, #tpu.memory_space<vmem>>, vector<16x16x32xbf16>
    %95 = vector.shape_cast %94 : vector<16x16x32xbf16> to vector<256x32xbf16>
    %c64_101 = arith.constant 64 : index
    %c0_102 = arith.constant 0 : index
    %96 = vector.load %arg7[%c64_101, %c0_102] : memref<288x10xbf16, #tpu.memory_space<vmem>>, vector<32x10xbf16>
    %cst_103 = arith.constant dense<0.000000e+00> : vector<256x10xf32>
    %97 = tpu.matmul %95, %96, %cst_103 {dimension_numbers = #tpu.dot_dimension_numbers<[1], [0], [0], [1], [0, 0, 1, 1], [], []>} : vector<256x32xbf16>, vector<32x10xbf16>, vector<256x10xf32> -> vector<256x10xf32>
    %98 = arith.addf %93, %97 : vector<256x10xf32>
    %c1_104 = arith.constant 1 : index
    %c0_105 = arith.constant 0 : index
    %c0_106 = arith.constant 0 : index
    %99 = vector.load %arg17[%c1_104, %c0_105, %c0_106] : memref<18x18x32xbf16, #tpu.memory_space<vmem>>, vector<16x16x32xbf16>
    %100 = vector.shape_cast %99 : vector<16x16x32xbf16> to vector<256x32xbf16>
    %c96 = arith.constant 96 : index
    %c0_107 = arith.constant 0 : index
    %101 = vector.load %arg7[%c96, %c0_107] : memref<288x10xbf16, #tpu.memory_space<vmem>>, vector<32x10xbf16>
    %cst_108 = arith.constant dense<0.000000e+00> : vector<256x10xf32>
    %102 = tpu.matmul %100, %101, %cst_108 {dimension_numbers = #tpu.dot_dimension_numbers<[1], [0], [0], [1], [0, 0, 1, 1], [], []>} : vector<256x32xbf16>, vector<32x10xbf16>, vector<256x10xf32> -> vector<256x10xf32>
    %103 = arith.addf %98, %102 : vector<256x10xf32>
    %c128_109 = arith.constant 128 : index
    %c0_110 = arith.constant 0 : index
    %104 = vector.load %arg7[%c128_109, %c0_110] : memref<288x10xbf16, #tpu.memory_space<vmem>>, vector<32x10xbf16>
    %cst_111 = arith.constant dense<0.000000e+00> : vector<256x10xf32>
    %105 = tpu.matmul %74, %104, %cst_111 {dimension_numbers = #tpu.dot_dimension_numbers<[1], [0], [0], [1], [0, 0, 1, 1], [], []>} : vector<256x32xbf16>, vector<32x10xbf16>, vector<256x10xf32> -> vector<256x10xf32>
    %106 = arith.addf %103, %105 : vector<256x10xf32>
    %c1_112 = arith.constant 1 : index
    %c2_113 = arith.constant 2 : index
    %c0_114 = arith.constant 0 : index
    %107 = vector.load %arg17[%c1_112, %c2_113, %c0_114] : memref<18x18x32xbf16, #tpu.memory_space<vmem>>, vector<16x16x32xbf16>
    %108 = vector.shape_cast %107 : vector<16x16x32xbf16> to vector<256x32xbf16>
    %c160 = arith.constant 160 : index
    %c0_115 = arith.constant 0 : index
    %109 = vector.load %arg7[%c160, %c0_115] : memref<288x10xbf16, #tpu.memory_space<vmem>>, vector<32x10xbf16>
    %cst_116 = arith.constant dense<0.000000e+00> : vector<256x10xf32>
    %110 = tpu.matmul %108, %109, %cst_116 {dimension_numbers = #tpu.dot_dimension_numbers<[1], [0], [0], [1], [0, 0, 1, 1], [], []>} : vector<256x32xbf16>, vector<32x10xbf16>, vector<256x10xf32> -> vector<256x10xf32>
    %111 = arith.addf %106, %110 : vector<256x10xf32>
    %c2_117 = arith.constant 2 : index
    %c0_118 = arith.constant 0 : index
    %c0_119 = arith.constant 0 : index
    %112 = vector.load %arg17[%c2_117, %c0_118, %c0_119] : memref<18x18x32xbf16, #tpu.memory_space<vmem>>, vector<16x16x32xbf16>
    %113 = vector.shape_cast %112 : vector<16x16x32xbf16> to vector<256x32xbf16>
    %c192_120 = arith.constant 192 : index
    %c0_121 = arith.constant 0 : index
    %114 = vector.load %arg7[%c192_120, %c0_121] : memref<288x10xbf16, #tpu.memory_space<vmem>>, vector<32x10xbf16>
    %cst_122 = arith.constant dense<0.000000e+00> : vector<256x10xf32>
    %115 = tpu.matmul %113, %114, %cst_122 {dimension_numbers = #tpu.dot_dimension_numbers<[1], [0], [0], [1], [0, 0, 1, 1], [], []>} : vector<256x32xbf16>, vector<32x10xbf16>, vector<256x10xf32> -> vector<256x10xf32>
    %116 = arith.addf %111, %115 : vector<256x10xf32>
    %c2_123 = arith.constant 2 : index
    %c1_124 = arith.constant 1 : index
    %c0_125 = arith.constant 0 : index
    %117 = vector.load %arg17[%c2_123, %c1_124, %c0_125] : memref<18x18x32xbf16, #tpu.memory_space<vmem>>, vector<16x16x32xbf16>
    %118 = vector.shape_cast %117 : vector<16x16x32xbf16> to vector<256x32xbf16>
    %c224 = arith.constant 224 : index
    %c0_126 = arith.constant 0 : index
    %119 = vector.load %arg7[%c224, %c0_126] : memref<288x10xbf16, #tpu.memory_space<vmem>>, vector<32x10xbf16>
    %cst_127 = arith.constant dense<0.000000e+00> : vector<256x10xf32>
    %120 = tpu.matmul %118, %119, %cst_127 {dimension_numbers = #tpu.dot_dimension_numbers<[1], [0], [0], [1], [0, 0, 1, 1], [], []>} : vector<256x32xbf16>, vector<32x10xbf16>, vector<256x10xf32> -> vector<256x10xf32>
    %121 = arith.addf %116, %120 : vector<256x10xf32>
    %c2_128 = arith.constant 2 : index
    %c2_129 = arith.constant 2 : index
    %c0_130 = arith.constant 0 : index
    %122 = vector.load %arg17[%c2_128, %c2_129, %c0_130] : memref<18x18x32xbf16, #tpu.memory_space<vmem>>, vector<16x16x32xbf16>
    %123 = vector.shape_cast %122 : vector<16x16x32xbf16> to vector<256x32xbf16>
    %c256_131 = arith.constant 256 : index
    %c0_132 = arith.constant 0 : index
    %124 = vector.load %arg7[%c256_131, %c0_132] : memref<288x10xbf16, #tpu.memory_space<vmem>>, vector<32x10xbf16>
    %cst_133 = arith.constant dense<0.000000e+00> : vector<256x10xf32>
    %125 = tpu.matmul %123, %124, %cst_133 {dimension_numbers = #tpu.dot_dimension_numbers<[1], [0], [0], [1], [0, 0, 1, 1], [], []>} : vector<256x32xbf16>, vector<32x10xbf16>, vector<256x10xf32> -> vector<256x10xf32>
    %126 = arith.addf %121, %125 : vector<256x10xf32>
    %c0_134 = arith.constant 0 : index
    %c0_135 = arith.constant 0 : index
    %127 = vector.load %arg8[%c0_134, %c0_135] : memref<1x10xf32, #tpu.memory_space<vmem>>, vector<1x10xf32>
    %128 = vector.broadcast %127 : vector<1x10xf32> to vector<256x10xf32>
    %129 = arith.mulf %126, %128 : vector<256x10xf32>
    %c0_136 = arith.constant 0 : index
    %c0_137 = arith.constant 0 : index
    %130 = vector.load %arg9[%c0_136, %c0_137] : memref<1x10xf32, #tpu.memory_space<vmem>>, vector<1x10xf32>
    %131 = vector.broadcast %130 : vector<1x10xf32> to vector<256x10xf32>
    %132 = arith.addf %129, %131 : vector<256x10xf32>
    %cst_138 = arith.constant 0.00999999977 : f32
    %133 = vector.broadcast %cst_138 : f32 to vector<256x10xf32>
    %134 = arith.mulf %133, %132 : vector<256x10xf32>
    %135 = arith.maximumf %132, %134 : vector<256x10xf32>
    %136 = arith.truncf %135 : vector<256x10xf32> to vector<256x10xbf16>
    %c0_139 = arith.constant 0 : index
    %c0_140 = arith.constant 0 : index
    %137 = vector.load %arg10[%c0_139, %c0_140] : memref<10x10xbf16, #tpu.memory_space<vmem>>, vector<10x10xbf16>
    %cst_141 = arith.constant dense<0.000000e+00> : vector<256x10xf32>
    %138 = tpu.matmul %136, %137, %cst_141 {dimension_numbers = #tpu.dot_dimension_numbers<[1], [0], [0], [1], [0, 0, 1, 1], [], []>} : vector<256x10xbf16>, vector<10x10xbf16>, vector<256x10xf32> -> vector<256x10xf32>
    %c0_142 = arith.constant 0 : index
    %c0_143 = arith.constant 0 : index
    %139 = vector.load %arg11[%c0_142, %c0_143] : memref<1x10xf32, #tpu.memory_space<vmem>>, vector<1x10xf32>
    %140 = vector.broadcast %139 : vector<1x10xf32> to vector<256x10xf32>
    %141 = arith.addf %138, %140 : vector<256x10xf32>
    %cst_144 = arith.constant dense<0.000000e+00> : vector<10xf32>
    %142 = vector.multi_reduction <add>, %141, %cst_144 [0] : vector<256x10xf32> to vector<10xf32>
    %143 = vector.shape_cast %142 : vector<10xf32> to vector<1x10xf32>
    %cst_145 = arith.constant 2.560000e+02 : f32
    %144 = vector.broadcast %cst_145 : f32 to vector<1x10xf32>
    %145 = arith.divf %143, %144 : vector<1x10xf32>
    %c0_146 = arith.constant 0 : index
    %c0_147 = arith.constant 0 : index
    %146 = vector.load %arg12[%c0_146, %c0_147] : memref<1x10xf32, #tpu.memory_space<vmem>>, vector<1x10xf32>
    %147 = arith.mulf %145, %146 : vector<1x10xf32>
    %cst_148 = arith.constant dense<0.000000e+00> : vector<1xf32>
    %148 = vector.multi_reduction <add>, %147, %cst_148 [1] : vector<1x10xf32> to vector<1xf32>
    %149 = vector.shape_cast %148 : vector<1xf32> to vector<1x1xf32>
    %c0_149 = arith.constant 0 : index
    %c0_150 = arith.constant 0 : index
    %150 = vector.load %arg13[%c0_149, %c0_150] : memref<1x1xf32, #tpu.memory_space<vmem>>, vector<1x1xf32>
    %151 = arith.addf %149, %150 : vector<1x1xf32>
    %cst_151 = arith.constant 0.000000e+00 : f32
    %152 = vector.broadcast %cst_151 : f32 to vector<1x1xf32>
    %153 = arith.subf %152, %151 : vector<1x1xf32>
    %154 = math.exp %153 : vector<1x1xf32>
    %cst_152 = arith.constant 1.000000e+00 : f32
    %155 = vector.broadcast %cst_152 : f32 to vector<1x1xf32>
    %156 = arith.addf %155, %154 : vector<1x1xf32>
    %cst_153 = arith.constant 1.000000e+00 : f32
    %157 = vector.broadcast %cst_153 : f32 to vector<1x1xf32>
    %158 = arith.divf %157, %156 : vector<1x1xf32>
    %159 = vector.shape_cast %158 : vector<1x1xf32> to vector<1x1x1xf32>
    %c0_154 = arith.constant 0 : index
    %c0_155 = arith.constant 0 : index
    %c0_156 = arith.constant 0 : index
    %160 = vector.load %arg15[%c0_154, %c0_155, %c0_156] : memref<1x1x1xf32, #tpu.memory_space<vmem>>, vector<1x1x1xf32>
    tpu.vector_store %arg15[%c0_154, %c0_155, %c0_156], %159 {strides = array<i32>} : memref<1x1x1xf32, #tpu.memory_space<vmem>>, vector<1x1x1xf32>,
    return
  }
  func.func @transform_0(%arg0: i32) -> (i32, i32, i32, i32) {
    %c0_i32 = arith.constant 0 : i32
    %c0_i32_0 = arith.constant 0 : i32
    %c0_i32_1 = arith.constant 0 : i32
    %c0_i32_2 = arith.constant 0 : i32
    return %arg0, %c0_i32, %c0_i32_0, %c0_i32_1 : i32, i32, i32, i32
  }
  func.func @transform_1(%arg0: i32) -> (i32, i32) {
    %c0_i32 = arith.constant 0 : i32
    %c0_i32_0 = arith.constant 0 : i32
    %c0_i32_1 = arith.constant 0 : i32
    return %c0_i32, %c0_i32_0 : i32, i32
  }
  func.func @transform_2(%arg0: i32) -> (i32, i32) {
    %c0_i32 = arith.constant 0 : i32
    %c0_i32_0 = arith.constant 0 : i32
    %c0_i32_1 = arith.constant 0 : i32
    return %c0_i32, %c0_i32_0 : i32, i32
  }
  func.func @transform_3(%arg0: i32) -> (i32, i32) {
    %c0_i32 = arith.constant 0 : i32
    %c0_i32_0 = arith.constant 0 : i32
    %c0_i32_1 = arith.constant 0 : i32
    return %c0_i32, %c0_i32_0 : i32, i32
  }
  func.func @transform_4(%arg0: i32) -> (i32, i32) {
    %c0_i32 = arith.constant 0 : i32
    %c0_i32_0 = arith.constant 0 : i32
    %c0_i32_1 = arith.constant 0 : i32
    return %c0_i32, %c0_i32_0 : i32, i32
  }
  func.func @transform_5(%arg0: i32) -> (i32, i32) {
    %c0_i32 = arith.constant 0 : i32
    %c0_i32_0 = arith.constant 0 : i32
    %c0_i32_1 = arith.constant 0 : i32
    return %c0_i32, %c0_i32_0 : i32, i32
  }
  func.func @transform_6(%arg0: i32) -> (i32, i32) {
    %c0_i32 = arith.constant 0 : i32
    %c0_i32_0 = arith.constant 0 : i32
    %c0_i32_1 = arith.constant 0 : i32
    return %c0_i32, %c0_i32_0 : i32, i32
  }
  func.func @transform_7(%arg0: i32) -> (i32, i32) {
    %c0_i32 = arith.constant 0 : i32
    %c0_i32_0 = arith.constant 0 : i32
    %c0_i32_1 = arith.constant 0 : i32
    return %c0_i32, %c0_i32_0 : i32, i32
  }
  func.func @transform_8(%arg0: i32) -> (i32, i32) {
    %c0_i32 = arith.constant 0 : i32
    %c0_i32_0 = arith.constant 0 : i32
    %c0_i32_1 = arith.constant 0 : i32
    return %c0_i32, %c0_i32_0 : i32, i32
  }
  func.func @transform_9(%arg0: i32) -> (i32, i32) {
    %c0_i32 = arith.constant 0 : i32
    %c0_i32_0 = arith.constant 0 : i32
    %c0_i32_1 = arith.constant 0 : i32
    return %c0_i32, %c0_i32_0 : i32, i32
  }
  func.func @transform_10(%arg0: i32) -> (i32, i32) {
    %c0_i32 = arith.constant 0 : i32
    %c0_i32_0 = arith.constant 0 : i32
    %c0_i32_1 = arith.constant 0 : i32
    return %c0_i32, %c0_i32_0 : i32, i32
  }
  func.func @transform_11(%arg0: i32) -> (i32, i32) {
    %c0_i32 = arith.constant 0 : i32
    %c0_i32_0 = arith.constant 0 : i32
    %c0_i32_1 = arith.constant 0 : i32
    return %c0_i32, %c0_i32_0 : i32, i32
  }
  func.func @transform_12(%arg0: i32) -> (i32, i32) {
    %c0_i32 = arith.constant 0 : i32
    %c0_i32_0 = arith.constant 0 : i32
    %c0_i32_1 = arith.constant 0 : i32
    return %c0_i32, %c0_i32_0 : i32, i32
  }
  func.func @transform_13(%arg0: i32) -> (i32, i32, i32) {
    %c0_i32 = arith.constant 0 : i32
    %c0_i32_0 = arith.constant 0 : i32
    %c0_i32_1 = arith.constant 0 : i32
    return %arg0, %c0_i32, %c0_i32_0 : i32, i32, i32
  }
  func.func @transform_14(%arg0: i32) -> (i32, i32, i32) {
    %c0_i32 = arith.constant 0 : i32
    %c0_i32_0 = arith.constant 0 : i32
    %c0_i32_1 = arith.constant 0 : i32
    return %arg0, %c0_i32, %c0_i32_0 : i32, i32, i32
  }
}

</mosaic_0001>

<llo_original>
// kernel: tpu_custom_call.1
$region0: #{tpu_custom_call.1}
  #allocation0 [shape = 'u32[]', space=smem, size = 0x4, offset = 0x4, fixed_abs, tag = 'smem constant byte address 0x4 - core index']
  #allocation1 [shape = 'u32[144,128]{1,0:T(1,128)}', space=vmem, size = 0x12000, scoped, tag = 'internal scratch']
  #allocation2 [shape = 'bf16[18,18,64]{2,1,0:T(8,128)(2,1)}', space=vmem, size = 0x1b000, scoped, tag = 'scratch operand']
  #allocation3 [shape = 'bf16[18,18,32]{2,1,0:T(8,128)(2,1)}', space=vmem, size = 0x1b000, scoped, tag = 'scratch operand']
  #allocation4 [shape = 'f32[1,1]{1,0:T(1,128)S(1)}', space=vmem, size = 0x200, scoped, tag = 'scoped memory for tpu_custom_call.1']
  %s0 = inlined_call_operand.vmem [shape: f32[2,16,16,64], index: 0, kind: input, shape index: {}]
  %s1 = inlined_call_operand.vmem [shape: bf16[576,32], index: 1, kind: input, shape index: {}]
  %s2 = inlined_call_operand.vmem [shape: f32[1,32], index: 2, kind: input, shape index: {}]
  %s3 = inlined_call_operand.vmem [shape: f32[1,32], index: 3, kind: input, shape index: {}]
  %s4 = inlined_call_operand.vmem [shape: bf16[32,12], index: 4, kind: input, shape index: {}]
  %s5 = inlined_call_operand.vmem [shape: f32[1,12], index: 5, kind: input, shape index: {}]
  %s6 = inlined_call_operand.vmem [shape: bf16[288,10], index: 6, kind: input, shape index: {}]
  %s7 = inlined_call_operand.vmem [shape: f32[1,10], index: 7, kind: input, shape index: {}]
  %s8 = inlined_call_operand.vmem [shape: f32[1,10], index: 8, kind: input, shape index: {}]
  %s9 = inlined_call_operand.vmem [shape: bf16[10,10], index: 9, kind: input, shape index: {}]
  %s10 = inlined_call_operand.vmem [shape: f32[1,10], index: 10, kind: input, shape index: {}]
  %s11 = inlined_call_operand.vmem [shape: f32[1,10], index: 11, kind: input, shape index: {}]
  %s12 = inlined_call_operand.<no memory space> [shape: f32[1,1], index: 12, kind: input, shape index: {}]
  %s13 = inlined_call_operand.vmem [shape: f32[2,256,12], index: 13, kind: output, shape index: {0}]
  %s14 = inlined_call_operand.vmem [shape: f32[2,1,1], index: 14, kind: output, shape index: {1}]
  %15 = xla_tuple %s13, %s14
  %s16 = sld [smem:[#allocation0]]
  $region93: #{tpu_custom_call.1} parent=0
    _
  %s18 = ssub.s32 1, %s16
  %s19 = scalar_select 0, %s18, %s16
  %v20 = vstv %s12
  %21 = vst [vmem:[#allocation4] sm:$0x1] %v20
  loop: start=0, step=1, limit=4
  $region2: #{tpu_custom_call.1} parent=0 // loop_pre_header
    _
  $region3: #{tpu_custom_call.1} parent=0 // loop_header
    %s23 = sphi 0, %s27
    %p24 = scmp.ge.s32.totalorder %s23, 4
    %s33 = sphi 0, %s35
    %s36 = sphi 0, %s33
    %s37 = sphi 0, %s36
    %s53 = sphi 0, %s37
    %s57 = sphi 0, %s57
    %s59 = sphi 0, %s57
    %s60 = sphi 0, %s59
    %s74 = sphi 0, %s60
    %s78 = sphi 0, %s78
    %s80 = sphi 0, %s78
    %s81 = sphi 0, %s80
    %s95 = sphi 0, %s81
    %s99 = sphi 0, %s99
    %s101 = sphi 0, %s99
    %s102 = sphi 0, %s101
    %s116 = sphi 0, %s102
    %s120 = sphi 0, %s120
    %s122 = sphi 0, %s120
    %s123 = sphi 0, %s122
    %s137 = sphi 0, %s123
    %s141 = sphi 0, %s141
    %s143 = sphi 0, %s141
    %s144 = sphi 0, %s143
    %s158 = sphi 0, %s144
    %s162 = sphi 0, %s162
    %s164 = sphi 0, %s162
    %s165 = sphi 0, %s164
    %s179 = sphi 0, %s165
    %s183 = sphi 0, %s183
    %s185 = sphi 0, %s183
    %s186 = sphi 0, %s185
    %s200 = sphi 0, %s186
    %s204 = sphi 0, %s204
    %s206 = sphi 0, %s204
    %s207 = sphi 0, %s206
    %s221 = sphi 0, %s207
    %s225 = sphi 0, %s225
    %s227 = sphi 0, %s225
    %s228 = sphi 0, %s227
    %s242 = sphi 0, %s228
    %s246 = sphi 0, %s246
    %s248 = sphi 0, %s246
    %s249 = sphi 0, %s248
    %s263 = sphi 0, %s249
    %s267 = sphi 0, %s267
    %s269 = sphi 0, %s267
    %s270 = sphi 0, %s269
    %s284 = sphi 0, %s270
    %s288 = sphi 0, %s288
    %s290 = sphi 0, %s288
    %s291 = sphi 0, %s290
    %s305 = sphi 0, %s291
    %s311 = sphi 0, %s313
    %s314 = sphi 0, %s311
    %s315 = sphi 0, %s314
    %s331 = sphi 0, %s315
    %s337 = sphi 0, %s339
    %s340 = sphi 0, %s337
    %s341 = sphi 0, %s340
    %s357 = sphi 0, %s341
  $region4: #{tpu_custom_call.1} parent=0 // loop_header_branch
    %26 = sbr.rel (%p24) target = $region8
  $region5: #{tpu_custom_call.1} parent=0 // loop_body
    %s28 = ssub.s32 %s23, 1
    %s29 = ssub.s32 %s23, 2
    %s30 = sadd.s32 %s23, 1
    %s31 = ssub.s32 %s23, %s30
    %p32 = scmp.eq.s32.totalorder %s31, 0
    %s34 = sadd.s32 %s33, 1
    %s35 = scalar_select %p32, %s33, %s34
    %p38 = pneg %p32
    %p39 = scmp.eq.s32.totalorder %s23, 1
    %p40 = por %p38, %p39
    %p41 = scmp.ne.s32.totalorder %s33, %s36
    %p42 = scmp.eq.s32.totalorder %s23, 0
    %p43 = por %p41, %p42
    %p44 = scmp.ne.s32.totalorder %s33, %s36
    %p45 = scmp.eq.s32.totalorder %s28, 1
    %p46 = por %p44, %p45
    %p47 = scmp.ne.s32.totalorder %s36, %s37
    %p48 = scmp.eq.s32.totalorder %s28, 0
    %p49 = por %p47, %p48
    %p50 = scmp.ne.s32.totalorder %s36, %s37
    %p51 = scmp.eq.s32.totalorder %s29, 1
    %p52 = por %p50, %p51
    %p54 = scmp.ne.s32.totalorder %s37, %s53
    %p55 = scmp.eq.s32.totalorder %s29, 0
    %p56 = por %p54, %p55
    %s58 = sadd.s32 %s57, 1
    %p61 = scmp.eq.s32.totalorder %s23, 1
    %p62 = scmp.ne.s32.totalorder %s57, %s59
    %p63 = scmp.eq.s32.totalorder %s23, 0
    %p64 = por %p62, %p63
    %p65 = scmp.ne.s32.totalorder %s57, %s59
    %p66 = scmp.eq.s32.totalorder %s28, 1
    %p67 = por %p65, %p66
    %p68 = scmp.ne.s32.totalorder %s59, %s60
    %p69 = scmp.eq.s32.totalorder %s28, 0
    %p70 = por %p68, %p69
    %p71 = scmp.ne.s32.totalorder %s59, %s60
    %p72 = scmp.eq.s32.totalorder %s29, 1
    %p73 = por %p71, %p72
    %p75 = scmp.ne.s32.totalorder %s60, %s74
    %p76 = scmp.eq.s32.totalorder %s29, 0
    %p77 = por %p75, %p76
    %s79 = sadd.s32 %s78, 1
    %p82 = scmp.eq.s32.totalorder %s23, 1
    %p83 = scmp.ne.s32.totalorder %s78, %s80
    %p84 = scmp.eq.s32.totalorder %s23, 0
    %p85 = por %p83, %p84
    %p86 = scmp.ne.s32.totalorder %s78, %s80
    %p87 = scmp.eq.s32.totalorder %s28, 1
    %p88 = por %p86, %p87
    %p89 = scmp.ne.s32.totalorder %s80, %s81
    %p90 = scmp.eq.s32.totalorder %s28, 0
    %p91 = por %p89, %p90
    %p92 = scmp.ne.s32.totalorder %s80, %s81
    %p93 = scmp.eq.s32.totalorder %s29, 1
    %p94 = por %p92, %p93
    %p96 = scmp.ne.s32.totalorder %s81, %s95
    %p97 = scmp.eq.s32.totalorder %s29, 0
    %p98 = por %p96, %p97
    %s100 = sadd.s32 %s99, 1
    %p103 = scmp.eq.s32.totalorder %s23, 1
    %p104 = scmp.ne.s32.totalorder %s99, %s101
    %p105 = scmp.eq.s32.totalorder %s23, 0
    %p106 = por %p104, %p105
    %p107 = scmp.ne.s32.totalorder %s99, %s101
    %p108 = scmp.eq.s32.totalorder %s28, 1
    %p109 = por %p107, %p108
    %p110 = scmp.ne.s32.totalorder %s101, %s102
    %p111 = scmp.eq.s32.totalorder %s28, 0
    %p112 = por %p110, %p111
    %p113 = scmp.ne.s32.totalorder %s101, %s102
    %p114 = scmp.eq.s32.totalorder %s29, 1
    %p115 = por %p113, %p114
    %p117 = scmp.ne.s32.totalorder %s102, %s116
    %p118 = scmp.eq.s32.totalorder %s29, 0
    %p119 = por %p117, %p118
    %s121 = sadd.s32 %s120, 1
    %p124 = scmp.eq.s32.totalorder %s23, 1
    %p125 = scmp.ne.s32.totalorder %s120, %s122
    %p126 = scmp.eq.s32.totalorder %s23, 0
    %p127 = por %p125, %p126
    %p128 = scmp.ne.s32.totalorder %s120, %s122
    %p129 = scmp.eq.s32.totalorder %s28, 1
    %p130 = por %p128, %p129
    %p131 = scmp.ne.s32.totalorder %s122, %s123
    %p132 = scmp.eq.s32.totalorder %s28, 0
    %p133 = por %p131, %p132
    %p134 = scmp.ne.s32.totalorder %s122, %s123
    %p135 = scmp.eq.s32.totalorder %s29, 1
    %p136 = por %p134, %p135
    %p138 = scmp.ne.s32.totalorder %s123, %s137
    %p139 = scmp.eq.s32.totalorder %s29, 0
    %p140 = por %p138, %p139
    %s142 = sadd.s32 %s141, 1
    %p145 = scmp.eq.s32.totalorder %s23, 1
    %p146 = scmp.ne.s32.totalorder %s141, %s143
    %p147 = scmp.eq.s32.totalorder %s23, 0
    %p148 = por %p146, %p147
    %p149 = scmp.ne.s32.totalorder %s141, %s143
    %p150 = scmp.eq.s32.totalorder %s28, 1
    %p151 = por %p149, %p150
    %p152 = scmp.ne.s32.totalorder %s143, %s144
    %p153 = scmp.eq.s32.totalorder %s28, 0
    %p154 = por %p152, %p153
    %p155 = scmp.ne.s32.totalorder %s143, %s144
    %p156 = scmp.eq.s32.totalorder %s29, 1
    %p157 = por %p155, %p156
    %p159 = scmp.ne.s32.totalorder %s144, %s158
    %p160 = scmp.eq.s32.totalorder %s29, 0
    %p161 = por %p159, %p160
    %s163 = sadd.s32 %s162, 1
    %p166 = scmp.eq.s32.totalorder %s23, 1
    %p167 = scmp.ne.s32.totalorder %s162, %s164
    %p168 = scmp.eq.s32.totalorder %s23, 0
    %p169 = por %p167, %p168
    %p170 = scmp.ne.s32.totalorder %s162, %s164
    %p171 = scmp.eq.s32.totalorder %s28, 1
    %p172 = por %p170, %p171
    %p173 = scmp.ne.s32.totalorder %s164, %s165
    %p174 = scmp.eq.s32.totalorder %s28, 0
    %p175 = por %p173, %p174
    %p176 = scmp.ne.s32.totalorder %s164, %s165
    %p177 = scmp.eq.s32.totalorder %s29, 1
    %p178 = por %p176, %p177
    %p180 = scmp.ne.s32.totalorder %s165, %s179
    %p181 = scmp.eq.s32.totalorder %s29, 0
    %p182 = por %p180, %p181
    %s184 = sadd.s32 %s183, 1
    %p187 = scmp.eq.s32.totalorder %s23, 1
    %p188 = scmp.ne.s32.totalorder %s183, %s185
    %p189 = scmp.eq.s32.totalorder %s23, 0
    %p190 = por %p188, %p189
    %p191 = scmp.ne.s32.totalorder %s183, %s185
    %p192 = scmp.eq.s32.totalorder %s28, 1
    %p193 = por %p191, %p192
    %p194 = scmp.ne.s32.totalorder %s185, %s186
    %p195 = scmp.eq.s32.totalorder %s28, 0
    %p196 = por %p194, %p195
    %p197 = scmp.ne.s32.totalorder %s185, %s186
    %p198 = scmp.eq.s32.totalorder %s29, 1
    %p199 = por %p197, %p198
    %p201 = scmp.ne.s32.totalorder %s186, %s200
    %p202 = scmp.eq.s32.totalorder %s29, 0
    %p203 = por %p201, %p202
    %s205 = sadd.s32 %s204, 1
    %p208 = scmp.eq.s32.totalorder %s23, 1
    %p209 = scmp.ne.s32.totalorder %s204, %s206
    %p210 = scmp.eq.s32.totalorder %s23, 0
    %p211 = por %p209, %p210
    %p212 = scmp.ne.s32.totalorder %s204, %s206
    %p213 = scmp.eq.s32.totalorder %s28, 1
    %p214 = por %p212, %p213
    %p215 = scmp.ne.s32.totalorder %s206, %s207
    %p216 = scmp.eq.s32.totalorder %s28, 0
    %p217 = por %p215, %p216
    %p218 = scmp.ne.s32.totalorder %s206, %s207
    %p219 = scmp.eq.s32.totalorder %s29, 1
    %p220 = por %p218, %p219
    %p222 = scmp.ne.s32.totalorder %s207, %s221
    %p223 = scmp.eq.s32.totalorder %s29, 0
    %p224 = por %p222, %p223
    %s226 = sadd.s32 %s225, 1
    %p229 = scmp.eq.s32.totalorder %s23, 1
    %p230 = scmp.ne.s32.totalorder %s225, %s227
    %p231 = scmp.eq.s32.totalorder %s23, 0
    %p232 = por %p230, %p231
    %p233 = scmp.ne.s32.totalorder %s225, %s227
    %p234 = scmp.eq.s32.totalorder %s28, 1
    %p235 = por %p233, %p234
    %p236 = scmp.ne.s32.totalorder %s227, %s228
    %p237 = scmp.eq.s32.totalorder %s28, 0
    %p238 = por %p236, %p237
    %p239 = scmp.ne.s32.totalorder %s227, %s228
    %p240 = scmp.eq.s32.totalorder %s29, 1
    %p241 = por %p239, %p240
    %p243 = scmp.ne.s32.totalorder %s228, %s242
    %p244 = scmp.eq.s32.totalorder %s29, 0
    %p245 = por %p243, %p244
    %s247 = sadd.s32 %s246, 1
    %p250 = scmp.eq.s32.totalorder %s23, 1
    %p251 = scmp.ne.s32.totalorder %s246, %s248
    %p252 = scmp.eq.s32.totalorder %s23, 0
    %p253 = por %p251, %p252
    %p254 = scmp.ne.s32.totalorder %s246, %s248
    %p255 = scmp.eq.s32.totalorder %s28, 1
    %p256 = por %p254, %p255
    %p257 = scmp.ne.s32.totalorder %s248, %s249
    %p258 = scmp.eq.s32.totalorder %s28, 0
    %p259 = por %p257, %p258
    %p260 = scmp.ne.s32.totalorder %s248, %s249
    %p261 = scmp.eq.s32.totalorder %s29, 1
    %p262 = por %p260, %p261
    %p264 = scmp.ne.s32.totalorder %s249, %s263
    %p265 = scmp.eq.s32.totalorder %s29, 0
    %p266 = por %p264, %p265
    %s268 = sadd.s32 %s267, 1
    %p271 = scmp.eq.s32.totalorder %s23, 1
    %p272 = scmp.ne.s32.totalorder %s267, %s269
    %p273 = scmp.eq.s32.totalorder %s23, 0
    %p274 = por %p272, %p273
    %p275 = scmp.ne.s32.totalorder %s267, %s269
    %p276 = scmp.eq.s32.totalorder %s28, 1
    %p277 = por %p275, %p276
    %p278 = scmp.ne.s32.totalorder %s269, %s270
    %p279 = scmp.eq.s32.totalorder %s28, 0
    %p280 = por %p278, %p279
    %p281 = scmp.ne.s32.totalorder %s269, %s270
    %p282 = scmp.eq.s32.totalorder %s29, 1
    %p283 = por %p281, %p282
    %p285 = scmp.ne.s32.totalorder %s270, %s284
    %p286 = scmp.eq.s32.totalorder %s29, 0
    %p287 = por %p285, %p286
    %s289 = sadd.s32 %s288, 1
    %p292 = scmp.eq.s32.totalorder %s23, 1
    %p293 = scmp.ne.s32.totalorder %s288, %s290
    %p294 = scmp.eq.s32.totalorder %s23, 0
    %p295 = por %p293, %p294
    %p296 = scmp.ne.s32.totalorder %s288, %s290
    %p297 = scmp.eq.s32.totalorder %s28, 1
    %p298 = por %p296, %p297
    %p299 = scmp.ne.s32.totalorder %s290, %s291
    %p300 = scmp.eq.s32.totalorder %s28, 0
    %p301 = por %p299, %p300
    %p302 = scmp.ne.s32.totalorder %s290, %s291
    %p303 = scmp.eq.s32.totalorder %s29, 1
    %p304 = por %p302, %p303
    %p306 = scmp.ne.s32.totalorder %s291, %s305
    %p307 = scmp.eq.s32.totalorder %s29, 0
    %p308 = por %p306, %p307
    %s309 = ssub.s32 %s23, %s30
    %p310 = scmp.eq.s32.totalorder %s309, 0
    %s312 = sadd.s32 %s311, 1
    %s313 = scalar_select %p310, %s311, %s312
    %p316 = pneg %p310
    %p317 = scmp.eq.s32.totalorder %s23, 1
    %p318 = por %p316, %p317
    %p319 = scmp.ne.s32.totalorder %s311, %s314
    %p320 = scmp.eq.s32.totalorder %s23, 0
    %p321 = por %p319, %p320
    %p322 = scmp.ne.s32.totalorder %s311, %s314
    %p323 = scmp.eq.s32.totalorder %s28, 1
    %p324 = por %p322, %p323
    %p325 = scmp.ne.s32.totalorder %s314, %s315
    %p326 = scmp.eq.s32.totalorder %s28, 0
    %p327 = por %p325, %p326
    %p328 = scmp.ne.s32.totalorder %s314, %s315
    %p329 = scmp.eq.s32.totalorder %s29, 1
    %p330 = por %p328, %p329
    %p332 = scmp.ne.s32.totalorder %s315, %s331
    %p333 = scmp.eq.s32.totalorder %s29, 0
    %p334 = por %p332, %p333
    %s335 = ssub.s32 %s23, %s30
    %p336 = scmp.eq.s32.totalorder %s335, 0
    %s338 = sadd.s32 %s337, 1
    %s339 = scalar_select %p336, %s337, %s338
    %p342 = pneg %p336
    %p343 = scmp.eq.s32.totalorder %s23, 1
    %p344 = por %p342, %p343
    %p345 = scmp.ne.s32.totalorder %s337, %s340
    %p346 = scmp.eq.s32.totalorder %s23, 0
    %p347 = por %p345, %p346
    %p348 = scmp.ne.s32.totalorder %s337, %s340
    %p349 = scmp.eq.s32.totalorder %s28, 1
    %p350 = por %p348, %p349
    %p351 = scmp.ne.s32.totalorder %s340, %s341
    %p352 = scmp.eq.s32.totalorder %s28, 0
    %p353 = por %p351, %p352
    %p354 = scmp.ne.s32.totalorder %s340, %s341
    %p355 = scmp.eq.s32.totalorder %s29, 1
    %p356 = por %p354, %p355
    %p358 = scmp.ne.s32.totalorder %s341, %s357
    %p359 = scmp.eq.s32.totalorder %s29, 0
    %p360 = por %p358, %p359
    %p361 = scmp.le.s32.totalorder 1, %s23
    %p362 = scmp.lt.s32.totalorder %s23, 3
    %p363 = pnand %p361, %p362
    %p364 = pneg %p363
    // Predicated region
    $region9: #{tpu_custom_call.1} parent=5 // pred_check
      _
    $region10: #{tpu_custom_call.1} parent=5 // pred_check_branch
      %366 = sbr.rel (%p363) target = $region12
    $region11: #{tpu_custom_call.1} parent=5 // pred_region
      %s367 = ssub.s32 %s23, 1
      // Predicated region
      $region13: #{tpu_custom_call.1} parent=11 // pred_check
        %p368 = pneg %p70
      $region14: #{tpu_custom_call.1} parent=11 // pred_check_branch
        %370 = sbr.rel (%p368) target = $region16
      $region15: #{tpu_custom_call.1} parent=11 // pred_region
        _
      $region16: #{tpu_custom_call.1} parent=11 // pred_fallthru
        _
      // Predicated region
      $region17: #{tpu_custom_call.1} parent=11 // pred_check
        %p371 = pneg %p91
      $region18: #{tpu_custom_call.1} parent=11 // pred_check_branch
        %373 = sbr.rel (%p371) target = $region20
      $region19: #{tpu_custom_call.1} parent=11 // pred_region
        _
      $region20: #{tpu_custom_call.1} parent=11 // pred_fallthru
        _
      // Predicated region
      $region21: #{tpu_custom_call.1} parent=11 // pred_check
        %p374 = pneg %p112
      $region22: #{tpu_custom_call.1} parent=11 // pred_check_branch
        %376 = sbr.rel (%p374) target = $region24
      $region23: #{tpu_custom_call.1} parent=11 // pred_region
        _
      $region24: #{tpu_custom_call.1} parent=11 // pred_fallthru
        _
      // Predicated region
      $region25: #{tpu_custom_call.1} parent=11 // pred_check
        %p377 = pneg %p133
      $region26: #{tpu_custom_call.1} parent=11 // pred_check_branch
        %379 = sbr.rel (%p377) target = $region28
      $region27: #{tpu_custom_call.1} parent=11 // pred_region
        _
      $region28: #{tpu_custom_call.1} parent=11 // pred_fallthru
        _
      // Predicated region
      $region29: #{tpu_custom_call.1} parent=11 // pred_check
        %p380 = pneg %p154
      $region30: #{tpu_custom_call.1} parent=11 // pred_check_branch
        %382 = sbr.rel (%p380) target = $region32
      $region31: #{tpu_custom_call.1} parent=11 // pred_region
        _
      $region32: #{tpu_custom_call.1} parent=11 // pred_fallthru
        _
      // Predicated region
      $region33: #{tpu_custom_call.1} parent=11 // pred_check
        %p383 = pneg %p175
      $region34: #{tpu_custom_call.1} parent=11 // pred_check_branch
        %385 = sbr.rel (%p383) target = $region36
      $region35: #{tpu_custom_call.1} parent=11 // pred_region
        _
      $region36: #{tpu_custom_call.1} parent=11 // pred_fallthru
        _
      // Predicated region
      $region37: #{tpu_custom_call.1} parent=11 // pred_check
        %p386 = pneg %p196
      $region38: #{tpu_custom_call.1} parent=11 // pred_check_branch
        %388 = sbr.rel (%p386) target = $region40
      $region39: #{tpu_custom_call.1} parent=11 // pred_region
        _
      $region40: #{tpu_custom_call.1} parent=11 // pred_fallthru
        _
      // Predicated region
      $region41: #{tpu_custom_call.1} parent=11 // pred_check
        %p389 = pneg %p217
      $region42: #{tpu_custom_call.1} parent=11 // pred_check_branch
        %391 = sbr.rel (%p389) target = $region44
      $region43: #{tpu_custom_call.1} parent=11 // pred_region
        _
      $region44: #{tpu_custom_call.1} parent=11 // pred_fallthru
        _
      // Predicated region
      $region45: #{tpu_custom_call.1} parent=11 // pred_check
        %p392 = pneg %p238
      $region46: #{tpu_custom_call.1} parent=11 // pred_check_branch
        %394 = sbr.rel (%p392) target = $region48
      $region47: #{tpu_custom_call.1} parent=11 // pred_region
        _
      $region48: #{tpu_custom_call.1} parent=11 // pred_fallthru
        _
      // Predicated region
      $region49: #{tpu_custom_call.1} parent=11 // pred_check
        %p395 = pneg %p259
      $region50: #{tpu_custom_call.1} parent=11 // pred_check_branch
        %397 = sbr.rel (%p395) target = $region52
      $region51: #{tpu_custom_call.1} parent=11 // pred_region
        _
      $region52: #{tpu_custom_call.1} parent=11 // pred_fallthru
        _
      // Predicated region
      $region53: #{tpu_custom_call.1} parent=11 // pred_check
        %p398 = pneg %p280
      $region54: #{tpu_custom_call.1} parent=11 // pred_check_branch
        %400 = sbr.rel (%p398) target = $region56
      $region55: #{tpu_custom_call.1} parent=11 // pred_region
        _
      $region56: #{tpu_custom_call.1} parent=11 // pred_fallthru
        _
      // Predicated region
      $region57: #{tpu_custom_call.1} parent=11 // pred_check
        %p401 = pneg %p301
      $region58: #{tpu_custom_call.1} parent=11 // pred_check_branch
        %403 = sbr.rel (%p401) target = $region60
      $region59: #{tpu_custom_call.1} parent=11 // pred_region
        _
      $region60: #{tpu_custom_call.1} parent=11 // pred_fallthru
        _
    $region12: #{tpu_custom_call.1} parent=5 // pred_fallthru
      _
    %p404 = scmp.lt.s32.totalorder %s23, 2
    // Predicated region
    $region61: #{tpu_custom_call.1} parent=5 // pred_check
      %p405 = pneg %p404
    $region62: #{tpu_custom_call.1} parent=5 // pred_check_branch
      %407 = sbr.rel (%p405) target = $region64
    $region63: #{tpu_custom_call.1} parent=5 // pred_region
      // Predicated region
      $region65: #{tpu_custom_call.1} parent=63 // pred_check
        %p408 = pneg %p43
      $region66: #{tpu_custom_call.1} parent=63 // pred_check_branch
        %410 = sbr.rel (%p408) target = $region68
      $region67: #{tpu_custom_call.1} parent=63 // pred_region
        %p411 = scmp.lt.s32.totalorder %s23, 1
        %s412 = scalar_select %p411, %s23, 1
        %s413 = smul.addr %s412, 32
        %s414 = smul.addr %s413, 8
        %s415 = scalar_lea.vmem %s0, %s414
      $region68: #{tpu_custom_call.1} parent=63 // pred_fallthru
        _
    $region64: #{tpu_custom_call.1} parent=5 // pred_fallthru
      _
    %p416 = scmp.le.s32.totalorder 1, %s23
    %p417 = scmp.lt.s32.totalorder %s23, 3
    %p418 = pnand %p416, %p417
    %p419 = pneg %p418
    // Predicated region
    $region69: #{tpu_custom_call.1} parent=5 // pred_check
      _
    $region70: #{tpu_custom_call.1} parent=5 // pred_check_branch
      %421 = sbr.rel (%p418) target = $region72
    $region71: #{tpu_custom_call.1} parent=5 // pred_region
      %s422 = ssub.s32 %s23, 1
      %p423 = scmp.lt.s32.totalorder %s28, 1
      %s424 = scalar_select %p423, %s28, 1
      %s425 = smul.addr %s424, 32
      %s426 = smul.addr %s425, 8
      %s427 = scalar_lea.vmem %s0, %s426
      %p428 = pneg %p49
      %p429 = pneg %p46
      %p430 = pneg %p70
      %p431 = pneg %p67
      %p432 = pneg %p91
      %p433 = pneg %p88
      %p434 = pneg %p112
      %p435 = pneg %p109
      %p436 = pneg %p133
      %p437 = pneg %p130
      %p438 = pneg %p154
      %p439 = pneg %p151
      %p440 = pneg %p175
      %p441 = pneg %p172
      %p442 = pneg %p196
      %p443 = pneg %p193
      %p444 = pneg %p217
      %p445 = pneg %p214
      %p446 = pneg %p238
      %p447 = pneg %p235
      %p448 = pneg %p259
      %p449 = pneg %p256
      %p450 = pneg %p280
      %p451 = pneg %p277
      %p452 = pneg %p301
      %p453 = pneg %p298
      %p454 = pneg %p327
      %p455 = pneg %p324
      %p456 = scmp.lt.s32.totalorder %s28, 1
      %s457 = scalar_select %p456, %s28, 1
      %s458 = smul.addr %s457, 32
      %s459 = smul.addr %s458, 8
      %s460 = scalar_lea.vmem %s13, %s459
      %p461 = pneg %p353
      %p462 = pneg %p350
      %p463 = scmp.lt.s32.totalorder %s28, 1
      %s464 = scalar_select %p463, %s28, 1
      %s465 = scalar_lea.vmem %s14, %s464
      %p466 = scmp.lt.s32.totalorder %s28, 1
      %s467 = scalar_select %p466, %s28, 1
      %s468 = smul.addr %s467, 32
      %s469 = smul.addr %s468, 8
      %s470 = scalar_lea.vmem %s0, %s469
      %p471 = scmp.lt.s32.totalorder %s28, 1
      %s472 = scalar_select %p471, %s28, 1
      %s473 = smul.addr %s472, 32
      %s474 = smul.addr %s473, 8
      %s475 = scalar_lea.vmem %s13, %s474
      %p476 = scmp.lt.s32.totalorder %s28, 1
      %s477 = scalar_select %p476, %s28, 1
      %s478 = scalar_lea.vmem %s14, %s477
      %v480 = vld [vmem:[%s470] sm:$0xff]
      %v481 = vld [vmem:[%s470 + $0x8] sm:$0xff]
      %v482 = vld [vmem:[%s470 + $0x10] sm:$0xff]
      %v483 = vld [vmem:[%s470 + $0x18] sm:$0xff]
      %v484 = vld [vmem:[%s470 + $0x20] sm:$0xff]
      %v485 = vld [vmem:[%s470 + $0x28] sm:$0xff]
      %v486 = vld [vmem:[%s470 + $0x30] sm:$0xff]
      %v487 = vld [vmem:[%s470 + $0x38] sm:$0xff]
      %v488 = vld [vmem:[%s470 + $0x40] sm:$0xff]
      %v489 = vld [vmem:[%s470 + $0x48] sm:$0xff]
      %v490 = vld [vmem:[%s470 + $0x50] sm:$0xff]
      %v491 = vld [vmem:[%s470 + $0x58] sm:$0xff]
      %v492 = vld [vmem:[%s470 + $0x60] sm:$0xff]
      %v493 = vld [vmem:[%s470 + $0x68] sm:$0xff]
      %v494 = vld [vmem:[%s470 + $0x70] sm:$0xff]
      %v495 = vld [vmem:[%s470 + $0x78] sm:$0xff]
      %v496 = vld [vmem:[%s470 + $0x80] sm:$0xff]
      %v497 = vld [vmem:[%s470 + $0x88] sm:$0xff]
      %v498 = vld [vmem:[%s470 + $0x90] sm:$0xff]
      %v499 = vld [vmem:[%s470 + $0x98] sm:$0xff]
      %v500 = vld [vmem:[%s470 + $0xa0] sm:$0xff]
      %v501 = vld [vmem:[%s470 + $0xa8] sm:$0xff]
      %v502 = vld [vmem:[%s470 + $0xb0] sm:$0xff]
      %v503 = vld [vmem:[%s470 + $0xb8] sm:$0xff]
      %v504 = vld [vmem:[%s470 + $0xc0] sm:$0xff]
      %v505 = vld [vmem:[%s470 + $0xc8] sm:$0xff]
      %v506 = vld [vmem:[%s470 + $0xd0] sm:$0xff]
      %v507 = vld [vmem:[%s470 + $0xd8] sm:$0xff]
      %v508 = vld [vmem:[%s470 + $0xe0] sm:$0xff]
      %v509 = vld [vmem:[%s470 + $0xe8] sm:$0xff]
      %v510 = vld [vmem:[%s470 + $0xf0] sm:$0xff]
      %v511 = vld [vmem:[%s470 + $0xf8] sm:$0xff]
      %v512 = vpack.c.bf16 %v481, %v480
      %v513 = vpack.c.bf16 %v483, %v482
      %v514 = vpack.c.bf16 %v485, %v484
      %v515 = vpack.c.bf16 %v487, %v486
      %v516 = vpack.c.bf16 %v489, %v488
      %v517 = vpack.c.bf16 %v491, %v490
      %v518 = vpack.c.bf16 %v493, %v492
      %v519 = vpack.c.bf16 %v495, %v494
      %v520 = vpack.c.bf16 %v497, %v496
      %v521 = vpack.c.bf16 %v499, %v498
      %v522 = vpack.c.bf16 %v501, %v500
      %v523 = vpack.c.bf16 %v503, %v502
      %v524 = vpack.c.bf16 %v505, %v504
      %v525 = vpack.c.bf16 %v507, %v506
      %v526 = vpack.c.bf16 %v509, %v508
      %v527 = vpack.c.bf16 %v511, %v510
      %v529 = vshrl.u32 %v512, 16
      %v531 = vrot.slane %v529, 7
      %v532 = vshll.u32 %v512, 16
      %v534 = vor.u32 %v531, %v532
      %v536 = vshrl.u32 %v513, 16
      %v538 = vrot.slane %v536, 7
      %v539 = vshll.u32 %v513, 16
      %v541 = vor.u32 %v538, %v539
      %v543 = vshrl.u32 %v514, 16
      %v545 = vrot.slane %v543, 7
      %v546 = vshll.u32 %v514, 16
      %v548 = vor.u32 %v545, %v546
      %v550 = vshrl.u32 %v515, 16
      %v552 = vrot.slane %v550, 7
      %v553 = vshll.u32 %v515, 16
      %v555 = vor.u32 %v552, %v553
      %v557 = vshrl.u32 %v516, 16
      %v559 = vrot.slane %v557, 7
      %v560 = vshll.u32 %v516, 16
      %v562 = vor.u32 %v559, %v560
      %v564 = vshrl.u32 %v517, 16
      %v566 = vrot.slane %v564, 7
      %v567 = vshll.u32 %v517, 16
      %v569 = vor.u32 %v566, %v567
      %v571 = vshrl.u32 %v518, 16
      %v573 = vrot.slane %v571, 7
      %v574 = vshll.u32 %v518, 16
      %v576 = vor.u32 %v573, %v574
      %v578 = vshrl.u32 %v519, 16
      %v580 = vrot.slane %v578, 7
      %v581 = vshll.u32 %v519, 16
      %v583 = vor.u32 %v580, %v581
      %v585 = vshrl.u32 %v520, 16
      %v587 = vrot.slane %v585, 7
      %v588 = vshll.u32 %v520, 16
      %v590 = vor.u32 %v587, %v588
      %v592 = vshrl.u32 %v521, 16
      %v594 = vrot.slane %v592, 7
      %v595 = vshll.u32 %v521, 16
      %v597 = vor.u32 %v594, %v595
      %v599 = vshrl.u32 %v522, 16
      %v601 = vrot.slane %v599, 7
      %v602 = vshll.u32 %v522, 16
      %v604 = vor.u32 %v601, %v602
      %v606 = vshrl.u32 %v523, 16
      %v608 = vrot.slane %v606, 7
      %v609 = vshll.u32 %v523, 16
      %v611 = vor.u32 %v608, %v609
      %v613 = vshrl.u32 %v524, 16
      %v615 = vrot.slane %v613, 7
      %v616 = vshll.u32 %v524, 16
      %v618 = vor.u32 %v615, %v616
      %v620 = vshrl.u32 %v525, 16
      %v622 = vrot.slane %v620, 7
      %v623 = vshll.u32 %v525, 16
      %v625 = vor.u32 %v622, %v623
      %v627 = vshrl.u32 %v526, 16
      %v629 = vrot.slane %v627, 7
      %v630 = vshll.u32 %v526, 16
      %v632 = vor.u32 %v629, %v630
      %v634 = vshrl.u32 %v527, 16
      %v636 = vrot.slane %v634, 7
      %v637 = vshll.u32 %v527, 16
      %v639 = vor.u32 %v636, %v637
      %vm672 = vcmask 1040384
      %vm673 = vsmask.f32 256
      %vm674 = vmand %vm672, %vm673
      %v675 = vsel %vm674, 0, %v534
      %v676 = vsel %vm674, 0, %v541
      %v677 = vsel %vm674, 0, %v548
      %v678 = vsel %vm674, 0, %v555
      %v679 = vsel %vm674, 0, %v562
      %v680 = vsel %vm674, 0, %v569
      %v681 = vsel %vm674, 0, %v576
      %v682 = vsel %vm674, 0, %v583
      %v683 = vsel %vm674, 0, %v590
      %v684 = vsel %vm674, 0, %v597
      %v685 = vsel %vm674, 0, %v604
      %v686 = vsel %vm674, 0, %v611
      %v687 = vsel %vm674, 0, %v618
      %v688 = vsel %vm674, 0, %v625
      %v689 = vsel %vm674, 0, %v632
      %v690 = vsel %vm674, 0, %v639
      %v691 = vsel %vm674, %v531, 0
      %v692 = vsel %vm674, %v538, 0
      %v693 = vsel %vm674, %v545, 0
      %v694 = vsel %vm674, %v552, 0
      %v695 = vsel %vm674, %v559, 0
      %v696 = vsel %vm674, %v566, 0
      %v697 = vsel %vm674, %v573, 0
      %v698 = vsel %vm674, %v580, 0
      %v699 = vsel %vm674, %v587, 0
      %v700 = vsel %vm674, %v594, 0
      %v701 = vsel %vm674, %v601, 0
      %v702 = vsel %vm674, %v608, 0
      %v703 = vsel %vm674, %v615, 0
      %v704 = vsel %vm674, %v622, 0
      %v705 = vsel %vm674, %v629, 0
      %v706 = vsel %vm674, %v636, 0
      %v739 = vunpack.c.l.b16 %v675
      %v740 = vunpack.c.h.b16 %v675
      %v741 = vunpack.c.l.b16 %v691
      %v742 = vunpack.c.l.b16 %v676
      %v743 = vunpack.c.h.b16 %v676
      %v744 = vunpack.c.l.b16 %v692
      %v745 = vunpack.c.l.b16 %v677
      %v746 = vunpack.c.h.b16 %v677
      %v747 = vunpack.c.l.b16 %v693
      %v748 = vunpack.c.l.b16 %v678
      %v749 = vunpack.c.h.b16 %v678
      %v750 = vunpack.c.l.b16 %v694
      %v751 = vunpack.c.l.b16 %v679
      %v752 = vunpack.c.h.b16 %v679
      %v753 = vunpack.c.l.b16 %v695
      %v754 = vunpack.c.l.b16 %v680
      %v755 = vunpack.c.h.b16 %v680
      %v756 = vunpack.c.l.b16 %v696
      %v757 = vunpack.c.l.b16 %v681
      %v758 = vunpack.c.h.b16 %v681
      %v759 = vunpack.c.l.b16 %v697
      %v760 = vunpack.c.l.b16 %v682
      %v761 = vunpack.c.h.b16 %v682
      %v762 = vunpack.c.l.b16 %v698
      %v763 = vunpack.c.l.b16 %v683
      %v764 = vunpack.c.h.b16 %v683
      %v765 = vunpack.c.l.b16 %v699
      %v766 = vunpack.c.l.b16 %v684
      %v767 = vunpack.c.h.b16 %v684
      %v768 = vunpack.c.l.b16 %v700
      %v769 = vunpack.c.l.b16 %v685
      %v770 = vunpack.c.h.b16 %v685
      %v771 = vunpack.c.l.b16 %v701
      %v772 = vunpack.c.l.b16 %v686
      %v773 = vunpack.c.h.b16 %v686
      %v774 = vunpack.c.l.b16 %v702
      %v775 = vunpack.c.l.b16 %v687
      %v776 = vunpack.c.h.b16 %v687
      %v777 = vunpack.c.l.b16 %v703
      %v778 = vunpack.c.l.b16 %v688
      %v779 = vunpack.c.h.b16 %v688
      %v780 = vunpack.c.l.b16 %v704
      %v781 = vunpack.c.l.b16 %v689
      %v782 = vunpack.c.h.b16 %v689
      %v783 = vunpack.c.l.b16 %v705
      %v784 = vunpack.c.l.b16 %v690
      %v785 = vunpack.c.h.b16 %v690
      %v786 = vunpack.c.l.b16 %v706
      %v787 = vpack.c.b16 %v739, %v739
      %v788 = vpack.c.b16 %v740, %v740
      %v789 = vpack.c.b16 %v741, %v741
      %v790 = vpack.c.b16 %v742, %v742
      %v791 = vpack.c.b16 %v743, %v743
      %v792 = vpack.c.b16 %v744, %v744
      %v793 = vpack.c.b16 %v745, %v745
      %v794 = vpack.c.b16 %v746, %v746
      %v795 = vpack.c.b16 %v747, %v747
      %v796 = vpack.c.b16 %v748, %v748
      %v797 = vpack.c.b16 %v749, %v749
      %v798 = vpack.c.b16 %v750, %v750
      %v799 = vpack.c.b16 %v751, %v751
      %v800 = vpack.c.b16 %v752, %v752
      %v801 = vpack.c.b16 %v753, %v753
      %v802 = vpack.c.b16 %v754, %v754
      %v803 = vpack.c.b16 %v755, %v755
      %v804 = vpack.c.b16 %v756, %v756
      %v805 = vpack.c.b16 %v757, %v757
      %v806 = vpack.c.b16 %v758, %v758
      %v807 = vpack.c.b16 %v759, %v759
      %v808 = vpack.c.b16 %v760, %v760
      %v809 = vpack.c.b16 %v761, %v761
      %v810 = vpack.c.b16 %v762, %v762
      %v811 = vpack.c.b16 %v763, %v763
      %v812 = vpack.c.b16 %v764, %v764
      %v813 = vpack.c.b16 %v765, %v765
      %v814 = vpack.c.b16 %v766, %v766
      %v815 = vpack.c.b16 %v767, %v767
      %v816 = vpack.c.b16 %v768, %v768
      %v817 = vpack.c.b16 %v769, %v769
      %v818 = vpack.c.b16 %v770, %v770
      %v819 = vpack.c.b16 %v771, %v771
      %v820 = vpack.c.b16 %v772, %v772
      %v821 = vpack.c.b16 %v773, %v773
      %v822 = vpack.c.b16 %v774, %v774
      %v823 = vpack.c.b16 %v775, %v775
      %v824 = vpack.c.b16 %v776, %v776
      %v825 = vpack.c.b16 %v777, %v777
      %v826 = vpack.c.b16 %v778, %v778
      %v827 = vpack.c.b16 %v779, %v779
      %v828 = vpack.c.b16 %v780, %v780
      %v829 = vpack.c.b16 %v781, %v781
      %v830 = vpack.c.b16 %v782, %v782
      %v831 = vpack.c.b16 %v783, %v783
      %v832 = vpack.c.b16 %v784, %v784
      %v833 = vpack.c.b16 %v785, %v785
      %v834 = vpack.c.b16 %v786, %v786
      %s883 = scalar_lea.vmem [#allocation2], 12
      %vm884 = vcmask 519168
      %885 = vst.msk [vmem:[%s883] sm:$0xf] %vm884, %v787
      %886 = vst.msk [vmem:[%s883 + $0x4] sm:$0xf] %vm884, %v788
      %vm887 = vcmask 516096
      %888 = vst.msk [vmem:[%s883 + $0x8] sm:$0x1] %vm887, %v789
      %889 = vst.msk [vmem:[%s883 + $0xc] sm:$0xf] %vm884, %v790
      %890 = vst.msk [vmem:[%s883 + $0x10] sm:$0xf] %vm884, %v791
      %891 = vst.msk [vmem:[%s883 + $0x14] sm:$0x1] %vm887, %v792
      %892 = vst.msk [vmem:[%s883 + $0x18] sm:$0xf] %vm884, %v793
      %893 = vst.msk [vmem:[%s883 + $0x1c] sm:$0xf] %vm884, %v794
      %894 = vst.msk [vmem:[%s883 + $0x20] sm:$0x1] %vm887, %v795
      %895 = vst.msk [vmem:[%s883 + $0x24] sm:$0xf] %vm884, %v796
      %896 = vst.msk [vmem:[%s883 + $0x28] sm:$0xf] %vm884, %v797
      %897 = vst.msk [vmem:[%s883 + $0x2c] sm:$0x1] %vm887, %v798
      %898 = vst.msk [vmem:[%s883 + $0x30] sm:$0xf] %vm884, %v799
      %899 = vst.msk [vmem:[%s883 + $0x34] sm:$0xf] %vm884, %v800
      %900 = vst.msk [vmem:[%s883 + $0x38] sm:$0x1] %vm887, %v801
      %901 = vst.msk [vmem:[%s883 + $0x3c] sm:$0xf] %vm884, %v802
      %902 = vst.msk [vmem:[%s883 + $0x40] sm:$0xf] %vm884, %v803
      %903 = vst.msk [vmem:[%s883 + $0x44] sm:$0x1] %vm887, %v804
      %904 = vst.msk [vmem:[%s883 + $0x48] sm:$0xf] %vm884, %v805
      %905 = vst.msk [vmem:[%s883 + $0x4c] sm:$0xf] %vm884, %v806
      %906 = vst.msk [vmem:[%s883 + $0x50] sm:$0x1] %vm887, %v807
      %907 = vst.msk [vmem:[%s883 + $0x54] sm:$0xf] %vm884, %v808
      %908 = vst.msk [vmem:[%s883 + $0x58] sm:$0xf] %vm884, %v809
      %909 = vst.msk [vmem:[%s883 + $0x5c] sm:$0x1] %vm887, %v810
      %910 = vst.msk [vmem:[%s883 + $0x60] sm:$0xf] %vm884, %v811
      %911 = vst.msk [vmem:[%s883 + $0x64] sm:$0xf] %vm884, %v812
      %912 = vst.msk [vmem:[%s883 + $0x68] sm:$0x1] %vm887, %v813
      %913 = vst.msk [vmem:[%s883 + $0x6c] sm:$0xf] %vm884, %v814
      %914 = vst.msk [vmem:[%s883 + $0x70] sm:$0xf] %vm884, %v815
      %915 = vst.msk [vmem:[%s883 + $0x74] sm:$0x1] %vm887, %v816
      %916 = vst.msk [vmem:[%s883 + $0x78] sm:$0xf] %vm884, %v817
      %917 = vst.msk [vmem:[%s883 + $0x7c] sm:$0xf] %vm884, %v818
      %918 = vst.msk [vmem:[%s883 + $0x80] sm:$0x1] %vm887, %v819
      %919 = vst.msk [vmem:[%s883 + $0x84] sm:$0xf] %vm884, %v820
      %920 = vst.msk [vmem:[%s883 + $0x88] sm:$0xf] %vm884, %v821
      %921 = vst.msk [vmem:[%s883 + $0x8c] sm:$0x1] %vm887, %v822
      %922 = vst.msk [vmem:[%s883 + $0x90] sm:$0xf] %vm884, %v823
      %923 = vst.msk [vmem:[%s883 + $0x94] sm:$0xf] %vm884, %v824
      %924 = vst.msk [vmem:[%s883 + $0x98] sm:$0x1] %vm887, %v825
      %925 = vst.msk [vmem:[%s883 + $0x9c] sm:$0xf] %vm884, %v826
      %926 = vst.msk [vmem:[%s883 + $0xa0] sm:$0xf] %vm884, %v827
      %927 = vst.msk [vmem:[%s883 + $0xa4] sm:$0x1] %vm887, %v828
      %928 = vst.msk [vmem:[%s883 + $0xa8] sm:$0xf] %vm884, %v829
      %929 = vst.msk [vmem:[%s883 + $0xac] sm:$0xf] %vm884, %v830
      %930 = vst.msk [vmem:[%s883 + $0xb0] sm:$0x1] %vm887, %v831
      %931 = vst.msk [vmem:[%s883 + $0xb4] sm:$0xf] %vm884, %v832
      %932 = vst.msk [vmem:[%s883 + $0xb8] sm:$0xf] %vm884, %v833
      %933 = vst.msk [vmem:[%s883 + $0xbc] sm:$0x1] %vm887, %v834
      %934 = vst.msk [vmem:[#allocation2] sm:$0xf] %vm884, 0
      %935 = vst.msk [vmem:[#allocation2 + $0x4] sm:$0xf] %vm884, 0
      %936 = vst.msk [vmem:[#allocation2 + $0x8] sm:$0x1] %vm887, 0
      %s937 = scalar_lea.vmem [#allocation2], 204
      %938 = vst.msk [vmem:[%s937] sm:$0xf] %vm884, 0
      %939 = vst.msk [vmem:[%s937 + $0x4] sm:$0xf] %vm884, 0
      %940 = vst.msk [vmem:[%s937 + $0x8] sm:$0x1] %vm887, 0
      %v941 = vld [vmem:[#allocation2] sm:$0xf]
      %v942 = vld [vmem:[#allocation2 + $0x4] sm:$0xf]
      %v943 = vld [vmem:[#allocation2 + $0xc] sm:$0xf]
      %v944 = vld [vmem:[#allocation2 + $0x10] sm:$0xf]
      %v945 = vld [vmem:[#allocation2 + $0x18] sm:$0xf]
      %v946 = vld [vmem:[#allocation2 + $0x1c] sm:$0xf]
      %v947 = vld [vmem:[#allocation2 + $0x24] sm:$0xf]
      %v948 = vld [vmem:[#allocation2 + $0x28] sm:$0xf]
      %v949 = vld [vmem:[#allocation2 + $0x30] sm:$0xf]
      %v950 = vld [vmem:[#allocation2 + $0x34] sm:$0xf]
      %v951 = vld [vmem:[#allocation2 + $0x3c] sm:$0xf]
      %v952 = vld [vmem:[#allocation2 + $0x40] sm:$0xf]
      %v953 = vld [vmem:[#allocation2 + $0x48] sm:$0xf]
      %v954 = vld [vmem:[#allocation2 + $0x4c] sm:$0xf]
      %v955 = vld [vmem:[#allocation2 + $0x54] sm:$0xf]
      %v956 = vld [vmem:[#allocation2 + $0x58] sm:$0xf]
      %v957 = vld [vmem:[#allocation2 + $0x60] sm:$0xf]
      %v958 = vld [vmem:[#allocation2 + $0x64] sm:$0xf]
      %v959 = vld [vmem:[#allocation2 + $0x6c] sm:$0xf]
      %v960 = vld [vmem:[#allocation2 + $0x70] sm:$0xf]
      %v961 = vld [vmem:[#allocation2 + $0x78] sm:$0xf]
      %v962 = vld [vmem:[#allocation2 + $0x7c] sm:$0xf]
      %v963 = vld [vmem:[#allocation2 + $0x84] sm:$0xf]
      %v964 = vld [vmem:[#allocation2 + $0x88] sm:$0xf]
      %v965 = vld [vmem:[#allocation2 + $0x90] sm:$0xf]
      %v966 = vld [vmem:[#allocation2 + $0x94] sm:$0xf]
      %v967 = vld [vmem:[#allocation2 + $0x9c] sm:$0xf]
      %v968 = vld [vmem:[#allocation2 + $0xa0] sm:$0xf]
      %v969 = vld [vmem:[#allocation2 + $0xa8] sm:$0xf]
      %v970 = vld [vmem:[#allocation2 + $0xac] sm:$0xf]
      %v971 = vld [vmem:[#allocation2 + $0xb4] sm:$0xf]
      %v972 = vld [vmem:[#allocation2 + $0xb8] sm:$0xf]
      %v973 = vld [vmem:[%s1] sm:$0xf]
      %v974 = vld [vmem:[%s1 + $0x4] sm:$0xf]
      %v975 = vld [vmem:[%s1 + $0x8] sm:$0xf]
      %v976 = vld [vmem:[%s1 + $0xc] sm:$0xf]
      %v977 = vld [vmem:[%s1 + $0x10] sm:$0xf]
      %v978 = vld [vmem:[%s1 + $0x14] sm:$0xf]
      %v979 = vld [vmem:[%s1 + $0x18] sm:$0xf]
      %v980 = vld [vmem:[%s1 + $0x1c] sm:$0xf]
      %v981 = vld [vmem:[#allocation2 + $0x8] sm:$0x1]
      %v982 = vld [vmem:[#allocation2 + $0x14] sm:$0x1]
      %v983 = vld [vmem:[#allocation2 + $0x20] sm:$0x1]
      %v984 = vld [vmem:[#allocation2 + $0x2c] sm:$0x1]
      %v985 = vld [vmem:[#allocation2 + $0x38] sm:$0x1]
      %v986 = vld [vmem:[#allocation2 + $0x44] sm:$0x1]
      %v987 = vld [vmem:[#allocation2 + $0x50] sm:$0x1]
      %v988 = vld [vmem:[#allocation2 + $0x5c] sm:$0x1]
      %v989 = vld [vmem:[#allocation2 + $0x68] sm:$0x1]
      %v990 = vld [vmem:[#allocation2 + $0x74] sm:$0x1]
      %v991 = vld [vmem:[#allocation2 + $0x80] sm:$0x1]
      %v992 = vld [vmem:[#allocation2 + $0x8c] sm:$0x1]
      %v993 = vld [vmem:[#allocation2 + $0x98] sm:$0x1]
      %v994 = vld [vmem:[#allocation2 + $0xa4] sm:$0x1]
      %v995 = vld [vmem:[#allocation2 + $0xb0] sm:$0x1]
      %v996 = vld [vmem:[#allocation2 + $0xbc] sm:$0x1]
      %vm997 = vsmask.f32 3328
      %vm998 = vsmask.f32 7440
      %vm999 = vmor %vm997, %vm998
      %v1001 = vshrl.u32 %v941, 16
      %v1003 = vrot.slane %v1001, 4
      %v1004 = vshll.u32 %v941, 16
      %v1006 = vrot.slane %v1004, 5
      %v1007 = vor.u32 %v1003, %v1006
      %v1008 = vrot.slane %v1007, 4
      %v1010 = vshll.u32 %v942, 16
      %v1012 = vrot.slane %v1010, 5
      %v1013 = vsel %vm999, %v1008, %v1012
      %v1014 = vshrl.u32 %v942, 16
      %v1016 = vrot.slane %v1014, 4
      %v1017 = vor.u32 %v1016, %v1012
      %v1018 = vrot.slane %v1017, 4
      %v1020 = vshll.u32 %v981, 16
      %v1022 = vrot.slane %v1020, 5
      %v1023 = vsel %vm999, %v1018, %v1022
      %v1025 = vshrl.u32 %v943, 16
      %v1027 = vrot.slane %v1025, 4
      %v1028 = vshll.u32 %v943, 16
      %v1030 = vrot.slane %v1028, 5
      %v1031 = vor.u32 %v1027, %v1030
      %v1032 = vrot.slane %v1031, 4
      %v1034 = vshll.u32 %v944, 16
      %v1036 = vrot.slane %v1034, 5
      %v1037 = vsel %vm999, %v1032, %v1036
      %v1038 = vshrl.u32 %v944, 16
      %v1040 = vrot.slane %v1038, 4
      %v1041 = vor.u32 %v1040, %v1036
      %v1042 = vrot.slane %v1041, 4
      %v1044 = vshll.u32 %v982, 16
      %v1046 = vrot.slane %v1044, 5
      %v1047 = vsel %vm999, %v1042, %v1046
      %v1049 = vshrl.u32 %v945, 16
      %v1051 = vrot.slane %v1049, 4
      %v1052 = vshll.u32 %v945, 16
      %v1054 = vrot.slane %v1052, 5
      %v1055 = vor.u32 %v1051, %v1054
      %v1056 = vrot.slane %v1055, 4
      %v1058 = vshll.u32 %v946, 16
      %v1060 = vrot.slane %v1058, 5
      %v1061 = vsel %vm999, %v1056, %v1060
      %v1062 = vshrl.u32 %v946, 16
      %v1064 = vrot.slane %v1062, 4
      %v1065 = vor.u32 %v1064, %v1060
      %v1066 = vrot.slane %v1065, 4
      %v1068 = vshll.u32 %v983, 16
      %v1070 = vrot.slane %v1068, 5
      %v1071 = vsel %vm999, %v1066, %v1070
      %v1073 = vshrl.u32 %v947, 16
      %v1075 = vrot.slane %v1073, 4
      %v1076 = vshll.u32 %v947, 16
      %v1078 = vrot.slane %v1076, 5
      %v1079 = vor.u32 %v1075, %v1078
      %v1080 = vrot.slane %v1079, 4
      %v1082 = vshll.u32 %v948, 16
      %v1084 = vrot.slane %v1082, 5
      %v1085 = vsel %vm999, %v1080, %v1084
      %v1086 = vshrl.u32 %v948, 16
      %v1088 = vrot.slane %v1086, 4
      %v1089 = vor.u32 %v1088, %v1084
      %v1090 = vrot.slane %v1089, 4
      %v1092 = vshll.u32 %v984, 16
      %v1094 = vrot.slane %v1092, 5
      %v1095 = vsel %vm999, %v1090, %v1094
      %v1097 = vshrl.u32 %v949, 16
      %v1099 = vrot.slane %v1097, 4
      %v1100 = vshll.u32 %v949, 16
      %v1102 = vrot.slane %v1100, 5
      %v1103 = vor.u32 %v1099, %v1102
      %v1104 = vrot.slane %v1103, 4
      %v1106 = vshll.u32 %v950, 16
      %v1108 = vrot.slane %v1106, 5
      %v1109 = vsel %vm999, %v1104, %v1108
      %v1110 = vshrl.u32 %v950, 16
      %v1112 = vrot.slane %v1110, 4
      %v1113 = vor.u32 %v1112, %v1108
      %v1114 = vrot.slane %v1113, 4
      %v1116 = vshll.u32 %v985, 16
      %v1118 = vrot.slane %v1116, 5
      %v1119 = vsel %vm999, %v1114, %v1118
      %v1121 = vshrl.u32 %v951, 16
      %v1123 = vrot.slane %v1121, 4
      %v1124 = vshll.u32 %v951, 16
      %v1126 = vrot.slane %v1124, 5
      %v1127 = vor.u32 %v1123, %v1126
      %v1128 = vrot.slane %v1127, 4
      %v1130 = vshll.u32 %v952, 16
      %v1132 = vrot.slane %v1130, 5
      %v1133 = vsel %vm999, %v1128, %v1132
      %v1134 = vshrl.u32 %v952, 16
      %v1136 = vrot.slane %v1134, 4
      %v1137 = vor.u32 %v1136, %v1132
      %v1138 = vrot.slane %v1137, 4
      %v1140 = vshll.u32 %v986, 16
      %v1142 = vrot.slane %v1140, 5
      %v1143 = vsel %vm999, %v1138, %v1142
      %v1145 = vshrl.u32 %v953, 16
      %v1147 = vrot.slane %v1145, 4
      %v1148 = vshll.u32 %v953, 16
      %v1150 = vrot.slane %v1148, 5
      %v1151 = vor.u32 %v1147, %v1150
      %v1152 = vrot.slane %v1151, 4
      %v1154 = vshll.u32 %v954, 16
      %v1156 = vrot.slane %v1154, 5
      %v1157 = vsel %vm999, %v1152, %v1156
      %v1158 = vshrl.u32 %v954, 16
      %v1160 = vrot.slane %v1158, 4
      %v1161 = vor.u32 %v1160, %v1156
      %v1162 = vrot.slane %v1161, 4
      %v1164 = vshll.u32 %v987, 16
      %v1166 = vrot.slane %v1164, 5
      %v1167 = vsel %vm999, %v1162, %v1166
      %v1169 = vshrl.u32 %v955, 16
      %v1171 = vrot.slane %v1169, 4
      %v1172 = vshll.u32 %v955, 16
      %v1174 = vrot.slane %v1172, 5
      %v1175 = vor.u32 %v1171, %v1174
      %v1176 = vrot.slane %v1175, 4
      %v1178 = vshll.u32 %v956, 16
      %v1180 = vrot.slane %v1178, 5
      %v1181 = vsel %vm999, %v1176, %v1180
      %v1182 = vshrl.u32 %v956, 16
      %v1184 = vrot.slane %v1182, 4
      %v1185 = vor.u32 %v1184, %v1180
      %v1186 = vrot.slane %v1185, 4
      %v1188 = vshll.u32 %v988, 16
      %v1190 = vrot.slane %v1188, 5
      %v1191 = vsel %vm999, %v1186, %v1190
      %v1193 = vshrl.u32 %v957, 16
      %v1195 = vrot.slane %v1193, 4
      %v1196 = vshll.u32 %v957, 16
      %v1198 = vrot.slane %v1196, 5
      %v1199 = vor.u32 %v1195, %v1198
      %v1200 = vrot.slane %v1199, 4
      %v1202 = vshll.u32 %v958, 16
      %v1204 = vrot.slane %v1202, 5
      %v1205 = vsel %vm999, %v1200, %v1204
      %v1206 = vshrl.u32 %v958, 16
      %v1208 = vrot.slane %v1206, 4
      %v1209 = vor.u32 %v1208, %v1204
      %v1210 = vrot.slane %v1209, 4
      %v1212 = vshll.u32 %v989, 16
      %v1214 = vrot.slane %v1212, 5
      %v1215 = vsel %vm999, %v1210, %v1214
      %v1217 = vshrl.u32 %v959, 16
      %v1219 = vrot.slane %v1217, 4
      %v1220 = vshll.u32 %v959, 16
      %v1222 = vrot.slane %v1220, 5
      %v1223 = vor.u32 %v1219, %v1222
      %v1224 = vrot.slane %v1223, 4
      %v1226 = vshll.u32 %v960, 16
      %v1228 = vrot.slane %v1226, 5
      %v1229 = vsel %vm999, %v1224, %v1228
      %v1230 = vshrl.u32 %v960, 16
      %v1232 = vrot.slane %v1230, 4
      %v1233 = vor.u32 %v1232, %v1228
      %v1234 = vrot.slane %v1233, 4
      %v1236 = vshll.u32 %v990, 16
      %v1238 = vrot.slane %v1236, 5
      %v1239 = vsel %vm999, %v1234, %v1238
      %v1241 = vshrl.u32 %v961, 16
      %v1243 = vrot.slane %v1241, 4
      %v1244 = vshll.u32 %v961, 16
      %v1246 = vrot.slane %v1244, 5
      %v1247 = vor.u32 %v1243, %v1246
      %v1248 = vrot.slane %v1247, 4
      %v1250 = vshll.u32 %v962, 16
      %v1252 = vrot.slane %v1250, 5
      %v1253 = vsel %vm999, %v1248, %v1252
      %v1254 = vshrl.u32 %v962, 16
      %v1256 = vrot.slane %v1254, 4
      %v1257 = vor.u32 %v1256, %v1252
      %v1258 = vrot.slane %v1257, 4
      %v1260 = vshll.u32 %v991, 16
      %v1262 = vrot.slane %v1260, 5
      %v1263 = vsel %vm999, %v1258, %v1262
      %v1265 = vshrl.u32 %v963, 16
      %v1267 = vrot.slane %v1265, 4
      %v1268 = vshll.u32 %v963, 16
      %v1270 = vrot.slane %v1268, 5
      %v1271 = vor.u32 %v1267, %v1270
      %v1272 = vrot.slane %v1271, 4
      %v1274 = vshll.u32 %v964, 16
      %v1276 = vrot.slane %v1274, 5
      %v1277 = vsel %vm999, %v1272, %v1276
      %v1278 = vshrl.u32 %v964, 16
      %v1280 = vrot.slane %v1278, 4
      %v1281 = vor.u32 %v1280, %v1276
      %v1282 = vrot.slane %v1281, 4
      %v1284 = vshll.u32 %v992, 16
      %v1286 = vrot.slane %v1284, 5
      %v1287 = vsel %vm999, %v1282, %v1286
      %v1289 = vshrl.u32 %v965, 16
      %v1291 = vrot.slane %v1289, 4
      %v1292 = vshll.u32 %v965, 16
      %v1294 = vrot.slane %v1292, 5
      %v1295 = vor.u32 %v1291, %v1294
      %v1296 = vrot.slane %v1295, 4
      %v1298 = vshll.u32 %v966, 16
      %v1300 = vrot.slane %v1298, 5
      %v1301 = vsel %vm999, %v1296, %v1300
      %v1302 = vshrl.u32 %v966, 16
      %v1304 = vrot.slane %v1302, 4
      %v1305 = vor.u32 %v1304, %v1300
      %v1306 = vrot.slane %v1305, 4
      %v1308 = vshll.u32 %v993, 16
      %v1310 = vrot.slane %v1308, 5
      %v1311 = vsel %vm999, %v1306, %v1310
      %v1313 = vshrl.u32 %v967, 16
      %v1315 = vrot.slane %v1313, 4
      %v1316 = vshll.u32 %v967, 16
      %v1318 = vrot.slane %v1316, 5
      %v1319 = vor.u32 %v1315, %v1318
      %v1320 = vrot.slane %v1319, 4
      %v1322 = vshll.u32 %v968, 16
      %v1324 = vrot.slane %v1322, 5
      %v1325 = vsel %vm999, %v1320, %v1324
      %v1326 = vshrl.u32 %v968, 16
      %v1328 = vrot.slane %v1326, 4
      %v1329 = vor.u32 %v1328, %v1324
      %v1330 = vrot.slane %v1329, 4
      %v1332 = vshll.u32 %v994, 16
      %v1334 = vrot.slane %v1332, 5
      %v1335 = vsel %vm999, %v1330, %v1334
      %v1337 = vshrl.u32 %v969, 16
      %v1339 = vrot.slane %v1337, 4
      %v1340 = vshll.u32 %v969, 16
      %v1342 = vrot.slane %v1340, 5
      %v1343 = vor.u32 %v1339, %v1342
      %v1344 = vrot.slane %v1343, 4
      %v1346 = vshll.u32 %v970, 16
      %v1348 = vrot.slane %v1346, 5
      %v1349 = vsel %vm999, %v1344, %v1348
      %v1350 = vshrl.u32 %v970, 16
      %v1352 = vrot.slane %v1350, 4
      %v1353 = vor.u32 %v1352, %v1348
      %v1354 = vrot.slane %v1353, 4
      %v1356 = vshll.u32 %v995, 16
      %v1358 = vrot.slane %v1356, 5
      %v1359 = vsel %vm999, %v1354, %v1358
      %v1361 = vshrl.u32 %v971, 16
      %v1363 = vrot.slane %v1361, 4
      %v1364 = vshll.u32 %v971, 16
      %v1366 = vrot.slane %v1364, 5
      %v1367 = vor.u32 %v1363, %v1366
      %v1368 = vrot.slane %v1367, 4
      %v1370 = vshll.u32 %v972, 16
      %v1372 = vrot.slane %v1370, 5
      %v1373 = vsel %vm999, %v1368, %v1372
      %v1374 = vshrl.u32 %v972, 16
      %v1376 = vrot.slane %v1374, 4
      %v1377 = vor.u32 %v1376, %v1372
      %v1378 = vrot.slane %v1377, 4
      %v1380 = vshll.u32 %v996, 16
      %v1382 = vrot.slane %v1380, 5
      %v1383 = vsel %vm999, %v1378, %v1382
      %v1384 = vld [vmem:[%s1 + $0x20] sm:$0xf]
      %v1385 = vld [vmem:[%s1 + $0x24] sm:$0xf]
      %v1386 = vld [vmem:[%s1 + $0x28] sm:$0xf]
      %v1387 = vld [vmem:[%s1 + $0x2c] sm:$0xf]
      %v1388 = vld [vmem:[%s1 + $0x30] sm:$0xf]
      %v1389 = vld [vmem:[%s1 + $0x34] sm:$0xf]
      %v1390 = vld [vmem:[%s1 + $0x38] sm:$0xf]
      %v1391 = vld [vmem:[%s1 + $0x3c] sm:$0xf]
      %v1392 = vunpack.c.l.b16 %v1013
      %v1393 = vunpack.c.l.b16 %v1023
      %v1394 = vunpack.c.l.b16 %v1037
      %v1395 = vunpack.c.l.b16 %v1047
      %v1396 = vunpack.c.l.b16 %v1061
      %v1397 = vunpack.c.l.b16 %v1071
      %v1398 = vunpack.c.l.b16 %v1085
      %v1399 = vunpack.c.l.b16 %v1095
      %v1400 = vunpack.c.l.b16 %v1109
      %v1401 = vunpack.c.l.b16 %v1119
      %v1402 = vunpack.c.l.b16 %v1133
      %v1403 = vunpack.c.l.b16 %v1143
      %v1404 = vunpack.c.l.b16 %v1157
      %v1405 = vunpack.c.l.b16 %v1167
      %v1406 = vunpack.c.l.b16 %v1181
      %v1407 = vunpack.c.l.b16 %v1191
      %v1408 = vunpack.c.l.b16 %v1205
      %v1409 = vunpack.c.l.b16 %v1215
      %v1410 = vunpack.c.l.b16 %v1229
      %v1411 = vunpack.c.l.b16 %v1239
      %v1412 = vunpack.c.l.b16 %v1253
      %v1413 = vunpack.c.l.b16 %v1263
      %v1414 = vunpack.c.l.b16 %v1277
      %v1415 = vunpack.c.l.b16 %v1287
      %v1416 = vunpack.c.l.b16 %v1301
      %v1417 = vunpack.c.l.b16 %v1311
      %v1418 = vunpack.c.l.b16 %v1325
      %v1419 = vunpack.c.l.b16 %v1335
      %v1420 = vunpack.c.l.b16 %v1349
      %v1421 = vunpack.c.l.b16 %v1359
      %v1422 = vunpack.c.l.b16 %v1373
      %v1423 = vunpack.c.l.b16 %v1383
      %v1424 = vpack.c.b16 %v1393, %v1392
      %v1425 = vpack.c.b16 %v1395, %v1394
      %v1426 = vpack.c.b16 %v1397, %v1396
      %v1427 = vpack.c.b16 %v1399, %v1398
      %v1428 = vpack.c.b16 %v1401, %v1400
      %v1429 = vpack.c.b16 %v1403, %v1402
      %v1430 = vpack.c.b16 %v1405, %v1404
      %v1431 = vpack.c.b16 %v1407, %v1406
      %v1432 = vpack.c.b16 %v1409, %v1408
      %v1433 = vpack.c.b16 %v1411, %v1410
      %v1434 = vpack.c.b16 %v1413, %v1412
      %v1435 = vpack.c.b16 %v1415, %v1414
      %v1436 = vpack.c.b16 %v1417, %v1416
      %v1437 = vpack.c.b16 %v1419, %v1418
      %v1438 = vpack.c.b16 %v1421, %v1420
      %v1439 = vpack.c.b16 %v1423, %v1422
      %v1448 = vunpack.c.l.b16 %v1384
      %v1449 = vunpack.c.l.b16 %v1385
      %v1450 = vunpack.c.l.b16 %v1386
      %v1451 = vunpack.c.l.b16 %v1387
      %v1452 = vunpack.c.l.b16 %v1388
      %v1453 = vunpack.c.l.b16 %v1389
      %v1454 = vunpack.c.l.b16 %v1390
      %v1455 = vunpack.c.l.b16 %v1391
      %v1456 = vpack.c.b16 %v1449, %v1448
      %v1457 = vpack.c.b16 %v1451, %v1450
      %v1458 = vpack.c.b16 %v1453, %v1452
      %v1459 = vpack.c.b16 %v1455, %v1454
      %vm1464 = vcmask 523264
      %v1466 = vsel %vm1464, %v1424, 0
      %v1469 = vsel %vm1464, %v1425, 0
      %v1472 = vsel %vm1464, %v1426, 0
      %v1475 = vsel %vm1464, %v1427, 0
      %v1478 = vsel %vm1464, %v1428, 0
      %v1481 = vsel %vm1464, %v1429, 0
      %v1484 = vsel %vm1464, %v1430, 0
      %v1487 = vsel %vm1464, %v1431, 0
      %v1490 = vsel %vm1464, %v1432, 0
      %v1493 = vsel %vm1464, %v1433, 0
      %v1496 = vsel %vm1464, %v1434, 0
      %v1499 = vsel %vm1464, %v1435, 0
      %v1502 = vsel %vm1464, %v1436, 0
      %v1505 = vsel %vm1464, %v1437, 0
      %v1508 = vsel %vm1464, %v1438, 0
      %v1511 = vsel %vm1464, %v1439, 0
      %1513 = vmatprep.subr.bf16.mxu0 0
      %1514 = vmatpush1.bf16.msra.mxu0 %v1456
      %1515 = vmatprep.subr.bf16.mxu0 0
      %1516 = vmatpush1.bf16.msra.mxu0 %v1457
      %1517 = vmatprep.subr.bf16.mxu0 0
      %1518 = vmatpush1.bf16.msra.mxu0 %v1458
      %1519 = vmatprep.subr.bf16.mxu0 0
      %1520 = vmatpush1.bf16.msra.mxu0 %v1459
      %1521 = vmatprep.subr.bf16.mxu0 0
      %1522 = vmatpush1.bf16.msra.mxu0 0
      %1523 = vmatprep.subr.bf16.mxu0 0
      %1524 = vmatpush1.bf16.msra.mxu0 0
      %1525 = vmatprep.subr.bf16.mxu0 0
      %1526 = vmatpush1.bf16.msra.mxu0 0
      %1527 = vmatprep.subr.bf16.mxu0 0
      %1528 = vmatpush1.bf16.msra.mxu0 0
      %1529 = vmatprep.subr.bf16.mxu0 0
      %1530 = vmatpush1.bf16.msra.mxu0 0
      %1531 = vmatprep.subr.bf16.mxu0 0
      %1532 = vmatpush1.bf16.msra.mxu0 0
      %1533 = vmatprep.subr.bf16.mxu0 0
      %1534 = vmatpush1.bf16.msra.mxu0 0
      %1535 = vmatprep.subr.bf16.mxu0 0
      %1536 = vmatpush1.bf16.msra.mxu0 0
      %1537 = vmatprep.subr.bf16.mxu0 0
      %1538 = vmatpush1.bf16.msra.mxu0 0
      %1539 = vmatprep.subr.bf16.mxu0 0
      %1540 = vmatpush1.bf16.msra.mxu0 0
      %1541 = vmatprep.subr.bf16.mxu0 0
      %1542 = vmatpush1.bf16.msra.mxu0 0
      %1543 = vmatprep.subr.bf16.mxu0 0
      %1544 = vmatpush1.bf16.msra.mxu0 0
      %1545 = vmatprep.mubr.bf16.mxu0 0
      %1546 = vmatmul.mubr.bf16.gmra.mrb[0].mxu0 %v1466
      %v1547 = vpop.f32.mrb[0].mxu0
      %v1548 = vadd.f32 0.0, %v1547
      %v1549 = vpop.f32.mrb[0].mxu0
      %v1550 = vpop.f32.mrb[0].mxu0
      %v1551 = vadd.f32 0.0, %v1550
      %v1552 = vpop.f32.mrb[0].mxu0
      %1553 = vmatprep.mubr.bf16.mxu0 0
      %1554 = vmatmul.mubr.bf16.gmra.mrb[0].mxu0 %v1469
      %v1555 = vpop.f32.mrb[0].mxu0
      %v1556 = vadd.f32 0.0, %v1555
      %v1557 = vpop.f32.mrb[0].mxu0
      %v1558 = vpop.f32.mrb[0].mxu0
      %v1559 = vadd.f32 0.0, %v1558
      %v1560 = vpop.f32.mrb[0].mxu0
      %1561 = vmatprep.mubr.bf16.mxu0 0
      %1562 = vmatmul.mubr.bf16.gmra.mrb[0].mxu0 %v1472
      %v1563 = vpop.f32.mrb[0].mxu0
      %v1564 = vadd.f32 0.0, %v1563
      %v1565 = vpop.f32.mrb[0].mxu0
      %v1566 = vpop.f32.mrb[0].mxu0
      %v1567 = vadd.f32 0.0, %v1566
      %v1568 = vpop.f32.mrb[0].mxu0
      %1569 = vmatprep.mubr.bf16.mxu0 0
      %1570 = vmatmul.mubr.bf16.gmra.mrb[0].mxu0 %v1475
      %v1571 = vpop.f32.mrb[0].mxu0
      %v1572 = vadd.f32 0.0, %v1571
      %v1573 = vpop.f32.mrb[0].mxu0
      %v1574 = vpop.f32.mrb[0].mxu0
      %v1575 = vadd.f32 0.0, %v1574
      %v1576 = vpop.f32.mrb[0].mxu0
      %1577 = vmatprep.mubr.bf16.mxu0 0
      %1578 = vmatmul.mubr.bf16.gmra.mrb[0].mxu0 %v1478
      %v1579 = vpop.f32.mrb[0].mxu0
      %v1580 = vadd.f32 0.0, %v1579
      %v1581 = vpop.f32.mrb[0].mxu0
      %v1582 = vpop.f32.mrb[0].mxu0
      %v1583 = vadd.f32 0.0, %v1582
      %v1584 = vpop.f32.mrb[0].mxu0
      %1585 = vmatprep.mubr.bf16.mxu0 0
      %1586 = vmatmul.mubr.bf16.gmra.mrb[0].mxu0 %v1481
      %v1587 = vpop.f32.mrb[0].mxu0
      %v1588 = vadd.f32 0.0, %v1587
      %v1589 = vpop.f32.mrb[0].mxu0
      %v1590 = vpop.f32.mrb[0].mxu0
      %v1591 = vadd.f32 0.0, %v1590
      %v1592 = vpop.f32.mrb[0].mxu0
      %1593 = vmatprep.mubr.bf16.mxu0 0
      %1594 = vmatmul.mubr.bf16.gmra.mrb[0].mxu0 %v1484
      %v1595 = vpop.f32.mrb[0].mxu0
      %v1596 = vadd.f32 0.0, %v1595
      %v1597 = vpop.f32.mrb[0].mxu0
      %v1598 = vpop.f32.mrb[0].mxu0
      %v1599 = vadd.f32 0.0, %v1598
      %v1600 = vpop.f32.mrb[0].mxu0
      %1601 = vmatprep.mubr.bf16.mxu0 0
      %1602 = vmatmul.mubr.bf16.gmra.mrb[0].mxu0 %v1487
      %v1603 = vpop.f32.mrb[0].mxu0
      %v1604 = vadd.f32 0.0, %v1603
      %v1605 = vpop.f32.mrb[0].mxu0
      %v1606 = vpop.f32.mrb[0].mxu0
      %v1607 = vadd.f32 0.0, %v1606
      %v1608 = vpop.f32.mrb[0].mxu0
      %1609 = vmatprep.mubr.bf16.mxu0 0
      %1610 = vmatmul.mubr.bf16.gmra.mrb[0].mxu0 %v1490
      %v1611 = vpop.f32.mrb[0].mxu0
      %v1612 = vadd.f32 0.0, %v1611
      %v1613 = vpop.f32.mrb[0].mxu0
      %v1614 = vpop.f32.mrb[0].mxu0
      %v1615 = vadd.f32 0.0, %v1614
      %v1616 = vpop.f32.mrb[0].mxu0
      %1617 = vmatprep.mubr.bf16.mxu0 0
      %1618 = vmatmul.mubr.bf16.gmra.mrb[0].mxu0 %v1493
      %v1619 = vpop.f32.mrb[0].mxu0
      %v1620 = vadd.f32 0.0, %v1619
      %v1621 = vpop.f32.mrb[0].mxu0
      %v1622 = vpop.f32.mrb[0].mxu0
      %v1623 = vadd.f32 0.0, %v1622
      %v1624 = vpop.f32.mrb[0].mxu0
      %1625 = vmatprep.mubr.bf16.mxu0 0
      %1626 = vmatmul.mubr.bf16.gmra.mrb[0].mxu0 %v1496
      %v1627 = vpop.f32.mrb[0].mxu0
      %v1628 = vadd.f32 0.0, %v1627
      %v1629 = vpop.f32.mrb[0].mxu0
      %v1630 = vpop.f32.mrb[0].mxu0
      %v1631 = vadd.f32 0.0, %v1630
      %v1632 = vpop.f32.mrb[0].mxu0
      %1633 = vmatprep.mubr.bf16.mxu0 0
      %1634 = vmatmul.mubr.bf16.gmra.mrb[0].mxu0 %v1499
      %v1635 = vpop.f32.mrb[0].mxu0
      %v1636 = vadd.f32 0.0, %v1635
      %v1637 = vpop.f32.mrb[0].mxu0
      %v1638 = vpop.f32.mrb[0].mxu0
      %v1639 = vadd.f32 0.0, %v1638
      %v1640 = vpop.f32.mrb[0].mxu0
      %1641 = vmatprep.mubr.bf16.mxu0 0
      %1642 = vmatmul.mubr.bf16.gmra.mrb[0].mxu0 %v1502
      %v1643 = vpop.f32.mrb[0].mxu0
      %v1644 = vadd.f32 0.0, %v1643
      %v1645 = vpop.f32.mrb[0].mxu0
      %v1646 = vpop.f32.mrb[0].mxu0
      %v1647 = vadd.f32 0.0, %v1646
      %v1648 = vpop.f32.mrb[0].mxu0
      %1649 = vmatprep.mubr.bf16.mxu0 0
      %1650 = vmatmul.mubr.bf16.gmra.mrb[0].mxu0 %v1505
      %v1651 = vpop.f32.mrb[0].mxu0
      %v1652 = vadd.f32 0.0, %v1651
      %v1653 = vpop.f32.mrb[0].mxu0
      %v1654 = vpop.f32.mrb[0].mxu0
      %v1655 = vadd.f32 0.0, %v1654
      %v1656 = vpop.f32.mrb[0].mxu0
      %1657 = vmatprep.mubr.bf16.mxu0 0
      %1658 = vmatmul.mubr.bf16.gmra.mrb[0].mxu0 %v1508
      %v1659 = vpop.f32.mrb[0].mxu0
      %v1660 = vadd.f32 0.0, %v1659
      %v1661 = vpop.f32.mrb[0].mxu0
      %v1662 = vpop.f32.mrb[0].mxu0
      %v1663 = vadd.f32 0.0, %v1662
      %v1664 = vpop.f32.mrb[0].mxu0
      %1665 = vmatprep.mubr.bf16.mxu0 0
      %1666 = vmatmul.mubr.bf16.gmra.mrb[0].mxu0 %v1511
      %v1667 = vpop.f32.mrb[0].mxu0
      %v1668 = vadd.f32 0.0, %v1667
      %v1669 = vpop.f32.mrb[0].mxu0
      %v1670 = vpop.f32.mrb[0].mxu0
      %v1671 = vadd.f32 0.0, %v1670
      %v1672 = vpop.f32.mrb[0].mxu0
      %1673 = vdwg.mxu0
      %v1706 = vunpack.c.l.b16 %v941
      %v1707 = vunpack.c.l.b16 %v942
      %v1708 = vunpack.c.l.b16 %v943
      %v1709 = vunpack.c.l.b16 %v944
      %v1710 = vunpack.c.l.b16 %v945
      %v1711 = vunpack.c.l.b16 %v946
      %v1712 = vunpack.c.l.b16 %v947
      %v1713 = vunpack.c.l.b16 %v948
      %v1714 = vunpack.c.l.b16 %v949
      %v1715 = vunpack.c.l.b16 %v950
      %v1716 = vunpack.c.l.b16 %v951
      %v1717 = vunpack.c.l.b16 %v952
      %v1718 = vunpack.c.l.b16 %v953
      %v1719 = vunpack.c.l.b16 %v954
      %v1720 = vunpack.c.l.b16 %v955
      %v1721 = vunpack.c.l.b16 %v956
      %v1722 = vunpack.c.l.b16 %v957
      %v1723 = vunpack.c.l.b16 %v958
      %v1724 = vunpack.c.l.b16 %v959
      %v1725 = vunpack.c.l.b16 %v960
      %v1726 = vunpack.c.l.b16 %v961
      %v1727 = vunpack.c.l.b16 %v962
      %v1728 = vunpack.c.l.b16 %v963
      %v1729 = vunpack.c.l.b16 %v964
      %v1730 = vunpack.c.l.b16 %v965
      %v1731 = vunpack.c.l.b16 %v966
      %v1732 = vunpack.c.l.b16 %v967
      %v1733 = vunpack.c.l.b16 %v968
      %v1734 = vunpack.c.l.b16 %v969
      %v1735 = vunpack.c.l.b16 %v970
      %v1736 = vunpack.c.l.b16 %v971
      %v1737 = vunpack.c.l.b16 %v972
      %v1738 = vpack.c.b16 %v1707, %v1706
      %v1739 = vpack.c.b16 %v1709, %v1708
      %v1740 = vpack.c.b16 %v1711, %v1710
      %v1741 = vpack.c.b16 %v1713, %v1712
      %v1742 = vpack.c.b16 %v1715, %v1714
      %v1743 = vpack.c.b16 %v1717, %v1716
      %v1744 = vpack.c.b16 %v1719, %v1718
      %v1745 = vpack.c.b16 %v1721, %v1720
      %v1746 = vpack.c.b16 %v1723, %v1722
      %v1747 = vpack.c.b16 %v1725, %v1724
      %v1748 = vpack.c.b16 %v1727, %v1726
      %v1749 = vpack.c.b16 %v1729, %v1728
      %v1750 = vpack.c.b16 %v1731, %v1730
      %v1751 = vpack.c.b16 %v1733, %v1732
      %v1752 = vpack.c.b16 %v1735, %v1734
      %v1753 = vpack.c.b16 %v1737, %v1736
      %v1762 = vunpack.c.l.b16 %v973
      %v1763 = vunpack.c.l.b16 %v974
      %v1764 = vunpack.c.l.b16 %v975
      %v1765 = vunpack.c.l.b16 %v976
      %v1766 = vunpack.c.l.b16 %v977
      %v1767 = vunpack.c.l.b16 %v978
      %v1768 = vunpack.c.l.b16 %v979
      %v1769 = vunpack.c.l.b16 %v980
      %v1770 = vpack.c.b16 %v1763, %v1762
      %v1771 = vpack.c.b16 %v1765, %v1764
      %v1772 = vpack.c.b16 %v1767, %v1766
      %v1773 = vpack.c.b16 %v1769, %v1768
      %v1779 = vsel %vm1464, %v1738, 0
      %v1782 = vsel %vm1464, %v1739, 0
      %v1785 = vsel %vm1464, %v1740, 0
      %v1788 = vsel %vm1464, %v1741, 0
      %v1791 = vsel %vm1464, %v1742, 0
      %v1794 = vsel %vm1464, %v1743, 0
      %v1797 = vsel %vm1464, %v1744, 0
      %v1800 = vsel %vm1464, %v1745, 0
      %v1803 = vsel %vm1464, %v1746, 0
      %v1806 = vsel %vm1464, %v1747, 0
      %v1809 = vsel %vm1464, %v1748, 0
      %v1812 = vsel %vm1464, %v1749, 0
      %v1815 = vsel %vm1464, %v1750, 0
      %v1818 = vsel %vm1464, %v1751, 0
      %v1821 = vsel %vm1464, %v1752, 0
      %v1824 = vsel %vm1464, %v1753, 0
      %1826 = vmatprep.subr.bf16.mxu0 0
      %1827 = vmatpush1.bf16.msra.mxu0 %v1770
      %1828 = vmatprep.subr.bf16.mxu0 0
      %1829 = vmatpush1.bf16.msra.mxu0 %v1771
      %1830 = vmatprep.subr.bf16.mxu0 0
      %1831 = vmatpush1.bf16.msra.mxu0 %v1772
      %1832 = vmatprep.subr.bf16.mxu0 0
      %1833 = vmatpush1.bf16.msra.mxu0 %v1773
      %1834 = vmatprep.subr.bf16.mxu0 0
      %1835 = vmatpush1.bf16.msra.mxu0 0
      %1836 = vmatprep.subr.bf16.mxu0 0
      %1837 = vmatpush1.bf16.msra.mxu0 0
      %1838 = vmatprep.subr.bf16.mxu0 0
      %1839 = vmatpush1.bf16.msra.mxu0 0
      %1840 = vmatprep.subr.bf16.mxu0 0
      %1841 = vmatpush1.bf16.msra.mxu0 0
      %1842 = vmatprep.subr.bf16.mxu0 0
      %1843 = vmatpush1.bf16.msra.mxu0 0
      %1844 = vmatprep.subr.bf16.mxu0 0
      %1845 = vmatpush1.bf16.msra.mxu0 0
      %1846 = vmatprep.subr.bf16.mxu0 0
      %1847 = vmatpush1.bf16.msra.mxu0 0
      %1848 = vmatprep.subr.bf16.mxu0 0
      %1849 = vmatpush1.bf16.msra.mxu0 0
      %1850 = vmatprep.subr.bf16.mxu0 0
      %1851 = vmatpush1.bf16.msra.mxu0 0
      %1852 = vmatprep.subr.bf16.mxu0 0
      %1853 = vmatpush1.bf16.msra.mxu0 0
      %1854 = vmatprep.subr.bf16.mxu0 0
      %1855 = vmatpush1.bf16.msra.mxu0 0
      %1856 = vmatprep.subr.bf16.mxu0 0
      %1857 = vmatpush1.bf16.msra.mxu0 0
      %1858 = vmatprep.mubr.bf16.mxu0 0
      %1859 = vmatmul.mubr.bf16.gmra.mrb[0].mxu0 %v1779
      %v1860 = vpop.f32.mrb[0].mxu0
      %v1861 = vadd.f32 %v1548, %v1860
      %v1862 = vpop.f32.mrb[0].mxu0
      %v1863 = vpop.f32.mrb[0].mxu0
      %v1864 = vadd.f32 %v1551, %v1863
      %v1865 = vpop.f32.mrb[0].mxu0
      %1866 = vmatprep.mubr.bf16.mxu0 0
      %1867 = vmatmul.mubr.bf16.gmra.mrb[0].mxu0 %v1782
      %v1868 = vpop.f32.mrb[0].mxu0
      %v1869 = vadd.f32 %v1556, %v1868
      %v1870 = vpop.f32.mrb[0].mxu0
      %v1871 = vpop.f32.mrb[0].mxu0
      %v1872 = vadd.f32 %v1559, %v1871
      %v1873 = vpop.f32.mrb[0].mxu0
      %1874 = vmatprep.mubr.bf16.mxu0 0
      %1875 = vmatmul.mubr.bf16.gmra.mrb[0].mxu0 %v1785
      %v1876 = vpop.f32.mrb[0].mxu0
      %v1877 = vadd.f32 %v1564, %v1876
      %v1878 = vpop.f32.mrb[0].mxu0
      %v1879 = vpop.f32.mrb[0].mxu0
      %v1880 = vadd.f32 %v1567, %v1879
      %v1881 = vpop.f32.mrb[0].mxu0
      %1882 = vmatprep.mubr.bf16.mxu0 0
      %1883 = vmatmul.mubr.bf16.gmra.mrb[0].mxu0 %v1788
      %v1884 = vpop.f32.mrb[0].mxu0
      %v1885 = vadd.f32 %v1572, %v1884
      %v1886 = vpop.f32.mrb[0].mxu0
      %v1887 = vpop.f32.mrb[0].mxu0
      %v1888 = vadd.f32 %v1575, %v1887
      %v1889 = vpop.f32.mrb[0].mxu0
      %1890 = vmatprep.mubr.bf16.mxu0 0
      %1891 = vmatmul.mubr.bf16.gmra.mrb[0].mxu0 %v1791
      %v1892 = vpop.f32.mrb[0].mxu0
      %v1893 = vadd.f32 %v1580, %v1892
      %v1894 = vpop.f32.mrb[0].mxu0
      %v1895 = vpop.f32.mrb[0].mxu0
      %v1896 = vadd.f32 %v1583, %v1895
      %v1897 = vpop.f32.mrb[0].mxu0
      %1898 = vmatprep.mubr.bf16.mxu0 0
      %1899 = vmatmul.mubr.bf16.gmra.mrb[0].mxu0 %v1794
      %v1900 = vpop.f32.mrb[0].mxu0
      %v1901 = vadd.f32 %v1588, %v1900
      %v1902 = vpop.f32.mrb[0].mxu0
      %v1903 = vpop.f32.mrb[0].mxu0
      %v1904 = vadd.f32 %v1591, %v1903
      %v1905 = vpop.f32.mrb[0].mxu0
      %1906 = vmatprep.mubr.bf16.mxu0 0
      %1907 = vmatmul.mubr.bf16.gmra.mrb[0].mxu0 %v1797
      %v1908 = vpop.f32.mrb[0].mxu0
      %v1909 = vadd.f32 %v1596, %v1908
      %v1910 = vpop.f32.mrb[0].mxu0
      %v1911 = vpop.f32.mrb[0].mxu0
      %v1912 = vadd.f32 %v1599, %v1911
      %v1913 = vpop.f32.mrb[0].mxu0
      %1914 = vmatprep.mubr.bf16.mxu0 0
      %1915 = vmatmul.mubr.bf16.gmra.mrb[0].mxu0 %v1800
      %v1916 = vpop.f32.mrb[0].mxu0
      %v1917 = vadd.f32 %v1604, %v1916
      %v1918 = vpop.f32.mrb[0].mxu0
      %v1919 = vpop.f32.mrb[0].mxu0
      %v1920 = vadd.f32 %v1607, %v1919
      %v1921 = vpop.f32.mrb[0].mxu0
      %1922 = vmatprep.mubr.bf16.mxu0 0
      %1923 = vmatmul.mubr.bf16.gmra.mrb[0].mxu0 %v1803
      %v1924 = vpop.f32.mrb[0].mxu0
      %v1925 = vadd.f32 %v1612, %v1924
      %v1926 = vpop.f32.mrb[0].mxu0
      %v1927 = vpop.f32.mrb[0].mxu0
      %v1928 = vadd.f32 %v1615, %v1927
      %v1929 = vpop.f32.mrb[0].mxu0
      %1930 = vmatprep.mubr.bf16.mxu0 0
      %1931 = vmatmul.mubr.bf16.gmra.mrb[0].mxu0 %v1806
      %v1932 = vpop.f32.mrb[0].mxu0
      %v1933 = vadd.f32 %v1620, %v1932
      %v1934 = vpop.f32.mrb[0].mxu0
      %v1935 = vpop.f32.mrb[0].mxu0
      %v1936 = vadd.f32 %v1623, %v1935
      %v1937 = vpop.f32.mrb[0].mxu0
      %1938 = vmatprep.mubr.bf16.mxu0 0
      %1939 = vmatmul.mubr.bf16.gmra.mrb[0].mxu0 %v1809
      %v1940 = vpop.f32.mrb[0].mxu0
      %v1941 = vadd.f32 %v1628, %v1940
      %v1942 = vpop.f32.mrb[0].mxu0
      %v1943 = vpop.f32.mrb[0].mxu0
      %v1944 = vadd.f32 %v1631, %v1943
      %v1945 = vpop.f32.mrb[0].mxu0
      %1946 = vmatprep.mubr.bf16.mxu0 0
      %1947 = vmatmul.mubr.bf16.gmra.mrb[0].mxu0 %v1812
      %v1948 = vpop.f32.mrb[0].mxu0
      %v1949 = vadd.f32 %v1636, %v1948
      %v1950 = vpop.f32.mrb[0].mxu0
      %v1951 = vpop.f32.mrb[0].mxu0
      %v1952 = vadd.f32 %v1639, %v1951
      %v1953 = vpop.f32.mrb[0].mxu0
      %1954 = vmatprep.mubr.bf16.mxu0 0
      %1955 = vmatmul.mubr.bf16.gmra.mrb[0].mxu0 %v1815
      %v1956 = vpop.f32.mrb[0].mxu0
      %v1957 = vadd.f32 %v1644, %v1956
      %v1958 = vpop.f32.mrb[0].mxu0
      %v1959 = vpop.f32.mrb[0].mxu0
      %v1960 = vadd.f32 %v1647, %v1959
      %v1961 = vpop.f32.mrb[0].mxu0
      %1962 = vmatprep.mubr.bf16.mxu0 0
      %1963 = vmatmul.mubr.bf16.gmra.mrb[0].mxu0 %v1818
      %v1964 = vpop.f32.mrb[0].mxu0
      %v1965 = vadd.f32 %v1652, %v1964
      %v1966 = vpop.f32.mrb[0].mxu0
      %v1967 = vpop.f32.mrb[0].mxu0
      %v1968 = vadd.f32 %v1655, %v1967
      %v1969 = vpop.f32.mrb[0].mxu0
      %1970 = vmatprep.mubr.bf16.mxu0 0
      %1971 = vmatmul.mubr.bf16.gmra.mrb[0].mxu0 %v1821
      %v1972 = vpop.f32.mrb[0].mxu0
      %v1973 = vadd.f32 %v1660, %v1972
      %v1974 = vpop.f32.mrb[0].mxu0
      %v1975 = vpop.f32.mrb[0].mxu0
      %v1976 = vadd.f32 %v1663, %v1975
      %v1977 = vpop.f32.mrb[0].mxu0
      %1978 = vmatprep.mubr.bf16.mxu0 0
      %1979 = vmatmul.mubr.bf16.gmra.mrb[0].mxu0 %v1824
      %v1980 = vpop.f32.mrb[0].mxu0
      %v1981 = vadd.f32 %v1668, %v1980
      %v1982 = vpop.f32.mrb[0].mxu0
      %v1983 = vpop.f32.mrb[0].mxu0
      %v1984 = vadd.f32 %v1671, %v1983
      %v1985 = vpop.f32.mrb[0].mxu0
      %1986 = vdwg.mxu0
      %v1987 = vld [vmem:[#allocation2] sm:$0xe]
      %v1988 = vld [vmem:[#allocation2 + $0xc] sm:$0xe]
      %v1989 = vld [vmem:[#allocation2 + $0x18] sm:$0xe]
      %v1990 = vld [vmem:[#allocation2 + $0x24] sm:$0xe]
      %v1991 = vld [vmem:[#allocation2 + $0x30] sm:$0xe]
      %v1992 = vld [vmem:[#allocation2 + $0x3c] sm:$0xe]
      %v1993 = vld [vmem:[#allocation2 + $0x48] sm:$0xe]
      %v1994 = vld [vmem:[#allocation2 + $0x54] sm:$0xe]
      %v1995 = vld [vmem:[#allocation2 + $0x60] sm:$0xe]
      %v1996 = vld [vmem:[#allocation2 + $0x6c] sm:$0xe]
      %v1997 = vld [vmem:[#allocation2 + $0x78] sm:$0xe]
      %v1998 = vld [vmem:[#allocation2 + $0x84] sm:$0xe]
      %v1999 = vld [vmem:[#allocation2 + $0x90] sm:$0xe]
      %v2000 = vld [vmem:[#allocation2 + $0x9c] sm:$0xe]
      %v2001 = vld [vmem:[#allocation2 + $0xa8] sm:$0xe]
      %v2002 = vld [vmem:[#allocation2 + $0xb4] sm:$0xe]
      %vm2035 = vcmask 1042432
      %vm2036 = vcmask 1046532
      %vm2037 = vmor %vm2035, %vm2036
      %v2038 = vrot.slane %v1987, 5
      %v2039 = vrot.slane %v2038, 4
      %v2040 = vrot.slane %v942, 5
      %v2041 = vsel %vm2037, %v2039, %v2040
      %v2042 = vrot.slane %v2040, 4
      %v2043 = vrot.slane %v981, 5
      %v2044 = vsel %vm2037, %v2042, %v2043
      %v2045 = vrot.slane %v1988, 5
      %v2046 = vrot.slane %v2045, 4
      %v2047 = vrot.slane %v944, 5
      %v2048 = vsel %vm2037, %v2046, %v2047
      %v2049 = vrot.slane %v2047, 4
      %v2050 = vrot.slane %v982, 5
      %v2051 = vsel %vm2037, %v2049, %v2050
      %v2052 = vrot.slane %v1989, 5
      %v2053 = vrot.slane %v2052, 4
      %v2054 = vrot.slane %v946, 5
      %v2055 = vsel %vm2037, %v2053, %v2054
      %v2056 = vrot.slane %v2054, 4
      %v2057 = vrot.slane %v983, 5
      %v2058 = vsel %vm2037, %v2056, %v2057
      %v2059 = vrot.slane %v1990, 5
      %v2060 = vrot.slane %v2059, 4
      %v2061 = vrot.slane %v948, 5
      %v2062 = vsel %vm2037, %v2060, %v2061
      %v2063 = vrot.slane %v2061, 4
      %v2064 = vrot.slane %v984, 5
      %v2065 = vsel %vm2037, %v2063, %v2064
      %v2066 = vrot.slane %v1991, 5
      %v2067 = vrot.slane %v2066, 4
      %v2068 = vrot.slane %v950, 5
      %v2069 = vsel %vm2037, %v2067, %v2068
      %v2070 = vrot.slane %v2068, 4
      %v2071 = vrot.slane %v985, 5
      %v2072 = vsel %vm2037, %v2070, %v2071
      %v2073 = vrot.slane %v1992, 5
      %v2074 = vrot.slane %v2073, 4
      %v2075 = vrot.slane %v952, 5
      %v2076 = vsel %vm2037, %v2074, %v2075
      %v2077 = vrot.slane %v2075, 4
      %v2078 = vrot.slane %v986, 5
      %v2079 = vsel %vm2037, %v2077, %v2078
      %v2080 = vrot.slane %v1993, 5
      %v2081 = vrot.slane %v2080, 4
      %v2082 = vrot.slane %v954, 5
      %v2083 = vsel %vm2037, %v2081, %v2082
      %v2084 = vrot.slane %v2082, 4
      %v2085 = vrot.slane %v987, 5
      %v2086 = vsel %vm2037, %v2084, %v2085
      %v2087 = vrot.slane %v1994, 5
      %v2088 = vrot.slane %v2087, 4
      %v2089 = vrot.slane %v956, 5
      %v2090 = vsel %vm2037, %v2088, %v2089
      %v2091 = vrot.slane %v2089, 4
      %v2092 = vrot.slane %v988, 5
      %v2093 = vsel %vm2037, %v2091, %v2092
      %v2094 = vrot.slane %v1995, 5
      %v2095 = vrot.slane %v2094, 4
      %v2096 = vrot.slane %v958, 5
      %v2097 = vsel %vm2037, %v2095, %v2096
      %v2098 = vrot.slane %v2096, 4
      %v2099 = vrot.slane %v989, 5
      %v2100 = vsel %vm2037, %v2098, %v2099
      %v2101 = vrot.slane %v1996, 5
      %v2102 = vrot.slane %v2101, 4
      %v2103 = vrot.slane %v960, 5
      %v2104 = vsel %vm2037, %v2102, %v2103
      %v2105 = vrot.slane %v2103, 4
      %v2106 = vrot.slane %v990, 5
      %v2107 = vsel %vm2037, %v2105, %v2106
      %v2108 = vrot.slane %v1997, 5
      %v2109 = vrot.slane %v2108, 4
      %v2110 = vrot.slane %v962, 5
      %v2111 = vsel %vm2037, %v2109, %v2110
      %v2112 = vrot.slane %v2110, 4
      %v2113 = vrot.slane %v991, 5
      %v2114 = vsel %vm2037, %v2112, %v2113
      %v2115 = vrot.slane %v1998, 5
      %v2116 = vrot.slane %v2115, 4
      %v2117 = vrot.slane %v964, 5
      %v2118 = vsel %vm2037, %v2116, %v2117
      %v2119 = vrot.slane %v2117, 4
      %v2120 = vrot.slane %v992, 5
      %v2121 = vsel %vm2037, %v2119, %v2120
      %v2122 = vrot.slane %v1999, 5
      %v2123 = vrot.slane %v2122, 4
      %v2124 = vrot.slane %v966, 5
      %v2125 = vsel %vm2037, %v2123, %v2124
      %v2126 = vrot.slane %v2124, 4
      %v2127 = vrot.slane %v993, 5
      %v2128 = vsel %vm2037, %v2126, %v2127
      %v2129 = vrot.slane %v2000, 5
      %v2130 = vrot.slane %v2129, 4
      %v2131 = vrot.slane %v968, 5
      %v2132 = vsel %vm2037, %v2130, %v2131
      %v2133 = vrot.slane %v2131, 4
      %v2134 = vrot.slane %v994, 5
      %v2135 = vsel %vm2037, %v2133, %v2134
      %v2136 = vrot.slane %v2001, 5
      %v2137 = vrot.slane %v2136, 4
      %v2138 = vrot.slane %v970, 5
      %v2139 = vsel %vm2037, %v2137, %v2138
      %v2140 = vrot.slane %v2138, 4
      %v2141 = vrot.slane %v995, 5
      %v2142 = vsel %vm2037, %v2140, %v2141
      %v2143 = vrot.slane %v2002, 5
      %v2144 = vrot.slane %v2143, 4
      %v2145 = vrot.slane %v972, 5
      %v2146 = vsel %vm2037, %v2144, %v2145
      %v2147 = vrot.slane %v2145, 4
      %v2148 = vrot.slane %v996, 5
      %v2149 = vsel %vm2037, %v2147, %v2148
      %v2150 = vld [vmem:[%s1 + $0x40] sm:$0xf]
      %v2151 = vld [vmem:[%s1 + $0x44] sm:$0xf]
      %v2152 = vld [vmem:[%s1 + $0x48] sm:$0xf]
      %v2153 = vld [vmem:[%s1 + $0x4c] sm:$0xf]
      %v2154 = vld [vmem:[%s1 + $0x50] sm:$0xf]
      %v2155 = vld [vmem:[%s1 + $0x54] sm:$0xf]
      %v2156 = vld [vmem:[%s1 + $0x58] sm:$0xf]
      %v2157 = vld [vmem:[%s1 + $0x5c] sm:$0xf]
      %v2158 = vunpack.c.l.b16 %v2041
      %v2159 = vunpack.c.l.b16 %v2044
      %v2160 = vunpack.c.l.b16 %v2048
      %v2161 = vunpack.c.l.b16 %v2051
      %v2162 = vunpack.c.l.b16 %v2055
      %v2163 = vunpack.c.l.b16 %v2058
      %v2164 = vunpack.c.l.b16 %v2062
      %v2165 = vunpack.c.l.b16 %v2065
      %v2166 = vunpack.c.l.b16 %v2069
      %v2167 = vunpack.c.l.b16 %v2072
      %v2168 = vunpack.c.l.b16 %v2076
      %v2169 = vunpack.c.l.b16 %v2079
      %v2170 = vunpack.c.l.b16 %v2083
      %v2171 = vunpack.c.l.b16 %v2086
      %v2172 = vunpack.c.l.b16 %v2090
      %v2173 = vunpack.c.l.b16 %v2093
      %v2174 = vunpack.c.l.b16 %v2097
      %v2175 = vunpack.c.l.b16 %v2100
      %v2176 = vunpack.c.l.b16 %v2104
      %v2177 = vunpack.c.l.b16 %v2107
      %v2178 = vunpack.c.l.b16 %v2111
      %v2179 = vunpack.c.l.b16 %v2114
      %v2180 = vunpack.c.l.b16 %v2118
      %v2181 = vunpack.c.l.b16 %v2121
      %v2182 = vunpack.c.l.b16 %v2125
      %v2183 = vunpack.c.l.b16 %v2128
      %v2184 = vunpack.c.l.b16 %v2132
      %v2185 = vunpack.c.l.b16 %v2135
      %v2186 = vunpack.c.l.b16 %v2139
      %v2187 = vunpack.c.l.b16 %v2142
      %v2188 = vunpack.c.l.b16 %v2146
      %v2189 = vunpack.c.l.b16 %v2149
      %v2190 = vpack.c.b16 %v2159, %v2158
      %v2191 = vpack.c.b16 %v2161, %v2160
      %v2192 = vpack.c.b16 %v2163, %v2162
      %v2193 = vpack.c.b16 %v2165, %v2164
      %v2194 = vpack.c.b16 %v2167, %v2166
      %v2195 = vpack.c.b16 %v2169, %v2168
      %v2196 = vpack.c.b16 %v2171, %v2170
      %v2197 = vpack.c.b16 %v2173, %v2172
      %v2198 = vpack.c.b16 %v2175, %v2174
      %v2199 = vpack.c.b16 %v2177, %v2176
      %v2200 = vpack.c.b16 %v2179, %v2178
      %v2201 = vpack.c.b16 %v2181, %v2180
      %v2202 = vpack.c.b16 %v2183, %v2182
      %v2203 = vpack.c.b16 %v2185, %v2184
      %v2204 = vpack.c.b16 %v2187, %v2186
      %v2205 = vpack.c.b16 %v2189, %v2188
      %v2214 = vunpack.c.l.b16 %v2150
      %v2215 = vunpack.c.l.b16 %v2151
      %v2216 = vunpack.c.l.b16 %v2152
      %v2217 = vunpack.c.l.b16 %v2153
      %v2218 = vunpack.c.l.b16 %v2154
      %v2219 = vunpack.c.l.b16 %v2155
      %v2220 = vunpack.c.l.b16 %v2156
      %v2221 = vunpack.c.l.b16 %v2157
      %v2222 = vpack.c.b16 %v2215, %v2214
      %v2223 = vpack.c.b16 %v2217, %v2216
      %v2224 = vpack.c.b16 %v2219, %v2218
      %v2225 = vpack.c.b16 %v2221, %v2220
      %v2231 = vsel %vm1464, %v2190, 0
      %v2234 = vsel %vm1464, %v2191, 0
      %v2237 = vsel %vm1464, %v2192, 0
      %v2240 = vsel %vm1464, %v2193, 0
      %v2243 = vsel %vm1464, %v2194, 0
      %v2246 = vsel %vm1464, %v2195, 0
      %v2249 = vsel %vm1464, %v2196, 0
      %v2252 = vsel %vm1464, %v2197, 0
      %v2255 = vsel %vm1464, %v2198, 0
      %v2258 = vsel %vm1464, %v2199, 0
      %v2261 = vsel %vm1464, %v2200, 0
      %v2264 = vsel %vm1464, %v2201, 0
      %v2267 = vsel %vm1464, %v2202, 0
      %v2270 = vsel %vm1464, %v2203, 0
      %v2273 = vsel %vm1464, %v2204, 0
      %v2276 = vsel %vm1464, %v2205, 0
      %2278 = vmatprep.subr.bf16.mxu0 0
      %2279 = vmatpush1.bf16.msra.mxu0 %v2222
      %2280 = vmatprep.subr.bf16.mxu0 0
      %2281 = vmatpush1.bf16.msra.mxu0 %v2223
      %2282 = vmatprep.subr.bf16.mxu0 0
      %2283 = vmatpush1.bf16.msra.mxu0 %v2224
      %2284 = vmatprep.subr.bf16.mxu0 0
      %2285 = vmatpush1.bf16.msra.mxu0 %v2225
      %2286 = vmatprep.subr.bf16.mxu0 0
      %2287 = vmatpush1.bf16.msra.mxu0 0
      %2288 = vmatprep.subr.bf16.mxu0 0
      %2289 = vmatpush1.bf16.msra.mxu0 0
      %2290 = vmatprep.subr.bf16.mxu0 0
      %2291 = vmatpush1.bf16.msra.mxu0 0
      %2292 = vmatprep.subr.bf16.mxu0 0
      %2293 = vmatpush1.bf16.msra.mxu0 0
      %2294 = vmatprep.subr.bf16.mxu0 0
      %2295 = vmatpush1.bf16.msra.mxu0 0
      %2296 = vmatprep.subr.bf16.mxu0 0
      %2297 = vmatpush1.bf16.msra.mxu0 0
      %2298 = vmatprep.subr.bf16.mxu0 0
      %2299 = vmatpush1.bf16.msra.mxu0 0
      %2300 = vmatprep.subr.bf16.mxu0 0
      %2301 = vmatpush1.bf16.msra.mxu0 0
      %2302 = vmatprep.subr.bf16.mxu0 0
      %2303 = vmatpush1.bf16.msra.mxu0 0
      %2304 = vmatprep.subr.bf16.mxu0 0
      %2305 = vmatpush1.bf16.msra.mxu0 0
      %2306 = vmatprep.subr.bf16.mxu0 0
      %2307 = vmatpush1.bf16.msra.mxu0 0
      %2308 = vmatprep.subr.bf16.mxu0 0
      %2309 = vmatpush1.bf16.msra.mxu0 0
      %2310 = vmatprep.mubr.bf16.mxu0 0
      %2311 = vmatmul.mubr.bf16.gmra.mrb[0].mxu0 %v2231
      %v2312 = vpop.f32.mrb[0].mxu0
      %v2313 = vadd.f32 0.0, %v2312
      %v2314 = vpop.f32.mrb[0].mxu0
      %v2315 = vpop.f32.mrb[0].mxu0
      %v2316 = vadd.f32 0.0, %v2315
      %v2317 = vpop.f32.mrb[0].mxu0
      %2318 = vmatprep.mubr.bf16.mxu0 0
      %2319 = vmatmul.mubr.bf16.gmra.mrb[0].mxu0 %v2234
      %v2320 = vpop.f32.mrb[0].mxu0
      %v2321 = vadd.f32 0.0, %v2320
      %v2322 = vpop.f32.mrb[0].mxu0
      %v2323 = vpop.f32.mrb[0].mxu0
      %v2324 = vadd.f32 0.0, %v2323
      %v2325 = vpop.f32.mrb[0].mxu0
      %2326 = vmatprep.mubr.bf16.mxu0 0
      %2327 = vmatmul.mubr.bf16.gmra.mrb[0].mxu0 %v2237
      %v2328 = vpop.f32.mrb[0].mxu0
      %v2329 = vadd.f32 0.0, %v2328
      %v2330 = vpop.f32.mrb[0].mxu0
      %v2331 = vpop.f32.mrb[0].mxu0
      %v2332 = vadd.f32 0.0, %v2331
      %v2333 = vpop.f32.mrb[0].mxu0
      %2334 = vmatprep.mubr.bf16.mxu0 0
      %2335 = vmatmul.mubr.bf16.gmra.mrb[0].mxu0 %v2240
      %v2336 = vpop.f32.mrb[0].mxu0
      %v2337 = vadd.f32 0.0, %v2336
      %v2338 = vpop.f32.mrb[0].mxu0
      %v2339 = vpop.f32.mrb[0].mxu0
      %v2340 = vadd.f32 0.0, %v2339
      %v2341 = vpop.f32.mrb[0].mxu0
      %2342 = vmatprep.mubr.bf16.mxu0 0
      %2343 = vmatmul.mubr.bf16.gmra.mrb[0].mxu0 %v2243
      %v2344 = vpop.f32.mrb[0].mxu0
      %v2345 = vadd.f32 0.0, %v2344
      %v2346 = vpop.f32.mrb[0].mxu0
      %v2347 = vpop.f32.mrb[0].mxu0
      %v2348 = vadd.f32 0.0, %v2347
      %v2349 = vpop.f32.mrb[0].mxu0
      %2350 = vmatprep.mubr.bf16.mxu0 0
      %2351 = vmatmul.mubr.bf16.gmra.mrb[0].mxu0 %v2246
      %v2352 = vpop.f32.mrb[0].mxu0
      %v2353 = vadd.f32 0.0, %v2352
      %v2354 = vpop.f32.mrb[0].mxu0
      %v2355 = vpop.f32.mrb[0].mxu0
      %v2356 = vadd.f32 0.0, %v2355
      %v2357 = vpop.f32.mrb[0].mxu0
      %2358 = vmatprep.mubr.bf16.mxu0 0
      %2359 = vmatmul.mubr.bf16.gmra.mrb[0].mxu0 %v2249
      %v2360 = vpop.f32.mrb[0].mxu0
      %v2361 = vadd.f32 0.0, %v2360
      %v2362 = vpop.f32.mrb[0].mxu0
      %v2363 = vpop.f32.mrb[0].mxu0
      %v2364 = vadd.f32 0.0, %v2363
      %v2365 = vpop.f32.mrb[0].mxu0
      %2366 = vmatprep.mubr.bf16.mxu0 0
      %2367 = vmatmul.mubr.bf16.gmra.mrb[0].mxu0 %v2252
      %v2368 = vpop.f32.mrb[0].mxu0
      %v2369 = vadd.f32 0.0, %v2368
      %v2370 = vpop.f32.mrb[0].mxu0
      %v2371 = vpop.f32.mrb[0].mxu0
      %v2372 = vadd.f32 0.0, %v2371
      %v2373 = vpop.f32.mrb[0].mxu0
      %2374 = vmatprep.mubr.bf16.mxu0 0
      %2375 = vmatmul.mubr.bf16.gmra.mrb[0].mxu0 %v2255
      %v2376 = vpop.f32.mrb[0].mxu0
      %v2377 = vadd.f32 0.0, %v2376
      %v2378 = vpop.f32.mrb[0].mxu0
      %v2379 = vpop.f32.mrb[0].mxu0
      %v2380 = vadd.f32 0.0, %v2379
      %v2381 = vpop.f32.mrb[0].mxu0
      %2382 = vmatprep.mubr.bf16.mxu0 0
      %2383 = vmatmul.mubr.bf16.gmra.mrb[0].mxu0 %v2258
      %v2384 = vpop.f32.mrb[0].mxu0
      %v2385 = vadd.f32 0.0, %v2384
      %v2386 = vpop.f32.mrb[0].mxu0
      %v2387 = vpop.f32.mrb[0].mxu0
      %v2388 = vadd.f32 0.0, %v2387
      %v2389 = vpop.f32.mrb[0].mxu0
      %2390 = vmatprep.mubr.bf16.mxu0 0
      %2391 = vmatmul.mubr.bf16.gmra.mrb[0].mxu0 %v2261
      %v2392 = vpop.f32.mrb[0].mxu0
      %v2393 = vadd.f32 0.0, %v2392
      %v2394 = vpop.f32.mrb[0].mxu0
      %v2395 = vpop.f32.mrb[0].mxu0
      %v2396 = vadd.f32 0.0, %v2395
      %v2397 = vpop.f32.mrb[0].mxu0
      %2398 = vmatprep.mubr.bf16.mxu0 0
      %2399 = vmatmul.mubr.bf16.gmra.mrb[0].mxu0 %v2264
      %v2400 = vpop.f32.mrb[0].mxu0
      %v2401 = vadd.f32 0.0, %v2400
      %v2402 = vpop.f32.mrb[0].mxu0
      %v2403 = vpop.f32.mrb[0].mxu0
      %v2404 = vadd.f32 0.0, %v2403
      %v2405 = vpop.f32.mrb[0].mxu0
      %2406 = vmatprep.mubr.bf16.mxu0 0
      %2407 = vmatmul.mubr.bf16.gmra.mrb[0].mxu0 %v2267
      %v2408 = vpop.f32.mrb[0].mxu0
      %v2409 = vadd.f32 0.0, %v2408
      %v2410 = vpop.f32.mrb[0].mxu0
      %v2411 = vpop.f32.mrb[0].mxu0
      %v2412 = vadd.f32 0.0, %v2411
      %v2413 = vpop.f32.mrb[0].mxu0
      %2414 = vmatprep.mubr.bf16.mxu0 0
      %2415 = vmatmul.mubr.bf16.gmra.mrb[0].mxu0 %v2270
      %v2416 = vpop.f32.mrb[0].mxu0
      %v2417 = vadd.f32 0.0, %v2416
      %v2418 = vpop.f32.mrb[0].mxu0
      %v2419 = vpop.f32.mrb[0].mxu0
      %v2420 = vadd.f32 0.0, %v2419
      %v2421 = vpop.f32.mrb[0].mxu0
      %2422 = vmatprep.mubr.bf16.mxu0 0
      %2423 = vmatmul.mubr.bf16.gmra.mrb[0].mxu0 %v2273
      %v2424 = vpop.f32.mrb[0].mxu0
      %v2425 = vadd.f32 0.0, %v2424
      %v2426 = vpop.f32.mrb[0].mxu0
      %v2427 = vpop.f32.mrb[0].mxu0
      %v2428 = vadd.f32 0.0, %v2427
      %v2429 = vpop.f32.mrb[0].mxu0
      %2430 = vmatprep.mubr.bf16.mxu0 0
      %2431 = vmatmul.mubr.bf16.gmra.mrb[0].mxu0 %v2276
      %v2432 = vpop.f32.mrb[0].mxu0
      %v2433 = vadd.f32 0.0, %v2432
      %v2434 = vpop.f32.mrb[0].mxu0
      %v2435 = vpop.f32.mrb[0].mxu0
      %v2436 = vadd.f32 0.0, %v2435
      %v2437 = vpop.f32.mrb[0].mxu0
      %2438 = vdwg.mxu0
      %v2439 = vadd.f32 %v1861, %v2313
      %v2440 = vadd.f32 %v1864, %v2316
      %v2441 = vadd.f32 %v1869, %v2321
      %v2442 = vadd.f32 %v1872, %v2324
      %v2443 = vadd.f32 %v1877, %v2329
      %v2444 = vadd.f32 %v1880, %v2332
      %v2445 = vadd.f32 %v1885, %v2337
      %v2446 = vadd.f32 %v1888, %v2340
      %v2447 = vadd.f32 %v1893, %v2345
      %v2448 = vadd.f32 %v1896, %v2348
      %v2449 = vadd.f32 %v1901, %v2353
      %v2450 = vadd.f32 %v1904, %v2356
      %v2451 = vadd.f32 %v1909, %v2361
      %v2452 = vadd.f32 %v1912, %v2364
      %v2453 = vadd.f32 %v1917, %v2369
      %v2454 = vadd.f32 %v1920, %v2372
      %v2455 = vadd.f32 %v1925, %v2377
      %v2456 = vadd.f32 %v1928, %v2380
      %v2457 = vadd.f32 %v1933, %v2385
      %v2458 = vadd.f32 %v1936, %v2388
      %v2459 = vadd.f32 %v1941, %v2393
      %v2460 = vadd.f32 %v1944, %v2396
      %v2461 = vadd.f32 %v1949, %v2401
      %v2462 = vadd.f32 %v1952, %v2404
      %v2463 = vadd.f32 %v1957, %v2409
      %v2464 = vadd.f32 %v1960, %v2412
      %v2465 = vadd.f32 %v1965, %v2417
      %v2466 = vadd.f32 %v1968, %v2420
      %v2467 = vadd.f32 %v1973, %v2425
      %v2468 = vadd.f32 %v1976, %v2428
      %v2469 = vadd.f32 %v1981, %v2433
      %v2470 = vadd.f32 %v1984, %v2436
      %v2471 = vld [vmem:[%s883] sm:$0xf]
      %v2472 = vld [vmem:[%s883 + $0x4] sm:$0xf]
      %v2473 = vld [vmem:[%s883 + $0xc] sm:$0xf]
      %v2474 = vld [vmem:[%s883 + $0x10] sm:$0xf]
      %v2475 = vld [vmem:[%s883 + $0x18] sm:$0xf]
      %v2476 = vld [vmem:[%s883 + $0x1c] sm:$0xf]
      %v2477 = vld [vmem:[%s883 + $0x24] sm:$0xf]
      %v2478 = vld [vmem:[%s883 + $0x28] sm:$0xf]
      %v2479 = vld [vmem:[%s883 + $0x30] sm:$0xf]
      %v2480 = vld [vmem:[%s883 + $0x34] sm:$0xf]
      %v2481 = vld [vmem:[%s883 + $0x3c] sm:$0xf]
      %v2482 = vld [vmem:[%s883 + $0x40] sm:$0xf]
      %v2483 = vld [vmem:[%s883 + $0x48] sm:$0xf]
      %v2484 = vld [vmem:[%s883 + $0x4c] sm:$0xf]
      %v2485 = vld [vmem:[%s883 + $0x54] sm:$0xf]
      %v2486 = vld [vmem:[%s883 + $0x58] sm:$0xf]
      %v2487 = vld [vmem:[%s883 + $0x60] sm:$0xf]
      %v2488 = vld [vmem:[%s883 + $0x64] sm:$0xf]
      %v2489 = vld [vmem:[%s883 + $0x6c] sm:$0xf]
      %v2490 = vld [vmem:[%s883 + $0x70] sm:$0xf]
      %v2491 = vld [vmem:[%s883 + $0x78] sm:$0xf]
      %v2492 = vld [vmem:[%s883 + $0x7c] sm:$0xf]
      %v2493 = vld [vmem:[%s883 + $0x84] sm:$0xf]
      %v2494 = vld [vmem:[%s883 + $0x88] sm:$0xf]
      %v2495 = vld [vmem:[%s883 + $0x90] sm:$0xf]
      %v2496 = vld [vmem:[%s883 + $0x94] sm:$0xf]
      %v2497 = vld [vmem:[%s883 + $0x9c] sm:$0xf]
      %v2498 = vld [vmem:[%s883 + $0xa0] sm:$0xf]
      %v2499 = vld [vmem:[%s883 + $0xa8] sm:$0xf]
      %v2500 = vld [vmem:[%s883 + $0xac] sm:$0xf]
      %v2501 = vld [vmem:[%s883 + $0xb4] sm:$0xf]
      %v2502 = vld [vmem:[%s883 + $0xb8] sm:$0xf]
      %v2503 = vld [vmem:[%s1 + $0x60] sm:$0xf]
      %v2504 = vld [vmem:[%s1 + $0x64] sm:$0xf]
      %v2505 = vld [vmem:[%s1 + $0x68] sm:$0xf]
      %v2506 = vld [vmem:[%s1 + $0x6c] sm:$0xf]
      %v2507 = vld [vmem:[%s1 + $0x70] sm:$0xf]
      %v2508 = vld [vmem:[%s1 + $0x74] sm:$0xf]
      %v2509 = vld [vmem:[%s1 + $0x78] sm:$0xf]
      %v2510 = vld [vmem:[%s1 + $0x7c] sm:$0xf]
      %v2543 = vunpack.c.l.b16 %v2471
      %v2544 = vunpack.c.l.b16 %v2472
      %v2545 = vunpack.c.l.b16 %v2473
      %v2546 = vunpack.c.l.b16 %v2474
      %v2547 = vunpack.c.l.b16 %v2475
      %v2548 = vunpack.c.l.b16 %v2476
      %v2549 = vunpack.c.l.b16 %v2477
      %v2550 = vunpack.c.l.b16 %v2478
      %v2551 = vunpack.c.l.b16 %v2479
      %v2552 = vunpack.c.l.b16 %v2480
      %v2553 = vunpack.c.l.b16 %v2481
      %v2554 = vunpack.c.l.b16 %v2482
      %v2555 = vunpack.c.l.b16 %v2483
      %v2556 = vunpack.c.l.b16 %v2484
      %v2557 = vunpack.c.l.b16 %v2485
      %v2558 = vunpack.c.l.b16 %v2486
      %v2559 = vunpack.c.l.b16 %v2487
      %v2560 = vunpack.c.l.b16 %v2488
      %v2561 = vunpack.c.l.b16 %v2489
      %v2562 = vunpack.c.l.b16 %v2490
      %v2563 = vunpack.c.l.b16 %v2491
      %v2564 = vunpack.c.l.b16 %v2492
      %v2565 = vunpack.c.l.b16 %v2493
      %v2566 = vunpack.c.l.b16 %v2494
      %v2567 = vunpack.c.l.b16 %v2495
      %v2568 = vunpack.c.l.b16 %v2496
      %v2569 = vunpack.c.l.b16 %v2497
      %v2570 = vunpack.c.l.b16 %v2498
      %v2571 = vunpack.c.l.b16 %v2499
      %v2572 = vunpack.c.l.b16 %v2500
      %v2573 = vunpack.c.l.b16 %v2501
      %v2574 = vunpack.c.l.b16 %v2502
      %v2575 = vpack.c.b16 %v2544, %v2543
      %v2576 = vpack.c.b16 %v2546, %v2545
      %v2577 = vpack.c.b16 %v2548, %v2547
      %v2578 = vpack.c.b16 %v2550, %v2549
      %v2579 = vpack.c.b16 %v2552, %v2551
      %v2580 = vpack.c.b16 %v2554, %v2553
      %v2581 = vpack.c.b16 %v2556, %v2555
      %v2582 = vpack.c.b16 %v2558, %v2557
      %v2583 = vpack.c.b16 %v2560, %v2559
      %v2584 = vpack.c.b16 %v2562, %v2561
      %v2585 = vpack.c.b16 %v2564, %v2563
      %v2586 = vpack.c.b16 %v2566, %v2565
      %v2587 = vpack.c.b16 %v2568, %v2567
      %v2588 = vpack.c.b16 %v2570, %v2569
      %v2589 = vpack.c.b16 %v2572, %v2571
      %v2590 = vpack.c.b16 %v2574, %v2573
      %v2599 = vunpack.c.l.b16 %v2503
      %v2600 = vunpack.c.l.b16 %v2504
      %v2601 = vunpack.c.l.b16 %v2505
      %v2602 = vunpack.c.l.b16 %v2506
      %v2603 = vunpack.c.l.b16 %v2507
      %v2604 = vunpack.c.l.b16 %v2508
      %v2605 = vunpack.c.l.b16 %v2509
      %v2606 = vunpack.c.l.b16 %v2510
      %v2607 = vpack.c.b16 %v2600, %v2599
      %v2608 = vpack.c.b16 %v2602, %v2601
      %v2609 = vpack.c.b16 %v2604, %v2603
      %v2610 = vpack.c.b16 %v2606, %v2605
      %v2616 = vsel %vm1464, %v2575, 0
      %v2619 = vsel %vm1464, %v2576, 0
      %v2622 = vsel %vm1464, %v2577, 0
      %v2625 = vsel %vm1464, %v2578, 0
      %v2628 = vsel %vm1464, %v2579, 0
      %v2631 = vsel %vm1464, %v2580, 0
      %v2634 = vsel %vm1464, %v2581, 0
      %v2637 = vsel %vm1464, %v2582, 0
      %v2640 = vsel %vm1464, %v2583, 0
      %v2643 = vsel %vm1464, %v2584, 0
      %v2646 = vsel %vm1464, %v2585, 0
      %v2649 = vsel %vm1464, %v2586, 0
      %v2652 = vsel %vm1464, %v2587, 0
      %v2655 = vsel %vm1464, %v2588, 0
      %v2658 = vsel %vm1464, %v2589, 0
      %v2661 = vsel %vm1464, %v2590, 0
      %2663 = vmatprep.subr.bf16.mxu0 0
      %2664 = vmatpush1.bf16.msra.mxu0 %v2607
      %2665 = vmatprep.subr.bf16.mxu0 0
      %2666 = vmatpush1.bf16.msra.mxu0 %v2608
      %2667 = vmatprep.subr.bf16.mxu0 0
      %2668 = vmatpush1.bf16.msra.mxu0 %v2609
      %2669 = vmatprep.subr.bf16.mxu0 0
      %2670 = vmatpush1.bf16.msra.mxu0 %v2610
      %2671 = vmatprep.subr.bf16.mxu0 0
      %2672 = vmatpush1.bf16.msra.mxu0 0
      %2673 = vmatprep.subr.bf16.mxu0 0
      %2674 = vmatpush1.bf16.msra.mxu0 0
      %2675 = vmatprep.subr.bf16.mxu0 0
      %2676 = vmatpush1.bf16.msra.mxu0 0
      %2677 = vmatprep.subr.bf16.mxu0 0
      %2678 = vmatpush1.bf16.msra.mxu0 0
      %2679 = vmatprep.subr.bf16.mxu0 0
      %2680 = vmatpush1.bf16.msra.mxu0 0
      %2681 = vmatprep.subr.bf16.mxu0 0
      %2682 = vmatpush1.bf16.msra.mxu0 0
      %2683 = vmatprep.subr.bf16.mxu0 0
      %2684 = vmatpush1.bf16.msra.mxu0 0
      %2685 = vmatprep.subr.bf16.mxu0 0
      %2686 = vmatpush1.bf16.msra.mxu0 0
      %2687 = vmatprep.subr.bf16.mxu0 0
      %2688 = vmatpush1.bf16.msra.mxu0 0
      %2689 = vmatprep.subr.bf16.mxu0 0
      %2690 = vmatpush1.bf16.msra.mxu0 0
      %2691 = vmatprep.subr.bf16.mxu0 0
      %2692 = vmatpush1.bf16.msra.mxu0 0
      %2693 = vmatprep.subr.bf16.mxu0 0
      %2694 = vmatpush1.bf16.msra.mxu0 0
      %2695 = vmatprep.mubr.bf16.mxu0 0
      %2696 = vmatmul.mubr.bf16.gmra.mrb[0].mxu0 %v2616
      %v2697 = vpop.f32.mrb[0].mxu0
      %v2698 = vadd.f32 0.0, %v2697
      %v2699 = vpop.f32.mrb[0].mxu0
      %v2700 = vpop.f32.mrb[0].mxu0
      %v2701 = vadd.f32 0.0, %v2700
      %v2702 = vpop.f32.mrb[0].mxu0
      %2703 = vmatprep.mubr.bf16.mxu0 0
      %2704 = vmatmul.mubr.bf16.gmra.mrb[0].mxu0 %v2619
      %v2705 = vpop.f32.mrb[0].mxu0
      %v2706 = vadd.f32 0.0, %v2705
      %v2707 = vpop.f32.mrb[0].mxu0
      %v2708 = vpop.f32.mrb[0].mxu0
      %v2709 = vadd.f32 0.0, %v2708
      %v2710 = vpop.f32.mrb[0].mxu0
      %2711 = vmatprep.mubr.bf16.mxu0 0
      %2712 = vmatmul.mubr.bf16.gmra.mrb[0].mxu0 %v2622
      %v2713 = vpop.f32.mrb[0].mxu0
      %v2714 = vadd.f32 0.0, %v2713
      %v2715 = vpop.f32.mrb[0].mxu0
      %v2716 = vpop.f32.mrb[0].mxu0
      %v2717 = vadd.f32 0.0, %v2716
      %v2718 = vpop.f32.mrb[0].mxu0
      %2719 = vmatprep.mubr.bf16.mxu0 0
      %2720 = vmatmul.mubr.bf16.gmra.mrb[0].mxu0 %v2625
      %v2721 = vpop.f32.mrb[0].mxu0
      %v2722 = vadd.f32 0.0, %v2721
      %v2723 = vpop.f32.mrb[0].mxu0
      %v2724 = vpop.f32.mrb[0].mxu0
      %v2725 = vadd.f32 0.0, %v2724
      %v2726 = vpop.f32.mrb[0].mxu0
      %2727 = vmatprep.mubr.bf16.mxu0 0
      %2728 = vmatmul.mubr.bf16.gmra.mrb[0].mxu0 %v2628
      %v2729 = vpop.f32.mrb[0].mxu0
      %v2730 = vadd.f32 0.0, %v2729
      %v2731 = vpop.f32.mrb[0].mxu0
      %v2732 = vpop.f32.mrb[0].mxu0
      %v2733 = vadd.f32 0.0, %v2732
      %v2734 = vpop.f32.mrb[0].mxu0
      %2735 = vmatprep.mubr.bf16.mxu0 0
      %2736 = vmatmul.mubr.bf16.gmra.mrb[0].mxu0 %v2631
      %v2737 = vpop.f32.mrb[0].mxu0
      %v2738 = vadd.f32 0.0, %v2737
      %v2739 = vpop.f32.mrb[0].mxu0
      %v2740 = vpop.f32.mrb[0].mxu0
      %v2741 = vadd.f32 0.0, %v2740
      %v2742 = vpop.f32.mrb[0].mxu0
      %2743 = vmatprep.mubr.bf16.mxu0 0
      %2744 = vmatmul.mubr.bf16.gmra.mrb[0].mxu0 %v2634
      %v2745 = vpop.f32.mrb[0].mxu0
      %v2746 = vadd.f32 0.0, %v2745
      %v2747 = vpop.f32.mrb[0].mxu0
      %v2748 = vpop.f32.mrb[0].mxu0
      %v2749 = vadd.f32 0.0, %v2748
      %v2750 = vpop.f32.mrb[0].mxu0
      %2751 = vmatprep.mubr.bf16.mxu0 0
      %2752 = vmatmul.mubr.bf16.gmra.mrb[0].mxu0 %v2637
      %v2753 = vpop.f32.mrb[0].mxu0
      %v2754 = vadd.f32 0.0, %v2753
      %v2755 = vpop.f32.mrb[0].mxu0
      %v2756 = vpop.f32.mrb[0].mxu0
      %v2757 = vadd.f32 0.0, %v2756
      %v2758 = vpop.f32.mrb[0].mxu0
      %2759 = vmatprep.mubr.bf16.mxu0 0
      %2760 = vmatmul.mubr.bf16.gmra.mrb[0].mxu0 %v2640
      %v2761 = vpop.f32.mrb[0].mxu0
      %v2762 = vadd.f32 0.0, %v2761
      %v2763 = vpop.f32.mrb[0].mxu0
      %v2764 = vpop.f32.mrb[0].mxu0
      %v2765 = vadd.f32 0.0, %v2764
      %v2766 = vpop.f32.mrb[0].mxu0
      %2767 = vmatprep.mubr.bf16.mxu0 0
      %2768 = vmatmul.mubr.bf16.gmra.mrb[0].mxu0 %v2643
      %v2769 = vpop.f32.mrb[0].mxu0
      %v2770 = vadd.f32 0.0, %v2769
      %v2771 = vpop.f32.mrb[0].mxu0
      %v2772 = vpop.f32.mrb[0].mxu0
      %v2773 = vadd.f32 0.0, %v2772
      %v2774 = vpop.f32.mrb[0].mxu0
      %2775 = vmatprep.mubr.bf16.mxu0 0
      %2776 = vmatmul.mubr.bf16.gmra.mrb[0].mxu0 %v2646
      %v2777 = vpop.f32.mrb[0].mxu0
      %v2778 = vadd.f32 0.0, %v2777
      %v2779 = vpop.f32.mrb[0].mxu0
      %v2780 = vpop.f32.mrb[0].mxu0
      %v2781 = vadd.f32 0.0, %v2780
      %v2782 = vpop.f32.mrb[0].mxu0
      %2783 = vmatprep.mubr.bf16.mxu0 0
      %2784 = vmatmul.mubr.bf16.gmra.mrb[0].mxu0 %v2649
      %v2785 = vpop.f32.mrb[0].mxu0
      %v2786 = vadd.f32 0.0, %v2785
      %v2787 = vpop.f32.mrb[0].mxu0
      %v2788 = vpop.f32.mrb[0].mxu0
      %v2789 = vadd.f32 0.0, %v2788
      %v2790 = vpop.f32.mrb[0].mxu0
      %2791 = vmatprep.mubr.bf16.mxu0 0
      %2792 = vmatmul.mubr.bf16.gmra.mrb[0].mxu0 %v2652
      %v2793 = vpop.f32.mrb[0].mxu0
      %v2794 = vadd.f32 0.0, %v2793
      %v2795 = vpop.f32.mrb[0].mxu0
      %v2796 = vpop.f32.mrb[0].mxu0
      %v2797 = vadd.f32 0.0, %v2796
      %v2798 = vpop.f32.mrb[0].mxu0
      %2799 = vmatprep.mubr.bf16.mxu0 0
      %2800 = vmatmul.mubr.bf16.gmra.mrb[0].mxu0 %v2655
      %v2801 = vpop.f32.mrb[0].mxu0
      %v2802 = vadd.f32 0.0, %v2801
      %v2803 = vpop.f32.mrb[0].mxu0
      %v2804 = vpop.f32.mrb[0].mxu0
      %v2805 = vadd.f32 0.0, %v2804
      %v2806 = vpop.f32.mrb[0].mxu0
      %2807 = vmatprep.mubr.bf16.mxu0 0
      %2808 = vmatmul.mubr.bf16.gmra.mrb[0].mxu0 %v2658
      %v2809 = vpop.f32.mrb[0].mxu0
      %v2810 = vadd.f32 0.0, %v2809
      %v2811 = vpop.f32.mrb[0].mxu0
      %v2812 = vpop.f32.mrb[0].mxu0
      %v2813 = vadd.f32 0.0, %v2812
      %v2814 = vpop.f32.mrb[0].mxu0
      %2815 = vmatprep.mubr.bf16.mxu0 0
      %2816 = vmatmul.mubr.bf16.gmra.mrb[0].mxu0 %v2661
      %v2817 = vpop.f32.mrb[0].mxu0
      %v2818 = vadd.f32 0.0, %v2817
      %v2819 = vpop.f32.mrb[0].mxu0
      %v2820 = vpop.f32.mrb[0].mxu0
      %v2821 = vadd.f32 0.0, %v2820
      %v2822 = vpop.f32.mrb[0].mxu0
      %2823 = vdwg.mxu0
      %v2824 = vadd.f32 %v2439, %v2698
      %v2825 = vadd.f32 %v2440, %v2701
      %v2826 = vadd.f32 %v2441, %v2706
      %v2827 = vadd.f32 %v2442, %v2709
      %v2828 = vadd.f32 %v2443, %v2714
      %v2829 = vadd.f32 %v2444, %v2717
      %v2830 = vadd.f32 %v2445, %v2722
      %v2831 = vadd.f32 %v2446, %v2725
      %v2832 = vadd.f32 %v2447, %v2730
      %v2833 = vadd.f32 %v2448, %v2733
      %v2834 = vadd.f32 %v2449, %v2738
      %v2835 = vadd.f32 %v2450, %v2741
      %v2836 = vadd.f32 %v2451, %v2746
      %v2837 = vadd.f32 %v2452, %v2749
      %v2838 = vadd.f32 %v2453, %v2754
      %v2839 = vadd.f32 %v2454, %v2757
      %v2840 = vadd.f32 %v2455, %v2762
      %v2841 = vadd.f32 %v2456, %v2765
      %v2842 = vadd.f32 %v2457, %v2770
      %v2843 = vadd.f32 %v2458, %v2773
      %v2844 = vadd.f32 %v2459, %v2778
      %v2845 = vadd.f32 %v2460, %v2781
      %v2846 = vadd.f32 %v2461, %v2786
      %v2847 = vadd.f32 %v2462, %v2789
      %v2848 = vadd.f32 %v2463, %v2794
      %v2849 = vadd.f32 %v2464, %v2797
      %v2850 = vadd.f32 %v2465, %v2802
      %v2851 = vadd.f32 %v2466, %v2805
      %v2852 = vadd.f32 %v2467, %v2810
      %v2853 = vadd.f32 %v2468, %v2813
      %v2854 = vadd.f32 %v2469, %v2818
      %v2855 = vadd.f32 %v2470, %v2821
      %v2856 = vld [vmem:[%s883] sm:$0xf]
      %v2857 = vld [vmem:[%s883 + $0x4] sm:$0xf]
      %v2858 = vld [vmem:[%s883 + $0x8] sm:$0x1]
      %v2859 = vld [vmem:[%s883 + $0xc] sm:$0xf]
      %v2860 = vld [vmem:[%s883 + $0x10] sm:$0xf]
      %v2861 = vld [vmem:[%s883 + $0x14] sm:$0x1]
      %v2862 = vld [vmem:[%s883 + $0x18] sm:$0xf]
      %v2863 = vld [vmem:[%s883 + $0x1c] sm:$0xf]
      %v2864 = vld [vmem:[%s883 + $0x20] sm:$0x1]
      %v2865 = vld [vmem:[%s883 + $0x24] sm:$0xf]
      %v2866 = vld [vmem:[%s883 + $0x28] sm:$0xf]
      %v2867 = vld [vmem:[%s883 + $0x2c] sm:$0x1]
      %v2868 = vld [vmem:[%s883 + $0x30] sm:$0xf]
      %v2869 = vld [vmem:[%s883 + $0x34] sm:$0xf]
      %v2870 = vld [vmem:[%s883 + $0x38] sm:$0x1]
      %v2871 = vld [vmem:[%s883 + $0x3c] sm:$0xf]
      %v2872 = vld [vmem:[%s883 + $0x40] sm:$0xf]
      %v2873 = vld [vmem:[%s883 + $0x44] sm:$0x1]
      %v2874 = vld [vmem:[%s883 + $0x48] sm:$0xf]
      %v2875 = vld [vmem:[%s883 + $0x4c] sm:$0xf]
      %v2876 = vld [vmem:[%s883 + $0x50] sm:$0x1]
      %v2877 = vld [vmem:[%s883 + $0x54] sm:$0xf]
      %v2878 = vld [vmem:[%s883 + $0x58] sm:$0xf]
      %v2879 = vld [vmem:[%s883 + $0x5c] sm:$0x1]
      %v2880 = vld [vmem:[%s883 + $0x60] sm:$0xf]
      %v2881 = vld [vmem:[%s883 + $0x64] sm:$0xf]
      %v2882 = vld [vmem:[%s883 + $0x68] sm:$0x1]
      %v2883 = vld [vmem:[%s883 + $0x6c] sm:$0xf]
      %v2884 = vld [vmem:[%s883 + $0x70] sm:$0xf]
      %v2885 = vld [vmem:[%s883 + $0x74] sm:$0x1]
      %v2886 = vld [vmem:[%s883 + $0x78] sm:$0xf]
      %v2887 = vld [vmem:[%s883 + $0x7c] sm:$0xf]
      %v2888 = vld [vmem:[%s883 + $0x80] sm:$0x1]
      %v2889 = vld [vmem:[%s883 + $0x84] sm:$0xf]
      %v2890 = vld [vmem:[%s883 + $0x88] sm:$0xf]
      %v2891 = vld [vmem:[%s883 + $0x8c] sm:$0x1]
      %v2892 = vld [vmem:[%s883 + $0x90] sm:$0xf]
      %v2893 = vld [vmem:[%s883 + $0x94] sm:$0xf]
      %v2894 = vld [vmem:[%s883 + $0x98] sm:$0x1]
      %v2895 = vld [vmem:[%s883 + $0x9c] sm:$0xf]
      %v2896 = vld [vmem:[%s883 + $0xa0] sm:$0xf]
      %v2897 = vld [vmem:[%s883 + $0xa4] sm:$0x1]
      %v2898 = vld [vmem:[%s883 + $0xa8] sm:$0xf]
      %v2899 = vld [vmem:[%s883 + $0xac] sm:$0xf]
      %v2900 = vld [vmem:[%s883 + $0xb0] sm:$0x1]
      %v2901 = vld [vmem:[%s883 + $0xb4] sm:$0xf]
      %v2902 = vld [vmem:[%s883 + $0xb8] sm:$0xf]
      %v2903 = vld [vmem:[%s883 + $0xbc] sm:$0x1]
      %v2905 = vshrl.u32 %v2856, 16
      %v2907 = vrot.slane %v2905, 4
      %v2908 = vshll.u32 %v2856, 16
      %v2910 = vrot.slane %v2908, 5
      %v2911 = vor.u32 %v2907, %v2910
      %v2912 = vrot.slane %v2911, 4
      %v2914 = vshll.u32 %v2857, 16
      %v2916 = vrot.slane %v2914, 5
      %v2917 = vsel %vm999, %v2912, %v2916
      %v2918 = vshrl.u32 %v2857, 16
      %v2920 = vrot.slane %v2918, 4
      %v2921 = vor.u32 %v2920, %v2916
      %v2922 = vrot.slane %v2921, 4
      %v2924 = vshll.u32 %v2858, 16
      %v2926 = vrot.slane %v2924, 5
      %v2927 = vsel %vm999, %v2922, %v2926
      %v2929 = vshrl.u32 %v2859, 16
      %v2931 = vrot.slane %v2929, 4
      %v2932 = vshll.u32 %v2859, 16
      %v2934 = vrot.slane %v2932, 5
      %v2935 = vor.u32 %v2931, %v2934
      %v2936 = vrot.slane %v2935, 4
      %v2938 = vshll.u32 %v2860, 16
      %v2940 = vrot.slane %v2938, 5
      %v2941 = vsel %vm999, %v2936, %v2940
      %v2942 = vshrl.u32 %v2860, 16
      %v2944 = vrot.slane %v2942, 4
      %v2945 = vor.u32 %v2944, %v2940
      %v2946 = vrot.slane %v2945, 4
      %v2948 = vshll.u32 %v2861, 16
      %v2950 = vrot.slane %v2948, 5
      %v2951 = vsel %vm999, %v2946, %v2950
      %v2953 = vshrl.u32 %v2862, 16
      %v2955 = vrot.slane %v2953, 4
      %v2956 = vshll.u32 %v2862, 16
      %v2958 = vrot.slane %v2956, 5
      %v2959 = vor.u32 %v2955, %v2958
      %v2960 = vrot.slane %v2959, 4
      %v2962 = vshll.u32 %v2863, 16
      %v2964 = vrot.slane %v2962, 5
      %v2965 = vsel %vm999, %v2960, %v2964
      %v2966 = vshrl.u32 %v2863, 16
      %v2968 = vrot.slane %v2966, 4
      %v2969 = vor.u32 %v2968, %v2964
      %v2970 = vrot.slane %v2969, 4
      %v2972 = vshll.u32 %v2864, 16
      %v2974 = vrot.slane %v2972, 5
      %v2975 = vsel %vm999, %v2970, %v2974
      %v2977 = vshrl.u32 %v2865, 16
      %v2979 = vrot.slane %v2977, 4
      %v2980 = vshll.u32 %v2865, 16
      %v2982 = vrot.slane %v2980, 5
      %v2983 = vor.u32 %v2979, %v2982
      %v2984 = vrot.slane %v2983, 4
      %v2986 = vshll.u32 %v2866, 16
      %v2988 = vrot.slane %v2986, 5
      %v2989 = vsel %vm999, %v2984, %v2988
      %v2990 = vshrl.u32 %v2866, 16
      %v2992 = vrot.slane %v2990, 4
      %v2993 = vor.u32 %v2992, %v2988
      %v2994 = vrot.slane %v2993, 4
      %v2996 = vshll.u32 %v2867, 16
      %v2998 = vrot.slane %v2996, 5
      %v2999 = vsel %vm999, %v2994, %v2998
      %v3001 = vshrl.u32 %v2868, 16
      %v3003 = vrot.slane %v3001, 4
      %v3004 = vshll.u32 %v2868, 16
      %v3006 = vrot.slane %v3004, 5
      %v3007 = vor.u32 %v3003, %v3006
      %v3008 = vrot.slane %v3007, 4
      %v3010 = vshll.u32 %v2869, 16
      %v3012 = vrot.slane %v3010, 5
      %v3013 = vsel %vm999, %v3008, %v3012
      %v3014 = vshrl.u32 %v2869, 16
      %v3016 = vrot.slane %v3014, 4
      %v3017 = vor.u32 %v3016, %v3012
      %v3018 = vrot.slane %v3017, 4
      %v3020 = vshll.u32 %v2870, 16
      %v3022 = vrot.slane %v3020, 5
      %v3023 = vsel %vm999, %v3018, %v3022
      %v3025 = vshrl.u32 %v2871, 16
      %v3027 = vrot.slane %v3025, 4
      %v3028 = vshll.u32 %v2871, 16
      %v3030 = vrot.slane %v3028, 5
      %v3031 = vor.u32 %v3027, %v3030
      %v3032 = vrot.slane %v3031, 4
      %v3034 = vshll.u32 %v2872, 16
      %v3036 = vrot.slane %v3034, 5
      %v3037 = vsel %vm999, %v3032, %v3036
      %v3038 = vshrl.u32 %v2872, 16
      %v3040 = vrot.slane %v3038, 4
      %v3041 = vor.u32 %v3040, %v3036
      %v3042 = vrot.slane %v3041, 4
      %v3044 = vshll.u32 %v2873, 16
      %v3046 = vrot.slane %v3044, 5
      %v3047 = vsel %vm999, %v3042, %v3046
      %v3049 = vshrl.u32 %v2874, 16
      %v3051 = vrot.slane %v3049, 4
      %v3052 = vshll.u32 %v2874, 16
      %v3054 = vrot.slane %v3052, 5
      %v3055 = vor.u32 %v3051, %v3054
      %v3056 = vrot.slane %v3055, 4
      %v3058 = vshll.u32 %v2875, 16
      %v3060 = vrot.slane %v3058, 5
      %v3061 = vsel %vm999, %v3056, %v3060
      %v3062 = vshrl.u32 %v2875, 16
      %v3064 = vrot.slane %v3062, 4
      %v3065 = vor.u32 %v3064, %v3060
      %v3066 = vrot.slane %v3065, 4
      %v3068 = vshll.u32 %v2876, 16
      %v3070 = vrot.slane %v3068, 5
      %v3071 = vsel %vm999, %v3066, %v3070
      %v3073 = vshrl.u32 %v2877, 16
      %v3075 = vrot.slane %v3073, 4
      %v3076 = vshll.u32 %v2877, 16
      %v3078 = vrot.slane %v3076, 5
      %v3079 = vor.u32 %v3075, %v3078
      %v3080 = vrot.slane %v3079, 4
      %v3082 = vshll.u32 %v2878, 16
      %v3084 = vrot.slane %v3082, 5
      %v3085 = vsel %vm999, %v3080, %v3084
      %v3086 = vshrl.u32 %v2878, 16
      %v3088 = vrot.slane %v3086, 4
      %v3089 = vor.u32 %v3088, %v3084
      %v3090 = vrot.slane %v3089, 4
      %v3092 = vshll.u32 %v2879, 16
      %v3094 = vrot.slane %v3092, 5
      %v3095 = vsel %vm999, %v3090, %v3094
      %v3097 = vshrl.u32 %v2880, 16
      %v3099 = vrot.slane %v3097, 4
      %v3100 = vshll.u32 %v2880, 16
      %v3102 = vrot.slane %v3100, 5
      %v3103 = vor.u32 %v3099, %v3102
      %v3104 = vrot.slane %v3103, 4
      %v3106 = vshll.u32 %v2881, 16
      %v3108 = vrot.slane %v3106, 5
      %v3109 = vsel %vm999, %v3104, %v3108
      %v3110 = vshrl.u32 %v2881, 16
      %v3112 = vrot.slane %v3110, 4
      %v3113 = vor.u32 %v3112, %v3108
      %v3114 = vrot.slane %v3113, 4
      %v3116 = vshll.u32 %v2882, 16
      %v3118 = vrot.slane %v3116, 5
      %v3119 = vsel %vm999, %v3114, %v3118
      %v3121 = vshrl.u32 %v2883, 16
      %v3123 = vrot.slane %v3121, 4
      %v3124 = vshll.u32 %v2883, 16
      %v3126 = vrot.slane %v3124, 5
      %v3127 = vor.u32 %v3123, %v3126
      %v3128 = vrot.slane %v3127, 4
      %v3130 = vshll.u32 %v2884, 16
      %v3132 = vrot.slane %v3130, 5
      %v3133 = vsel %vm999, %v3128, %v3132
      %v3134 = vshrl.u32 %v2884, 16
      %v3136 = vrot.slane %v3134, 4
      %v3137 = vor.u32 %v3136, %v3132
      %v3138 = vrot.slane %v3137, 4
      %v3140 = vshll.u32 %v2885, 16
      %v3142 = vrot.slane %v3140, 5
      %v3143 = vsel %vm999, %v3138, %v3142
      %v3145 = vshrl.u32 %v2886, 16
      %v3147 = vrot.slane %v3145, 4
      %v3148 = vshll.u32 %v2886, 16
      %v3150 = vrot.slane %v3148, 5
      %v3151 = vor.u32 %v3147, %v3150
      %v3152 = vrot.slane %v3151, 4
      %v3154 = vshll.u32 %v2887, 16
      %v3156 = vrot.slane %v3154, 5
      %v3157 = vsel %vm999, %v3152, %v3156
      %v3158 = vshrl.u32 %v2887, 16
      %v3160 = vrot.slane %v3158, 4
      %v3161 = vor.u32 %v3160, %v3156
      %v3162 = vrot.slane %v3161, 4
      %v3164 = vshll.u32 %v2888, 16
      %v3166 = vrot.slane %v3164, 5
      %v3167 = vsel %vm999, %v3162, %v3166
      %v3169 = vshrl.u32 %v2889, 16
      %v3171 = vrot.slane %v3169, 4
      %v3172 = vshll.u32 %v2889, 16
      %v3174 = vrot.slane %v3172, 5
      %v3175 = vor.u32 %v3171, %v3174
      %v3176 = vrot.slane %v3175, 4
      %v3178 = vshll.u32 %v2890, 16
      %v3180 = vrot.slane %v3178, 5
      %v3181 = vsel %vm999, %v3176, %v3180
      %v3182 = vshrl.u32 %v2890, 16
      %v3184 = vrot.slane %v3182, 4
      %v3185 = vor.u32 %v3184, %v3180
      %v3186 = vrot.slane %v3185, 4
      %v3188 = vshll.u32 %v2891, 16
      %v3190 = vrot.slane %v3188, 5
      %v3191 = vsel %vm999, %v3186, %v3190
      %v3193 = vshrl.u32 %v2892, 16
      %v3195 = vrot.slane %v3193, 4
      %v3196 = vshll.u32 %v2892, 16
      %v3198 = vrot.slane %v3196, 5
      %v3199 = vor.u32 %v3195, %v3198
      %v3200 = vrot.slane %v3199, 4
      %v3202 = vshll.u32 %v2893, 16
      %v3204 = vrot.slane %v3202, 5
      %v3205 = vsel %vm999, %v3200, %v3204
      %v3206 = vshrl.u32 %v2893, 16
      %v3208 = vrot.slane %v3206, 4
      %v3209 = vor.u32 %v3208, %v3204
      %v3210 = vrot.slane %v3209, 4
      %v3212 = vshll.u32 %v2894, 16
      %v3214 = vrot.slane %v3212, 5
      %v3215 = vsel %vm999, %v3210, %v3214
      %v3217 = vshrl.u32 %v2895, 16
      %v3219 = vrot.slane %v3217, 4
      %v3220 = vshll.u32 %v2895, 16
      %v3222 = vrot.slane %v3220, 5
      %v3223 = vor.u32 %v3219, %v3222
      %v3224 = vrot.slane %v3223, 4
      %v3226 = vshll.u32 %v2896, 16
      %v3228 = vrot.slane %v3226, 5
      %v3229 = vsel %vm999, %v3224, %v3228
      %v3230 = vshrl.u32 %v2896, 16
      %v3232 = vrot.slane %v3230, 4
      %v3233 = vor.u32 %v3232, %v3228
      %v3234 = vrot.slane %v3233, 4
      %v3236 = vshll.u32 %v2897, 16
      %v3238 = vrot.slane %v3236, 5
      %v3239 = vsel %vm999, %v3234, %v3238
      %v3241 = vshrl.u32 %v2898, 16
      %v3243 = vrot.slane %v3241, 4
      %v3244 = vshll.u32 %v2898, 16
      %v3246 = vrot.slane %v3244, 5
      %v3247 = vor.u32 %v3243, %v3246
      %v3248 = vrot.slane %v3247, 4
      %v3250 = vshll.u32 %v2899, 16
      %v3252 = vrot.slane %v3250, 5
      %v3253 = vsel %vm999, %v3248, %v3252
      %v3254 = vshrl.u32 %v2899, 16
      %v3256 = vrot.slane %v3254, 4
      %v3257 = vor.u32 %v3256, %v3252
      %v3258 = vrot.slane %v3257, 4
      %v3260 = vshll.u32 %v2900, 16
      %v3262 = vrot.slane %v3260, 5
      %v3263 = vsel %vm999, %v3258, %v3262
      %v3265 = vshrl.u32 %v2901, 16
      %v3267 = vrot.slane %v3265, 4
      %v3268 = vshll.u32 %v2901, 16
      %v3270 = vrot.slane %v3268, 5
      %v3271 = vor.u32 %v3267, %v3270
      %v3272 = vrot.slane %v3271, 4
      %v3274 = vshll.u32 %v2902, 16
      %v3276 = vrot.slane %v3274, 5
      %v3277 = vsel %vm999, %v3272, %v3276
      %v3278 = vshrl.u32 %v2902, 16
      %v3280 = vrot.slane %v3278, 4
      %v3281 = vor.u32 %v3280, %v3276
      %v3282 = vrot.slane %v3281, 4
      %v3284 = vshll.u32 %v2903, 16
      %v3286 = vrot.slane %v3284, 5
      %v3287 = vsel %vm999, %v3282, %v3286
      %v3288 = vld [vmem:[%s1 + $0x80] sm:$0xf]
      %v3289 = vld [vmem:[%s1 + $0x84] sm:$0xf]
      %v3290 = vld [vmem:[%s1 + $0x88] sm:$0xf]
      %v3291 = vld [vmem:[%s1 + $0x8c] sm:$0xf]
      %v3292 = vld [vmem:[%s1 + $0x90] sm:$0xf]
      %v3293 = vld [vmem:[%s1 + $0x94] sm:$0xf]
      %v3294 = vld [vmem:[%s1 + $0x98] sm:$0xf]
      %v3295 = vld [vmem:[%s1 + $0x9c] sm:$0xf]
      %v3296 = vunpack.c.l.b16 %v2917
      %v3297 = vunpack.c.l.b16 %v2927
      %v3298 = vunpack.c.l.b16 %v2941
      %v3299 = vunpack.c.l.b16 %v2951
      %v3300 = vunpack.c.l.b16 %v2965
      %v3301 = vunpack.c.l.b16 %v2975
      %v3302 = vunpack.c.l.b16 %v2989
      %v3303 = vunpack.c.l.b16 %v2999
      %v3304 = vunpack.c.l.b16 %v3013
      %v3305 = vunpack.c.l.b16 %v3023
      %v3306 = vunpack.c.l.b16 %v3037
      %v3307 = vunpack.c.l.b16 %v3047
      %v3308 = vunpack.c.l.b16 %v3061
      %v3309 = vunpack.c.l.b16 %v3071
      %v3310 = vunpack.c.l.b16 %v3085
      %v3311 = vunpack.c.l.b16 %v3095
      %v3312 = vunpack.c.l.b16 %v3109
      %v3313 = vunpack.c.l.b16 %v3119
      %v3314 = vunpack.c.l.b16 %v3133
      %v3315 = vunpack.c.l.b16 %v3143
      %v3316 = vunpack.c.l.b16 %v3157
      %v3317 = vunpack.c.l.b16 %v3167
      %v3318 = vunpack.c.l.b16 %v3181
      %v3319 = vunpack.c.l.b16 %v3191
      %v3320 = vunpack.c.l.b16 %v3205
      %v3321 = vunpack.c.l.b16 %v3215
      %v3322 = vunpack.c.l.b16 %v3229
      %v3323 = vunpack.c.l.b16 %v3239
      %v3324 = vunpack.c.l.b16 %v3253
      %v3325 = vunpack.c.l.b16 %v3263
      %v3326 = vunpack.c.l.b16 %v3277
      %v3327 = vunpack.c.l.b16 %v3287
      %v3328 = vpack.c.b16 %v3297, %v3296
      %v3329 = vpack.c.b16 %v3299, %v3298
      %v3330 = vpack.c.b16 %v3301, %v3300
      %v3331 = vpack.c.b16 %v3303, %v3302
      %v3332 = vpack.c.b16 %v3305, %v3304
      %v3333 = vpack.c.b16 %v3307, %v3306
      %v3334 = vpack.c.b16 %v3309, %v3308
      %v3335 = vpack.c.b16 %v3311, %v3310
      %v3336 = vpack.c.b16 %v3313, %v3312
      %v3337 = vpack.c.b16 %v3315, %v3314
      %v3338 = vpack.c.b16 %v3317, %v3316
      %v3339 = vpack.c.b16 %v3319, %v3318
      %v3340 = vpack.c.b16 %v3321, %v3320
      %v3341 = vpack.c.b16 %v3323, %v3322
      %v3342 = vpack.c.b16 %v3325, %v3324
      %v3343 = vpack.c.b16 %v3327, %v3326
      %v3352 = vunpack.c.l.b16 %v3288
      %v3353 = vunpack.c.l.b16 %v3289
      %v3354 = vunpack.c.l.b16 %v3290
      %v3355 = vunpack.c.l.b16 %v3291
      %v3356 = vunpack.c.l.b16 %v3292
      %v3357 = vunpack.c.l.b16 %v3293
      %v3358 = vunpack.c.l.b16 %v3294
      %v3359 = vunpack.c.l.b16 %v3295
      %v3360 = vpack.c.b16 %v3353, %v3352
      %v3361 = vpack.c.b16 %v3355, %v3354
      %v3362 = vpack.c.b16 %v3357, %v3356
      %v3363 = vpack.c.b16 %v3359, %v3358
      %v3369 = vsel %vm1464, %v3328, 0
      %v3372 = vsel %vm1464, %v3329, 0
      %v3375 = vsel %vm1464, %v3330, 0
      %v3378 = vsel %vm1464, %v3331, 0
      %v3381 = vsel %vm1464, %v3332, 0
      %v3384 = vsel %vm1464, %v3333, 0
      %v3387 = vsel %vm1464, %v3334, 0
      %v3390 = vsel %vm1464, %v3335, 0
      %v3393 = vsel %vm1464, %v3336, 0
      %v3396 = vsel %vm1464, %v3337, 0
      %v3399 = vsel %vm1464, %v3338, 0
      %v3402 = vsel %vm1464, %v3339, 0
      %v3405 = vsel %vm1464, %v3340, 0
      %v3408 = vsel %vm1464, %v3341, 0
      %v3411 = vsel %vm1464, %v3342, 0
      %v3414 = vsel %vm1464, %v3343, 0
      %3416 = vmatprep.subr.bf16.mxu0 0
      %3417 = vmatpush1.bf16.msra.mxu0 %v3360
      %3418 = vmatprep.subr.bf16.mxu0 0
      %3419 = vmatpush1.bf16.msra.mxu0 %v3361
      %3420 = vmatprep.subr.bf16.mxu0 0
      %3421 = vmatpush1.bf16.msra.mxu0 %v3362
      %3422 = vmatprep.subr.bf16.mxu0 0
      %3423 = vmatpush1.bf16.msra.mxu0 %v3363
      %3424 = vmatprep.subr.bf16.mxu0 0
      %3425 = vmatpush1.bf16.msra.mxu0 0
      %3426 = vmatprep.subr.bf16.mxu0 0
      %3427 = vmatpush1.bf16.msra.mxu0 0
      %3428 = vmatprep.subr.bf16.mxu0 0
      %3429 = vmatpush1.bf16.msra.mxu0 0
      %3430 = vmatprep.subr.bf16.mxu0 0
      %3431 = vmatpush1.bf16.msra.mxu0 0
      %3432 = vmatprep.subr.bf16.mxu0 0
      %3433 = vmatpush1.bf16.msra.mxu0 0
      %3434 = vmatprep.subr.bf16.mxu0 0
      %3435 = vmatpush1.bf16.msra.mxu0 0
      %3436 = vmatprep.subr.bf16.mxu0 0
      %3437 = vmatpush1.bf16.msra.mxu0 0
      %3438 = vmatprep.subr.bf16.mxu0 0
      %3439 = vmatpush1.bf16.msra.mxu0 0
      %3440 = vmatprep.subr.bf16.mxu0 0
      %3441 = vmatpush1.bf16.msra.mxu0 0
      %3442 = vmatprep.subr.bf16.mxu0 0
      %3443 = vmatpush1.bf16.msra.mxu0 0
      %3444 = vmatprep.subr.bf16.mxu0 0
      %3445 = vmatpush1.bf16.msra.mxu0 0
      %3446 = vmatprep.subr.bf16.mxu0 0
      %3447 = vmatpush1.bf16.msra.mxu0 0
      %3448 = vmatprep.mubr.bf16.mxu0 0
      %3449 = vmatmul.mubr.bf16.gmra.mrb[0].mxu0 %v3369
      %v3450 = vpop.f32.mrb[0].mxu0
      %v3451 = vadd.f32 0.0, %v3450
      %v3452 = vpop.f32.mrb[0].mxu0
      %v3453 = vpop.f32.mrb[0].mxu0
      %v3454 = vadd.f32 0.0, %v3453
      %v3455 = vpop.f32.mrb[0].mxu0
      %3456 = vmatprep.mubr.bf16.mxu0 0
      %3457 = vmatmul.mubr.bf16.gmra.mrb[0].mxu0 %v3372
      %v3458 = vpop.f32.mrb[0].mxu0
      %v3459 = vadd.f32 0.0, %v3458
      %v3460 = vpop.f32.mrb[0].mxu0
      %v3461 = vpop.f32.mrb[0].mxu0
      %v3462 = vadd.f32 0.0, %v3461
      %v3463 = vpop.f32.mrb[0].mxu0
      %3464 = vmatprep.mubr.bf16.mxu0 0
      %3465 = vmatmul.mubr.bf16.gmra.mrb[0].mxu0 %v3375
      %v3466 = vpop.f32.mrb[0].mxu0
      %v3467 = vadd.f32 0.0, %v3466
      %v3468 = vpop.f32.mrb[0].mxu0
      %v3469 = vpop.f32.mrb[0].mxu0
      %v3470 = vadd.f32 0.0, %v3469
      %v3471 = vpop.f32.mrb[0].mxu0
      %3472 = vmatprep.mubr.bf16.mxu0 0
      %3473 = vmatmul.mubr.bf16.gmra.mrb[0].mxu0 %v3378
      %v3474 = vpop.f32.mrb[0].mxu0
      %v3475 = vadd.f32 0.0, %v3474
      %v3476 = vpop.f32.mrb[0].mxu0
      %v3477 = vpop.f32.mrb[0].mxu0
      %v3478 = vadd.f32 0.0, %v3477
      %v3479 = vpop.f32.mrb[0].mxu0
      %3480 = vmatprep.mubr.bf16.mxu0 0
      %3481 = vmatmul.mubr.bf16.gmra.mrb[0].mxu0 %v3381
      %v3482 = vpop.f32.mrb[0].mxu0
      %v3483 = vadd.f32 0.0, %v3482
      %v3484 = vpop.f32.mrb[0].mxu0
      %v3485 = vpop.f32.mrb[0].mxu0
      %v3486 = vadd.f32 0.0, %v3485
      %v3487 = vpop.f32.mrb[0].mxu0
      %3488 = vmatprep.mubr.bf16.mxu0 0
      %3489 = vmatmul.mubr.bf16.gmra.mrb[0].mxu0 %v3384
      %v3490 = vpop.f32.mrb[0].mxu0
      %v3491 = vadd.f32 0.0, %v3490
      %v3492 = vpop.f32.mrb[0].mxu0
      %v3493 = vpop.f32.mrb[0].mxu0
      %v3494 = vadd.f32 0.0, %v3493
      %v3495 = vpop.f32.mrb[0].mxu0
      %3496 = vmatprep.mubr.bf16.mxu0 0
      %3497 = vmatmul.mubr.bf16.gmra.mrb[0].mxu0 %v3387
      %v3498 = vpop.f32.mrb[0].mxu0
      %v3499 = vadd.f32 0.0, %v3498
      %v3500 = vpop.f32.mrb[0].mxu0
      %v3501 = vpop.f32.mrb[0].mxu0
      %v3502 = vadd.f32 0.0, %v3501
      %v3503 = vpop.f32.mrb[0].mxu0
      %3504 = vmatprep.mubr.bf16.mxu0 0
      %3505 = vmatmul.mubr.bf16.gmra.mrb[0].mxu0 %v3390
      %v3506 = vpop.f32.mrb[0].mxu0
      %v3507 = vadd.f32 0.0, %v3506
      %v3508 = vpop.f32.mrb[0].mxu0
      %v3509 = vpop.f32.mrb[0].mxu0
      %v3510 = vadd.f32 0.0, %v3509
      %v3511 = vpop.f32.mrb[0].mxu0
      %3512 = vmatprep.mubr.bf16.mxu0 0
      %3513 = vmatmul.mubr.bf16.gmra.mrb[0].mxu0 %v3393
      %v3514 = vpop.f32.mrb[0].mxu0
      %v3515 = vadd.f32 0.0, %v3514
      %v3516 = vpop.f32.mrb[0].mxu0
      %v3517 = vpop.f32.mrb[0].mxu0
      %v3518 = vadd.f32 0.0, %v3517
      %v3519 = vpop.f32.mrb[0].mxu0
      %3520 = vmatprep.mubr.bf16.mxu0 0
      %3521 = vmatmul.mubr.bf16.gmra.mrb[0].mxu0 %v3396
      %v3522 = vpop.f32.mrb[0].mxu0
      %v3523 = vadd.f32 0.0, %v3522
      %v3524 = vpop.f32.mrb[0].mxu0
      %v3525 = vpop.f32.mrb[0].mxu0
      %v3526 = vadd.f32 0.0, %v3525
      %v3527 = vpop.f32.mrb[0].mxu0
      %3528 = vmatprep.mubr.bf16.mxu0 0
      %3529 = vmatmul.mubr.bf16.gmra.mrb[0].mxu0 %v3399
      %v3530 = vpop.f32.mrb[0].mxu0
      %v3531 = vadd.f32 0.0, %v3530
      %v3532 = vpop.f32.mrb[0].mxu0
      %v3533 = vpop.f32.mrb[0].mxu0
      %v3534 = vadd.f32 0.0, %v3533
      %v3535 = vpop.f32.mrb[0].mxu0
      %3536 = vmatprep.mubr.bf16.mxu0 0
      %3537 = vmatmul.mubr.bf16.gmra.mrb[0].mxu0 %v3402
      %v3538 = vpop.f32.mrb[0].mxu0
      %v3539 = vadd.f32 0.0, %v3538
      %v3540 = vpop.f32.mrb[0].mxu0
      %v3541 = vpop.f32.mrb[0].mxu0
      %v3542 = vadd.f32 0.0, %v3541
      %v3543 = vpop.f32.mrb[0].mxu0
      %3544 = vmatprep.mubr.bf16.mxu0 0
      %3545 = vmatmul.mubr.bf16.gmra.mrb[0].mxu0 %v3405
      %v3546 = vpop.f32.mrb[0].mxu0
      %v3547 = vadd.f32 0.0, %v3546
      %v3548 = vpop.f32.mrb[0].mxu0
      %v3549 = vpop.f32.mrb[0].mxu0
      %v3550 = vadd.f32 0.0, %v3549
      %v3551 = vpop.f32.mrb[0].mxu0
      %3552 = vmatprep.mubr.bf16.mxu0 0
      %3553 = vmatmul.mubr.bf16.gmra.mrb[0].mxu0 %v3408
      %v3554 = vpop.f32.mrb[0].mxu0
      %v3555 = vadd.f32 0.0, %v3554
      %v3556 = vpop.f32.mrb[0].mxu0
      %v3557 = vpop.f32.mrb[0].mxu0
      %v3558 = vadd.f32 0.0, %v3557
      %v3559 = vpop.f32.mrb[0].mxu0
      %3560 = vmatprep.mubr.bf16.mxu0 0
      %3561 = vmatmul.mubr.bf16.gmra.mrb[0].mxu0 %v3411
      %v3562 = vpop.f32.mrb[0].mxu0
      %v3563 = vadd.f32 0.0, %v3562
      %v3564 = vpop.f32.mrb[0].mxu0
      %v3565 = vpop.f32.mrb[0].mxu0
      %v3566 = vadd.f32 0.0, %v3565
      %v3567 = vpop.f32.mrb[0].mxu0
      %3568 = vmatprep.mubr.bf16.mxu0 0
      %3569 = vmatmul.mubr.bf16.gmra.mrb[0].mxu0 %v3414
      %v3570 = vpop.f32.mrb[0].mxu0
      %v3571 = vadd.f32 0.0, %v3570
      %v3572 = vpop.f32.mrb[0].mxu0
      %v3573 = vpop.f32.mrb[0].mxu0
      %v3574 = vadd.f32 0.0, %v3573
      %v3575 = vpop.f32.mrb[0].mxu0
      %3576 = vdwg.mxu0
      %v3577 = vadd.f32 %v2824, %v3451
      %v3578 = vadd.f32 %v2825, %v3454
      %v3579 = vadd.f32 %v2826, %v3459
      %v3580 = vadd.f32 %v2827, %v3462
      %v3581 = vadd.f32 %v2828, %v3467
      %v3582 = vadd.f32 %v2829, %v3470
      %v3583 = vadd.f32 %v2830, %v3475
      %v3584 = vadd.f32 %v2831, %v3478
      %v3585 = vadd.f32 %v2832, %v3483
      %v3586 = vadd.f32 %v2833, %v3486
      %v3587 = vadd.f32 %v2834, %v3491
      %v3588 = vadd.f32 %v2835, %v3494
      %v3589 = vadd.f32 %v2836, %v3499
      %v3590 = vadd.f32 %v2837, %v3502
      %v3591 = vadd.f32 %v2838, %v3507
      %v3592 = vadd.f32 %v2839, %v3510
      %v3593 = vadd.f32 %v2840, %v3515
      %v3594 = vadd.f32 %v2841, %v3518
      %v3595 = vadd.f32 %v2842, %v3523
      %v3596 = vadd.f32 %v2843, %v3526
      %v3597 = vadd.f32 %v2844, %v3531
      %v3598 = vadd.f32 %v2845, %v3534
      %v3599 = vadd.f32 %v2846, %v3539
      %v3600 = vadd.f32 %v2847, %v3542
      %v3601 = vadd.f32 %v2848, %v3547
      %v3602 = vadd.f32 %v2849, %v3550
      %v3603 = vadd.f32 %v2850, %v3555
      %v3604 = vadd.f32 %v2851, %v3558
      %v3605 = vadd.f32 %v2852, %v3563
      %v3606 = vadd.f32 %v2853, %v3566
      %v3607 = vadd.f32 %v2854, %v3571
      %v3608 = vadd.f32 %v2855, %v3574
      %v3609 = vld [vmem:[%s883] sm:$0xe]
      %v3610 = vld [vmem:[%s883 + $0xc] sm:$0xe]
      %v3611 = vld [vmem:[%s883 + $0x18] sm:$0xe]
      %v3612 = vld [vmem:[%s883 + $0x24] sm:$0xe]
      %v3613 = vld [vmem:[%s883 + $0x30] sm:$0xe]
      %v3614 = vld [vmem:[%s883 + $0x3c] sm:$0xe]
      %v3615 = vld [vmem:[%s883 + $0x48] sm:$0xe]
      %v3616 = vld [vmem:[%s883 + $0x54] sm:$0xe]
      %v3617 = vld [vmem:[%s883 + $0x60] sm:$0xe]
      %v3618 = vld [vmem:[%s883 + $0x6c] sm:$0xe]
      %v3619 = vld [vmem:[%s883 + $0x78] sm:$0xe]
      %v3620 = vld [vmem:[%s883 + $0x84] sm:$0xe]
      %v3621 = vld [vmem:[%s883 + $0x90] sm:$0xe]
      %v3622 = vld [vmem:[%s883 + $0x9c] sm:$0xe]
      %v3623 = vld [vmem:[%s883 + $0xa8] sm:$0xe]
      %v3624 = vld [vmem:[%s883 + $0xb4] sm:$0xe]
      %v3673 = vrot.slane %v3609, 5
      %v3674 = vrot.slane %v3673, 4
      %v3675 = vrot.slane %v2857, 5
      %v3676 = vsel %vm2037, %v3674, %v3675
      %v3677 = vrot.slane %v3675, 4
      %v3678 = vrot.slane %v2858, 5
      %v3679 = vsel %vm2037, %v3677, %v3678
      %v3680 = vrot.slane %v3610, 5
      %v3681 = vrot.slane %v3680, 4
      %v3682 = vrot.slane %v2860, 5
      %v3683 = vsel %vm2037, %v3681, %v3682
      %v3684 = vrot.slane %v3682, 4
      %v3685 = vrot.slane %v2861, 5
      %v3686 = vsel %vm2037, %v3684, %v3685
      %v3687 = vrot.slane %v3611, 5
      %v3688 = vrot.slane %v3687, 4
      %v3689 = vrot.slane %v2863, 5
      %v3690 = vsel %vm2037, %v3688, %v3689
      %v3691 = vrot.slane %v3689, 4
      %v3692 = vrot.slane %v2864, 5
      %v3693 = vsel %vm2037, %v3691, %v3692
      %v3694 = vrot.slane %v3612, 5
      %v3695 = vrot.slane %v3694, 4
      %v3696 = vrot.slane %v2866, 5
      %v3697 = vsel %vm2037, %v3695, %v3696
      %v3698 = vrot.slane %v3696, 4
      %v3699 = vrot.slane %v2867, 5
      %v3700 = vsel %vm2037, %v3698, %v3699
      %v3701 = vrot.slane %v3613, 5
      %v3702 = vrot.slane %v3701, 4
      %v3703 = vrot.slane %v2869, 5
      %v3704 = vsel %vm2037, %v3702, %v3703
      %v3705 = vrot.slane %v3703, 4
      %v3706 = vrot.slane %v2870, 5
      %v3707 = vsel %vm2037, %v3705, %v3706
      %v3708 = vrot.slane %v3614, 5
      %v3709 = vrot.slane %v3708, 4
      %v3710 = vrot.slane %v2872, 5
      %v3711 = vsel %vm2037, %v3709, %v3710
      %v3712 = vrot.slane %v3710, 4
      %v3713 = vrot.slane %v2873, 5
      %v3714 = vsel %vm2037, %v3712, %v3713
      %v3715 = vrot.slane %v3615, 5
      %v3716 = vrot.slane %v3715, 4
      %v3717 = vrot.slane %v2875, 5
      %v3718 = vsel %vm2037, %v3716, %v3717
      %v3719 = vrot.slane %v3717, 4
      %v3720 = vrot.slane %v2876, 5
      %v3721 = vsel %vm2037, %v3719, %v3720
      %v3722 = vrot.slane %v3616, 5
      %v3723 = vrot.slane %v3722, 4
      %v3724 = vrot.slane %v2878, 5
      %v3725 = vsel %vm2037, %v3723, %v3724
      %v3726 = vrot.slane %v3724, 4
      %v3727 = vrot.slane %v2879, 5
      %v3728 = vsel %vm2037, %v3726, %v3727
      %v3729 = vrot.slane %v3617, 5
      %v3730 = vrot.slane %v3729, 4
      %v3731 = vrot.slane %v2881, 5
      %v3732 = vsel %vm2037, %v3730, %v3731
      %v3733 = vrot.slane %v3731, 4
      %v3734 = vrot.slane %v2882, 5
      %v3735 = vsel %vm2037, %v3733, %v3734
      %v3736 = vrot.slane %v3618, 5
      %v3737 = vrot.slane %v3736, 4
      %v3738 = vrot.slane %v2884, 5
      %v3739 = vsel %vm2037, %v3737, %v3738
      %v3740 = vrot.slane %v3738, 4
      %v3741 = vrot.slane %v2885, 5
      %v3742 = vsel %vm2037, %v3740, %v3741
      %v3743 = vrot.slane %v3619, 5
      %v3744 = vrot.slane %v3743, 4
      %v3745 = vrot.slane %v2887, 5
      %v3746 = vsel %vm2037, %v3744, %v3745
      %v3747 = vrot.slane %v3745, 4
      %v3748 = vrot.slane %v2888, 5
      %v3749 = vsel %vm2037, %v3747, %v3748
      %v3750 = vrot.slane %v3620, 5
      %v3751 = vrot.slane %v3750, 4
      %v3752 = vrot.slane %v2890, 5
      %v3753 = vsel %vm2037, %v3751, %v3752
      %v3754 = vrot.slane %v3752, 4
      %v3755 = vrot.slane %v2891, 5
      %v3756 = vsel %vm2037, %v3754, %v3755
      %v3757 = vrot.slane %v3621, 5
      %v3758 = vrot.slane %v3757, 4
      %v3759 = vrot.slane %v2893, 5
      %v3760 = vsel %vm2037, %v3758, %v3759
      %v3761 = vrot.slane %v3759, 4
      %v3762 = vrot.slane %v2894, 5
      %v3763 = vsel %vm2037, %v3761, %v3762
      %v3764 = vrot.slane %v3622, 5
      %v3765 = vrot.slane %v3764, 4
      %v3766 = vrot.slane %v2896, 5
      %v3767 = vsel %vm2037, %v3765, %v3766
      %v3768 = vrot.slane %v3766, 4
      %v3769 = vrot.slane %v2897, 5
      %v3770 = vsel %vm2037, %v3768, %v3769
      %v3771 = vrot.slane %v3623, 5
      %v3772 = vrot.slane %v3771, 4
      %v3773 = vrot.slane %v2899, 5
      %v3774 = vsel %vm2037, %v3772, %v3773
      %v3775 = vrot.slane %v3773, 4
      %v3776 = vrot.slane %v2900, 5
      %v3777 = vsel %vm2037, %v3775, %v3776
      %v3778 = vrot.slane %v3624, 5
      %v3779 = vrot.slane %v3778, 4
      %v3780 = vrot.slane %v2902, 5
      %v3781 = vsel %vm2037, %v3779, %v3780
      %v3782 = vrot.slane %v3780, 4
      %v3783 = vrot.slane %v2903, 5
      %v3784 = vsel %vm2037, %v3782, %v3783
      %v3785 = vld [vmem:[%s1 + $0xa0] sm:$0xf]
      %v3786 = vld [vmem:[%s1 + $0xa4] sm:$0xf]
      %v3787 = vld [vmem:[%s1 + $0xa8] sm:$0xf]
      %v3788 = vld [vmem:[%s1 + $0xac] sm:$0xf]
      %v3789 = vld [vmem:[%s1 + $0xb0] sm:$0xf]
      %v3790 = vld [vmem:[%s1 + $0xb4] sm:$0xf]
      %v3791 = vld [vmem:[%s1 + $0xb8] sm:$0xf]
      %v3792 = vld [vmem:[%s1 + $0xbc] sm:$0xf]
      %v3793 = vunpack.c.l.b16 %v3676
      %v3794 = vunpack.c.l.b16 %v3679
      %v3795 = vunpack.c.l.b16 %v3683
      %v3796 = vunpack.c.l.b16 %v3686
      %v3797 = vunpack.c.l.b16 %v3690
      %v3798 = vunpack.c.l.b16 %v3693
      %v3799 = vunpack.c.l.b16 %v3697
      %v3800 = vunpack.c.l.b16 %v3700
      %v3801 = vunpack.c.l.b16 %v3704
      %v3802 = vunpack.c.l.b16 %v3707
      %v3803 = vunpack.c.l.b16 %v3711
      %v3804 = vunpack.c.l.b16 %v3714
      %v3805 = vunpack.c.l.b16 %v3718
      %v3806 = vunpack.c.l.b16 %v3721
      %v3807 = vunpack.c.l.b16 %v3725
      %v3808 = vunpack.c.l.b16 %v3728
      %v3809 = vunpack.c.l.b16 %v3732
      %v3810 = vunpack.c.l.b16 %v3735
      %v3811 = vunpack.c.l.b16 %v3739
      %v3812 = vunpack.c.l.b16 %v3742
      %v3813 = vunpack.c.l.b16 %v3746
      %v3814 = vunpack.c.l.b16 %v3749
      %v3815 = vunpack.c.l.b16 %v3753
      %v3816 = vunpack.c.l.b16 %v3756
      %v3817 = vunpack.c.l.b16 %v3760
      %v3818 = vunpack.c.l.b16 %v3763
      %v3819 = vunpack.c.l.b16 %v3767
      %v3820 = vunpack.c.l.b16 %v3770
      %v3821 = vunpack.c.l.b16 %v3774
      %v3822 = vunpack.c.l.b16 %v3777
      %v3823 = vunpack.c.l.b16 %v3781
      %v3824 = vunpack.c.l.b16 %v3784
      %v3825 = vpack.c.b16 %v3794, %v3793
      %v3826 = vpack.c.b16 %v3796, %v3795
      %v3827 = vpack.c.b16 %v3798, %v3797
      %v3828 = vpack.c.b16 %v3800, %v3799
      %v3829 = vpack.c.b16 %v3802, %v3801
      %v3830 = vpack.c.b16 %v3804, %v3803
      %v3831 = vpack.c.b16 %v3806, %v3805
      %v3832 = vpack.c.b16 %v3808, %v3807
      %v3833 = vpack.c.b16 %v3810, %v3809
      %v3834 = vpack.c.b16 %v3812, %v3811
      %v3835 = vpack.c.b16 %v3814, %v3813
      %v3836 = vpack.c.b16 %v3816, %v3815
      %v3837 = vpack.c.b16 %v3818, %v3817
      %v3838 = vpack.c.b16 %v3820, %v3819
      %v3839 = vpack.c.b16 %v3822, %v3821
      %v3840 = vpack.c.b16 %v3824, %v3823
      %v3849 = vunpack.c.l.b16 %v3785
      %v3850 = vunpack.c.l.b16 %v3786
      %v3851 = vunpack.c.l.b16 %v3787
      %v3852 = vunpack.c.l.b16 %v3788
      %v3853 = vunpack.c.l.b16 %v3789
      %v3854 = vunpack.c.l.b16 %v3790
      %v3855 = vunpack.c.l.b16 %v3791
      %v3856 = vunpack.c.l.b16 %v3792
      %v3857 = vpack.c.b16 %v3850, %v3849
      %v3858 = vpack.c.b16 %v3852, %v3851
      %v3859 = vpack.c.b16 %v3854, %v3853
      %v3860 = vpack.c.b16 %v3856, %v3855
      %v3866 = vsel %vm1464, %v3825, 0
      %v3869 = vsel %vm1464, %v3826, 0
      %v3872 = vsel %vm1464, %v3827, 0
      %v3875 = vsel %vm1464, %v3828, 0
      %v3878 = vsel %vm1464, %v3829, 0
      %v3881 = vsel %vm1464, %v3830, 0
      %v3884 = vsel %vm1464, %v3831, 0
      %v3887 = vsel %vm1464, %v3832, 0
      %v3890 = vsel %vm1464, %v3833, 0
      %v3893 = vsel %vm1464, %v3834, 0
      %v3896 = vsel %vm1464, %v3835, 0
      %v3899 = vsel %vm1464, %v3836, 0
      %v3902 = vsel %vm1464, %v3837, 0
      %v3905 = vsel %vm1464, %v3838, 0
      %v3908 = vsel %vm1464, %v3839, 0
      %v3911 = vsel %vm1464, %v3840, 0
      %3913 = vmatprep.subr.bf16.mxu0 0
      %3914 = vmatpush1.bf16.msra.mxu0 %v3857
      %3915 = vmatprep.subr.bf16.mxu0 0
      %3916 = vmatpush1.bf16.msra.mxu0 %v3858
      %3917 = vmatprep.subr.bf16.mxu0 0
      %3918 = vmatpush1.bf16.msra.mxu0 %v3859
      %3919 = vmatprep.subr.bf16.mxu0 0
      %3920 = vmatpush1.bf16.msra.mxu0 %v3860
      %3921 = vmatprep.subr.bf16.mxu0 0
      %3922 = vmatpush1.bf16.msra.mxu0 0
      %3923 = vmatprep.subr.bf16.mxu0 0
      %3924 = vmatpush1.bf16.msra.mxu0 0
      %3925 = vmatprep.subr.bf16.mxu0 0
      %3926 = vmatpush1.bf16.msra.mxu0 0
      %3927 = vmatprep.subr.bf16.mxu0 0
      %3928 = vmatpush1.bf16.msra.mxu0 0
      %3929 = vmatprep.subr.bf16.mxu0 0
      %3930 = vmatpush1.bf16.msra.mxu0 0
      %3931 = vmatprep.subr.bf16.mxu0 0
      %3932 = vmatpush1.bf16.msra.mxu0 0
      %3933 = vmatprep.subr.bf16.mxu0 0
      %3934 = vmatpush1.bf16.msra.mxu0 0
      %3935 = vmatprep.subr.bf16.mxu0 0
      %3936 = vmatpush1.bf16.msra.mxu0 0
      %3937 = vmatprep.subr.bf16.mxu0 0
      %3938 = vmatpush1.bf16.msra.mxu0 0
      %3939 = vmatprep.subr.bf16.mxu0 0
      %3940 = vmatpush1.bf16.msra.mxu0 0
      %3941 = vmatprep.subr.bf16.mxu0 0
      %3942 = vmatpush1.bf16.msra.mxu0 0
      %3943 = vmatprep.subr.bf16.mxu0 0
      %3944 = vmatpush1.bf16.msra.mxu0 0
      %3945 = vmatprep.mubr.bf16.mxu0 0
      %3946 = vmatmul.mubr.bf16.gmra.mrb[0].mxu0 %v3866
      %v3947 = vpop.f32.mrb[0].mxu0
      %v3948 = vadd.f32 0.0, %v3947
      %v3949 = vpop.f32.mrb[0].mxu0
      %v3950 = vpop.f32.mrb[0].mxu0
      %v3951 = vadd.f32 0.0, %v3950
      %v3952 = vpop.f32.mrb[0].mxu0
      %3953 = vmatprep.mubr.bf16.mxu0 0
      %3954 = vmatmul.mubr.bf16.gmra.mrb[0].mxu0 %v3869
      %v3955 = vpop.f32.mrb[0].mxu0
      %v3956 = vadd.f32 0.0, %v3955
      %v3957 = vpop.f32.mrb[0].mxu0
      %v3958 = vpop.f32.mrb[0].mxu0
      %v3959 = vadd.f32 0.0, %v3958
      %v3960 = vpop.f32.mrb[0].mxu0
      %3961 = vmatprep.mubr.bf16.mxu0 0
      %3962 = vmatmul.mubr.bf16.gmra.mrb[0].mxu0 %v3872
      %v3963 = vpop.f32.mrb[0].mxu0
      %v3964 = vadd.f32 0.0, %v3963
      %v3965 = vpop.f32.mrb[0].mxu0
      %v3966 = vpop.f32.mrb[0].mxu0
      %v3967 = vadd.f32 0.0, %v3966
      %v3968 = vpop.f32.mrb[0].mxu0
      %3969 = vmatprep.mubr.bf16.mxu0 0
      %3970 = vmatmul.mubr.bf16.gmra.mrb[0].mxu0 %v3875
      %v3971 = vpop.f32.mrb[0].mxu0
      %v3972 = vadd.f32 0.0, %v3971
      %v3973 = vpop.f32.mrb[0].mxu0
      %v3974 = vpop.f32.mrb[0].mxu0
      %v3975 = vadd.f32 0.0, %v3974
      %v3976 = vpop.f32.mrb[0].mxu0
      %3977 = vmatprep.mubr.bf16.mxu0 0
      %3978 = vmatmul.mubr.bf16.gmra.mrb[0].mxu0 %v3878
      %v3979 = vpop.f32.mrb[0].mxu0
      %v3980 = vadd.f32 0.0, %v3979
      %v3981 = vpop.f32.mrb[0].mxu0
      %v3982 = vpop.f32.mrb[0].mxu0
      %v3983 = vadd.f32 0.0, %v3982
      %v3984 = vpop.f32.mrb[0].mxu0
      %3985 = vmatprep.mubr.bf16.mxu0 0
      %3986 = vmatmul.mubr.bf16.gmra.mrb[0].mxu0 %v3881
      %v3987 = vpop.f32.mrb[0].mxu0
      %v3988 = vadd.f32 0.0, %v3987
      %v3989 = vpop.f32.mrb[0].mxu0
      %v3990 = vpop.f32.mrb[0].mxu0
      %v3991 = vadd.f32 0.0, %v3990
      %v3992 = vpop.f32.mrb[0].mxu0
      %3993 = vmatprep.mubr.bf16.mxu0 0
      %3994 = vmatmul.mubr.bf16.gmra.mrb[0].mxu0 %v3884
      %v3995 = vpop.f32.mrb[0].mxu0
      %v3996 = vadd.f32 0.0, %v3995
      %v3997 = vpop.f32.mrb[0].mxu0
      %v3998 = vpop.f32.mrb[0].mxu0
      %v3999 = vadd.f32 0.0, %v3998
      %v4000 = vpop.f32.mrb[0].mxu0
      %4001 = vmatprep.mubr.bf16.mxu0 0
      %4002 = vmatmul.mubr.bf16.gmra.mrb[0].mxu0 %v3887
      %v4003 = vpop.f32.mrb[0].mxu0
      %v4004 = vadd.f32 0.0, %v4003
      %v4005 = vpop.f32.mrb[0].mxu0
      %v4006 = vpop.f32.mrb[0].mxu0
      %v4007 = vadd.f32 0.0, %v4006
      %v4008 = vpop.f32.mrb[0].mxu0
      %4009 = vmatprep.mubr.bf16.mxu0 0
      %4010 = vmatmul.mubr.bf16.gmra.mrb[0].mxu0 %v3890
      %v4011 = vpop.f32.mrb[0].mxu0
      %v4012 = vadd.f32 0.0, %v4011
      %v4013 = vpop.f32.mrb[0].mxu0
      %v4014 = vpop.f32.mrb[0].mxu0
      %v4015 = vadd.f32 0.0, %v4014
      %v4016 = vpop.f32.mrb[0].mxu0
      %4017 = vmatprep.mubr.bf16.mxu0 0
      %4018 = vmatmul.mubr.bf16.gmra.mrb[0].mxu0 %v3893
      %v4019 = vpop.f32.mrb[0].mxu0
      %v4020 = vadd.f32 0.0, %v4019
      %v4021 = vpop.f32.mrb[0].mxu0
      %v4022 = vpop.f32.mrb[0].mxu0
      %v4023 = vadd.f32 0.0, %v4022
      %v4024 = vpop.f32.mrb[0].mxu0
      %4025 = vmatprep.mubr.bf16.mxu0 0
      %4026 = vmatmul.mubr.bf16.gmra.mrb[0].mxu0 %v3896
      %v4027 = vpop.f32.mrb[0].mxu0
      %v4028 = vadd.f32 0.0, %v4027
      %v4029 = vpop.f32.mrb[0].mxu0
      %v4030 = vpop.f32.mrb[0].mxu0
      %v4031 = vadd.f32 0.0, %v4030
      %v4032 = vpop.f32.mrb[0].mxu0
      %4033 = vmatprep.mubr.bf16.mxu0 0
      %4034 = vmatmul.mubr.bf16.gmra.mrb[0].mxu0 %v3899
      %v4035 = vpop.f32.mrb[0].mxu0
      %v4036 = vadd.f32 0.0, %v4035
      %v4037 = vpop.f32.mrb[0].mxu0
      %v4038 = vpop.f32.mrb[0].mxu0
      %v4039 = vadd.f32 0.0, %v4038
      %v4040 = vpop.f32.mrb[0].mxu0
      %4041 = vmatprep.mubr.bf16.mxu0 0
      %4042 = vmatmul.mubr.bf16.gmra.mrb[0].mxu0 %v3902
      %v4043 = vpop.f32.mrb[0].mxu0
      %v4044 = vadd.f32 0.0, %v4043
      %v4045 = vpop.f32.mrb[0].mxu0
      %v4046 = vpop.f32.mrb[0].mxu0
      %v4047 = vadd.f32 0.0, %v4046
      %v4048 = vpop.f32.mrb[0].mxu0
      %4049 = vmatprep.mubr.bf16.mxu0 0
      %4050 = vmatmul.mubr.bf16.gmra.mrb[0].mxu0 %v3905
      %v4051 = vpop.f32.mrb[0].mxu0
      %v4052 = vadd.f32 0.0, %v4051
      %v4053 = vpop.f32.mrb[0].mxu0
      %v4054 = vpop.f32.mrb[0].mxu0
      %v4055 = vadd.f32 0.0, %v4054
      %v4056 = vpop.f32.mrb[0].mxu0
      %4057 = vmatprep.mubr.bf16.mxu0 0
      %4058 = vmatmul.mubr.bf16.gmra.mrb[0].mxu0 %v3908
      %v4059 = vpop.f32.mrb[0].mxu0
      %v4060 = vadd.f32 0.0, %v4059
      %v4061 = vpop.f32.mrb[0].mxu0
      %v4062 = vpop.f32.mrb[0].mxu0
      %v4063 = vadd.f32 0.0, %v4062
      %v4064 = vpop.f32.mrb[0].mxu0
      %4065 = vmatprep.mubr.bf16.mxu0 0
      %4066 = vmatmul.mubr.bf16.gmra.mrb[0].mxu0 %v3911
      %v4067 = vpop.f32.mrb[0].mxu0
      %v4068 = vadd.f32 0.0, %v4067
      %v4069 = vpop.f32.mrb[0].mxu0
      %v4070 = vpop.f32.mrb[0].mxu0
      %v4071 = vadd.f32 0.0, %v4070
      %v4072 = vpop.f32.mrb[0].mxu0
      %4073 = vdwg.mxu0
      %v4074 = vadd.f32 %v3577, %v3948
      %v4075 = vadd.f32 %v3578, %v3951
      %v4076 = vadd.f32 %v3579, %v3956
      %v4077 = vadd.f32 %v3580, %v3959
      %v4078 = vadd.f32 %v3581, %v3964
      %v4079 = vadd.f32 %v3582, %v3967
      %v4080 = vadd.f32 %v3583, %v3972
      %v4081 = vadd.f32 %v3584, %v3975
      %v4082 = vadd.f32 %v3585, %v3980
      %v4083 = vadd.f32 %v3586, %v3983
      %v4084 = vadd.f32 %v3587, %v3988
      %v4085 = vadd.f32 %v3588, %v3991
      %v4086 = vadd.f32 %v3589, %v3996
      %v4087 = vadd.f32 %v3590, %v3999
      %v4088 = vadd.f32 %v3591, %v4004
      %v4089 = vadd.f32 %v3592, %v4007
      %v4090 = vadd.f32 %v3593, %v4012
      %v4091 = vadd.f32 %v3594, %v4015
      %v4092 = vadd.f32 %v3595, %v4020
      %v4093 = vadd.f32 %v3596, %v4023
      %v4094 = vadd.f32 %v3597, %v4028
      %v4095 = vadd.f32 %v3598, %v4031
      %v4096 = vadd.f32 %v3599, %v4036
      %v4097 = vadd.f32 %v3600, %v4039
      %v4098 = vadd.f32 %v3601, %v4044
      %v4099 = vadd.f32 %v3602, %v4047
      %v4100 = vadd.f32 %v3603, %v4052
      %v4101 = vadd.f32 %v3604, %v4055
      %v4102 = vadd.f32 %v3605, %v4060
      %v4103 = vadd.f32 %v3606, %v4063
      %v4104 = vadd.f32 %v3607, %v4068
      %v4105 = vadd.f32 %v3608, %v4071
      %s4106 = scalar_lea.vmem [#allocation2], 24
      %v4107 = vld [vmem:[%s4106] sm:$0xf]
      %v4108 = vld [vmem:[%s4106 + $0x4] sm:$0xf]
      %v4109 = vld [vmem:[%s4106 + $0xc] sm:$0xf]
      %v4110 = vld [vmem:[%s4106 + $0x10] sm:$0xf]
      %v4111 = vld [vmem:[%s4106 + $0x18] sm:$0xf]
      %v4112 = vld [vmem:[%s4106 + $0x1c] sm:$0xf]
      %v4113 = vld [vmem:[%s4106 + $0x24] sm:$0xf]
      %v4114 = vld [vmem:[%s4106 + $0x28] sm:$0xf]
      %v4115 = vld [vmem:[%s4106 + $0x30] sm:$0xf]
      %v4116 = vld [vmem:[%s4106 + $0x34] sm:$0xf]
      %v4117 = vld [vmem:[%s4106 + $0x3c] sm:$0xf]
      %v4118 = vld [vmem:[%s4106 + $0x40] sm:$0xf]
      %v4119 = vld [vmem:[%s4106 + $0x48] sm:$0xf]
      %v4120 = vld [vmem:[%s4106 + $0x4c] sm:$0xf]
      %v4121 = vld [vmem:[%s4106 + $0x54] sm:$0xf]
      %v4122 = vld [vmem:[%s4106 + $0x58] sm:$0xf]
      %v4123 = vld [vmem:[%s4106 + $0x60] sm:$0xf]
      %v4124 = vld [vmem:[%s4106 + $0x64] sm:$0xf]
      %v4125 = vld [vmem:[%s4106 + $0x6c] sm:$0xf]
      %v4126 = vld [vmem:[%s4106 + $0x70] sm:$0xf]
      %v4127 = vld [vmem:[%s4106 + $0x78] sm:$0xf]
      %v4128 = vld [vmem:[%s4106 + $0x7c] sm:$0xf]
      %v4129 = vld [vmem:[%s4106 + $0x84] sm:$0xf]
      %v4130 = vld [vmem:[%s4106 + $0x88] sm:$0xf]
      %v4131 = vld [vmem:[%s4106 + $0x90] sm:$0xf]
      %v4132 = vld [vmem:[%s4106 + $0x94] sm:$0xf]
      %v4133 = vld [vmem:[%s4106 + $0x9c] sm:$0xf]
      %v4134 = vld [vmem:[%s4106 + $0xa0] sm:$0xf]
      %v4135 = vld [vmem:[%s4106 + $0xa8] sm:$0xf]
      %v4136 = vld [vmem:[%s4106 + $0xac] sm:$0xf]
      %v4137 = vld [vmem:[%s4106 + $0xb4] sm:$0xf]
      %v4138 = vld [vmem:[%s4106 + $0xb8] sm:$0xf]
      %v4139 = vld [vmem:[%s1 + $0xc0] sm:$0xf]
      %v4140 = vld [vmem:[%s1 + $0xc4] sm:$0xf]
      %v4141 = vld [vmem:[%s1 + $0xc8] sm:$0xf]
      %v4142 = vld [vmem:[%s1 + $0xcc] sm:$0xf]
      %v4143 = vld [vmem:[%s1 + $0xd0] sm:$0xf]
      %v4144 = vld [vmem:[%s1 + $0xd4] sm:$0xf]
      %v4145 = vld [vmem:[%s1 + $0xd8] sm:$0xf]
      %v4146 = vld [vmem:[%s1 + $0xdc] sm:$0xf]
      %v4179 = vunpack.c.l.b16 %v4107
      %v4180 = vunpack.c.l.b16 %v4108
      %v4181 = vunpack.c.l.b16 %v4109
      %v4182 = vunpack.c.l.b16 %v4110
      %v4183 = vunpack.c.l.b16 %v4111
      %v4184 = vunpack.c.l.b16 %v4112
      %v4185 = vunpack.c.l.b16 %v4113
      %v4186 = vunpack.c.l.b16 %v4114
      %v4187 = vunpack.c.l.b16 %v4115
      %v4188 = vunpack.c.l.b16 %v4116
      %v4189 = vunpack.c.l.b16 %v4117
      %v4190 = vunpack.c.l.b16 %v4118
      %v4191 = vunpack.c.l.b16 %v4119
      %v4192 = vunpack.c.l.b16 %v4120
      %v4193 = vunpack.c.l.b16 %v4121
      %v4194 = vunpack.c.l.b16 %v4122
      %v4195 = vunpack.c.l.b16 %v4123
      %v4196 = vunpack.c.l.b16 %v4124
      %v4197 = vunpack.c.l.b16 %v4125
      %v4198 = vunpack.c.l.b16 %v4126
      %v4199 = vunpack.c.l.b16 %v4127
      %v4200 = vunpack.c.l.b16 %v4128
      %v4201 = vunpack.c.l.b16 %v4129
      %v4202 = vunpack.c.l.b16 %v4130
      %v4203 = vunpack.c.l.b16 %v4131
      %v4204 = vunpack.c.l.b16 %v4132
      %v4205 = vunpack.c.l.b16 %v4133
      %v4206 = vunpack.c.l.b16 %v4134
      %v4207 = vunpack.c.l.b16 %v4135
      %v4208 = vunpack.c.l.b16 %v4136
      %v4209 = vunpack.c.l.b16 %v4137
      %v4210 = vunpack.c.l.b16 %v4138
      %v4211 = vpack.c.b16 %v4180, %v4179
      %v4212 = vpack.c.b16 %v4182, %v4181
      %v4213 = vpack.c.b16 %v4184, %v4183
      %v4214 = vpack.c.b16 %v4186, %v4185
      %v4215 = vpack.c.b16 %v4188, %v4187
      %v4216 = vpack.c.b16 %v4190, %v4189
      %v4217 = vpack.c.b16 %v4192, %v4191
      %v4218 = vpack.c.b16 %v4194, %v4193
      %v4219 = vpack.c.b16 %v4196, %v4195
      %v4220 = vpack.c.b16 %v4198, %v4197
      %v4221 = vpack.c.b16 %v4200, %v4199
      %v4222 = vpack.c.b16 %v4202, %v4201
      %v4223 = vpack.c.b16 %v4204, %v4203
      %v4224 = vpack.c.b16 %v4206, %v4205
      %v4225 = vpack.c.b16 %v4208, %v4207
      %v4226 = vpack.c.b16 %v4210, %v4209
      %v4235 = vunpack.c.l.b16 %v4139
      %v4236 = vunpack.c.l.b16 %v4140
      %v4237 = vunpack.c.l.b16 %v4141
      %v4238 = vunpack.c.l.b16 %v4142
      %v4239 = vunpack.c.l.b16 %v4143
      %v4240 = vunpack.c.l.b16 %v4144
      %v4241 = vunpack.c.l.b16 %v4145
      %v4242 = vunpack.c.l.b16 %v4146
      %v4243 = vpack.c.b16 %v4236, %v4235
      %v4244 = vpack.c.b16 %v4238, %v4237
      %v4245 = vpack.c.b16 %v4240, %v4239
      %v4246 = vpack.c.b16 %v4242, %v4241
      %v4252 = vsel %vm1464, %v4211, 0
      %v4255 = vsel %vm1464, %v4212, 0
      %v4258 = vsel %vm1464, %v4213, 0
      %v4261 = vsel %vm1464, %v4214, 0
      %v4264 = vsel %vm1464, %v4215, 0
      %v4267 = vsel %vm1464, %v4216, 0
      %v4270 = vsel %vm1464, %v4217, 0
      %v4273 = vsel %vm1464, %v4218, 0
      %v4276 = vsel %vm1464, %v4219, 0
      %v4279 = vsel %vm1464, %v4220, 0
      %v4282 = vsel %vm1464, %v4221, 0
      %v4285 = vsel %vm1464, %v4222, 0
      %v4288 = vsel %vm1464, %v4223, 0
      %v4291 = vsel %vm1464, %v4224, 0
      %v4294 = vsel %vm1464, %v4225, 0
      %v4297 = vsel %vm1464, %v4226, 0
      %4299 = vmatprep.subr.bf16.mxu0 0
      %4300 = vmatpush1.bf16.msra.mxu0 %v4243
      %4301 = vmatprep.subr.bf16.mxu0 0
      %4302 = vmatpush1.bf16.msra.mxu0 %v4244
      %4303 = vmatprep.subr.bf16.mxu0 0
      %4304 = vmatpush1.bf16.msra.mxu0 %v4245
      %4305 = vmatprep.subr.bf16.mxu0 0
      %4306 = vmatpush1.bf16.msra.mxu0 %v4246
      %4307 = vmatprep.subr.bf16.mxu0 0
      %4308 = vmatpush1.bf16.msra.mxu0 0
      %4309 = vmatprep.subr.bf16.mxu0 0
      %4310 = vmatpush1.bf16.msra.mxu0 0
      %4311 = vmatprep.subr.bf16.mxu0 0
      %4312 = vmatpush1.bf16.msra.mxu0 0
      %4313 = vmatprep.subr.bf16.mxu0 0
      %4314 = vmatpush1.bf16.msra.mxu0 0
      %4315 = vmatprep.subr.bf16.mxu0 0
      %4316 = vmatpush1.bf16.msra.mxu0 0
      %4317 = vmatprep.subr.bf16.mxu0 0
      %4318 = vmatpush1.bf16.msra.mxu0 0
      %4319 = vmatprep.subr.bf16.mxu0 0
      %4320 = vmatpush1.bf16.msra.mxu0 0
      %4321 = vmatprep.subr.bf16.mxu0 0
      %4322 = vmatpush1.bf16.msra.mxu0 0
      %4323 = vmatprep.subr.bf16.mxu0 0
      %4324 = vmatpush1.bf16.msra.mxu0 0
      %4325 = vmatprep.subr.bf16.mxu0 0
      %4326 = vmatpush1.bf16.msra.mxu0 0
      %4327 = vmatprep.subr.bf16.mxu0 0
      %4328 = vmatpush1.bf16.msra.mxu0 0
      %4329 = vmatprep.subr.bf16.mxu0 0
      %4330 = vmatpush1.bf16.msra.mxu0 0
      %4331 = vmatprep.mubr.bf16.mxu0 0
      %4332 = vmatmul.mubr.bf16.gmra.mrb[0].mxu0 %v4252
      %v4333 = vpop.f32.mrb[0].mxu0
      %v4334 = vadd.f32 0.0, %v4333
      %v4335 = vpop.f32.mrb[0].mxu0
      %v4336 = vpop.f32.mrb[0].mxu0
      %v4337 = vadd.f32 0.0, %v4336
      %v4338 = vpop.f32.mrb[0].mxu0
      %4339 = vmatprep.mubr.bf16.mxu0 0
      %4340 = vmatmul.mubr.bf16.gmra.mrb[0].mxu0 %v4255
      %v4341 = vpop.f32.mrb[0].mxu0
      %v4342 = vadd.f32 0.0, %v4341
      %v4343 = vpop.f32.mrb[0].mxu0
      %v4344 = vpop.f32.mrb[0].mxu0
      %v4345 = vadd.f32 0.0, %v4344
      %v4346 = vpop.f32.mrb[0].mxu0
      %4347 = vmatprep.mubr.bf16.mxu0 0
      %4348 = vmatmul.mubr.bf16.gmra.mrb[0].mxu0 %v4258
      %v4349 = vpop.f32.mrb[0].mxu0
      %v4350 = vadd.f32 0.0, %v4349
      %v4351 = vpop.f32.mrb[0].mxu0
      %v4352 = vpop.f32.mrb[0].mxu0
      %v4353 = vadd.f32 0.0, %v4352
      %v4354 = vpop.f32.mrb[0].mxu0
      %4355 = vmatprep.mubr.bf16.mxu0 0
      %4356 = vmatmul.mubr.bf16.gmra.mrb[0].mxu0 %v4261
      %v4357 = vpop.f32.mrb[0].mxu0
      %v4358 = vadd.f32 0.0, %v4357
      %v4359 = vpop.f32.mrb[0].mxu0
      %v4360 = vpop.f32.mrb[0].mxu0
      %v4361 = vadd.f32 0.0, %v4360
      %v4362 = vpop.f32.mrb[0].mxu0
      %4363 = vmatprep.mubr.bf16.mxu0 0
      %4364 = vmatmul.mubr.bf16.gmra.mrb[0].mxu0 %v4264
      %v4365 = vpop.f32.mrb[0].mxu0
      %v4366 = vadd.f32 0.0, %v4365
      %v4367 = vpop.f32.mrb[0].mxu0
      %v4368 = vpop.f32.mrb[0].mxu0
      %v4369 = vadd.f32 0.0, %v4368
      %v4370 = vpop.f32.mrb[0].mxu0
      %4371 = vmatprep.mubr.bf16.mxu0 0
      %4372 = vmatmul.mubr.bf16.gmra.mrb[0].mxu0 %v4267
      %v4373 = vpop.f32.mrb[0].mxu0
      %v4374 = vadd.f32 0.0, %v4373
      %v4375 = vpop.f32.mrb[0].mxu0
      %v4376 = vpop.f32.mrb[0].mxu0
      %v4377 = vadd.f32 0.0, %v4376
      %v4378 = vpop.f32.mrb[0].mxu0
      %4379 = vmatprep.mubr.bf16.mxu0 0
      %4380 = vmatmul.mubr.bf16.gmra.mrb[0].mxu0 %v4270
      %v4381 = vpop.f32.mrb[0].mxu0
      %v4382 = vadd.f32 0.0, %v4381
      %v4383 = vpop.f32.mrb[0].mxu0
      %v4384 = vpop.f32.mrb[0].mxu0
      %v4385 = vadd.f32 0.0, %v4384
      %v4386 = vpop.f32.mrb[0].mxu0
      %4387 = vmatprep.mubr.bf16.mxu0 0
      %4388 = vmatmul.mubr.bf16.gmra.mrb[0].mxu0 %v4273
      %v4389 = vpop.f32.mrb[0].mxu0
      %v4390 = vadd.f32 0.0, %v4389
      %v4391 = vpop.f32.mrb[0].mxu0
      %v4392 = vpop.f32.mrb[0].mxu0
      %v4393 = vadd.f32 0.0, %v4392
      %v4394 = vpop.f32.mrb[0].mxu0
      %4395 = vmatprep.mubr.bf16.mxu0 0
      %4396 = vmatmul.mubr.bf16.gmra.mrb[0].mxu0 %v4276
      %v4397 = vpop.f32.mrb[0].mxu0
      %v4398 = vadd.f32 0.0, %v4397
      %v4399 = vpop.f32.mrb[0].mxu0
      %v4400 = vpop.f32.mrb[0].mxu0
      %v4401 = vadd.f32 0.0, %v4400
      %v4402 = vpop.f32.mrb[0].mxu0
      %4403 = vmatprep.mubr.bf16.mxu0 0
      %4404 = vmatmul.mubr.bf16.gmra.mrb[0].mxu0 %v4279
      %v4405 = vpop.f32.mrb[0].mxu0
      %v4406 = vadd.f32 0.0, %v4405
      %v4407 = vpop.f32.mrb[0].mxu0
      %v4408 = vpop.f32.mrb[0].mxu0
      %v4409 = vadd.f32 0.0, %v4408
      %v4410 = vpop.f32.mrb[0].mxu0
      %4411 = vmatprep.mubr.bf16.mxu0 0
      %4412 = vmatmul.mubr.bf16.gmra.mrb[0].mxu0 %v4282
      %v4413 = vpop.f32.mrb[0].mxu0
      %v4414 = vadd.f32 0.0, %v4413
      %v4415 = vpop.f32.mrb[0].mxu0
      %v4416 = vpop.f32.mrb[0].mxu0
      %v4417 = vadd.f32 0.0, %v4416
      %v4418 = vpop.f32.mrb[0].mxu0
      %4419 = vmatprep.mubr.bf16.mxu0 0
      %4420 = vmatmul.mubr.bf16.gmra.mrb[0].mxu0 %v4285
      %v4421 = vpop.f32.mrb[0].mxu0
      %v4422 = vadd.f32 0.0, %v4421
      %v4423 = vpop.f32.mrb[0].mxu0
      %v4424 = vpop.f32.mrb[0].mxu0
      %v4425 = vadd.f32 0.0, %v4424
      %v4426 = vpop.f32.mrb[0].mxu0
      %4427 = vmatprep.mubr.bf16.mxu0 0
      %4428 = vmatmul.mubr.bf16.gmra.mrb[0].mxu0 %v4288
      %v4429 = vpop.f32.mrb[0].mxu0
      %v4430 = vadd.f32 0.0, %v4429
      %v4431 = vpop.f32.mrb[0].mxu0
      %v4432 = vpop.f32.mrb[0].mxu0
      %v4433 = vadd.f32 0.0, %v4432
      %v4434 = vpop.f32.mrb[0].mxu0
      %4435 = vmatprep.mubr.bf16.mxu0 0
      %4436 = vmatmul.mubr.bf16.gmra.mrb[0].mxu0 %v4291
      %v4437 = vpop.f32.mrb[0].mxu0
      %v4438 = vadd.f32 0.0, %v4437
      %v4439 = vpop.f32.mrb[0].mxu0
      %v4440 = vpop.f32.mrb[0].mxu0
      %v4441 = vadd.f32 0.0, %v4440
      %v4442 = vpop.f32.mrb[0].mxu0
      %4443 = vmatprep.mubr.bf16.mxu0 0
      %4444 = vmatmul.mubr.bf16.gmra.mrb[0].mxu0 %v4294
      %v4445 = vpop.f32.mrb[0].mxu0
      %v4446 = vadd.f32 0.0, %v4445
      %v4447 = vpop.f32.mrb[0].mxu0
      %v4448 = vpop.f32.mrb[0].mxu0
      %v4449 = vadd.f32 0.0, %v4448
      %v4450 = vpop.f32.mrb[0].mxu0
      %4451 = vmatprep.mubr.bf16.mxu0 0
      %4452 = vmatmul.mubr.bf16.gmra.mrb[0].mxu0 %v4297
      %v4453 = vpop.f32.mrb[0].mxu0
      %v4454 = vadd.f32 0.0, %v4453
      %v4455 = vpop.f32.mrb[0].mxu0
      %v4456 = vpop.f32.mrb[0].mxu0
      %v4457 = vadd.f32 0.0, %v4456
      %v4458 = vpop.f32.mrb[0].mxu0
      %4459 = vdwg.mxu0
      %v4460 = vadd.f32 %v4074, %v4334
      %v4461 = vadd.f32 %v4075, %v4337
      %v4462 = vadd.f32 %v4076, %v4342
      %v4463 = vadd.f32 %v4077, %v4345
      %v4464 = vadd.f32 %v4078, %v4350
      %v4465 = vadd.f32 %v4079, %v4353
      %v4466 = vadd.f32 %v4080, %v4358
      %v4467 = vadd.f32 %v4081, %v4361
      %v4468 = vadd.f32 %v4082, %v4366
      %v4469 = vadd.f32 %v4083, %v4369
      %v4470 = vadd.f32 %v4084, %v4374
      %v4471 = vadd.f32 %v4085, %v4377
      %v4472 = vadd.f32 %v4086, %v4382
      %v4473 = vadd.f32 %v4087, %v4385
      %v4474 = vadd.f32 %v4088, %v4390
      %v4475 = vadd.f32 %v4089, %v4393
      %v4476 = vadd.f32 %v4090, %v4398
      %v4477 = vadd.f32 %v4091, %v4401
      %v4478 = vadd.f32 %v4092, %v4406
      %v4479 = vadd.f32 %v4093, %v4409
      %v4480 = vadd.f32 %v4094, %v4414
      %v4481 = vadd.f32 %v4095, %v4417
      %v4482 = vadd.f32 %v4096, %v4422
      %v4483 = vadd.f32 %v4097, %v4425
      %v4484 = vadd.f32 %v4098, %v4430
      %v4485 = vadd.f32 %v4099, %v4433
      %v4486 = vadd.f32 %v4100, %v4438
      %v4487 = vadd.f32 %v4101, %v4441
      %v4488 = vadd.f32 %v4102, %v4446
      %v4489 = vadd.f32 %v4103, %v4449
      %v4490 = vadd.f32 %v4104, %v4454
      %v4491 = vadd.f32 %v4105, %v4457
      %v4492 = vld [vmem:[%s4106] sm:$0xf]
      %v4493 = vld [vmem:[%s4106 + $0x4] sm:$0xf]
      %v4494 = vld [vmem:[%s4106 + $0x8] sm:$0x1]
      %v4495 = vld [vmem:[%s4106 + $0xc] sm:$0xf]
      %v4496 = vld [vmem:[%s4106 + $0x10] sm:$0xf]
      %v4497 = vld [vmem:[%s4106 + $0x14] sm:$0x1]
      %v4498 = vld [vmem:[%s4106 + $0x18] sm:$0xf]
      %v4499 = vld [vmem:[%s4106 + $0x1c] sm:$0xf]
      %v4500 = vld [vmem:[%s4106 + $0x20] sm:$0x1]
      %v4501 = vld [vmem:[%s4106 + $0x24] sm:$0xf]
      %v4502 = vld [vmem:[%s4106 + $0x28] sm:$0xf]
      %v4503 = vld [vmem:[%s4106 + $0x2c] sm:$0x1]
      %v4504 = vld [vmem:[%s4106 + $0x30] sm:$0xf]
      %v4505 = vld [vmem:[%s4106 + $0x34] sm:$0xf]
      %v4506 = vld [vmem:[%s4106 + $0x38] sm:$0x1]
      %v4507 = vld [vmem:[%s4106 + $0x3c] sm:$0xf]
      %v4508 = vld [vmem:[%s4106 + $0x40] sm:$0xf]
      %v4509 = vld [vmem:[%s4106 + $0x44] sm:$0x1]
      %v4510 = vld [vmem:[%s4106 + $0x48] sm:$0xf]
      %v4511 = vld [vmem:[%s4106 + $0x4c] sm:$0xf]
      %v4512 = vld [vmem:[%s4106 + $0x50] sm:$0x1]
      %v4513 = vld [vmem:[%s4106 + $0x54] sm:$0xf]
      %v4514 = vld [vmem:[%s4106 + $0x58] sm:$0xf]
      %v4515 = vld [vmem:[%s4106 + $0x5c] sm:$0x1]
      %v4516 = vld [vmem:[%s4106 + $0x60] sm:$0xf]
      %v4517 = vld [vmem:[%s4106 + $0x64] sm:$0xf]
      %v4518 = vld [vmem:[%s4106 + $0x68] sm:$0x1]
      %v4519 = vld [vmem:[%s4106 + $0x6c] sm:$0xf]
      %v4520 = vld [vmem:[%s4106 + $0x70] sm:$0xf]
      %v4521 = vld [vmem:[%s4106 + $0x74] sm:$0x1]
      %v4522 = vld [vmem:[%s4106 + $0x78] sm:$0xf]
      %v4523 = vld [vmem:[%s4106 + $0x7c] sm:$0xf]
      %v4524 = vld [vmem:[%s4106 + $0x80] sm:$0x1]
      %v4525 = vld [vmem:[%s4106 + $0x84] sm:$0xf]
      %v4526 = vld [vmem:[%s4106 + $0x88] sm:$0xf]
      %v4527 = vld [vmem:[%s4106 + $0x8c] sm:$0x1]
      %v4528 = vld [vmem:[%s4106 + $0x90] sm:$0xf]
      %v4529 = vld [vmem:[%s4106 + $0x94] sm:$0xf]
      %v4530 = vld [vmem:[%s4106 + $0x98] sm:$0x1]
      %v4531 = vld [vmem:[%s4106 + $0x9c] sm:$0xf]
      %v4532 = vld [vmem:[%s4106 + $0xa0] sm:$0xf]
      %v4533 = vld [vmem:[%s4106 + $0xa4] sm:$0x1]
      %v4534 = vld [vmem:[%s4106 + $0xa8] sm:$0xf]
      %v4535 = vld [vmem:[%s4106 + $0xac] sm:$0xf]
      %v4536 = vld [vmem:[%s4106 + $0xb0] sm:$0x1]
      %v4537 = vld [vmem:[%s4106 + $0xb4] sm:$0xf]
      %v4538 = vld [vmem:[%s4106 + $0xb8] sm:$0xf]
      %v4539 = vld [vmem:[%s4106 + $0xbc] sm:$0x1]
      %v4541 = vshrl.u32 %v4492, 16
      %v4543 = vrot.slane %v4541, 4
      %v4544 = vshll.u32 %v4492, 16
      %v4546 = vrot.slane %v4544, 5
      %v4547 = vor.u32 %v4543, %v4546
      %v4548 = vrot.slane %v4547, 4
      %v4550 = vshll.u32 %v4493, 16
      %v4552 = vrot.slane %v4550, 5
      %v4553 = vsel %vm999, %v4548, %v4552
      %v4554 = vshrl.u32 %v4493, 16
      %v4556 = vrot.slane %v4554, 4
      %v4557 = vor.u32 %v4556, %v4552
      %v4558 = vrot.slane %v4557, 4
      %v4560 = vshll.u32 %v4494, 16
      %v4562 = vrot.slane %v4560, 5
      %v4563 = vsel %vm999, %v4558, %v4562
      %v4565 = vshrl.u32 %v4495, 16
      %v4567 = vrot.slane %v4565, 4
      %v4568 = vshll.u32 %v4495, 16
      %v4570 = vrot.slane %v4568, 5
      %v4571 = vor.u32 %v4567, %v4570
      %v4572 = vrot.slane %v4571, 4
      %v4574 = vshll.u32 %v4496, 16
      %v4576 = vrot.slane %v4574, 5
      %v4577 = vsel %vm999, %v4572, %v4576
      %v4578 = vshrl.u32 %v4496, 16
      %v4580 = vrot.slane %v4578, 4
      %v4581 = vor.u32 %v4580, %v4576
      %v4582 = vrot.slane %v4581, 4
      %v4584 = vshll.u32 %v4497, 16
      %v4586 = vrot.slane %v4584, 5
      %v4587 = vsel %vm999, %v4582, %v4586
      %v4589 = vshrl.u32 %v4498, 16
      %v4591 = vrot.slane %v4589, 4
      %v4592 = vshll.u32 %v4498, 16
      %v4594 = vrot.slane %v4592, 5
      %v4595 = vor.u32 %v4591, %v4594
      %v4596 = vrot.slane %v4595, 4
      %v4598 = vshll.u32 %v4499, 16
      %v4600 = vrot.slane %v4598, 5
      %v4601 = vsel %vm999, %v4596, %v4600
      %v4602 = vshrl.u32 %v4499, 16
      %v4604 = vrot.slane %v4602, 4
      %v4605 = vor.u32 %v4604, %v4600
      %v4606 = vrot.slane %v4605, 4
      %v4608 = vshll.u32 %v4500, 16
      %v4610 = vrot.slane %v4608, 5
      %v4611 = vsel %vm999, %v4606, %v4610
      %v4613 = vshrl.u32 %v4501, 16
      %v4615 = vrot.slane %v4613, 4
      %v4616 = vshll.u32 %v4501, 16
      %v4618 = vrot.slane %v4616, 5
      %v4619 = vor.u32 %v4615, %v4618
      %v4620 = vrot.slane %v4619, 4
      %v4622 = vshll.u32 %v4502, 16
      %v4624 = vrot.slane %v4622, 5
      %v4625 = vsel %vm999, %v4620, %v4624
      %v4626 = vshrl.u32 %v4502, 16
      %v4628 = vrot.slane %v4626, 4
      %v4629 = vor.u32 %v4628, %v4624
      %v4630 = vrot.slane %v4629, 4
      %v4632 = vshll.u32 %v4503, 16
      %v4634 = vrot.slane %v4632, 5
      %v4635 = vsel %vm999, %v4630, %v4634
      %v4637 = vshrl.u32 %v4504, 16
      %v4639 = vrot.slane %v4637, 4
      %v4640 = vshll.u32 %v4504, 16
      %v4642 = vrot.slane %v4640, 5
      %v4643 = vor.u32 %v4639, %v4642
      %v4644 = vrot.slane %v4643, 4
      %v4646 = vshll.u32 %v4505, 16
      %v4648 = vrot.slane %v4646, 5
      %v4649 = vsel %vm999, %v4644, %v4648
      %v4650 = vshrl.u32 %v4505, 16
      %v4652 = vrot.slane %v4650, 4
      %v4653 = vor.u32 %v4652, %v4648
      %v4654 = vrot.slane %v4653, 4
      %v4656 = vshll.u32 %v4506, 16
      %v4658 = vrot.slane %v4656, 5
      %v4659 = vsel %vm999, %v4654, %v4658
      %v4661 = vshrl.u32 %v4507, 16
      %v4663 = vrot.slane %v4661, 4
      %v4664 = vshll.u32 %v4507, 16
      %v4666 = vrot.slane %v4664, 5
      %v4667 = vor.u32 %v4663, %v4666
      %v4668 = vrot.slane %v4667, 4
      %v4670 = vshll.u32 %v4508, 16
      %v4672 = vrot.slane %v4670, 5
      %v4673 = vsel %vm999, %v4668, %v4672
      %v4674 = vshrl.u32 %v4508, 16
      %v4676 = vrot.slane %v4674, 4
      %v4677 = vor.u32 %v4676, %v4672
      %v4678 = vrot.slane %v4677, 4
      %v4680 = vshll.u32 %v4509, 16
      %v4682 = vrot.slane %v4680, 5
      %v4683 = vsel %vm999, %v4678, %v4682
      %v4685 = vshrl.u32 %v4510, 16
      %v4687 = vrot.slane %v4685, 4
      %v4688 = vshll.u32 %v4510, 16
      %v4690 = vrot.slane %v4688, 5
      %v4691 = vor.u32 %v4687, %v4690
      %v4692 = vrot.slane %v4691, 4
      %v4694 = vshll.u32 %v4511, 16
      %v4696 = vrot.slane %v4694, 5
      %v4697 = vsel %vm999, %v4692, %v4696
      %v4698 = vshrl.u32 %v4511, 16
      %v4700 = vrot.slane %v4698, 4
      %v4701 = vor.u32 %v4700, %v4696
      %v4702 = vrot.slane %v4701, 4
      %v4704 = vshll.u32 %v4512, 16
      %v4706 = vrot.slane %v4704, 5
      %v4707 = vsel %vm999, %v4702, %v4706
      %v4709 = vshrl.u32 %v4513, 16
      %v4711 = vrot.slane %v4709, 4
      %v4712 = vshll.u32 %v4513, 16
      %v4714 = vrot.slane %v4712, 5
      %v4715 = vor.u32 %v4711, %v4714
      %v4716 = vrot.slane %v4715, 4
      %v4718 = vshll.u32 %v4514, 16
      %v4720 = vrot.slane %v4718, 5
      %v4721 = vsel %vm999, %v4716, %v4720
      %v4722 = vshrl.u32 %v4514, 16
      %v4724 = vrot.slane %v4722, 4
      %v4725 = vor.u32 %v4724, %v4720
      %v4726 = vrot.slane %v4725, 4
      %v4728 = vshll.u32 %v4515, 16
      %v4730 = vrot.slane %v4728, 5
      %v4731 = vsel %vm999, %v4726, %v4730
      %v4733 = vshrl.u32 %v4516, 16
      %v4735 = vrot.slane %v4733, 4
      %v4736 = vshll.u32 %v4516, 16
      %v4738 = vrot.slane %v4736, 5
      %v4739 = vor.u32 %v4735, %v4738
      %v4740 = vrot.slane %v4739, 4
      %v4742 = vshll.u32 %v4517, 16
      %v4744 = vrot.slane %v4742, 5
      %v4745 = vsel %vm999, %v4740, %v4744
      %v4746 = vshrl.u32 %v4517, 16
      %v4748 = vrot.slane %v4746, 4
      %v4749 = vor.u32 %v4748, %v4744
      %v4750 = vrot.slane %v4749, 4
      %v4752 = vshll.u32 %v4518, 16
      %v4754 = vrot.slane %v4752, 5
      %v4755 = vsel %vm999, %v4750, %v4754
      %v4757 = vshrl.u32 %v4519, 16
      %v4759 = vrot.slane %v4757, 4
      %v4760 = vshll.u32 %v4519, 16
      %v4762 = vrot.slane %v4760, 5
      %v4763 = vor.u32 %v4759, %v4762
      %v4764 = vrot.slane %v4763, 4
      %v4766 = vshll.u32 %v4520, 16
      %v4768 = vrot.slane %v4766, 5
      %v4769 = vsel %vm999, %v4764, %v4768
      %v4770 = vshrl.u32 %v4520, 16
      %v4772 = vrot.slane %v4770, 4
      %v4773 = vor.u32 %v4772, %v4768
      %v4774 = vrot.slane %v4773, 4
      %v4776 = vshll.u32 %v4521, 16
      %v4778 = vrot.slane %v4776, 5
      %v4779 = vsel %vm999, %v4774, %v4778
      %v4781 = vshrl.u32 %v4522, 16
      %v4783 = vrot.slane %v4781, 4
      %v4784 = vshll.u32 %v4522, 16
      %v4786 = vrot.slane %v4784, 5
      %v4787 = vor.u32 %v4783, %v4786
      %v4788 = vrot.slane %v4787, 4
      %v4790 = vshll.u32 %v4523, 16
      %v4792 = vrot.slane %v4790, 5
      %v4793 = vsel %vm999, %v4788, %v4792
      %v4794 = vshrl.u32 %v4523, 16
      %v4796 = vrot.slane %v4794, 4
      %v4797 = vor.u32 %v4796, %v4792
      %v4798 = vrot.slane %v4797, 4
      %v4800 = vshll.u32 %v4524, 16
      %v4802 = vrot.slane %v4800, 5
      %v4803 = vsel %vm999, %v4798, %v4802
      %v4805 = vshrl.u32 %v4525, 16
      %v4807 = vrot.slane %v4805, 4
      %v4808 = vshll.u32 %v4525, 16
      %v4810 = vrot.slane %v4808, 5
      %v4811 = vor.u32 %v4807, %v4810
      %v4812 = vrot.slane %v4811, 4
      %v4814 = vshll.u32 %v4526, 16
      %v4816 = vrot.slane %v4814, 5
      %v4817 = vsel %vm999, %v4812, %v4816
      %v4818 = vshrl.u32 %v4526, 16
      %v4820 = vrot.slane %v4818, 4
      %v4821 = vor.u32 %v4820, %v4816
      %v4822 = vrot.slane %v4821, 4
      %v4824 = vshll.u32 %v4527, 16
      %v4826 = vrot.slane %v4824, 5
      %v4827 = vsel %vm999, %v4822, %v4826
      %v4829 = vshrl.u32 %v4528, 16
      %v4831 = vrot.slane %v4829, 4
      %v4832 = vshll.u32 %v4528, 16
      %v4834 = vrot.slane %v4832, 5
      %v4835 = vor.u32 %v4831, %v4834
      %v4836 = vrot.slane %v4835, 4
      %v4838 = vshll.u32 %v4529, 16
      %v4840 = vrot.slane %v4838, 5
      %v4841 = vsel %vm999, %v4836, %v4840
      %v4842 = vshrl.u32 %v4529, 16
      %v4844 = vrot.slane %v4842, 4
      %v4845 = vor.u32 %v4844, %v4840
      %v4846 = vrot.slane %v4845, 4
      %v4848 = vshll.u32 %v4530, 16
      %v4850 = vrot.slane %v4848, 5
      %v4851 = vsel %vm999, %v4846, %v4850
      %v4853 = vshrl.u32 %v4531, 16
      %v4855 = vrot.slane %v4853, 4
      %v4856 = vshll.u32 %v4531, 16
      %v4858 = vrot.slane %v4856, 5
      %v4859 = vor.u32 %v4855, %v4858
      %v4860 = vrot.slane %v4859, 4
      %v4862 = vshll.u32 %v4532, 16
      %v4864 = vrot.slane %v4862, 5
      %v4865 = vsel %vm999, %v4860, %v4864
      %v4866 = vshrl.u32 %v4532, 16
      %v4868 = vrot.slane %v4866, 4
      %v4869 = vor.u32 %v4868, %v4864
      %v4870 = vrot.slane %v4869, 4
      %v4872 = vshll.u32 %v4533, 16
      %v4874 = vrot.slane %v4872, 5
      %v4875 = vsel %vm999, %v4870, %v4874
      %v4877 = vshrl.u32 %v4534, 16
      %v4879 = vrot.slane %v4877, 4
      %v4880 = vshll.u32 %v4534, 16
      %v4882 = vrot.slane %v4880, 5
      %v4883 = vor.u32 %v4879, %v4882
      %v4884 = vrot.slane %v4883, 4
      %v4886 = vshll.u32 %v4535, 16
      %v4888 = vrot.slane %v4886, 5
      %v4889 = vsel %vm999, %v4884, %v4888
      %v4890 = vshrl.u32 %v4535, 16
      %v4892 = vrot.slane %v4890, 4
      %v4893 = vor.u32 %v4892, %v4888
      %v4894 = vrot.slane %v4893, 4
      %v4896 = vshll.u32 %v4536, 16
      %v4898 = vrot.slane %v4896, 5
      %v4899 = vsel %vm999, %v4894, %v4898
      %v4901 = vshrl.u32 %v4537, 16
      %v4903 = vrot.slane %v4901, 4
      %v4904 = vshll.u32 %v4537, 16
      %v4906 = vrot.slane %v4904, 5
      %v4907 = vor.u32 %v4903, %v4906
      %v4908 = vrot.slane %v4907, 4
      %v4910 = vshll.u32 %v4538, 16
      %v4912 = vrot.slane %v4910, 5
      %v4913 = vsel %vm999, %v4908, %v4912
      %v4914 = vshrl.u32 %v4538, 16
      %v4916 = vrot.slane %v4914, 4
      %v4917 = vor.u32 %v4916, %v4912
      %v4918 = vrot.slane %v4917, 4
      %v4920 = vshll.u32 %v4539, 16
      %v4922 = vrot.slane %v4920, 5
      %v4923 = vsel %vm999, %v4918, %v4922
      %v4924 = vld [vmem:[%s1 + $0xe0] sm:$0xf]
      %v4925 = vld [vmem:[%s1 + $0xe4] sm:$0xf]
      %v4926 = vld [vmem:[%s1 + $0xe8] sm:$0xf]
      %v4927 = vld [vmem:[%s1 + $0xec] sm:$0xf]
      %v4928 = vld [vmem:[%s1 + $0xf0] sm:$0xf]
      %v4929 = vld [vmem:[%s1 + $0xf4] sm:$0xf]
      %v4930 = vld [vmem:[%s1 + $0xf8] sm:$0xf]
      %v4931 = vld [vmem:[%s1 + $0xfc] sm:$0xf]
      %v4932 = vunpack.c.l.b16 %v4553
      %v4933 = vunpack.c.l.b16 %v4563
      %v4934 = vunpack.c.l.b16 %v4577
      %v4935 = vunpack.c.l.b16 %v4587
      %v4936 = vunpack.c.l.b16 %v4601
      %v4937 = vunpack.c.l.b16 %v4611
      %v4938 = vunpack.c.l.b16 %v4625
      %v4939 = vunpack.c.l.b16 %v4635
      %v4940 = vunpack.c.l.b16 %v4649
      %v4941 = vunpack.c.l.b16 %v4659
      %v4942 = vunpack.c.l.b16 %v4673
      %v4943 = vunpack.c.l.b16 %v4683
      %v4944 = vunpack.c.l.b16 %v4697
      %v4945 = vunpack.c.l.b16 %v4707
      %v4946 = vunpack.c.l.b16 %v4721
      %v4947 = vunpack.c.l.b16 %v4731
      %v4948 = vunpack.c.l.b16 %v4745
      %v4949 = vunpack.c.l.b16 %v4755
      %v4950 = vunpack.c.l.b16 %v4769
      %v4951 = vunpack.c.l.b16 %v4779
      %v4952 = vunpack.c.l.b16 %v4793
      %v4953 = vunpack.c.l.b16 %v4803
      %v4954 = vunpack.c.l.b16 %v4817
      %v4955 = vunpack.c.l.b16 %v4827
      %v4956 = vunpack.c.l.b16 %v4841
      %v4957 = vunpack.c.l.b16 %v4851
      %v4958 = vunpack.c.l.b16 %v4865
      %v4959 = vunpack.c.l.b16 %v4875
      %v4960 = vunpack.c.l.b16 %v4889
      %v4961 = vunpack.c.l.b16 %v4899
      %v4962 = vunpack.c.l.b16 %v4913
      %v4963 = vunpack.c.l.b16 %v4923
      %v4964 = vpack.c.b16 %v4933, %v4932
      %v4965 = vpack.c.b16 %v4935, %v4934
      %v4966 = vpack.c.b16 %v4937, %v4936
      %v4967 = vpack.c.b16 %v4939, %v4938
      %v4968 = vpack.c.b16 %v4941, %v4940
      %v4969 = vpack.c.b16 %v4943, %v4942
      %v4970 = vpack.c.b16 %v4945, %v4944
      %v4971 = vpack.c.b16 %v4947, %v4946
      %v4972 = vpack.c.b16 %v4949, %v4948
      %v4973 = vpack.c.b16 %v4951, %v4950
      %v4974 = vpack.c.b16 %v4953, %v4952
      %v4975 = vpack.c.b16 %v4955, %v4954
      %v4976 = vpack.c.b16 %v4957, %v4956
      %v4977 = vpack.c.b16 %v4959, %v4958
      %v4978 = vpack.c.b16 %v4961, %v4960
      %v4979 = vpack.c.b16 %v4963, %v4962
      %v4988 = vunpack.c.l.b16 %v4924
      %v4989 = vunpack.c.l.b16 %v4925
      %v4990 = vunpack.c.l.b16 %v4926
      %v4991 = vunpack.c.l.b16 %v4927
      %v4992 = vunpack.c.l.b16 %v4928
      %v4993 = vunpack.c.l.b16 %v4929
      %v4994 = vunpack.c.l.b16 %v4930
      %v4995 = vunpack.c.l.b16 %v4931
      %v4996 = vpack.c.b16 %v4989, %v4988
      %v4997 = vpack.c.b16 %v4991, %v4990
      %v4998 = vpack.c.b16 %v4993, %v4992
      %v4999 = vpack.c.b16 %v4995, %v4994
      %v5005 = vsel %vm1464, %v4964, 0
      %v5008 = vsel %vm1464, %v4965, 0
      %v5011 = vsel %vm1464, %v4966, 0
      %v5014 = vsel %vm1464, %v4967, 0
      %v5017 = vsel %vm1464, %v4968, 0
      %v5020 = vsel %vm1464, %v4969, 0
      %v5023 = vsel %vm1464, %v4970, 0
      %v5026 = vsel %vm1464, %v4971, 0
      %v5029 = vsel %vm1464, %v4972, 0
      %v5032 = vsel %vm1464, %v4973, 0
      %v5035 = vsel %vm1464, %v4974, 0
      %v5038 = vsel %vm1464, %v4975, 0
      %v5041 = vsel %vm1464, %v4976, 0
      %v5044 = vsel %vm1464, %v4977, 0
      %v5047 = vsel %vm1464, %v4978, 0
      %v5050 = vsel %vm1464, %v4979, 0
      %5052 = vmatprep.subr.bf16.mxu0 0
      %5053 = vmatpush1.bf16.msra.mxu0 %v4996
      %5054 = vmatprep.subr.bf16.mxu0 0
      %5055 = vmatpush1.bf16.msra.mxu0 %v4997
      %5056 = vmatprep.subr.bf16.mxu0 0
      %5057 = vmatpush1.bf16.msra.mxu0 %v4998
      %5058 = vmatprep.subr.bf16.mxu0 0
      %5059 = vmatpush1.bf16.msra.mxu0 %v4999
      %5060 = vmatprep.subr.bf16.mxu0 0
      %5061 = vmatpush1.bf16.msra.mxu0 0
      %5062 = vmatprep.subr.bf16.mxu0 0
      %5063 = vmatpush1.bf16.msra.mxu0 0
      %5064 = vmatprep.subr.bf16.mxu0 0
      %5065 = vmatpush1.bf16.msra.mxu0 0
      %5066 = vmatprep.subr.bf16.mxu0 0
      %5067 = vmatpush1.bf16.msra.mxu0 0
      %5068 = vmatprep.subr.bf16.mxu0 0
      %5069 = vmatpush1.bf16.msra.mxu0 0
      %5070 = vmatprep.subr.bf16.mxu0 0
      %5071 = vmatpush1.bf16.msra.mxu0 0
      %5072 = vmatprep.subr.bf16.mxu0 0
      %5073 = vmatpush1.bf16.msra.mxu0 0
      %5074 = vmatprep.subr.bf16.mxu0 0
      %5075 = vmatpush1.bf16.msra.mxu0 0
      %5076 = vmatprep.subr.bf16.mxu0 0
      %5077 = vmatpush1.bf16.msra.mxu0 0
      %5078 = vmatprep.subr.bf16.mxu0 0
      %5079 = vmatpush1.bf16.msra.mxu0 0
      %5080 = vmatprep.subr.bf16.mxu0 0
      %5081 = vmatpush1.bf16.msra.mxu0 0
      %5082 = vmatprep.subr.bf16.mxu0 0
      %5083 = vmatpush1.bf16.msra.mxu0 0
      %5084 = vmatprep.mubr.bf16.mxu0 0
      %5085 = vmatmul.mubr.bf16.gmra.mrb[0].mxu0 %v5005
      %v5086 = vpop.f32.mrb[0].mxu0
      %v5087 = vadd.f32 0.0, %v5086
      %v5088 = vpop.f32.mrb[0].mxu0
      %v5089 = vpop.f32.mrb[0].mxu0
      %v5090 = vadd.f32 0.0, %v5089
      %v5091 = vpop.f32.mrb[0].mxu0
      %5092 = vmatprep.mubr.bf16.mxu0 0
      %5093 = vmatmul.mubr.bf16.gmra.mrb[0].mxu0 %v5008
      %v5094 = vpop.f32.mrb[0].mxu0
      %v5095 = vadd.f32 0.0, %v5094
      %v5096 = vpop.f32.mrb[0].mxu0
      %v5097 = vpop.f32.mrb[0].mxu0
      %v5098 = vadd.f32 0.0, %v5097
      %v5099 = vpop.f32.mrb[0].mxu0
      %5100 = vmatprep.mubr.bf16.mxu0 0
      %5101 = vmatmul.mubr.bf16.gmra.mrb[0].mxu0 %v5011
      %v5102 = vpop.f32.mrb[0].mxu0
      %v5103 = vadd.f32 0.0, %v5102
      %v5104 = vpop.f32.mrb[0].mxu0
      %v5105 = vpop.f32.mrb[0].mxu0
      %v5106 = vadd.f32 0.0, %v5105
      %v5107 = vpop.f32.mrb[0].mxu0
      %5108 = vmatprep.mubr.bf16.mxu0 0
      %5109 = vmatmul.mubr.bf16.gmra.mrb[0].mxu0 %v5014
      %v5110 = vpop.f32.mrb[0].mxu0
      %v5111 = vadd.f32 0.0, %v5110
      %v5112 = vpop.f32.mrb[0].mxu0
      %v5113 = vpop.f32.mrb[0].mxu0
      %v5114 = vadd.f32 0.0, %v5113
      %v5115 = vpop.f32.mrb[0].mxu0
      %5116 = vmatprep.mubr.bf16.mxu0 0
      %5117 = vmatmul.mubr.bf16.gmra.mrb[0].mxu0 %v5017
      %v5118 = vpop.f32.mrb[0].mxu0
      %v5119 = vadd.f32 0.0, %v5118
      %v5120 = vpop.f32.mrb[0].mxu0
      %v5121 = vpop.f32.mrb[0].mxu0
      %v5122 = vadd.f32 0.0, %v5121
      %v5123 = vpop.f32.mrb[0].mxu0
      %5124 = vmatprep.mubr.bf16.mxu0 0
      %5125 = vmatmul.mubr.bf16.gmra.mrb[0].mxu0 %v5020
      %v5126 = vpop.f32.mrb[0].mxu0
      %v5127 = vadd.f32 0.0, %v5126
      %v5128 = vpop.f32.mrb[0].mxu0
      %v5129 = vpop.f32.mrb[0].mxu0
      %v5130 = vadd.f32 0.0, %v5129
      %v5131 = vpop.f32.mrb[0].mxu0
      %5132 = vmatprep.mubr.bf16.mxu0 0
      %5133 = vmatmul.mubr.bf16.gmra.mrb[0].mxu0 %v5023
      %v5134 = vpop.f32.mrb[0].mxu0
      %v5135 = vadd.f32 0.0, %v5134
      %v5136 = vpop.f32.mrb[0].mxu0
      %v5137 = vpop.f32.mrb[0].mxu0
      %v5138 = vadd.f32 0.0, %v5137
      %v5139 = vpop.f32.mrb[0].mxu0
      %5140 = vmatprep.mubr.bf16.mxu0 0
      %5141 = vmatmul.mubr.bf16.gmra.mrb[0].mxu0 %v5026
      %v5142 = vpop.f32.mrb[0].mxu0
      %v5143 = vadd.f32 0.0, %v5142
      %v5144 = vpop.f32.mrb[0].mxu0
      %v5145 = vpop.f32.mrb[0].mxu0
      %v5146 = vadd.f32 0.0, %v5145
      %v5147 = vpop.f32.mrb[0].mxu0
      %5148 = vmatprep.mubr.bf16.mxu0 0
      %5149 = vmatmul.mubr.bf16.gmra.mrb[0].mxu0 %v5029
      %v5150 = vpop.f32.mrb[0].mxu0
      %v5151 = vadd.f32 0.0, %v5150
      %v5152 = vpop.f32.mrb[0].mxu0
      %v5153 = vpop.f32.mrb[0].mxu0
      %v5154 = vadd.f32 0.0, %v5153
      %v5155 = vpop.f32.mrb[0].mxu0
      %5156 = vmatprep.mubr.bf16.mxu0 0
      %5157 = vmatmul.mubr.bf16.gmra.mrb[0].mxu0 %v5032
      %v5158 = vpop.f32.mrb[0].mxu0
      %v5159 = vadd.f32 0.0, %v5158
      %v5160 = vpop.f32.mrb[0].mxu0
      %v5161 = vpop.f32.mrb[0].mxu0
      %v5162 = vadd.f32 0.0, %v5161
      %v5163 = vpop.f32.mrb[0].mxu0
      %5164 = vmatprep.mubr.bf16.mxu0 0
      %5165 = vmatmul.mubr.bf16.gmra.mrb[0].mxu0 %v5035
      %v5166 = vpop.f32.mrb[0].mxu0
      %v5167 = vadd.f32 0.0, %v5166
      %v5168 = vpop.f32.mrb[0].mxu0
      %v5169 = vpop.f32.mrb[0].mxu0
      %v5170 = vadd.f32 0.0, %v5169
      %v5171 = vpop.f32.mrb[0].mxu0
      %5172 = vmatprep.mubr.bf16.mxu0 0
      %5173 = vmatmul.mubr.bf16.gmra.mrb[0].mxu0 %v5038
      %v5174 = vpop.f32.mrb[0].mxu0
      %v5175 = vadd.f32 0.0, %v5174
      %v5176 = vpop.f32.mrb[0].mxu0
      %v5177 = vpop.f32.mrb[0].mxu0
      %v5178 = vadd.f32 0.0, %v5177
      %v5179 = vpop.f32.mrb[0].mxu0
      %5180 = vmatprep.mubr.bf16.mxu0 0
      %5181 = vmatmul.mubr.bf16.gmra.mrb[0].mxu0 %v5041
      %v5182 = vpop.f32.mrb[0].mxu0
      %v5183 = vadd.f32 0.0, %v5182
      %v5184 = vpop.f32.mrb[0].mxu0
      %v5185 = vpop.f32.mrb[0].mxu0
      %v5186 = vadd.f32 0.0, %v5185
      %v5187 = vpop.f32.mrb[0].mxu0
      %5188 = vmatprep.mubr.bf16.mxu0 0
      %5189 = vmatmul.mubr.bf16.gmra.mrb[0].mxu0 %v5044
      %v5190 = vpop.f32.mrb[0].mxu0
      %v5191 = vadd.f32 0.0, %v5190
      %v5192 = vpop.f32.mrb[0].mxu0
      %v5193 = vpop.f32.mrb[0].mxu0
      %v5194 = vadd.f32 0.0, %v5193
      %v5195 = vpop.f32.mrb[0].mxu0
      %5196 = vmatprep.mubr.bf16.mxu0 0
      %5197 = vmatmul.mubr.bf16.gmra.mrb[0].mxu0 %v5047
      %v5198 = vpop.f32.mrb[0].mxu0
      %v5199 = vadd.f32 0.0, %v5198
      %v5200 = vpop.f32.mrb[0].mxu0
      %v5201 = vpop.f32.mrb[0].mxu0
      %v5202 = vadd.f32 0.0, %v5201
      %v5203 = vpop.f32.mrb[0].mxu0
      %5204 = vmatprep.mubr.bf16.mxu0 0
      %5205 = vmatmul.mubr.bf16.gmra.mrb[0].mxu0 %v5050
      %v5206 = vpop.f32.mrb[0].mxu0
      %v5207 = vadd.f32 0.0, %v5206
      %v5208 = vpop.f32.mrb[0].mxu0
      %v5209 = vpop.f32.mrb[0].mxu0
      %v5210 = vadd.f32 0.0, %v5209
      %v5211 = vpop.f32.mrb[0].mxu0
      %5212 = vdwg.mxu0
      %v5213 = vadd.f32 %v4460, %v5087
      %v5214 = vadd.f32 %v4461, %v5090
      %v5215 = vadd.f32 %v4462, %v5095
      %v5216 = vadd.f32 %v4463, %v5098
      %v5217 = vadd.f32 %v4464, %v5103
      %v5218 = vadd.f32 %v4465, %v5106
      %v5219 = vadd.f32 %v4466, %v5111
      %v5220 = vadd.f32 %v4467, %v5114
      %v5221 = vadd.f32 %v4468, %v5119
      %v5222 = vadd.f32 %v4469, %v5122
      %v5223 = vadd.f32 %v4470, %v5127
      %v5224 = vadd.f32 %v4471, %v5130
      %v5225 = vadd.f32 %v4472, %v5135
      %v5226 = vadd.f32 %v4473, %v5138
      %v5227 = vadd.f32 %v4474, %v5143
      %v5228 = vadd.f32 %v4475, %v5146
      %v5229 = vadd.f32 %v4476, %v5151
      %v5230 = vadd.f32 %v4477, %v5154
      %v5231 = vadd.f32 %v4478, %v5159
      %v5232 = vadd.f32 %v4479, %v5162
      %v5233 = vadd.f32 %v4480, %v5167
      %v5234 = vadd.f32 %v4481, %v5170
      %v5235 = vadd.f32 %v4482, %v5175
      %v5236 = vadd.f32 %v4483, %v5178
      %v5237 = vadd.f32 %v4484, %v5183
      %v5238 = vadd.f32 %v4485, %v5186
      %v5239 = vadd.f32 %v4486, %v5191
      %v5240 = vadd.f32 %v4487, %v5194
      %v5241 = vadd.f32 %v4488, %v5199
      %v5242 = vadd.f32 %v4489, %v5202
      %v5243 = vadd.f32 %v4490, %v5207
      %v5244 = vadd.f32 %v4491, %v5210
      %v5245 = vld [vmem:[%s4106] sm:$0xe]
      %v5246 = vld [vmem:[%s4106 + $0xc] sm:$0xe]
      %v5247 = vld [vmem:[%s4106 + $0x18] sm:$0xe]
      %v5248 = vld [vmem:[%s4106 + $0x24] sm:$0xe]
      %v5249 = vld [vmem:[%s4106 + $0x30] sm:$0xe]
      %v5250 = vld [vmem:[%s4106 + $0x3c] sm:$0xe]
      %v5251 = vld [vmem:[%s4106 + $0x48] sm:$0xe]
      %v5252 = vld [vmem:[%s4106 + $0x54] sm:$0xe]
      %v5253 = vld [vmem:[%s4106 + $0x60] sm:$0xe]
      %v5254 = vld [vmem:[%s4106 + $0x6c] sm:$0xe]
      %v5255 = vld [vmem:[%s4106 + $0x78] sm:$0xe]
      %v5256 = vld [vmem:[%s4106 + $0x84] sm:$0xe]
      %v5257 = vld [vmem:[%s4106 + $0x90] sm:$0xe]
      %v5258 = vld [vmem:[%s4106 + $0x9c] sm:$0xe]
      %v5259 = vld [vmem:[%s4106 + $0xa8] sm:$0xe]
      %v5260 = vld [vmem:[%s4106 + $0xb4] sm:$0xe]
      %v5309 = vrot.slane %v5245, 5
      %v5310 = vrot.slane %v5309, 4
      %v5311 = vrot.slane %v4493, 5
      %v5312 = vsel %vm2037, %v5310, %v5311
      %v5313 = vrot.slane %v5311, 4
      %v5314 = vrot.slane %v4494, 5
      %v5315 = vsel %vm2037, %v5313, %v5314
      %v5316 = vrot.slane %v5246, 5
      %v5317 = vrot.slane %v5316, 4
      %v5318 = vrot.slane %v4496, 5
      %v5319 = vsel %vm2037, %v5317, %v5318
      %v5320 = vrot.slane %v5318, 4
      %v5321 = vrot.slane %v4497, 5
      %v5322 = vsel %vm2037, %v5320, %v5321
      %v5323 = vrot.slane %v5247, 5
      %v5324 = vrot.slane %v5323, 4
      %v5325 = vrot.slane %v4499, 5
      %v5326 = vsel %vm2037, %v5324, %v5325
      %v5327 = vrot.slane %v5325, 4
      %v5328 = vrot.slane %v4500, 5
      %v5329 = vsel %vm2037, %v5327, %v5328
      %v5330 = vrot.slane %v5248, 5
      %v5331 = vrot.slane %v5330, 4
      %v5332 = vrot.slane %v4502, 5
      %v5333 = vsel %vm2037, %v5331, %v5332
      %v5334 = vrot.slane %v5332, 4
      %v5335 = vrot.slane %v4503, 5
      %v5336 = vsel %vm2037, %v5334, %v5335
      %v5337 = vrot.slane %v5249, 5
      %v5338 = vrot.slane %v5337, 4
      %v5339 = vrot.slane %v4505, 5
      %v5340 = vsel %vm2037, %v5338, %v5339
      %v5341 = vrot.slane %v5339, 4
      %v5342 = vrot.slane %v4506, 5
      %v5343 = vsel %vm2037, %v5341, %v5342
      %v5344 = vrot.slane %v5250, 5
      %v5345 = vrot.slane %v5344, 4
      %v5346 = vrot.slane %v4508, 5
      %v5347 = vsel %vm2037, %v5345, %v5346
      %v5348 = vrot.slane %v5346, 4
      %v5349 = vrot.slane %v4509, 5
      %v5350 = vsel %vm2037, %v5348, %v5349
      %v5351 = vrot.slane %v5251, 5
      %v5352 = vrot.slane %v5351, 4
      %v5353 = vrot.slane %v4511, 5
      %v5354 = vsel %vm2037, %v5352, %v5353
      %v5355 = vrot.slane %v5353, 4
      %v5356 = vrot.slane %v4512, 5
      %v5357 = vsel %vm2037, %v5355, %v5356
      %v5358 = vrot.slane %v5252, 5
      %v5359 = vrot.slane %v5358, 4
      %v5360 = vrot.slane %v4514, 5
      %v5361 = vsel %vm2037, %v5359, %v5360
      %v5362 = vrot.slane %v5360, 4
      %v5363 = vrot.slane %v4515, 5
      %v5364 = vsel %vm2037, %v5362, %v5363
      %v5365 = vrot.slane %v5253, 5
      %v5366 = vrot.slane %v5365, 4
      %v5367 = vrot.slane %v4517, 5
      %v5368 = vsel %vm2037, %v5366, %v5367
      %v5369 = vrot.slane %v5367, 4
      %v5370 = vrot.slane %v4518, 5
      %v5371 = vsel %vm2037, %v5369, %v5370
      %v5372 = vrot.slane %v5254, 5
      %v5373 = vrot.slane %v5372, 4
      %v5374 = vrot.slane %v4520, 5
      %v5375 = vsel %vm2037, %v5373, %v5374
      %v5376 = vrot.slane %v5374, 4
      %v5377 = vrot.slane %v4521, 5
      %v5378 = vsel %vm2037, %v5376, %v5377
      %v5379 = vrot.slane %v5255, 5
      %v5380 = vrot.slane %v5379, 4
      %v5381 = vrot.slane %v4523, 5
      %v5382 = vsel %vm2037, %v5380, %v5381
      %v5383 = vrot.slane %v5381, 4
      %v5384 = vrot.slane %v4524, 5
      %v5385 = vsel %vm2037, %v5383, %v5384
      %v5386 = vrot.slane %v5256, 5
      %v5387 = vrot.slane %v5386, 4
      %v5388 = vrot.slane %v4526, 5
      %v5389 = vsel %vm2037, %v5387, %v5388
      %v5390 = vrot.slane %v5388, 4
      %v5391 = vrot.slane %v4527, 5
      %v5392 = vsel %vm2037, %v5390, %v5391
      %v5393 = vrot.slane %v5257, 5
      %v5394 = vrot.slane %v5393, 4
      %v5395 = vrot.slane %v4529, 5
      %v5396 = vsel %vm2037, %v5394, %v5395
      %v5397 = vrot.slane %v5395, 4
      %v5398 = vrot.slane %v4530, 5
      %v5399 = vsel %vm2037, %v5397, %v5398
      %v5400 = vrot.slane %v5258, 5
      %v5401 = vrot.slane %v5400, 4
      %v5402 = vrot.slane %v4532, 5
      %v5403 = vsel %vm2037, %v5401, %v5402
      %v5404 = vrot.slane %v5402, 4
      %v5405 = vrot.slane %v4533, 5
      %v5406 = vsel %vm2037, %v5404, %v5405
      %v5407 = vrot.slane %v5259, 5
      %v5408 = vrot.slane %v5407, 4
      %v5409 = vrot.slane %v4535, 5
      %v5410 = vsel %vm2037, %v5408, %v5409
      %v5411 = vrot.slane %v5409, 4
      %v5412 = vrot.slane %v4536, 5
      %v5413 = vsel %vm2037, %v5411, %v5412
      %v5414 = vrot.slane %v5260, 5
      %v5415 = vrot.slane %v5414, 4
      %v5416 = vrot.slane %v4538, 5
      %v5417 = vsel %vm2037, %v5415, %v5416
      %v5418 = vrot.slane %v5416, 4
      %v5419 = vrot.slane %v4539, 5
      %v5420 = vsel %vm2037, %v5418, %v5419
      %v5421 = vld [vmem:[%s1 + $0x100] sm:$0xf]
      %v5422 = vld [vmem:[%s1 + $0x104] sm:$0xf]
      %v5423 = vld [vmem:[%s1 + $0x108] sm:$0xf]
      %v5424 = vld [vmem:[%s1 + $0x10c] sm:$0xf]
      %v5425 = vld [vmem:[%s1 + $0x110] sm:$0xf]
      %v5426 = vld [vmem:[%s1 + $0x114] sm:$0xf]
      %v5427 = vld [vmem:[%s1 + $0x118] sm:$0xf]
      %v5428 = vld [vmem:[%s1 + $0x11c] sm:$0xf]
      %v5429 = vunpack.c.l.b16 %v5312
      %v5430 = vunpack.c.l.b16 %v5315
      %v5431 = vunpack.c.l.b16 %v5319
      %v5432 = vunpack.c.l.b16 %v5322
      %v5433 = vunpack.c.l.b16 %v5326
      %v5434 = vunpack.c.l.b16 %v5329
      %v5435 = vunpack.c.l.b16 %v5333
      %v5436 = vunpack.c.l.b16 %v5336
      %v5437 = vunpack.c.l.b16 %v5340
      %v5438 = vunpack.c.l.b16 %v5343
      %v5439 = vunpack.c.l.b16 %v5347
      %v5440 = vunpack.c.l.b16 %v5350
      %v5441 = vunpack.c.l.b16 %v5354
      %v5442 = vunpack.c.l.b16 %v5357
      %v5443 = vunpack.c.l.b16 %v5361
      %v5444 = vunpack.c.l.b16 %v5364
      %v5445 = vunpack.c.l.b16 %v5368
      %v5446 = vunpack.c.l.b16 %v5371
      %v5447 = vunpack.c.l.b16 %v5375
      %v5448 = vunpack.c.l.b16 %v5378
      %v5449 = vunpack.c.l.b16 %v5382
      %v5450 = vunpack.c.l.b16 %v5385
      %v5451 = vunpack.c.l.b16 %v5389
      %v5452 = vunpack.c.l.b16 %v5392
      %v5453 = vunpack.c.l.b16 %v5396
      %v5454 = vunpack.c.l.b16 %v5399
      %v5455 = vunpack.c.l.b16 %v5403
      %v5456 = vunpack.c.l.b16 %v5406
      %v5457 = vunpack.c.l.b16 %v5410
      %v5458 = vunpack.c.l.b16 %v5413
      %v5459 = vunpack.c.l.b16 %v5417
      %v5460 = vunpack.c.l.b16 %v5420
      %v5461 = vpack.c.b16 %v5430, %v5429
      %v5462 = vpack.c.b16 %v5432, %v5431
      %v5463 = vpack.c.b16 %v5434, %v5433
      %v5464 = vpack.c.b16 %v5436, %v5435
      %v5465 = vpack.c.b16 %v5438, %v5437
      %v5466 = vpack.c.b16 %v5440, %v5439
      %v5467 = vpack.c.b16 %v5442, %v5441
      %v5468 = vpack.c.b16 %v5444, %v5443
      %v5469 = vpack.c.b16 %v5446, %v5445
      %v5470 = vpack.c.b16 %v5448, %v5447
      %v5471 = vpack.c.b16 %v5450, %v5449
      %v5472 = vpack.c.b16 %v5452, %v5451
      %v5473 = vpack.c.b16 %v5454, %v5453
      %v5474 = vpack.c.b16 %v5456, %v5455
      %v5475 = vpack.c.b16 %v5458, %v5457
      %v5476 = vpack.c.b16 %v5460, %v5459
      %v5485 = vunpack.c.l.b16 %v5421
      %v5486 = vunpack.c.l.b16 %v5422
      %v5487 = vunpack.c.l.b16 %v5423
      %v5488 = vunpack.c.l.b16 %v5424
      %v5489 = vunpack.c.l.b16 %v5425
      %v5490 = vunpack.c.l.b16 %v5426
      %v5491 = vunpack.c.l.b16 %v5427
      %v5492 = vunpack.c.l.b16 %v5428
      %v5493 = vpack.c.b16 %v5486, %v5485
      %v5494 = vpack.c.b16 %v5488, %v5487
      %v5495 = vpack.c.b16 %v5490, %v5489
      %v5496 = vpack.c.b16 %v5492, %v5491
      %v5502 = vsel %vm1464, %v5461, 0
      %v5505 = vsel %vm1464, %v5462, 0
      %v5508 = vsel %vm1464, %v5463, 0
      %v5511 = vsel %vm1464, %v5464, 0
      %v5514 = vsel %vm1464, %v5465, 0
      %v5517 = vsel %vm1464, %v5466, 0
      %v5520 = vsel %vm1464, %v5467, 0
      %v5523 = vsel %vm1464, %v5468, 0
      %v5526 = vsel %vm1464, %v5469, 0
      %v5529 = vsel %vm1464, %v5470, 0
      %v5532 = vsel %vm1464, %v5471, 0
      %v5535 = vsel %vm1464, %v5472, 0
      %v5538 = vsel %vm1464, %v5473, 0
      %v5541 = vsel %vm1464, %v5474, 0
      %v5544 = vsel %vm1464, %v5475, 0
      %v5547 = vsel %vm1464, %v5476, 0
      %5549 = vmatprep.subr.bf16.mxu0 0
      %5550 = vmatpush1.bf16.msra.mxu0 %v5493
      %5551 = vmatprep.subr.bf16.mxu0 0
      %5552 = vmatpush1.bf16.msra.mxu0 %v5494
      %5553 = vmatprep.subr.bf16.mxu0 0
      %5554 = vmatpush1.bf16.msra.mxu0 %v5495
      %5555 = vmatprep.subr.bf16.mxu0 0
      %5556 = vmatpush1.bf16.msra.mxu0 %v5496
      %5557 = vmatprep.subr.bf16.mxu0 0
      %5558 = vmatpush1.bf16.msra.mxu0 0
      %5559 = vmatprep.subr.bf16.mxu0 0
      %5560 = vmatpush1.bf16.msra.mxu0 0
      %5561 = vmatprep.subr.bf16.mxu0 0
      %5562 = vmatpush1.bf16.msra.mxu0 0
      %5563 = vmatprep.subr.bf16.mxu0 0
      %5564 = vmatpush1.bf16.msra.mxu0 0
      %5565 = vmatprep.subr.bf16.mxu0 0
      %5566 = vmatpush1.bf16.msra.mxu0 0
      %5567 = vmatprep.subr.bf16.mxu0 0
      %5568 = vmatpush1.bf16.msra.mxu0 0
      %5569 = vmatprep.subr.bf16.mxu0 0
      %5570 = vmatpush1.bf16.msra.mxu0 0
      %5571 = vmatprep.subr.bf16.mxu0 0
      %5572 = vmatpush1.bf16.msra.mxu0 0
      %5573 = vmatprep.subr.bf16.mxu0 0
      %5574 = vmatpush1.bf16.msra.mxu0 0
      %5575 = vmatprep.subr.bf16.mxu0 0
      %5576 = vmatpush1.bf16.msra.mxu0 0
      %5577 = vmatprep.subr.bf16.mxu0 0
      %5578 = vmatpush1.bf16.msra.mxu0 0
      %5579 = vmatprep.subr.bf16.mxu0 0
      %5580 = vmatpush1.bf16.msra.mxu0 0
      %5581 = vmatprep.mubr.bf16.mxu0 0
      %5582 = vmatmul.mubr.bf16.gmra.mrb[0].mxu0 %v5502
      %v5583 = vpop.f32.mrb[0].mxu0
      %v5584 = vadd.f32 0.0, %v5583
      %v5585 = vpop.f32.mrb[0].mxu0
      %v5586 = vpop.f32.mrb[0].mxu0
      %v5587 = vadd.f32 0.0, %v5586
      %v5588 = vpop.f32.mrb[0].mxu0
      %5589 = vmatprep.mubr.bf16.mxu0 0
      %5590 = vmatmul.mubr.bf16.gmra.mrb[0].mxu0 %v5505
      %v5591 = vpop.f32.mrb[0].mxu0
      %v5592 = vadd.f32 0.0, %v5591
      %v5593 = vpop.f32.mrb[0].mxu0
      %v5594 = vpop.f32.mrb[0].mxu0
      %v5595 = vadd.f32 0.0, %v5594
      %v5596 = vpop.f32.mrb[0].mxu0
      %5597 = vmatprep.mubr.bf16.mxu0 0
      %5598 = vmatmul.mubr.bf16.gmra.mrb[0].mxu0 %v5508
      %v5599 = vpop.f32.mrb[0].mxu0
      %v5600 = vadd.f32 0.0, %v5599
      %v5601 = vpop.f32.mrb[0].mxu0
      %v5602 = vpop.f32.mrb[0].mxu0
      %v5603 = vadd.f32 0.0, %v5602
      %v5604 = vpop.f32.mrb[0].mxu0
      %5605 = vmatprep.mubr.bf16.mxu0 0
      %5606 = vmatmul.mubr.bf16.gmra.mrb[0].mxu0 %v5511
      %v5607 = vpop.f32.mrb[0].mxu0
      %v5608 = vadd.f32 0.0, %v5607
      %v5609 = vpop.f32.mrb[0].mxu0
      %v5610 = vpop.f32.mrb[0].mxu0
      %v5611 = vadd.f32 0.0, %v5610
      %v5612 = vpop.f32.mrb[0].mxu0
      %5613 = vmatprep.mubr.bf16.mxu0 0
      %5614 = vmatmul.mubr.bf16.gmra.mrb[0].mxu0 %v5514
      %v5615 = vpop.f32.mrb[0].mxu0
      %v5616 = vadd.f32 0.0, %v5615
      %v5617 = vpop.f32.mrb[0].mxu0
      %v5618 = vpop.f32.mrb[0].mxu0
      %v5619 = vadd.f32 0.0, %v5618
      %v5620 = vpop.f32.mrb[0].mxu0
      %5621 = vmatprep.mubr.bf16.mxu0 0
      %5622 = vmatmul.mubr.bf16.gmra.mrb[0].mxu0 %v5517
      %v5623 = vpop.f32.mrb[0].mxu0
      %v5624 = vadd.f32 0.0, %v5623
      %v5625 = vpop.f32.mrb[0].mxu0
      %v5626 = vpop.f32.mrb[0].mxu0
      %v5627 = vadd.f32 0.0, %v5626
      %v5628 = vpop.f32.mrb[0].mxu0
      %5629 = vmatprep.mubr.bf16.mxu0 0
      %5630 = vmatmul.mubr.bf16.gmra.mrb[0].mxu0 %v5520
      %v5631 = vpop.f32.mrb[0].mxu0
      %v5632 = vadd.f32 0.0, %v5631
      %v5633 = vpop.f32.mrb[0].mxu0
      %v5634 = vpop.f32.mrb[0].mxu0
      %v5635 = vadd.f32 0.0, %v5634
      %v5636 = vpop.f32.mrb[0].mxu0
      %5637 = vmatprep.mubr.bf16.mxu0 0
      %5638 = vmatmul.mubr.bf16.gmra.mrb[0].mxu0 %v5523
      %v5639 = vpop.f32.mrb[0].mxu0
      %v5640 = vadd.f32 0.0, %v5639
      %v5641 = vpop.f32.mrb[0].mxu0
      %v5642 = vpop.f32.mrb[0].mxu0
      %v5643 = vadd.f32 0.0, %v5642
      %v5644 = vpop.f32.mrb[0].mxu0
      %5645 = vmatprep.mubr.bf16.mxu0 0
      %5646 = vmatmul.mubr.bf16.gmra.mrb[0].mxu0 %v5526
      %v5647 = vpop.f32.mrb[0].mxu0
      %v5648 = vadd.f32 0.0, %v5647
      %v5649 = vpop.f32.mrb[0].mxu0
      %v5650 = vpop.f32.mrb[0].mxu0
      %v5651 = vadd.f32 0.0, %v5650
      %v5652 = vpop.f32.mrb[0].mxu0
      %5653 = vmatprep.mubr.bf16.mxu0 0
      %5654 = vmatmul.mubr.bf16.gmra.mrb[0].mxu0 %v5529
      %v5655 = vpop.f32.mrb[0].mxu0
      %v5656 = vadd.f32 0.0, %v5655
      %v5657 = vpop.f32.mrb[0].mxu0
      %v5658 = vpop.f32.mrb[0].mxu0
      %v5659 = vadd.f32 0.0, %v5658
      %v5660 = vpop.f32.mrb[0].mxu0
      %5661 = vmatprep.mubr.bf16.mxu0 0
      %5662 = vmatmul.mubr.bf16.gmra.mrb[0].mxu0 %v5532
      %v5663 = vpop.f32.mrb[0].mxu0
      %v5664 = vadd.f32 0.0, %v5663
      %v5665 = vpop.f32.mrb[0].mxu0
      %v5666 = vpop.f32.mrb[0].mxu0
      %v5667 = vadd.f32 0.0, %v5666
      %v5668 = vpop.f32.mrb[0].mxu0
      %5669 = vmatprep.mubr.bf16.mxu0 0
      %5670 = vmatmul.mubr.bf16.gmra.mrb[0].mxu0 %v5535
      %v5671 = vpop.f32.mrb[0].mxu0
      %v5672 = vadd.f32 0.0, %v5671
      %v5673 = vpop.f32.mrb[0].mxu0
      %v5674 = vpop.f32.mrb[0].mxu0
      %v5675 = vadd.f32 0.0, %v5674
      %v5676 = vpop.f32.mrb[0].mxu0
      %5677 = vmatprep.mubr.bf16.mxu0 0
      %5678 = vmatmul.mubr.bf16.gmra.mrb[0].mxu0 %v5538
      %v5679 = vpop.f32.mrb[0].mxu0
      %v5680 = vadd.f32 0.0, %v5679
      %v5681 = vpop.f32.mrb[0].mxu0
      %v5682 = vpop.f32.mrb[0].mxu0
      %v5683 = vadd.f32 0.0, %v5682
      %v5684 = vpop.f32.mrb[0].mxu0
      %5685 = vmatprep.mubr.bf16.mxu0 0
      %5686 = vmatmul.mubr.bf16.gmra.mrb[0].mxu0 %v5541
      %v5687 = vpop.f32.mrb[0].mxu0
      %v5688 = vadd.f32 0.0, %v5687
      %v5689 = vpop.f32.mrb[0].mxu0
      %v5690 = vpop.f32.mrb[0].mxu0
      %v5691 = vadd.f32 0.0, %v5690
      %v5692 = vpop.f32.mrb[0].mxu0
      %5693 = vmatprep.mubr.bf16.mxu0 0
      %5694 = vmatmul.mubr.bf16.gmra.mrb[0].mxu0 %v5544
      %v5695 = vpop.f32.mrb[0].mxu0
      %v5696 = vadd.f32 0.0, %v5695
      %v5697 = vpop.f32.mrb[0].mxu0
      %v5698 = vpop.f32.mrb[0].mxu0
      %v5699 = vadd.f32 0.0, %v5698
      %v5700 = vpop.f32.mrb[0].mxu0
      %5701 = vmatprep.mubr.bf16.mxu0 0
      %5702 = vmatmul.mubr.bf16.gmra.mrb[0].mxu0 %v5547
      %v5703 = vpop.f32.mrb[0].mxu0
      %v5704 = vadd.f32 0.0, %v5703
      %v5705 = vpop.f32.mrb[0].mxu0
      %v5706 = vpop.f32.mrb[0].mxu0
      %v5707 = vadd.f32 0.0, %v5706
      %v5708 = vpop.f32.mrb[0].mxu0
      %5709 = vdwg.mxu0
      %v5710 = vadd.f32 %v5213, %v5584
      %v5711 = vadd.f32 %v5214, %v5587
      %v5712 = vadd.f32 %v5215, %v5592
      %v5713 = vadd.f32 %v5216, %v5595
      %v5714 = vadd.f32 %v5217, %v5600
      %v5715 = vadd.f32 %v5218, %v5603
      %v5716 = vadd.f32 %v5219, %v5608
      %v5717 = vadd.f32 %v5220, %v5611
      %v5718 = vadd.f32 %v5221, %v5616
      %v5719 = vadd.f32 %v5222, %v5619
      %v5720 = vadd.f32 %v5223, %v5624
      %v5721 = vadd.f32 %v5224, %v5627
      %v5722 = vadd.f32 %v5225, %v5632
      %v5723 = vadd.f32 %v5226, %v5635
      %v5724 = vadd.f32 %v5227, %v5640
      %v5725 = vadd.f32 %v5228, %v5643
      %v5726 = vadd.f32 %v5229, %v5648
      %v5727 = vadd.f32 %v5230, %v5651
      %v5728 = vadd.f32 %v5231, %v5656
      %v5729 = vadd.f32 %v5232, %v5659
      %v5730 = vadd.f32 %v5233, %v5664
      %v5731 = vadd.f32 %v5234, %v5667
      %v5732 = vadd.f32 %v5235, %v5672
      %v5733 = vadd.f32 %v5236, %v5675
      %v5734 = vadd.f32 %v5237, %v5680
      %v5735 = vadd.f32 %v5238, %v5683
      %v5736 = vadd.f32 %v5239, %v5688
      %v5737 = vadd.f32 %v5240, %v5691
      %v5738 = vadd.f32 %v5241, %v5696
      %v5739 = vadd.f32 %v5242, %v5699
      %v5740 = vadd.f32 %v5243, %v5704
      %v5741 = vadd.f32 %v5244, %v5707
      %v5742 = vld [vmem:[%s2] sm:$0x1]
      %v5744 = vlaneseq
      %v5745 = vshrl.u32 %v5744, 7
      %v5746 = vsub.s32 0, %v5745
      %v5747 = vrot.slane %v5742, %v5746
      %v5749 = vmul.f32 %v5710, %v5747
      %v5750 = vmul.f32 %v5711, %v5747
      %v5751 = vmul.f32 %v5712, %v5747
      %v5752 = vmul.f32 %v5713, %v5747
      %v5753 = vmul.f32 %v5714, %v5747
      %v5754 = vmul.f32 %v5715, %v5747
      %v5755 = vmul.f32 %v5716, %v5747
      %v5756 = vmul.f32 %v5717, %v5747
      %v5757 = vmul.f32 %v5718, %v5747
      %v5758 = vmul.f32 %v5719, %v5747
      %v5759 = vmul.f32 %v5720, %v5747
      %v5760 = vmul.f32 %v5721, %v5747
      %v5761 = vmul.f32 %v5722, %v5747
      %v5762 = vmul.f32 %v5723, %v5747
      %v5763 = vmul.f32 %v5724, %v5747
      %v5764 = vmul.f32 %v5725, %v5747
      %v5765 = vmul.f32 %v5726, %v5747
      %v5766 = vmul.f32 %v5727, %v5747
      %v5767 = vmul.f32 %v5728, %v5747
      %v5768 = vmul.f32 %v5729, %v5747
      %v5769 = vmul.f32 %v5730, %v5747
      %v5770 = vmul.f32 %v5731, %v5747
      %v5771 = vmul.f32 %v5732, %v5747
      %v5772 = vmul.f32 %v5733, %v5747
      %v5773 = vmul.f32 %v5734, %v5747
      %v5774 = vmul.f32 %v5735, %v5747
      %v5775 = vmul.f32 %v5736, %v5747
      %v5776 = vmul.f32 %v5737, %v5747
      %v5777 = vmul.f32 %v5738, %v5747
      %v5778 = vmul.f32 %v5739, %v5747
      %v5779 = vmul.f32 %v5740, %v5747
      %v5780 = vmul.f32 %v5741, %v5747
      %v5781 = vld [vmem:[%s3] sm:$0x1]
      %v5783 = vlaneseq
      %v5784 = vshrl.u32 %v5783, 7
      %v5785 = vsub.s32 0, %v5784
      %v5786 = vrot.slane %v5781, %v5785
      %v5788 = vadd.f32 %v5749, %v5786
      %v5789 = vadd.f32 %v5750, %v5786
      %v5790 = vadd.f32 %v5751, %v5786
      %v5791 = vadd.f32 %v5752, %v5786
      %v5792 = vadd.f32 %v5753, %v5786
      %v5793 = vadd.f32 %v5754, %v5786
      %v5794 = vadd.f32 %v5755, %v5786
      %v5795 = vadd.f32 %v5756, %v5786
      %v5796 = vadd.f32 %v5757, %v5786
      %v5797 = vadd.f32 %v5758, %v5786
      %v5798 = vadd.f32 %v5759, %v5786
      %v5799 = vadd.f32 %v5760, %v5786
      %v5800 = vadd.f32 %v5761, %v5786
      %v5801 = vadd.f32 %v5762, %v5786
      %v5802 = vadd.f32 %v5763, %v5786
      %v5803 = vadd.f32 %v5764, %v5786
      %v5804 = vadd.f32 %v5765, %v5786
      %v5805 = vadd.f32 %v5766, %v5786
      %v5806 = vadd.f32 %v5767, %v5786
      %v5807 = vadd.f32 %v5768, %v5786
      %v5808 = vadd.f32 %v5769, %v5786
      %v5809 = vadd.f32 %v5770, %v5786
      %v5810 = vadd.f32 %v5771, %v5786
      %v5811 = vadd.f32 %v5772, %v5786
      %v5812 = vadd.f32 %v5773, %v5786
      %v5813 = vadd.f32 %v5774, %v5786
      %v5814 = vadd.f32 %v5775, %v5786
      %v5815 = vadd.f32 %v5776, %v5786
      %v5816 = vadd.f32 %v5777, %v5786
      %v5817 = vadd.f32 %v5778, %v5786
      %v5818 = vadd.f32 %v5779, %v5786
      %v5819 = vadd.f32 %v5780, %v5786
      %v5820 = vmax.f32 %v5788, 0.0
      %v5821 = vmax.f32 %v5789, 0.0
      %v5822 = vmax.f32 %v5790, 0.0
      %v5823 = vmax.f32 %v5791, 0.0
      %v5824 = vmax.f32 %v5792, 0.0
      %v5825 = vmax.f32 %v5793, 0.0
      %v5826 = vmax.f32 %v5794, 0.0
      %v5827 = vmax.f32 %v5795, 0.0
      %v5828 = vmax.f32 %v5796, 0.0
      %v5829 = vmax.f32 %v5797, 0.0
      %v5830 = vmax.f32 %v5798, 0.0
      %v5831 = vmax.f32 %v5799, 0.0
      %v5832 = vmax.f32 %v5800, 0.0
      %v5833 = vmax.f32 %v5801, 0.0
      %v5834 = vmax.f32 %v5802, 0.0
      %v5835 = vmax.f32 %v5803, 0.0
      %v5836 = vmax.f32 %v5804, 0.0
      %v5837 = vmax.f32 %v5805, 0.0
      %v5838 = vmax.f32 %v5806, 0.0
      %v5839 = vmax.f32 %v5807, 0.0
      %v5840 = vmax.f32 %v5808, 0.0
      %v5841 = vmax.f32 %v5809, 0.0
      %v5842 = vmax.f32 %v5810, 0.0
      %v5843 = vmax.f32 %v5811, 0.0
      %v5844 = vmax.f32 %v5812, 0.0
      %v5845 = vmax.f32 %v5813, 0.0
      %v5846 = vmax.f32 %v5814, 0.0
      %v5847 = vmax.f32 %v5815, 0.0
      %v5848 = vmax.f32 %v5816, 0.0
      %v5849 = vmax.f32 %v5817, 0.0
      %v5850 = vmax.f32 %v5818, 0.0
      %v5851 = vmax.f32 %v5819, 0.0
      %v5852 = vpack.c.bf16 %v5821, %v5820
      %v5853 = vpack.c.bf16 %v5823, %v5822
      %v5854 = vpack.c.bf16 %v5825, %v5824
      %v5855 = vpack.c.bf16 %v5827, %v5826
      %v5856 = vpack.c.bf16 %v5829, %v5828
      %v5857 = vpack.c.bf16 %v5831, %v5830
      %v5858 = vpack.c.bf16 %v5833, %v5832
      %v5859 = vpack.c.bf16 %v5835, %v5834
      %v5860 = vpack.c.bf16 %v5837, %v5836
      %v5861 = vpack.c.bf16 %v5839, %v5838
      %v5862 = vpack.c.bf16 %v5841, %v5840
      %v5863 = vpack.c.bf16 %v5843, %v5842
      %v5864 = vpack.c.bf16 %v5845, %v5844
      %v5865 = vpack.c.bf16 %v5847, %v5846
      %v5866 = vpack.c.bf16 %v5849, %v5848
      %v5867 = vpack.c.bf16 %v5851, %v5850
      %v5869 = vshrl.u32 %v5852, 16
      %v5871 = vrot.slane %v5869, 7
      %v5872 = vshll.u32 %v5852, 16
      %v5874 = vor.u32 %v5871, %v5872
      %v5876 = vshrl.u32 %v5853, 16
      %v5878 = vrot.slane %v5876, 7
      %v5879 = vshll.u32 %v5853, 16
      %v5881 = vor.u32 %v5878, %v5879
      %v5883 = vshrl.u32 %v5854, 16
      %v5885 = vrot.slane %v5883, 7
      %v5886 = vshll.u32 %v5854, 16
      %v5888 = vor.u32 %v5885, %v5886
      %v5890 = vshrl.u32 %v5855, 16
      %v5892 = vrot.slane %v5890, 7
      %v5893 = vshll.u32 %v5855, 16
      %v5895 = vor.u32 %v5892, %v5893
      %v5897 = vshrl.u32 %v5856, 16
      %v5899 = vrot.slane %v5897, 7
      %v5900 = vshll.u32 %v5856, 16
      %v5902 = vor.u32 %v5899, %v5900
      %v5904 = vshrl.u32 %v5857, 16
      %v5906 = vrot.slane %v5904, 7
      %v5907 = vshll.u32 %v5857, 16
      %v5909 = vor.u32 %v5906, %v5907
      %v5911 = vshrl.u32 %v5858, 16
      %v5913 = vrot.slane %v5911, 7
      %v5914 = vshll.u32 %v5858, 16
      %v5916 = vor.u32 %v5913, %v5914
      %v5918 = vshrl.u32 %v5859, 16
      %v5920 = vrot.slane %v5918, 7
      %v5921 = vshll.u32 %v5859, 16
      %v5923 = vor.u32 %v5920, %v5921
      %v5925 = vshrl.u32 %v5860, 16
      %v5927 = vrot.slane %v5925, 7
      %v5928 = vshll.u32 %v5860, 16
      %v5930 = vor.u32 %v5927, %v5928
      %v5932 = vshrl.u32 %v5861, 16
      %v5934 = vrot.slane %v5932, 7
      %v5935 = vshll.u32 %v5861, 16
      %v5937 = vor.u32 %v5934, %v5935
      %v5939 = vshrl.u32 %v5862, 16
      %v5941 = vrot.slane %v5939, 7
      %v5942 = vshll.u32 %v5862, 16
      %v5944 = vor.u32 %v5941, %v5942
      %v5946 = vshrl.u32 %v5863, 16
      %v5948 = vrot.slane %v5946, 7
      %v5949 = vshll.u32 %v5863, 16
      %v5951 = vor.u32 %v5948, %v5949
      %v5953 = vshrl.u32 %v5864, 16
      %v5955 = vrot.slane %v5953, 7
      %v5956 = vshll.u32 %v5864, 16
      %v5958 = vor.u32 %v5955, %v5956
      %v5960 = vshrl.u32 %v5865, 16
      %v5962 = vrot.slane %v5960, 7
      %v5963 = vshll.u32 %v5865, 16
      %v5965 = vor.u32 %v5962, %v5963
      %v5967 = vshrl.u32 %v5866, 16
      %v5969 = vrot.slane %v5967, 7
      %v5970 = vshll.u32 %v5866, 16
      %v5972 = vor.u32 %v5969, %v5970
      %v5974 = vshrl.u32 %v5867, 16
      %v5976 = vrot.slane %v5974, 7
      %v5977 = vshll.u32 %v5867, 16
      %v5979 = vor.u32 %v5976, %v5977
      %v6012 = vsel %vm674, 0, %v5874
      %v6013 = vsel %vm674, 0, %v5881
      %v6014 = vsel %vm674, 0, %v5888
      %v6015 = vsel %vm674, 0, %v5895
      %v6016 = vsel %vm674, 0, %v5902
      %v6017 = vsel %vm674, 0, %v5909
      %v6018 = vsel %vm674, 0, %v5916
      %v6019 = vsel %vm674, 0, %v5923
      %v6020 = vsel %vm674, 0, %v5930
      %v6021 = vsel %vm674, 0, %v5937
      %v6022 = vsel %vm674, 0, %v5944
      %v6023 = vsel %vm674, 0, %v5951
      %v6024 = vsel %vm674, 0, %v5958
      %v6025 = vsel %vm674, 0, %v5965
      %v6026 = vsel %vm674, 0, %v5972
      %v6027 = vsel %vm674, 0, %v5979
      %v6028 = vsel %vm674, %v5871, 0
      %v6029 = vsel %vm674, %v5878, 0
      %v6030 = vsel %vm674, %v5885, 0
      %v6031 = vsel %vm674, %v5892, 0
      %v6032 = vsel %vm674, %v5899, 0
      %v6033 = vsel %vm674, %v5906, 0
      %v6034 = vsel %vm674, %v5913, 0
      %v6035 = vsel %vm674, %v5920, 0
      %v6036 = vsel %vm674, %v5927, 0
      %v6037 = vsel %vm674, %v5934, 0
      %v6038 = vsel %vm674, %v5941, 0
      %v6039 = vsel %vm674, %v5948, 0
      %v6040 = vsel %vm674, %v5955, 0
      %v6041 = vsel %vm674, %v5962, 0
      %v6042 = vsel %vm674, %v5969, 0
      %v6043 = vsel %vm674, %v5976, 0
      %v6076 = vunpack.c.l.b16 %v6012
      %v6077 = vunpack.c.h.b16 %v6012
      %v6078 = vunpack.c.l.b16 %v6028
      %v6079 = vunpack.c.l.b16 %v6013
      %v6080 = vunpack.c.h.b16 %v6013
      %v6081 = vunpack.c.l.b16 %v6029
      %v6082 = vunpack.c.l.b16 %v6014
      %v6083 = vunpack.c.h.b16 %v6014
      %v6084 = vunpack.c.l.b16 %v6030
      %v6085 = vunpack.c.l.b16 %v6015
      %v6086 = vunpack.c.h.b16 %v6015
      %v6087 = vunpack.c.l.b16 %v6031
      %v6088 = vunpack.c.l.b16 %v6016
      %v6089 = vunpack.c.h.b16 %v6016
      %v6090 = vunpack.c.l.b16 %v6032
      %v6091 = vunpack.c.l.b16 %v6017
      %v6092 = vunpack.c.h.b16 %v6017
      %v6093 = vunpack.c.l.b16 %v6033
      %v6094 = vunpack.c.l.b16 %v6018
      %v6095 = vunpack.c.h.b16 %v6018
      %v6096 = vunpack.c.l.b16 %v6034
      %v6097 = vunpack.c.l.b16 %v6019
      %v6098 = vunpack.c.h.b16 %v6019
      %v6099 = vunpack.c.l.b16 %v6035
      %v6100 = vunpack.c.l.b16 %v6020
      %v6101 = vunpack.c.h.b16 %v6020
      %v6102 = vunpack.c.l.b16 %v6036
      %v6103 = vunpack.c.l.b16 %v6021
      %v6104 = vunpack.c.h.b16 %v6021
      %v6105 = vunpack.c.l.b16 %v6037
      %v6106 = vunpack.c.l.b16 %v6022
      %v6107 = vunpack.c.h.b16 %v6022
      %v6108 = vunpack.c.l.b16 %v6038
      %v6109 = vunpack.c.l.b16 %v6023
      %v6110 = vunpack.c.h.b16 %v6023
      %v6111 = vunpack.c.l.b16 %v6039
      %v6112 = vunpack.c.l.b16 %v6024
      %v6113 = vunpack.c.h.b16 %v6024
      %v6114 = vunpack.c.l.b16 %v6040
      %v6115 = vunpack.c.l.b16 %v6025
      %v6116 = vunpack.c.h.b16 %v6025
      %v6117 = vunpack.c.l.b16 %v6041
      %v6118 = vunpack.c.l.b16 %v6026
      %v6119 = vunpack.c.h.b16 %v6026
      %v6120 = vunpack.c.l.b16 %v6042
      %v6121 = vunpack.c.l.b16 %v6027
      %v6122 = vunpack.c.h.b16 %v6027
      %v6123 = vunpack.c.l.b16 %v6043
      %v6124 = vpack.c.b16 %v6076, %v6076
      %v6125 = vpack.c.b16 %v6077, %v6077
      %v6126 = vpack.c.b16 %v6078, %v6078
      %v6127 = vpack.c.b16 %v6079, %v6079
      %v6128 = vpack.c.b16 %v6080, %v6080
      %v6129 = vpack.c.b16 %v6081, %v6081
      %v6130 = vpack.c.b16 %v6082, %v6082
      %v6131 = vpack.c.b16 %v6083, %v6083
      %v6132 = vpack.c.b16 %v6084, %v6084
      %v6133 = vpack.c.b16 %v6085, %v6085
      %v6134 = vpack.c.b16 %v6086, %v6086
      %v6135 = vpack.c.b16 %v6087, %v6087
      %v6136 = vpack.c.b16 %v6088, %v6088
      %v6137 = vpack.c.b16 %v6089, %v6089
      %v6138 = vpack.c.b16 %v6090, %v6090
      %v6139 = vpack.c.b16 %v6091, %v6091
      %v6140 = vpack.c.b16 %v6092, %v6092
      %v6141 = vpack.c.b16 %v6093, %v6093
      %v6142 = vpack.c.b16 %v6094, %v6094
      %v6143 = vpack.c.b16 %v6095, %v6095
      %v6144 = vpack.c.b16 %v6096, %v6096
      %v6145 = vpack.c.b16 %v6097, %v6097
      %v6146 = vpack.c.b16 %v6098, %v6098
      %v6147 = vpack.c.b16 %v6099, %v6099
      %v6148 = vpack.c.b16 %v6100, %v6100
      %v6149 = vpack.c.b16 %v6101, %v6101
      %v6150 = vpack.c.b16 %v6102, %v6102
      %v6151 = vpack.c.b16 %v6103, %v6103
      %v6152 = vpack.c.b16 %v6104, %v6104
      %v6153 = vpack.c.b16 %v6105, %v6105
      %v6154 = vpack.c.b16 %v6106, %v6106
      %v6155 = vpack.c.b16 %v6107, %v6107
      %v6156 = vpack.c.b16 %v6108, %v6108
      %v6157 = vpack.c.b16 %v6109, %v6109
      %v6158 = vpack.c.b16 %v6110, %v6110
      %v6159 = vpack.c.b16 %v6111, %v6111
      %v6160 = vpack.c.b16 %v6112, %v6112
      %v6161 = vpack.c.b16 %v6113, %v6113
      %v6162 = vpack.c.b16 %v6114, %v6114
      %v6163 = vpack.c.b16 %v6115, %v6115
      %v6164 = vpack.c.b16 %v6116, %v6116
      %v6165 = vpack.c.b16 %v6117, %v6117
      %v6166 = vpack.c.b16 %v6118, %v6118
      %v6167 = vpack.c.b16 %v6119, %v6119
      %v6168 = vpack.c.b16 %v6120, %v6120
      %v6169 = vpack.c.b16 %v6121, %v6121
      %v6170 = vpack.c.b16 %v6122, %v6122
      %v6171 = vpack.c.b16 %v6123, %v6123
      %s6220 = scalar_lea.vmem [#allocation3], 12
      %vm6221 = vcmask 257024
      %6222 = vst.msk [vmem:[%s6220] sm:$0xf] %vm6221, %v6124
      %6223 = vst.msk [vmem:[%s6220 + $0x4] sm:$0xf] %vm6221, %v6125
      %vm6224 = vcmask 253952
      %6225 = vst.msk [vmem:[%s6220 + $0x8] sm:$0x1] %vm6224, %v6126
      %6226 = vst.msk [vmem:[%s6220 + $0xc] sm:$0xf] %vm6221, %v6127
      %6227 = vst.msk [vmem:[%s6220 + $0x10] sm:$0xf] %vm6221, %v6128
      %6228 = vst.msk [vmem:[%s6220 + $0x14] sm:$0x1] %vm6224, %v6129
      %6229 = vst.msk [vmem:[%s6220 + $0x18] sm:$0xf] %vm6221, %v6130
      %6230 = vst.msk [vmem:[%s6220 + $0x1c] sm:$0xf] %vm6221, %v6131
      %6231 = vst.msk [vmem:[%s6220 + $0x20] sm:$0x1] %vm6224, %v6132
      %6232 = vst.msk [vmem:[%s6220 + $0x24] sm:$0xf] %vm6221, %v6133
      %6233 = vst.msk [vmem:[%s6220 + $0x28] sm:$0xf] %vm6221, %v6134
      %6234 = vst.msk [vmem:[%s6220 + $0x2c] sm:$0x1] %vm6224, %v6135
      %6235 = vst.msk [vmem:[%s6220 + $0x30] sm:$0xf] %vm6221, %v6136
      %6236 = vst.msk [vmem:[%s6220 + $0x34] sm:$0xf] %vm6221, %v6137
      %6237 = vst.msk [vmem:[%s6220 + $0x38] sm:$0x1] %vm6224, %v6138
      %6238 = vst.msk [vmem:[%s6220 + $0x3c] sm:$0xf] %vm6221, %v6139
      %6239 = vst.msk [vmem:[%s6220 + $0x40] sm:$0xf] %vm6221, %v6140
      %6240 = vst.msk [vmem:[%s6220 + $0x44] sm:$0x1] %vm6224, %v6141
      %6241 = vst.msk [vmem:[%s6220 + $0x48] sm:$0xf] %vm6221, %v6142
      %6242 = vst.msk [vmem:[%s6220 + $0x4c] sm:$0xf] %vm6221, %v6143
      %6243 = vst.msk [vmem:[%s6220 + $0x50] sm:$0x1] %vm6224, %v6144
      %6244 = vst.msk [vmem:[%s6220 + $0x54] sm:$0xf] %vm6221, %v6145
      %6245 = vst.msk [vmem:[%s6220 + $0x58] sm:$0xf] %vm6221, %v6146
      %6246 = vst.msk [vmem:[%s6220 + $0x5c] sm:$0x1] %vm6224, %v6147
      %6247 = vst.msk [vmem:[%s6220 + $0x60] sm:$0xf] %vm6221, %v6148
      %6248 = vst.msk [vmem:[%s6220 + $0x64] sm:$0xf] %vm6221, %v6149
      %6249 = vst.msk [vmem:[%s6220 + $0x68] sm:$0x1] %vm6224, %v6150
      %6250 = vst.msk [vmem:[%s6220 + $0x6c] sm:$0xf] %vm6221, %v6151
      %6251 = vst.msk [vmem:[%s6220 + $0x70] sm:$0xf] %vm6221, %v6152
      %6252 = vst.msk [vmem:[%s6220 + $0x74] sm:$0x1] %vm6224, %v6153
      %6253 = vst.msk [vmem:[%s6220 + $0x78] sm:$0xf] %vm6221, %v6154
      %6254 = vst.msk [vmem:[%s6220 + $0x7c] sm:$0xf] %vm6221, %v6155
      %6255 = vst.msk [vmem:[%s6220 + $0x80] sm:$0x1] %vm6224, %v6156
      %6256 = vst.msk [vmem:[%s6220 + $0x84] sm:$0xf] %vm6221, %v6157
      %6257 = vst.msk [vmem:[%s6220 + $0x88] sm:$0xf] %vm6221, %v6158
      %6258 = vst.msk [vmem:[%s6220 + $0x8c] sm:$0x1] %vm6224, %v6159
      %6259 = vst.msk [vmem:[%s6220 + $0x90] sm:$0xf] %vm6221, %v6160
      %6260 = vst.msk [vmem:[%s6220 + $0x94] sm:$0xf] %vm6221, %v6161
      %6261 = vst.msk [vmem:[%s6220 + $0x98] sm:$0x1] %vm6224, %v6162
      %6262 = vst.msk [vmem:[%s6220 + $0x9c] sm:$0xf] %vm6221, %v6163
      %6263 = vst.msk [vmem:[%s6220 + $0xa0] sm:$0xf] %vm6221, %v6164
      %6264 = vst.msk [vmem:[%s6220 + $0xa4] sm:$0x1] %vm6224, %v6165
      %6265 = vst.msk [vmem:[%s6220 + $0xa8] sm:$0xf] %vm6221, %v6166
      %6266 = vst.msk [vmem:[%s6220 + $0xac] sm:$0xf] %vm6221, %v6167
      %6267 = vst.msk [vmem:[%s6220 + $0xb0] sm:$0x1] %vm6224, %v6168
      %6268 = vst.msk [vmem:[%s6220 + $0xb4] sm:$0xf] %vm6221, %v6169
      %6269 = vst.msk [vmem:[%s6220 + $0xb8] sm:$0xf] %vm6221, %v6170
      %6270 = vst.msk [vmem:[%s6220 + $0xbc] sm:$0x1] %vm6224, %v6171
      %6271 = vst.msk [vmem:[#allocation3] sm:$0xf] %vm6221, 0
      %6272 = vst.msk [vmem:[#allocation3 + $0x4] sm:$0xf] %vm6221, 0
      %6273 = vst.msk [vmem:[#allocation3 + $0x8] sm:$0x1] %vm6224, 0
      %s6274 = scalar_lea.vmem [#allocation3], 204
      %6275 = vst.msk [vmem:[%s6274] sm:$0xf] %vm6221, 0
      %6276 = vst.msk [vmem:[%s6274 + $0x4] sm:$0xf] %vm6221, 0
      %6277 = vst.msk [vmem:[%s6274 + $0x8] sm:$0x1] %vm6224, 0
      %v6278 = vld [vmem:[%s6220] sm:$0xf]
      %v6279 = vld [vmem:[%s6220 + $0x4] sm:$0xf]
      %v6280 = vld [vmem:[%s6220 + $0x8] sm:$0x1]
      %v6281 = vld [vmem:[%s6220 + $0xc] sm:$0xf]
      %v6282 = vld [vmem:[%s6220 + $0x10] sm:$0xf]
      %v6283 = vld [vmem:[%s6220 + $0x14] sm:$0x1]
      %v6284 = vld [vmem:[%s6220 + $0x18] sm:$0xf]
      %v6285 = vld [vmem:[%s6220 + $0x1c] sm:$0xf]
      %v6286 = vld [vmem:[%s6220 + $0x20] sm:$0x1]
      %v6287 = vld [vmem:[%s6220 + $0x24] sm:$0xf]
      %v6288 = vld [vmem:[%s6220 + $0x28] sm:$0xf]
      %v6289 = vld [vmem:[%s6220 + $0x2c] sm:$0x1]
      %v6290 = vld [vmem:[%s6220 + $0x30] sm:$0xf]
      %v6291 = vld [vmem:[%s6220 + $0x34] sm:$0xf]
      %v6292 = vld [vmem:[%s6220 + $0x38] sm:$0x1]
      %v6293 = vld [vmem:[%s6220 + $0x3c] sm:$0xf]
      %v6294 = vld [vmem:[%s6220 + $0x40] sm:$0xf]
      %v6295 = vld [vmem:[%s6220 + $0x44] sm:$0x1]
      %v6296 = vld [vmem:[%s6220 + $0x48] sm:$0xf]
      %v6297 = vld [vmem:[%s6220 + $0x4c] sm:$0xf]
      %v6298 = vld [vmem:[%s6220 + $0x50] sm:$0x1]
      %v6299 = vld [vmem:[%s6220 + $0x54] sm:$0xf]
      %v6300 = vld [vmem:[%s6220 + $0x58] sm:$0xf]
      %v6301 = vld [vmem:[%s6220 + $0x5c] sm:$0x1]
      %v6302 = vld [vmem:[%s6220 + $0x60] sm:$0xf]
      %v6303 = vld [vmem:[%s6220 + $0x64] sm:$0xf]
      %v6304 = vld [vmem:[%s6220 + $0x68] sm:$0x1]
      %v6305 = vld [vmem:[%s6220 + $0x6c] sm:$0xf]
      %v6306 = vld [vmem:[%s6220 + $0x70] sm:$0xf]
      %v6307 = vld [vmem:[%s6220 + $0x74] sm:$0x1]
      %v6308 = vld [vmem:[%s6220 + $0x78] sm:$0xf]
      %v6309 = vld [vmem:[%s6220 + $0x7c] sm:$0xf]
      %v6310 = vld [vmem:[%s6220 + $0x80] sm:$0x1]
      %v6311 = vld [vmem:[%s6220 + $0x84] sm:$0xf]
      %v6312 = vld [vmem:[%s6220 + $0x88] sm:$0xf]
      %v6313 = vld [vmem:[%s6220 + $0x8c] sm:$0x1]
      %v6314 = vld [vmem:[%s6220 + $0x90] sm:$0xf]
      %v6315 = vld [vmem:[%s6220 + $0x94] sm:$0xf]
      %v6316 = vld [vmem:[%s6220 + $0x98] sm:$0x1]
      %v6317 = vld [vmem:[%s6220 + $0x9c] sm:$0xf]
      %v6318 = vld [vmem:[%s6220 + $0xa0] sm:$0xf]
      %v6319 = vld [vmem:[%s6220 + $0xa4] sm:$0x1]
      %v6320 = vld [vmem:[%s6220 + $0xa8] sm:$0xf]
      %v6321 = vld [vmem:[%s6220 + $0xac] sm:$0xf]
      %v6322 = vld [vmem:[%s6220 + $0xb0] sm:$0x1]
      %v6323 = vld [vmem:[%s6220 + $0xb4] sm:$0xf]
      %v6324 = vld [vmem:[%s6220 + $0xb8] sm:$0xf]
      %v6325 = vld [vmem:[%s6220 + $0xbc] sm:$0x1]
      %v6327 = vshrl.u32 %v6278, 16
      %v6329 = vrot.slane %v6327, 4
      %v6330 = vshll.u32 %v6278, 16
      %v6332 = vrot.slane %v6330, 5
      %v6333 = vor.u32 %v6329, %v6332
      %v6334 = vrot.slane %v6333, 4
      %v6336 = vshll.u32 %v6279, 16
      %v6338 = vrot.slane %v6336, 5
      %v6339 = vsel %vm999, %v6334, %v6338
      %v6340 = vshrl.u32 %v6279, 16
      %v6342 = vrot.slane %v6340, 4
      %v6343 = vor.u32 %v6342, %v6338
      %v6344 = vrot.slane %v6343, 4
      %v6346 = vshll.u32 %v6280, 16
      %v6348 = vrot.slane %v6346, 5
      %v6349 = vsel %vm999, %v6344, %v6348
      %v6351 = vshrl.u32 %v6281, 16
      %v6353 = vrot.slane %v6351, 4
      %v6354 = vshll.u32 %v6281, 16
      %v6356 = vrot.slane %v6354, 5
      %v6357 = vor.u32 %v6353, %v6356
      %v6358 = vrot.slane %v6357, 4
      %v6360 = vshll.u32 %v6282, 16
      %v6362 = vrot.slane %v6360, 5
      %v6363 = vsel %vm999, %v6358, %v6362
      %v6364 = vshrl.u32 %v6282, 16
      %v6366 = vrot.slane %v6364, 4
      %v6367 = vor.u32 %v6366, %v6362
      %v6368 = vrot.slane %v6367, 4
      %v6370 = vshll.u32 %v6283, 16
      %v6372 = vrot.slane %v6370, 5
      %v6373 = vsel %vm999, %v6368, %v6372
      %v6375 = vshrl.u32 %v6284, 16
      %v6377 = vrot.slane %v6375, 4
      %v6378 = vshll.u32 %v6284, 16
      %v6380 = vrot.slane %v6378, 5
      %v6381 = vor.u32 %v6377, %v6380
      %v6382 = vrot.slane %v6381, 4
      %v6384 = vshll.u32 %v6285, 16
      %v6386 = vrot.slane %v6384, 5
      %v6387 = vsel %vm999, %v6382, %v6386
      %v6388 = vshrl.u32 %v6285, 16
      %v6390 = vrot.slane %v6388, 4
      %v6391 = vor.u32 %v6390, %v6386
      %v6392 = vrot.slane %v6391, 4
      %v6394 = vshll.u32 %v6286, 16
      %v6396 = vrot.slane %v6394, 5
      %v6397 = vsel %vm999, %v6392, %v6396
      %v6399 = vshrl.u32 %v6287, 16
      %v6401 = vrot.slane %v6399, 4
      %v6402 = vshll.u32 %v6287, 16
      %v6404 = vrot.slane %v6402, 5
      %v6405 = vor.u32 %v6401, %v6404
      %v6406 = vrot.slane %v6405, 4
      %v6408 = vshll.u32 %v6288, 16
      %v6410 = vrot.slane %v6408, 5
      %v6411 = vsel %vm999, %v6406, %v6410
      %v6412 = vshrl.u32 %v6288, 16
      %v6414 = vrot.slane %v6412, 4
      %v6415 = vor.u32 %v6414, %v6410
      %v6416 = vrot.slane %v6415, 4
      %v6418 = vshll.u32 %v6289, 16
      %v6420 = vrot.slane %v6418, 5
      %v6421 = vsel %vm999, %v6416, %v6420
      %v6423 = vshrl.u32 %v6290, 16
      %v6425 = vrot.slane %v6423, 4
      %v6426 = vshll.u32 %v6290, 16
      %v6428 = vrot.slane %v6426, 5
      %v6429 = vor.u32 %v6425, %v6428
      %v6430 = vrot.slane %v6429, 4
      %v6432 = vshll.u32 %v6291, 16
      %v6434 = vrot.slane %v6432, 5
      %v6435 = vsel %vm999, %v6430, %v6434
      %v6436 = vshrl.u32 %v6291, 16
      %v6438 = vrot.slane %v6436, 4
      %v6439 = vor.u32 %v6438, %v6434
      %v6440 = vrot.slane %v6439, 4
      %v6442 = vshll.u32 %v6292, 16
      %v6444 = vrot.slane %v6442, 5
      %v6445 = vsel %vm999, %v6440, %v6444
      %v6447 = vshrl.u32 %v6293, 16
      %v6449 = vrot.slane %v6447, 4
      %v6450 = vshll.u32 %v6293, 16
      %v6452 = vrot.slane %v6450, 5
      %v6453 = vor.u32 %v6449, %v6452
      %v6454 = vrot.slane %v6453, 4
      %v6456 = vshll.u32 %v6294, 16
      %v6458 = vrot.slane %v6456, 5
      %v6459 = vsel %vm999, %v6454, %v6458
      %v6460 = vshrl.u32 %v6294, 16
      %v6462 = vrot.slane %v6460, 4
      %v6463 = vor.u32 %v6462, %v6458
      %v6464 = vrot.slane %v6463, 4
      %v6466 = vshll.u32 %v6295, 16
      %v6468 = vrot.slane %v6466, 5
      %v6469 = vsel %vm999, %v6464, %v6468
      %v6471 = vshrl.u32 %v6296, 16
      %v6473 = vrot.slane %v6471, 4
      %v6474 = vshll.u32 %v6296, 16
      %v6476 = vrot.slane %v6474, 5
      %v6477 = vor.u32 %v6473, %v6476
      %v6478 = vrot.slane %v6477, 4
      %v6480 = vshll.u32 %v6297, 16
      %v6482 = vrot.slane %v6480, 5
      %v6483 = vsel %vm999, %v6478, %v6482
      %v6484 = vshrl.u32 %v6297, 16
      %v6486 = vrot.slane %v6484, 4
      %v6487 = vor.u32 %v6486, %v6482
      %v6488 = vrot.slane %v6487, 4
      %v6490 = vshll.u32 %v6298, 16
      %v6492 = vrot.slane %v6490, 5
      %v6493 = vsel %vm999, %v6488, %v6492
      %v6495 = vshrl.u32 %v6299, 16
      %v6497 = vrot.slane %v6495, 4
      %v6498 = vshll.u32 %v6299, 16
      %v6500 = vrot.slane %v6498, 5
      %v6501 = vor.u32 %v6497, %v6500
      %v6502 = vrot.slane %v6501, 4
      %v6504 = vshll.u32 %v6300, 16
      %v6506 = vrot.slane %v6504, 5
      %v6507 = vsel %vm999, %v6502, %v6506
      %v6508 = vshrl.u32 %v6300, 16
      %v6510 = vrot.slane %v6508, 4
      %v6511 = vor.u32 %v6510, %v6506
      %v6512 = vrot.slane %v6511, 4
      %v6514 = vshll.u32 %v6301, 16
      %v6516 = vrot.slane %v6514, 5
      %v6517 = vsel %vm999, %v6512, %v6516
      %v6519 = vshrl.u32 %v6302, 16
      %v6521 = vrot.slane %v6519, 4
      %v6522 = vshll.u32 %v6302, 16
      %v6524 = vrot.slane %v6522, 5
      %v6525 = vor.u32 %v6521, %v6524
      %v6526 = vrot.slane %v6525, 4
      %v6528 = vshll.u32 %v6303, 16
      %v6530 = vrot.slane %v6528, 5
      %v6531 = vsel %vm999, %v6526, %v6530
      %v6532 = vshrl.u32 %v6303, 16
      %v6534 = vrot.slane %v6532, 4
      %v6535 = vor.u32 %v6534, %v6530
      %v6536 = vrot.slane %v6535, 4
      %v6538 = vshll.u32 %v6304, 16
      %v6540 = vrot.slane %v6538, 5
      %v6541 = vsel %vm999, %v6536, %v6540
      %v6543 = vshrl.u32 %v6305, 16
      %v6545 = vrot.slane %v6543, 4
      %v6546 = vshll.u32 %v6305, 16
      %v6548 = vrot.slane %v6546, 5
      %v6549 = vor.u32 %v6545, %v6548
      %v6550 = vrot.slane %v6549, 4
      %v6552 = vshll.u32 %v6306, 16
      %v6554 = vrot.slane %v6552, 5
      %v6555 = vsel %vm999, %v6550, %v6554
      %v6556 = vshrl.u32 %v6306, 16
      %v6558 = vrot.slane %v6556, 4
      %v6559 = vor.u32 %v6558, %v6554
      %v6560 = vrot.slane %v6559, 4
      %v6562 = vshll.u32 %v6307, 16
      %v6564 = vrot.slane %v6562, 5
      %v6565 = vsel %vm999, %v6560, %v6564
      %v6567 = vshrl.u32 %v6308, 16
      %v6569 = vrot.slane %v6567, 4
      %v6570 = vshll.u32 %v6308, 16
      %v6572 = vrot.slane %v6570, 5
      %v6573 = vor.u32 %v6569, %v6572
      %v6574 = vrot.slane %v6573, 4
      %v6576 = vshll.u32 %v6309, 16
      %v6578 = vrot.slane %v6576, 5
      %v6579 = vsel %vm999, %v6574, %v6578
      %v6580 = vshrl.u32 %v6309, 16
      %v6582 = vrot.slane %v6580, 4
      %v6583 = vor.u32 %v6582, %v6578
      %v6584 = vrot.slane %v6583, 4
      %v6586 = vshll.u32 %v6310, 16
      %v6588 = vrot.slane %v6586, 5
      %v6589 = vsel %vm999, %v6584, %v6588
      %v6591 = vshrl.u32 %v6311, 16
      %v6593 = vrot.slane %v6591, 4
      %v6594 = vshll.u32 %v6311, 16
      %v6596 = vrot.slane %v6594, 5
      %v6597 = vor.u32 %v6593, %v6596
      %v6598 = vrot.slane %v6597, 4
      %v6600 = vshll.u32 %v6312, 16
      %v6602 = vrot.slane %v6600, 5
      %v6603 = vsel %vm999, %v6598, %v6602
      %v6604 = vshrl.u32 %v6312, 16
      %v6606 = vrot.slane %v6604, 4
      %v6607 = vor.u32 %v6606, %v6602
      %v6608 = vrot.slane %v6607, 4
      %v6610 = vshll.u32 %v6313, 16
      %v6612 = vrot.slane %v6610, 5
      %v6613 = vsel %vm999, %v6608, %v6612
      %v6615 = vshrl.u32 %v6314, 16
      %v6617 = vrot.slane %v6615, 4
      %v6618 = vshll.u32 %v6314, 16
      %v6620 = vrot.slane %v6618, 5
      %v6621 = vor.u32 %v6617, %v6620
      %v6622 = vrot.slane %v6621, 4
      %v6624 = vshll.u32 %v6315, 16
      %v6626 = vrot.slane %v6624, 5
      %v6627 = vsel %vm999, %v6622, %v6626
      %v6628 = vshrl.u32 %v6315, 16
      %v6630 = vrot.slane %v6628, 4
      %v6631 = vor.u32 %v6630, %v6626
      %v6632 = vrot.slane %v6631, 4
      %v6634 = vshll.u32 %v6316, 16
      %v6636 = vrot.slane %v6634, 5
      %v6637 = vsel %vm999, %v6632, %v6636
      %v6639 = vshrl.u32 %v6317, 16
      %v6641 = vrot.slane %v6639, 4
      %v6642 = vshll.u32 %v6317, 16
      %v6644 = vrot.slane %v6642, 5
      %v6645 = vor.u32 %v6641, %v6644
      %v6646 = vrot.slane %v6645, 4
      %v6648 = vshll.u32 %v6318, 16
      %v6650 = vrot.slane %v6648, 5
      %v6651 = vsel %vm999, %v6646, %v6650
      %v6652 = vshrl.u32 %v6318, 16
      %v6654 = vrot.slane %v6652, 4
      %v6655 = vor.u32 %v6654, %v6650
      %v6656 = vrot.slane %v6655, 4
      %v6658 = vshll.u32 %v6319, 16
      %v6660 = vrot.slane %v6658, 5
      %v6661 = vsel %vm999, %v6656, %v6660
      %v6663 = vshrl.u32 %v6320, 16
      %v6665 = vrot.slane %v6663, 4
      %v6666 = vshll.u32 %v6320, 16
      %v6668 = vrot.slane %v6666, 5
      %v6669 = vor.u32 %v6665, %v6668
      %v6670 = vrot.slane %v6669, 4
      %v6672 = vshll.u32 %v6321, 16
      %v6674 = vrot.slane %v6672, 5
      %v6675 = vsel %vm999, %v6670, %v6674
      %v6676 = vshrl.u32 %v6321, 16
      %v6678 = vrot.slane %v6676, 4
      %v6679 = vor.u32 %v6678, %v6674
      %v6680 = vrot.slane %v6679, 4
      %v6682 = vshll.u32 %v6322, 16
      %v6684 = vrot.slane %v6682, 5
      %v6685 = vsel %vm999, %v6680, %v6684
      %v6687 = vshrl.u32 %v6323, 16
      %v6689 = vrot.slane %v6687, 4
      %v6690 = vshll.u32 %v6323, 16
      %v6692 = vrot.slane %v6690, 5
      %v6693 = vor.u32 %v6689, %v6692
      %v6694 = vrot.slane %v6693, 4
      %v6696 = vshll.u32 %v6324, 16
      %v6698 = vrot.slane %v6696, 5
      %v6699 = vsel %vm999, %v6694, %v6698
      %v6700 = vshrl.u32 %v6324, 16
      %v6702 = vrot.slane %v6700, 4
      %v6703 = vor.u32 %v6702, %v6698
      %v6704 = vrot.slane %v6703, 4
      %v6706 = vshll.u32 %v6325, 16
      %v6708 = vrot.slane %v6706, 5
      %v6709 = vsel %vm999, %v6704, %v6708
      %v6710 = vld [vmem:[%s4] sm:$0xf]
      %v6711 = vld [vmem:[%s4 + $0x4] sm:$0xf]
      %v6712 = vld [vmem:[%s4 + $0x8] sm:$0xf]
      %v6713 = vld [vmem:[%s4 + $0xc] sm:$0xf]
      %v6714 = vld [vmem:[%s5] sm:$0x1]
      %v6716 = vlaneseq
      %v6717 = vshrl.u32 %v6716, 7
      %v6718 = vsub.s32 0, %v6717
      %v6719 = vrot.slane %v6714, %v6718
      %v6721 = vunpack.c.l.b16 %v6339
      %v6722 = vunpack.c.l.b16 %v6349
      %v6723 = vunpack.c.l.b16 %v6363
      %v6724 = vunpack.c.l.b16 %v6373
      %v6725 = vunpack.c.l.b16 %v6387
      %v6726 = vunpack.c.l.b16 %v6397
      %v6727 = vunpack.c.l.b16 %v6411
      %v6728 = vunpack.c.l.b16 %v6421
      %v6729 = vunpack.c.l.b16 %v6435
      %v6730 = vunpack.c.l.b16 %v6445
      %v6731 = vunpack.c.l.b16 %v6459
      %v6732 = vunpack.c.l.b16 %v6469
      %v6733 = vunpack.c.l.b16 %v6483
      %v6734 = vunpack.c.l.b16 %v6493
      %v6735 = vunpack.c.l.b16 %v6507
      %v6736 = vunpack.c.l.b16 %v6517
      %v6737 = vunpack.c.l.b16 %v6531
      %v6738 = vunpack.c.l.b16 %v6541
      %v6739 = vunpack.c.l.b16 %v6555
      %v6740 = vunpack.c.l.b16 %v6565
      %v6741 = vunpack.c.l.b16 %v6579
      %v6742 = vunpack.c.l.b16 %v6589
      %v6743 = vunpack.c.l.b16 %v6603
      %v6744 = vunpack.c.l.b16 %v6613
      %v6745 = vunpack.c.l.b16 %v6627
      %v6746 = vunpack.c.l.b16 %v6637
      %v6747 = vunpack.c.l.b16 %v6651
      %v6748 = vunpack.c.l.b16 %v6661
      %v6749 = vunpack.c.l.b16 %v6675
      %v6750 = vunpack.c.l.b16 %v6685
      %v6751 = vunpack.c.l.b16 %v6699
      %v6752 = vunpack.c.l.b16 %v6709
      %v6753 = vpack.c.b16 %v6722, %v6721
      %v6754 = vpack.c.b16 %v6724, %v6723
      %v6755 = vpack.c.b16 %v6726, %v6725
      %v6756 = vpack.c.b16 %v6728, %v6727
      %v6757 = vpack.c.b16 %v6730, %v6729
      %v6758 = vpack.c.b16 %v6732, %v6731
      %v6759 = vpack.c.b16 %v6734, %v6733
      %v6760 = vpack.c.b16 %v6736, %v6735
      %v6761 = vpack.c.b16 %v6738, %v6737
      %v6762 = vpack.c.b16 %v6740, %v6739
      %v6763 = vpack.c.b16 %v6742, %v6741
      %v6764 = vpack.c.b16 %v6744, %v6743
      %v6765 = vpack.c.b16 %v6746, %v6745
      %v6766 = vpack.c.b16 %v6748, %v6747
      %v6767 = vpack.c.b16 %v6750, %v6749
      %v6768 = vpack.c.b16 %v6752, %v6751
      %v6773 = vunpack.c.l.b16 %v6710
      %v6774 = vunpack.c.l.b16 %v6711
      %v6775 = vunpack.c.l.b16 %v6712
      %v6776 = vunpack.c.l.b16 %v6713
      %v6777 = vpack.c.b16 %v6774, %v6773
      %v6778 = vpack.c.b16 %v6776, %v6775
      %vm6781 = vcmask 261120
      %v6783 = vsel %vm6781, %v6753, 0
      %v6786 = vsel %vm6781, %v6754, 0
      %v6789 = vsel %vm6781, %v6755, 0
      %v6792 = vsel %vm6781, %v6756, 0
      %v6795 = vsel %vm6781, %v6757, 0
      %v6798 = vsel %vm6781, %v6758, 0
      %v6801 = vsel %vm6781, %v6759, 0
      %v6804 = vsel %vm6781, %v6760, 0
      %v6807 = vsel %vm6781, %v6761, 0
      %v6810 = vsel %vm6781, %v6762, 0
      %v6813 = vsel %vm6781, %v6763, 0
      %v6816 = vsel %vm6781, %v6764, 0
      %v6819 = vsel %vm6781, %v6765, 0
      %v6822 = vsel %vm6781, %v6766, 0
      %v6825 = vsel %vm6781, %v6767, 0
      %v6828 = vsel %vm6781, %v6768, 0
      %6830 = vmatprep.subr.bf16.mxu0 0
      %6831 = vmatpush1.bf16.msra.mxu0 %v6777
      %6832 = vmatprep.subr.bf16.mxu0 0
      %6833 = vmatpush1.bf16.msra.mxu0 %v6778
      %6834 = vmatprep.subr.bf16.mxu0 0
      %6835 = vmatpush1.bf16.msra.mxu0 0
      %6836 = vmatprep.subr.bf16.mxu0 0
      %6837 = vmatpush1.bf16.msra.mxu0 0
      %6838 = vmatprep.subr.bf16.mxu0 0
      %6839 = vmatpush1.bf16.msra.mxu0 0
      %6840 = vmatprep.subr.bf16.mxu0 0
      %6841 = vmatpush1.bf16.msra.mxu0 0
      %6842 = vmatprep.subr.bf16.mxu0 0
      %6843 = vmatpush1.bf16.msra.mxu0 0
      %6844 = vmatprep.subr.bf16.mxu0 0
      %6845 = vmatpush1.bf16.msra.mxu0 0
      %6846 = vmatprep.subr.bf16.mxu0 0
      %6847 = vmatpush1.bf16.msra.mxu0 0
      %6848 = vmatprep.subr.bf16.mxu0 0
      %6849 = vmatpush1.bf16.msra.mxu0 0
      %6850 = vmatprep.subr.bf16.mxu0 0
      %6851 = vmatpush1.bf16.msra.mxu0 0
      %6852 = vmatprep.subr.bf16.mxu0 0
      %6853 = vmatpush1.bf16.msra.mxu0 0
      %6854 = vmatprep.subr.bf16.mxu0 0
      %6855 = vmatpush1.bf16.msra.mxu0 0
      %6856 = vmatprep.subr.bf16.mxu0 0
      %6857 = vmatpush1.bf16.msra.mxu0 0
      %6858 = vmatprep.subr.bf16.mxu0 0
      %6859 = vmatpush1.bf16.msra.mxu0 0
      %6860 = vmatprep.subr.bf16.mxu0 0
      %6861 = vmatpush1.bf16.msra.mxu0 0
      %6862 = vmatprep.mubr.bf16.mxu0 0
      %6863 = vmatmul.mubr.bf16.gmra.mrb[0].mxu0 %v6783
      %v6864 = vpop.f32.mrb[0].mxu0
      %v6865 = vadd.f32 %v6719, %v6864
      %v6866 = vpop.f32.mrb[0].mxu0
      %v6867 = vpop.f32.mrb[0].mxu0
      %v6868 = vadd.f32 %v6719, %v6867
      %v6869 = vpop.f32.mrb[0].mxu0
      %6870 = vmatprep.mubr.bf16.mxu0 0
      %6871 = vmatmul.mubr.bf16.gmra.mrb[0].mxu0 %v6786
      %v6872 = vpop.f32.mrb[0].mxu0
      %v6873 = vadd.f32 %v6719, %v6872
      %v6874 = vpop.f32.mrb[0].mxu0
      %v6875 = vpop.f32.mrb[0].mxu0
      %v6876 = vadd.f32 %v6719, %v6875
      %v6877 = vpop.f32.mrb[0].mxu0
      %6878 = vmatprep.mubr.bf16.mxu0 0
      %6879 = vmatmul.mubr.bf16.gmra.mrb[0].mxu0 %v6789
      %v6880 = vpop.f32.mrb[0].mxu0
      %v6881 = vadd.f32 %v6719, %v6880
      %v6882 = vpop.f32.mrb[0].mxu0
      %v6883 = vpop.f32.mrb[0].mxu0
      %v6884 = vadd.f32 %v6719, %v6883
      %v6885 = vpop.f32.mrb[0].mxu0
      %6886 = vmatprep.mubr.bf16.mxu0 0
      %6887 = vmatmul.mubr.bf16.gmra.mrb[0].mxu0 %v6792
      %v6888 = vpop.f32.mrb[0].mxu0
      %v6889 = vadd.f32 %v6719, %v6888
      %v6890 = vpop.f32.mrb[0].mxu0
      %v6891 = vpop.f32.mrb[0].mxu0
      %v6892 = vadd.f32 %v6719, %v6891
      %v6893 = vpop.f32.mrb[0].mxu0
      %6894 = vmatprep.mubr.bf16.mxu0 0
      %6895 = vmatmul.mubr.bf16.gmra.mrb[0].mxu0 %v6795
      %v6896 = vpop.f32.mrb[0].mxu0
      %v6897 = vadd.f32 %v6719, %v6896
      %v6898 = vpop.f32.mrb[0].mxu0
      %v6899 = vpop.f32.mrb[0].mxu0
      %v6900 = vadd.f32 %v6719, %v6899
      %v6901 = vpop.f32.mrb[0].mxu0
      %6902 = vmatprep.mubr.bf16.mxu0 0
      %6903 = vmatmul.mubr.bf16.gmra.mrb[0].mxu0 %v6798
      %v6904 = vpop.f32.mrb[0].mxu0
      %v6905 = vadd.f32 %v6719, %v6904
      %v6906 = vpop.f32.mrb[0].mxu0
      %v6907 = vpop.f32.mrb[0].mxu0
      %v6908 = vadd.f32 %v6719, %v6907
      %v6909 = vpop.f32.mrb[0].mxu0
      %6910 = vmatprep.mubr.bf16.mxu0 0
      %6911 = vmatmul.mubr.bf16.gmra.mrb[0].mxu0 %v6801
      %v6912 = vpop.f32.mrb[0].mxu0
      %v6913 = vadd.f32 %v6719, %v6912
      %v6914 = vpop.f32.mrb[0].mxu0
      %v6915 = vpop.f32.mrb[0].mxu0
      %v6916 = vadd.f32 %v6719, %v6915
      %v6917 = vpop.f32.mrb[0].mxu0
      %6918 = vmatprep.mubr.bf16.mxu0 0
      %6919 = vmatmul.mubr.bf16.gmra.mrb[0].mxu0 %v6804
      %v6920 = vpop.f32.mrb[0].mxu0
      %v6921 = vadd.f32 %v6719, %v6920
      %v6922 = vpop.f32.mrb[0].mxu0
      %v6923 = vpop.f32.mrb[0].mxu0
      %v6924 = vadd.f32 %v6719, %v6923
      %v6925 = vpop.f32.mrb[0].mxu0
      %6926 = vmatprep.mubr.bf16.mxu0 0
      %6927 = vmatmul.mubr.bf16.gmra.mrb[0].mxu0 %v6807
      %v6928 = vpop.f32.mrb[0].mxu0
      %v6929 = vadd.f32 %v6719, %v6928
      %v6930 = vpop.f32.mrb[0].mxu0
      %v6931 = vpop.f32.mrb[0].mxu0
      %v6932 = vadd.f32 %v6719, %v6931
      %v6933 = vpop.f32.mrb[0].mxu0
      %6934 = vmatprep.mubr.bf16.mxu0 0
      %6935 = vmatmul.mubr.bf16.gmra.mrb[0].mxu0 %v6810
      %v6936 = vpop.f32.mrb[0].mxu0
      %v6937 = vadd.f32 %v6719, %v6936
      %v6938 = vpop.f32.mrb[0].mxu0
      %v6939 = vpop.f32.mrb[0].mxu0
      %v6940 = vadd.f32 %v6719, %v6939
      %v6941 = vpop.f32.mrb[0].mxu0
      %6942 = vmatprep.mubr.bf16.mxu0 0
      %6943 = vmatmul.mubr.bf16.gmra.mrb[0].mxu0 %v6813
      %v6944 = vpop.f32.mrb[0].mxu0
      %v6945 = vadd.f32 %v6719, %v6944
      %v6946 = vpop.f32.mrb[0].mxu0
      %v6947 = vpop.f32.mrb[0].mxu0
      %v6948 = vadd.f32 %v6719, %v6947
      %v6949 = vpop.f32.mrb[0].mxu0
      %6950 = vmatprep.mubr.bf16.mxu0 0
      %6951 = vmatmul.mubr.bf16.gmra.mrb[0].mxu0 %v6816
      %v6952 = vpop.f32.mrb[0].mxu0
      %v6953 = vadd.f32 %v6719, %v6952
      %v6954 = vpop.f32.mrb[0].mxu0
      %v6955 = vpop.f32.mrb[0].mxu0
      %v6956 = vadd.f32 %v6719, %v6955
      %v6957 = vpop.f32.mrb[0].mxu0
      %6958 = vmatprep.mubr.bf16.mxu0 0
      %6959 = vmatmul.mubr.bf16.gmra.mrb[0].mxu0 %v6819
      %v6960 = vpop.f32.mrb[0].mxu0
      %v6961 = vadd.f32 %v6719, %v6960
      %v6962 = vpop.f32.mrb[0].mxu0
      %v6963 = vpop.f32.mrb[0].mxu0
      %v6964 = vadd.f32 %v6719, %v6963
      %v6965 = vpop.f32.mrb[0].mxu0
      %6966 = vmatprep.mubr.bf16.mxu0 0
      %6967 = vmatmul.mubr.bf16.gmra.mrb[0].mxu0 %v6822
      %v6968 = vpop.f32.mrb[0].mxu0
      %v6969 = vadd.f32 %v6719, %v6968
      %v6970 = vpop.f32.mrb[0].mxu0
      %v6971 = vpop.f32.mrb[0].mxu0
      %v6972 = vadd.f32 %v6719, %v6971
      %v6973 = vpop.f32.mrb[0].mxu0
      %6974 = vmatprep.mubr.bf16.mxu0 0
      %6975 = vmatmul.mubr.bf16.gmra.mrb[0].mxu0 %v6825
      %v6976 = vpop.f32.mrb[0].mxu0
      %v6977 = vadd.f32 %v6719, %v6976
      %v6978 = vpop.f32.mrb[0].mxu0
      %v6979 = vpop.f32.mrb[0].mxu0
      %v6980 = vadd.f32 %v6719, %v6979
      %v6981 = vpop.f32.mrb[0].mxu0
      %6982 = vmatprep.mubr.bf16.mxu0 0
      %6983 = vmatmul.mubr.bf16.gmra.mrb[0].mxu0 %v6828
      %v6984 = vpop.f32.mrb[0].mxu0
      %v6985 = vadd.f32 %v6719, %v6984
      %v6986 = vpop.f32.mrb[0].mxu0
      %v6987 = vpop.f32.mrb[0].mxu0
      %v6988 = vadd.f32 %v6719, %v6987
      %v6989 = vpop.f32.mrb[0].mxu0
      %6990 = vdwg.mxu0
      %vm6991 = vcmask 97280
      %6992 = vst.msk [vmem:[%s475] sm:$0xff] %vm6991, %v6865
      %6993 = vst.msk [vmem:[%s475 + $0x8] sm:$0xff] %vm6991, %v6868
      %6994 = vst.msk [vmem:[%s475 + $0x10] sm:$0xff] %vm6991, %v6873
      %6995 = vst.msk [vmem:[%s475 + $0x18] sm:$0xff] %vm6991, %v6876
      %6996 = vst.msk [vmem:[%s475 + $0x20] sm:$0xff] %vm6991, %v6881
      %6997 = vst.msk [vmem:[%s475 + $0x28] sm:$0xff] %vm6991, %v6884
      %6998 = vst.msk [vmem:[%s475 + $0x30] sm:$0xff] %vm6991, %v6889
      %6999 = vst.msk [vmem:[%s475 + $0x38] sm:$0xff] %vm6991, %v6892
      %7000 = vst.msk [vmem:[%s475 + $0x40] sm:$0xff] %vm6991, %v6897
      %7001 = vst.msk [vmem:[%s475 + $0x48] sm:$0xff] %vm6991, %v6900
      %7002 = vst.msk [vmem:[%s475 + $0x50] sm:$0xff] %vm6991, %v6905
      %7003 = vst.msk [vmem:[%s475 + $0x58] sm:$0xff] %vm6991, %v6908
      %7004 = vst.msk [vmem:[%s475 + $0x60] sm:$0xff] %vm6991, %v6913
      %7005 = vst.msk [vmem:[%s475 + $0x68] sm:$0xff] %vm6991, %v6916
      %7006 = vst.msk [vmem:[%s475 + $0x70] sm:$0xff] %vm6991, %v6921
      %7007 = vst.msk [vmem:[%s475 + $0x78] sm:$0xff] %vm6991, %v6924
      %7008 = vst.msk [vmem:[%s475 + $0x80] sm:$0xff] %vm6991, %v6929
      %7009 = vst.msk [vmem:[%s475 + $0x88] sm:$0xff] %vm6991, %v6932
      %7010 = vst.msk [vmem:[%s475 + $0x90] sm:$0xff] %vm6991, %v6937
      %7011 = vst.msk [vmem:[%s475 + $0x98] sm:$0xff] %vm6991, %v6940
      %7012 = vst.msk [vmem:[%s475 + $0xa0] sm:$0xff] %vm6991, %v6945
      %7013 = vst.msk [vmem:[%s475 + $0xa8] sm:$0xff] %vm6991, %v6948
      %7014 = vst.msk [vmem:[%s475 + $0xb0] sm:$0xff] %vm6991, %v6953
      %7015 = vst.msk [vmem:[%s475 + $0xb8] sm:$0xff] %vm6991, %v6956
      %7016 = vst.msk [vmem:[%s475 + $0xc0] sm:$0xff] %vm6991, %v6961
      %7017 = vst.msk [vmem:[%s475 + $0xc8] sm:$0xff] %vm6991, %v6964
      %7018 = vst.msk [vmem:[%s475 + $0xd0] sm:$0xff] %vm6991, %v6969
      %7019 = vst.msk [vmem:[%s475 + $0xd8] sm:$0xff] %vm6991, %v6972
      %7020 = vst.msk [vmem:[%s475 + $0xe0] sm:$0xff] %vm6991, %v6977
      %7021 = vst.msk [vmem:[%s475 + $0xe8] sm:$0xff] %vm6991, %v6980
      %7022 = vst.msk [vmem:[%s475 + $0xf0] sm:$0xff] %vm6991, %v6985
      %7023 = vst.msk [vmem:[%s475 + $0xf8] sm:$0xff] %vm6991, %v6988
      %v7024 = vld [vmem:[#allocation3] sm:$0xf]
      %v7025 = vld [vmem:[#allocation3 + $0x4] sm:$0xf]
      %v7026 = vld [vmem:[#allocation3 + $0xc] sm:$0xf]
      %v7027 = vld [vmem:[#allocation3 + $0x10] sm:$0xf]
      %v7028 = vld [vmem:[#allocation3 + $0x18] sm:$0xf]
      %v7029 = vld [vmem:[#allocation3 + $0x1c] sm:$0xf]
      %v7030 = vld [vmem:[#allocation3 + $0x24] sm:$0xf]
      %v7031 = vld [vmem:[#allocation3 + $0x28] sm:$0xf]
      %v7032 = vld [vmem:[#allocation3 + $0x30] sm:$0xf]
      %v7033 = vld [vmem:[#allocation3 + $0x34] sm:$0xf]
      %v7034 = vld [vmem:[#allocation3 + $0x3c] sm:$0xf]
      %v7035 = vld [vmem:[#allocation3 + $0x40] sm:$0xf]
      %v7036 = vld [vmem:[#allocation3 + $0x48] sm:$0xf]
      %v7037 = vld [vmem:[#allocation3 + $0x4c] sm:$0xf]
      %v7038 = vld [vmem:[#allocation3 + $0x54] sm:$0xf]
      %v7039 = vld [vmem:[#allocation3 + $0x58] sm:$0xf]
      %v7040 = vld [vmem:[#allocation3 + $0x60] sm:$0xf]
      %v7041 = vld [vmem:[#allocation3 + $0x64] sm:$0xf]
      %v7042 = vld [vmem:[#allocation3 + $0x6c] sm:$0xf]
      %v7043 = vld [vmem:[#allocation3 + $0x70] sm:$0xf]
      %v7044 = vld [vmem:[#allocation3 + $0x78] sm:$0xf]
      %v7045 = vld [vmem:[#allocation3 + $0x7c] sm:$0xf]
      %v7046 = vld [vmem:[#allocation3 + $0x84] sm:$0xf]
      %v7047 = vld [vmem:[#allocation3 + $0x88] sm:$0xf]
      %v7048 = vld [vmem:[#allocation3 + $0x90] sm:$0xf]
      %v7049 = vld [vmem:[#allocation3 + $0x94] sm:$0xf]
      %v7050 = vld [vmem:[#allocation3 + $0x9c] sm:$0xf]
      %v7051 = vld [vmem:[#allocation3 + $0xa0] sm:$0xf]
      %v7052 = vld [vmem:[#allocation3 + $0xa8] sm:$0xf]
      %v7053 = vld [vmem:[#allocation3 + $0xac] sm:$0xf]
      %v7054 = vld [vmem:[#allocation3 + $0xb4] sm:$0xf]
      %v7055 = vld [vmem:[#allocation3 + $0xb8] sm:$0xf]
      %v7056 = vld [vmem:[%s6] sm:$0xf]
      %v7057 = vld [vmem:[%s6 + $0x4] sm:$0xf]
      %v7058 = vld [vmem:[%s6 + $0x8] sm:$0xf]
      %v7059 = vld [vmem:[%s6 + $0xc] sm:$0xf]
      %v7060 = vld [vmem:[#allocation3 + $0x8] sm:$0x1]
      %v7061 = vld [vmem:[#allocation3 + $0x14] sm:$0x1]
      %v7062 = vld [vmem:[#allocation3 + $0x20] sm:$0x1]
      %v7063 = vld [vmem:[#allocation3 + $0x2c] sm:$0x1]
      %v7064 = vld [vmem:[#allocation3 + $0x38] sm:$0x1]
      %v7065 = vld [vmem:[#allocation3 + $0x44] sm:$0x1]
      %v7066 = vld [vmem:[#allocation3 + $0x50] sm:$0x1]
      %v7067 = vld [vmem:[#allocation3 + $0x5c] sm:$0x1]
      %v7068 = vld [vmem:[#allocation3 + $0x68] sm:$0x1]
      %v7069 = vld [vmem:[#allocation3 + $0x74] sm:$0x1]
      %v7070 = vld [vmem:[#allocation3 + $0x80] sm:$0x1]
      %v7071 = vld [vmem:[#allocation3 + $0x8c] sm:$0x1]
      %v7072 = vld [vmem:[#allocation3 + $0x98] sm:$0x1]
      %v7073 = vld [vmem:[#allocation3 + $0xa4] sm:$0x1]
      %v7074 = vld [vmem:[#allocation3 + $0xb0] sm:$0x1]
      %v7075 = vld [vmem:[#allocation3 + $0xbc] sm:$0x1]
      %v7077 = vshrl.u32 %v7024, 16
      %v7079 = vrot.slane %v7077, 4
      %v7080 = vshll.u32 %v7024, 16
      %v7082 = vrot.slane %v7080, 5
      %v7083 = vor.u32 %v7079, %v7082
      %v7084 = vrot.slane %v7083, 4
      %v7086 = vshll.u32 %v7025, 16
      %v7088 = vrot.slane %v7086, 5
      %v7089 = vsel %vm999, %v7084, %v7088
      %v7090 = vshrl.u32 %v7025, 16
      %v7092 = vrot.slane %v7090, 4
      %v7093 = vor.u32 %v7092, %v7088
      %v7094 = vrot.slane %v7093, 4
      %v7096 = vshll.u32 %v7060, 16
      %v7098 = vrot.slane %v7096, 5
      %v7099 = vsel %vm999, %v7094, %v7098
      %v7101 = vshrl.u32 %v7026, 16
      %v7103 = vrot.slane %v7101, 4
      %v7104 = vshll.u32 %v7026, 16
      %v7106 = vrot.slane %v7104, 5
      %v7107 = vor.u32 %v7103, %v7106
      %v7108 = vrot.slane %v7107, 4
      %v7110 = vshll.u32 %v7027, 16
      %v7112 = vrot.slane %v7110, 5
      %v7113 = vsel %vm999, %v7108, %v7112
      %v7114 = vshrl.u32 %v7027, 16
      %v7116 = vrot.slane %v7114, 4
      %v7117 = vor.u32 %v7116, %v7112
      %v7118 = vrot.slane %v7117, 4
      %v7120 = vshll.u32 %v7061, 16
      %v7122 = vrot.slane %v7120, 5
      %v7123 = vsel %vm999, %v7118, %v7122
      %v7125 = vshrl.u32 %v7028, 16
      %v7127 = vrot.slane %v7125, 4
      %v7128 = vshll.u32 %v7028, 16
      %v7130 = vrot.slane %v7128, 5
      %v7131 = vor.u32 %v7127, %v7130
      %v7132 = vrot.slane %v7131, 4
      %v7134 = vshll.u32 %v7029, 16
      %v7136 = vrot.slane %v7134, 5
      %v7137 = vsel %vm999, %v7132, %v7136
      %v7138 = vshrl.u32 %v7029, 16
      %v7140 = vrot.slane %v7138, 4
      %v7141 = vor.u32 %v7140, %v7136
      %v7142 = vrot.slane %v7141, 4
      %v7144 = vshll.u32 %v7062, 16
      %v7146 = vrot.slane %v7144, 5
      %v7147 = vsel %vm999, %v7142, %v7146
      %v7149 = vshrl.u32 %v7030, 16
      %v7151 = vrot.slane %v7149, 4
      %v7152 = vshll.u32 %v7030, 16
      %v7154 = vrot.slane %v7152, 5
      %v7155 = vor.u32 %v7151, %v7154
      %v7156 = vrot.slane %v7155, 4
      %v7158 = vshll.u32 %v7031, 16
      %v7160 = vrot.slane %v7158, 5
      %v7161 = vsel %vm999, %v7156, %v7160
      %v7162 = vshrl.u32 %v7031, 16
      %v7164 = vrot.slane %v7162, 4
      %v7165 = vor.u32 %v7164, %v7160
      %v7166 = vrot.slane %v7165, 4
      %v7168 = vshll.u32 %v7063, 16
      %v7170 = vrot.slane %v7168, 5
      %v7171 = vsel %vm999, %v7166, %v7170
      %v7173 = vshrl.u32 %v7032, 16
      %v7175 = vrot.slane %v7173, 4
      %v7176 = vshll.u32 %v7032, 16
      %v7178 = vrot.slane %v7176, 5
      %v7179 = vor.u32 %v7175, %v7178
      %v7180 = vrot.slane %v7179, 4
      %v7182 = vshll.u32 %v7033, 16
      %v7184 = vrot.slane %v7182, 5
      %v7185 = vsel %vm999, %v7180, %v7184
      %v7186 = vshrl.u32 %v7033, 16
      %v7188 = vrot.slane %v7186, 4
      %v7189 = vor.u32 %v7188, %v7184
      %v7190 = vrot.slane %v7189, 4
      %v7192 = vshll.u32 %v7064, 16
      %v7194 = vrot.slane %v7192, 5
      %v7195 = vsel %vm999, %v7190, %v7194
      %v7197 = vshrl.u32 %v7034, 16
      %v7199 = vrot.slane %v7197, 4
      %v7200 = vshll.u32 %v7034, 16
      %v7202 = vrot.slane %v7200, 5
      %v7203 = vor.u32 %v7199, %v7202
      %v7204 = vrot.slane %v7203, 4
      %v7206 = vshll.u32 %v7035, 16
      %v7208 = vrot.slane %v7206, 5
      %v7209 = vsel %vm999, %v7204, %v7208
      %v7210 = vshrl.u32 %v7035, 16
      %v7212 = vrot.slane %v7210, 4
      %v7213 = vor.u32 %v7212, %v7208
      %v7214 = vrot.slane %v7213, 4
      %v7216 = vshll.u32 %v7065, 16
      %v7218 = vrot.slane %v7216, 5
      %v7219 = vsel %vm999, %v7214, %v7218
      %v7221 = vshrl.u32 %v7036, 16
      %v7223 = vrot.slane %v7221, 4
      %v7224 = vshll.u32 %v7036, 16
      %v7226 = vrot.slane %v7224, 5
      %v7227 = vor.u32 %v7223, %v7226
      %v7228 = vrot.slane %v7227, 4
      %v7230 = vshll.u32 %v7037, 16
      %v7232 = vrot.slane %v7230, 5
      %v7233 = vsel %vm999, %v7228, %v7232
      %v7234 = vshrl.u32 %v7037, 16
      %v7236 = vrot.slane %v7234, 4
      %v7237 = vor.u32 %v7236, %v7232
      %v7238 = vrot.slane %v7237, 4
      %v7240 = vshll.u32 %v7066, 16
      %v7242 = vrot.slane %v7240, 5
      %v7243 = vsel %vm999, %v7238, %v7242
      %v7245 = vshrl.u32 %v7038, 16
      %v7247 = vrot.slane %v7245, 4
      %v7248 = vshll.u32 %v7038, 16
      %v7250 = vrot.slane %v7248, 5
      %v7251 = vor.u32 %v7247, %v7250
      %v7252 = vrot.slane %v7251, 4
      %v7254 = vshll.u32 %v7039, 16
      %v7256 = vrot.slane %v7254, 5
      %v7257 = vsel %vm999, %v7252, %v7256
      %v7258 = vshrl.u32 %v7039, 16
      %v7260 = vrot.slane %v7258, 4
      %v7261 = vor.u32 %v7260, %v7256
      %v7262 = vrot.slane %v7261, 4
      %v7264 = vshll.u32 %v7067, 16
      %v7266 = vrot.slane %v7264, 5
      %v7267 = vsel %vm999, %v7262, %v7266
      %v7269 = vshrl.u32 %v7040, 16
      %v7271 = vrot.slane %v7269, 4
      %v7272 = vshll.u32 %v7040, 16
      %v7274 = vrot.slane %v7272, 5
      %v7275 = vor.u32 %v7271, %v7274
      %v7276 = vrot.slane %v7275, 4
      %v7278 = vshll.u32 %v7041, 16
      %v7280 = vrot.slane %v7278, 5
      %v7281 = vsel %vm999, %v7276, %v7280
      %v7282 = vshrl.u32 %v7041, 16
      %v7284 = vrot.slane %v7282, 4
      %v7285 = vor.u32 %v7284, %v7280
      %v7286 = vrot.slane %v7285, 4
      %v7288 = vshll.u32 %v7068, 16
      %v7290 = vrot.slane %v7288, 5
      %v7291 = vsel %vm999, %v7286, %v7290
      %v7293 = vshrl.u32 %v7042, 16
      %v7295 = vrot.slane %v7293, 4
      %v7296 = vshll.u32 %v7042, 16
      %v7298 = vrot.slane %v7296, 5
      %v7299 = vor.u32 %v7295, %v7298
      %v7300 = vrot.slane %v7299, 4
      %v7302 = vshll.u32 %v7043, 16
      %v7304 = vrot.slane %v7302, 5
      %v7305 = vsel %vm999, %v7300, %v7304
      %v7306 = vshrl.u32 %v7043, 16
      %v7308 = vrot.slane %v7306, 4
      %v7309 = vor.u32 %v7308, %v7304
      %v7310 = vrot.slane %v7309, 4
      %v7312 = vshll.u32 %v7069, 16
      %v7314 = vrot.slane %v7312, 5
      %v7315 = vsel %vm999, %v7310, %v7314
      %v7317 = vshrl.u32 %v7044, 16
      %v7319 = vrot.slane %v7317, 4
      %v7320 = vshll.u32 %v7044, 16
      %v7322 = vrot.slane %v7320, 5
      %v7323 = vor.u32 %v7319, %v7322
      %v7324 = vrot.slane %v7323, 4
      %v7326 = vshll.u32 %v7045, 16
      %v7328 = vrot.slane %v7326, 5
      %v7329 = vsel %vm999, %v7324, %v7328
      %v7330 = vshrl.u32 %v7045, 16
      %v7332 = vrot.slane %v7330, 4
      %v7333 = vor.u32 %v7332, %v7328
      %v7334 = vrot.slane %v7333, 4
      %v7336 = vshll.u32 %v7070, 16
      %v7338 = vrot.slane %v7336, 5
      %v7339 = vsel %vm999, %v7334, %v7338
      %v7341 = vshrl.u32 %v7046, 16
      %v7343 = vrot.slane %v7341, 4
      %v7344 = vshll.u32 %v7046, 16
      %v7346 = vrot.slane %v7344, 5
      %v7347 = vor.u32 %v7343, %v7346
      %v7348 = vrot.slane %v7347, 4
      %v7350 = vshll.u32 %v7047, 16
      %v7352 = vrot.slane %v7350, 5
      %v7353 = vsel %vm999, %v7348, %v7352
      %v7354 = vshrl.u32 %v7047, 16
      %v7356 = vrot.slane %v7354, 4
      %v7357 = vor.u32 %v7356, %v7352
      %v7358 = vrot.slane %v7357, 4
      %v7360 = vshll.u32 %v7071, 16
      %v7362 = vrot.slane %v7360, 5
      %v7363 = vsel %vm999, %v7358, %v7362
      %v7365 = vshrl.u32 %v7048, 16
      %v7367 = vrot.slane %v7365, 4
      %v7368 = vshll.u32 %v7048, 16
      %v7370 = vrot.slane %v7368, 5
      %v7371 = vor.u32 %v7367, %v7370
      %v7372 = vrot.slane %v7371, 4
      %v7374 = vshll.u32 %v7049, 16
      %v7376 = vrot.slane %v7374, 5
      %v7377 = vsel %vm999, %v7372, %v7376
      %v7378 = vshrl.u32 %v7049, 16
      %v7380 = vrot.slane %v7378, 4
      %v7381 = vor.u32 %v7380, %v7376
      %v7382 = vrot.slane %v7381, 4
      %v7384 = vshll.u32 %v7072, 16
      %v7386 = vrot.slane %v7384, 5
      %v7387 = vsel %vm999, %v7382, %v7386
      %v7389 = vshrl.u32 %v7050, 16
      %v7391 = vrot.slane %v7389, 4
      %v7392 = vshll.u32 %v7050, 16
      %v7394 = vrot.slane %v7392, 5
      %v7395 = vor.u32 %v7391, %v7394
      %v7396 = vrot.slane %v7395, 4
      %v7398 = vshll.u32 %v7051, 16
      %v7400 = vrot.slane %v7398, 5
      %v7401 = vsel %vm999, %v7396, %v7400
      %v7402 = vshrl.u32 %v7051, 16
      %v7404 = vrot.slane %v7402, 4
      %v7405 = vor.u32 %v7404, %v7400
      %v7406 = vrot.slane %v7405, 4
      %v7408 = vshll.u32 %v7073, 16
      %v7410 = vrot.slane %v7408, 5
      %v7411 = vsel %vm999, %v7406, %v7410
      %v7413 = vshrl.u32 %v7052, 16
      %v7415 = vrot.slane %v7413, 4
      %v7416 = vshll.u32 %v7052, 16
      %v7418 = vrot.slane %v7416, 5
      %v7419 = vor.u32 %v7415, %v7418
      %v7420 = vrot.slane %v7419, 4
      %v7422 = vshll.u32 %v7053, 16
      %v7424 = vrot.slane %v7422, 5
      %v7425 = vsel %vm999, %v7420, %v7424
      %v7426 = vshrl.u32 %v7053, 16
      %v7428 = vrot.slane %v7426, 4
      %v7429 = vor.u32 %v7428, %v7424
      %v7430 = vrot.slane %v7429, 4
      %v7432 = vshll.u32 %v7074, 16
      %v7434 = vrot.slane %v7432, 5
      %v7435 = vsel %vm999, %v7430, %v7434
      %v7437 = vshrl.u32 %v7054, 16
      %v7439 = vrot.slane %v7437, 4
      %v7440 = vshll.u32 %v7054, 16
      %v7442 = vrot.slane %v7440, 5
      %v7443 = vor.u32 %v7439, %v7442
      %v7444 = vrot.slane %v7443, 4
      %v7446 = vshll.u32 %v7055, 16
      %v7448 = vrot.slane %v7446, 5
      %v7449 = vsel %vm999, %v7444, %v7448
      %v7450 = vshrl.u32 %v7055, 16
      %v7452 = vrot.slane %v7450, 4
      %v7453 = vor.u32 %v7452, %v7448
      %v7454 = vrot.slane %v7453, 4
      %v7456 = vshll.u32 %v7075, 16
      %v7458 = vrot.slane %v7456, 5
      %v7459 = vsel %vm999, %v7454, %v7458
      %v7460 = vld [vmem:[%s6 + $0x10] sm:$0xf]
      %v7461 = vld [vmem:[%s6 + $0x14] sm:$0xf]
      %v7462 = vld [vmem:[%s6 + $0x18] sm:$0xf]
      %v7463 = vld [vmem:[%s6 + $0x1c] sm:$0xf]
      %v7464 = vunpack.c.l.b16 %v7089
      %v7465 = vunpack.c.l.b16 %v7099
      %v7466 = vunpack.c.l.b16 %v7113
      %v7467 = vunpack.c.l.b16 %v7123
      %v7468 = vunpack.c.l.b16 %v7137
      %v7469 = vunpack.c.l.b16 %v7147
      %v7470 = vunpack.c.l.b16 %v7161
      %v7471 = vunpack.c.l.b16 %v7171
      %v7472 = vunpack.c.l.b16 %v7185
      %v7473 = vunpack.c.l.b16 %v7195
      %v7474 = vunpack.c.l.b16 %v7209
      %v7475 = vunpack.c.l.b16 %v7219
      %v7476 = vunpack.c.l.b16 %v7233
      %v7477 = vunpack.c.l.b16 %v7243
      %v7478 = vunpack.c.l.b16 %v7257
      %v7479 = vunpack.c.l.b16 %v7267
      %v7480 = vunpack.c.l.b16 %v7281
      %v7481 = vunpack.c.l.b16 %v7291
      %v7482 = vunpack.c.l.b16 %v7305
      %v7483 = vunpack.c.l.b16 %v7315
      %v7484 = vunpack.c.l.b16 %v7329
      %v7485 = vunpack.c.l.b16 %v7339
      %v7486 = vunpack.c.l.b16 %v7353
      %v7487 = vunpack.c.l.b16 %v7363
      %v7488 = vunpack.c.l.b16 %v7377
      %v7489 = vunpack.c.l.b16 %v7387
      %v7490 = vunpack.c.l.b16 %v7401
      %v7491 = vunpack.c.l.b16 %v7411
      %v7492 = vunpack.c.l.b16 %v7425
      %v7493 = vunpack.c.l.b16 %v7435
      %v7494 = vunpack.c.l.b16 %v7449
      %v7495 = vunpack.c.l.b16 %v7459
      %v7496 = vpack.c.b16 %v7465, %v7464
      %v7497 = vpack.c.b16 %v7467, %v7466
      %v7498 = vpack.c.b16 %v7469, %v7468
      %v7499 = vpack.c.b16 %v7471, %v7470
      %v7500 = vpack.c.b16 %v7473, %v7472
      %v7501 = vpack.c.b16 %v7475, %v7474
      %v7502 = vpack.c.b16 %v7477, %v7476
      %v7503 = vpack.c.b16 %v7479, %v7478
      %v7504 = vpack.c.b16 %v7481, %v7480
      %v7505 = vpack.c.b16 %v7483, %v7482
      %v7506 = vpack.c.b16 %v7485, %v7484
      %v7507 = vpack.c.b16 %v7487, %v7486
      %v7508 = vpack.c.b16 %v7489, %v7488
      %v7509 = vpack.c.b16 %v7491, %v7490
      %v7510 = vpack.c.b16 %v7493, %v7492
      %v7511 = vpack.c.b16 %v7495, %v7494
      %v7516 = vunpack.c.l.b16 %v7460
      %v7517 = vunpack.c.l.b16 %v7461
      %v7518 = vunpack.c.l.b16 %v7462
      %v7519 = vunpack.c.l.b16 %v7463
      %v7520 = vpack.c.b16 %v7517, %v7516
      %v7521 = vpack.c.b16 %v7519, %v7518
      %v7525 = vsel %vm6781, %v7496, 0
      %v7528 = vsel %vm6781, %v7497, 0
      %v7531 = vsel %vm6781, %v7498, 0
      %v7534 = vsel %vm6781, %v7499, 0
      %v7537 = vsel %vm6781, %v7500, 0
      %v7540 = vsel %vm6781, %v7501, 0
      %v7543 = vsel %vm6781, %v7502, 0
      %v7546 = vsel %vm6781, %v7503, 0
      %v7549 = vsel %vm6781, %v7504, 0
      %v7552 = vsel %vm6781, %v7505, 0
      %v7555 = vsel %vm6781, %v7506, 0
      %v7558 = vsel %vm6781, %v7507, 0
      %v7561 = vsel %vm6781, %v7508, 0
      %v7564 = vsel %vm6781, %v7509, 0
      %v7567 = vsel %vm6781, %v7510, 0
      %v7570 = vsel %vm6781, %v7511, 0
      %7572 = vmatprep.subr.bf16.mxu0 0
      %7573 = vmatpush1.bf16.msra.mxu0 %v7520
      %7574 = vmatprep.subr.bf16.mxu0 0
      %7575 = vmatpush1.bf16.msra.mxu0 %v7521
      %7576 = vmatprep.subr.bf16.mxu0 0
      %7577 = vmatpush1.bf16.msra.mxu0 0
      %7578 = vmatprep.subr.bf16.mxu0 0
      %7579 = vmatpush1.bf16.msra.mxu0 0
      %7580 = vmatprep.subr.bf16.mxu0 0
      %7581 = vmatpush1.bf16.msra.mxu0 0
      %7582 = vmatprep.subr.bf16.mxu0 0
      %7583 = vmatpush1.bf16.msra.mxu0 0
      %7584 = vmatprep.subr.bf16.mxu0 0
      %7585 = vmatpush1.bf16.msra.mxu0 0
      %7586 = vmatprep.subr.bf16.mxu0 0
      %7587 = vmatpush1.bf16.msra.mxu0 0
      %7588 = vmatprep.subr.bf16.mxu0 0
      %7589 = vmatpush1.bf16.msra.mxu0 0
      %7590 = vmatprep.subr.bf16.mxu0 0
      %7591 = vmatpush1.bf16.msra.mxu0 0
      %7592 = vmatprep.subr.bf16.mxu0 0
      %7593 = vmatpush1.bf16.msra.mxu0 0
      %7594 = vmatprep.subr.bf16.mxu0 0
      %7595 = vmatpush1.bf16.msra.mxu0 0
      %7596 = vmatprep.subr.bf16.mxu0 0
      %7597 = vmatpush1.bf16.msra.mxu0 0
      %7598 = vmatprep.subr.bf16.mxu0 0
      %7599 = vmatpush1.bf16.msra.mxu0 0
      %7600 = vmatprep.subr.bf16.mxu0 0
      %7601 = vmatpush1.bf16.msra.mxu0 0
      %7602 = vmatprep.subr.bf16.mxu0 0
      %7603 = vmatpush1.bf16.msra.mxu0 0
      %7604 = vmatprep.mubr.bf16.mxu0 0
      %7605 = vmatmul.mubr.bf16.gmra.mrb[0].mxu0 %v7525
      %v7606 = vpop.f32.mrb[0].mxu0
      %v7607 = vadd.f32 0.0, %v7606
      %v7608 = vpop.f32.mrb[0].mxu0
      %v7609 = vpop.f32.mrb[0].mxu0
      %v7610 = vadd.f32 0.0, %v7609
      %v7611 = vpop.f32.mrb[0].mxu0
      %7612 = vmatprep.mubr.bf16.mxu0 0
      %7613 = vmatmul.mubr.bf16.gmra.mrb[0].mxu0 %v7528
      %v7614 = vpop.f32.mrb[0].mxu0
      %v7615 = vadd.f32 0.0, %v7614
      %v7616 = vpop.f32.mrb[0].mxu0
      %v7617 = vpop.f32.mrb[0].mxu0
      %v7618 = vadd.f32 0.0, %v7617
      %v7619 = vpop.f32.mrb[0].mxu0
      %7620 = vmatprep.mubr.bf16.mxu0 0
      %7621 = vmatmul.mubr.bf16.gmra.mrb[0].mxu0 %v7531
      %v7622 = vpop.f32.mrb[0].mxu0
      %v7623 = vadd.f32 0.0, %v7622
      %v7624 = vpop.f32.mrb[0].mxu0
      %v7625 = vpop.f32.mrb[0].mxu0
      %v7626 = vadd.f32 0.0, %v7625
      %v7627 = vpop.f32.mrb[0].mxu0
      %7628 = vmatprep.mubr.bf16.mxu0 0
      %7629 = vmatmul.mubr.bf16.gmra.mrb[0].mxu0 %v7534
      %v7630 = vpop.f32.mrb[0].mxu0
      %v7631 = vadd.f32 0.0, %v7630
      %v7632 = vpop.f32.mrb[0].mxu0
      %v7633 = vpop.f32.mrb[0].mxu0
      %v7634 = vadd.f32 0.0, %v7633
      %v7635 = vpop.f32.mrb[0].mxu0
      %7636 = vmatprep.mubr.bf16.mxu0 0
      %7637 = vmatmul.mubr.bf16.gmra.mrb[0].mxu0 %v7537
      %v7638 = vpop.f32.mrb[0].mxu0
      %v7639 = vadd.f32 0.0, %v7638
      %v7640 = vpop.f32.mrb[0].mxu0
      %v7641 = vpop.f32.mrb[0].mxu0
      %v7642 = vadd.f32 0.0, %v7641
      %v7643 = vpop.f32.mrb[0].mxu0
      %7644 = vmatprep.mubr.bf16.mxu0 0
      %7645 = vmatmul.mubr.bf16.gmra.mrb[0].mxu0 %v7540
      %v7646 = vpop.f32.mrb[0].mxu0
      %v7647 = vadd.f32 0.0, %v7646
      %v7648 = vpop.f32.mrb[0].mxu0
      %v7649 = vpop.f32.mrb[0].mxu0
      %v7650 = vadd.f32 0.0, %v7649
      %v7651 = vpop.f32.mrb[0].mxu0
      %7652 = vmatprep.mubr.bf16.mxu0 0
      %7653 = vmatmul.mubr.bf16.gmra.mrb[0].mxu0 %v7543
      %v7654 = vpop.f32.mrb[0].mxu0
      %v7655 = vadd.f32 0.0, %v7654
      %v7656 = vpop.f32.mrb[0].mxu0
      %v7657 = vpop.f32.mrb[0].mxu0
      %v7658 = vadd.f32 0.0, %v7657
      %v7659 = vpop.f32.mrb[0].mxu0
      %7660 = vmatprep.mubr.bf16.mxu0 0
      %7661 = vmatmul.mubr.bf16.gmra.mrb[0].mxu0 %v7546
      %v7662 = vpop.f32.mrb[0].mxu0
      %v7663 = vadd.f32 0.0, %v7662
      %v7664 = vpop.f32.mrb[0].mxu0
      %v7665 = vpop.f32.mrb[0].mxu0
      %v7666 = vadd.f32 0.0, %v7665
      %v7667 = vpop.f32.mrb[0].mxu0
      %7668 = vmatprep.mubr.bf16.mxu0 0
      %7669 = vmatmul.mubr.bf16.gmra.mrb[0].mxu0 %v7549
      %v7670 = vpop.f32.mrb[0].mxu0
      %v7671 = vadd.f32 0.0, %v7670
      %v7672 = vpop.f32.mrb[0].mxu0
      %v7673 = vpop.f32.mrb[0].mxu0
      %v7674 = vadd.f32 0.0, %v7673
      %v7675 = vpop.f32.mrb[0].mxu0
      %7676 = vmatprep.mubr.bf16.mxu0 0
      %7677 = vmatmul.mubr.bf16.gmra.mrb[0].mxu0 %v7552
      %v7678 = vpop.f32.mrb[0].mxu0
      %v7679 = vadd.f32 0.0, %v7678
      %v7680 = vpop.f32.mrb[0].mxu0
      %v7681 = vpop.f32.mrb[0].mxu0
      %v7682 = vadd.f32 0.0, %v7681
      %v7683 = vpop.f32.mrb[0].mxu0
      %7684 = vmatprep.mubr.bf16.mxu0 0
      %7685 = vmatmul.mubr.bf16.gmra.mrb[0].mxu0 %v7555
      %v7686 = vpop.f32.mrb[0].mxu0
      %v7687 = vadd.f32 0.0, %v7686
      %v7688 = vpop.f32.mrb[0].mxu0
      %v7689 = vpop.f32.mrb[0].mxu0
      %v7690 = vadd.f32 0.0, %v7689
      %v7691 = vpop.f32.mrb[0].mxu0
      %7692 = vmatprep.mubr.bf16.mxu0 0
      %7693 = vmatmul.mubr.bf16.gmra.mrb[0].mxu0 %v7558
      %v7694 = vpop.f32.mrb[0].mxu0
      %v7695 = vadd.f32 0.0, %v7694
      %v7696 = vpop.f32.mrb[0].mxu0
      %v7697 = vpop.f32.mrb[0].mxu0
      %v7698 = vadd.f32 0.0, %v7697
      %v7699 = vpop.f32.mrb[0].mxu0
      %7700 = vmatprep.mubr.bf16.mxu0 0
      %7701 = vmatmul.mubr.bf16.gmra.mrb[0].mxu0 %v7561
      %v7702 = vpop.f32.mrb[0].mxu0
      %v7703 = vadd.f32 0.0, %v7702
      %v7704 = vpop.f32.mrb[0].mxu0
      %v7705 = vpop.f32.mrb[0].mxu0
      %v7706 = vadd.f32 0.0, %v7705
      %v7707 = vpop.f32.mrb[0].mxu0
      %7708 = vmatprep.mubr.bf16.mxu0 0
      %7709 = vmatmul.mubr.bf16.gmra.mrb[0].mxu0 %v7564
      %v7710 = vpop.f32.mrb[0].mxu0
      %v7711 = vadd.f32 0.0, %v7710
      %v7712 = vpop.f32.mrb[0].mxu0
      %v7713 = vpop.f32.mrb[0].mxu0
      %v7714 = vadd.f32 0.0, %v7713
      %v7715 = vpop.f32.mrb[0].mxu0
      %7716 = vmatprep.mubr.bf16.mxu0 0
      %7717 = vmatmul.mubr.bf16.gmra.mrb[0].mxu0 %v7567
      %v7718 = vpop.f32.mrb[0].mxu0
      %v7719 = vadd.f32 0.0, %v7718
      %v7720 = vpop.f32.mrb[0].mxu0
      %v7721 = vpop.f32.mrb[0].mxu0
      %v7722 = vadd.f32 0.0, %v7721
      %v7723 = vpop.f32.mrb[0].mxu0
      %7724 = vmatprep.mubr.bf16.mxu0 0
      %7725 = vmatmul.mubr.bf16.gmra.mrb[0].mxu0 %v7570
      %v7726 = vpop.f32.mrb[0].mxu0
      %v7727 = vadd.f32 0.0, %v7726
      %v7728 = vpop.f32.mrb[0].mxu0
      %v7729 = vpop.f32.mrb[0].mxu0
      %v7730 = vadd.f32 0.0, %v7729
      %v7731 = vpop.f32.mrb[0].mxu0
      %7732 = vdwg.mxu0
      %v7765 = vunpack.c.l.b16 %v7024
      %v7766 = vunpack.c.l.b16 %v7025
      %v7767 = vunpack.c.l.b16 %v7026
      %v7768 = vunpack.c.l.b16 %v7027
      %v7769 = vunpack.c.l.b16 %v7028
      %v7770 = vunpack.c.l.b16 %v7029
      %v7771 = vunpack.c.l.b16 %v7030
      %v7772 = vunpack.c.l.b16 %v7031
      %v7773 = vunpack.c.l.b16 %v7032
      %v7774 = vunpack.c.l.b16 %v7033
      %v7775 = vunpack.c.l.b16 %v7034
      %v7776 = vunpack.c.l.b16 %v7035
      %v7777 = vunpack.c.l.b16 %v7036
      %v7778 = vunpack.c.l.b16 %v7037
      %v7779 = vunpack.c.l.b16 %v7038
      %v7780 = vunpack.c.l.b16 %v7039
      %v7781 = vunpack.c.l.b16 %v7040
      %v7782 = vunpack.c.l.b16 %v7041
      %v7783 = vunpack.c.l.b16 %v7042
      %v7784 = vunpack.c.l.b16 %v7043
      %v7785 = vunpack.c.l.b16 %v7044
      %v7786 = vunpack.c.l.b16 %v7045
      %v7787 = vunpack.c.l.b16 %v7046
      %v7788 = vunpack.c.l.b16 %v7047
      %v7789 = vunpack.c.l.b16 %v7048
      %v7790 = vunpack.c.l.b16 %v7049
      %v7791 = vunpack.c.l.b16 %v7050
      %v7792 = vunpack.c.l.b16 %v7051
      %v7793 = vunpack.c.l.b16 %v7052
      %v7794 = vunpack.c.l.b16 %v7053
      %v7795 = vunpack.c.l.b16 %v7054
      %v7796 = vunpack.c.l.b16 %v7055
      %v7797 = vpack.c.b16 %v7766, %v7765
      %v7798 = vpack.c.b16 %v7768, %v7767
      %v7799 = vpack.c.b16 %v7770, %v7769
      %v7800 = vpack.c.b16 %v7772, %v7771
      %v7801 = vpack.c.b16 %v7774, %v7773
      %v7802 = vpack.c.b16 %v7776, %v7775
      %v7803 = vpack.c.b16 %v7778, %v7777
      %v7804 = vpack.c.b16 %v7780, %v7779
      %v7805 = vpack.c.b16 %v7782, %v7781
      %v7806 = vpack.c.b16 %v7784, %v7783
      %v7807 = vpack.c.b16 %v7786, %v7785
      %v7808 = vpack.c.b16 %v7788, %v7787
      %v7809 = vpack.c.b16 %v7790, %v7789
      %v7810 = vpack.c.b16 %v7792, %v7791
      %v7811 = vpack.c.b16 %v7794, %v7793
      %v7812 = vpack.c.b16 %v7796, %v7795
      %v7817 = vunpack.c.l.b16 %v7056
      %v7818 = vunpack.c.l.b16 %v7057
      %v7819 = vunpack.c.l.b16 %v7058
      %v7820 = vunpack.c.l.b16 %v7059
      %v7821 = vpack.c.b16 %v7818, %v7817
      %v7822 = vpack.c.b16 %v7820, %v7819
      %v7826 = vsel %vm6781, %v7797, 0
      %v7829 = vsel %vm6781, %v7798, 0
      %v7832 = vsel %vm6781, %v7799, 0
      %v7835 = vsel %vm6781, %v7800, 0
      %v7838 = vsel %vm6781, %v7801, 0
      %v7841 = vsel %vm6781, %v7802, 0
      %v7844 = vsel %vm6781, %v7803, 0
      %v7847 = vsel %vm6781, %v7804, 0
      %v7850 = vsel %vm6781, %v7805, 0
      %v7853 = vsel %vm6781, %v7806, 0
      %v7856 = vsel %vm6781, %v7807, 0
      %v7859 = vsel %vm6781, %v7808, 0
      %v7862 = vsel %vm6781, %v7809, 0
      %v7865 = vsel %vm6781, %v7810, 0
      %v7868 = vsel %vm6781, %v7811, 0
      %v7871 = vsel %vm6781, %v7812, 0
      %7873 = vmatprep.subr.bf16.mxu0 0
      %7874 = vmatpush1.bf16.msra.mxu0 %v7821
      %7875 = vmatprep.subr.bf16.mxu0 0
      %7876 = vmatpush1.bf16.msra.mxu0 %v7822
      %7877 = vmatprep.subr.bf16.mxu0 0
      %7878 = vmatpush1.bf16.msra.mxu0 0
      %7879 = vmatprep.subr.bf16.mxu0 0
      %7880 = vmatpush1.bf16.msra.mxu0 0
      %7881 = vmatprep.subr.bf16.mxu0 0
      %7882 = vmatpush1.bf16.msra.mxu0 0
      %7883 = vmatprep.subr.bf16.mxu0 0
      %7884 = vmatpush1.bf16.msra.mxu0 0
      %7885 = vmatprep.subr.bf16.mxu0 0
      %7886 = vmatpush1.bf16.msra.mxu0 0
      %7887 = vmatprep.subr.bf16.mxu0 0
      %7888 = vmatpush1.bf16.msra.mxu0 0
      %7889 = vmatprep.subr.bf16.mxu0 0
      %7890 = vmatpush1.bf16.msra.mxu0 0
      %7891 = vmatprep.subr.bf16.mxu0 0
      %7892 = vmatpush1.bf16.msra.mxu0 0
      %7893 = vmatprep.subr.bf16.mxu0 0
      %7894 = vmatpush1.bf16.msra.mxu0 0
      %7895 = vmatprep.subr.bf16.mxu0 0
      %7896 = vmatpush1.bf16.msra.mxu0 0
      %7897 = vmatprep.subr.bf16.mxu0 0
      %7898 = vmatpush1.bf16.msra.mxu0 0
      %7899 = vmatprep.subr.bf16.mxu0 0
      %7900 = vmatpush1.bf16.msra.mxu0 0
      %7901 = vmatprep.subr.bf16.mxu0 0
      %7902 = vmatpush1.bf16.msra.mxu0 0
      %7903 = vmatprep.subr.bf16.mxu0 0
      %7904 = vmatpush1.bf16.msra.mxu0 0
      %7905 = vmatprep.mubr.bf16.mxu0 0
      %7906 = vmatmul.mubr.bf16.gmra.mrb[0].mxu0 %v7826
      %v7907 = vpop.f32.mrb[0].mxu0
      %v7908 = vadd.f32 %v7607, %v7907
      %v7909 = vpop.f32.mrb[0].mxu0
      %v7910 = vpop.f32.mrb[0].mxu0
      %v7911 = vadd.f32 %v7610, %v7910
      %v7912 = vpop.f32.mrb[0].mxu0
      %7913 = vmatprep.mubr.bf16.mxu0 0
      %7914 = vmatmul.mubr.bf16.gmra.mrb[0].mxu0 %v7829
      %v7915 = vpop.f32.mrb[0].mxu0
      %v7916 = vadd.f32 %v7615, %v7915
      %v7917 = vpop.f32.mrb[0].mxu0
      %v7918 = vpop.f32.mrb[0].mxu0
      %v7919 = vadd.f32 %v7618, %v7918
      %v7920 = vpop.f32.mrb[0].mxu0
      %7921 = vmatprep.mubr.bf16.mxu0 0
      %7922 = vmatmul.mubr.bf16.gmra.mrb[0].mxu0 %v7832
      %v7923 = vpop.f32.mrb[0].mxu0
      %v7924 = vadd.f32 %v7623, %v7923
      %v7925 = vpop.f32.mrb[0].mxu0
      %v7926 = vpop.f32.mrb[0].mxu0
      %v7927 = vadd.f32 %v7626, %v7926
      %v7928 = vpop.f32.mrb[0].mxu0
      %7929 = vmatprep.mubr.bf16.mxu0 0
      %7930 = vmatmul.mubr.bf16.gmra.mrb[0].mxu0 %v7835
      %v7931 = vpop.f32.mrb[0].mxu0
      %v7932 = vadd.f32 %v7631, %v7931
      %v7933 = vpop.f32.mrb[0].mxu0
      %v7934 = vpop.f32.mrb[0].mxu0
      %v7935 = vadd.f32 %v7634, %v7934
      %v7936 = vpop.f32.mrb[0].mxu0
      %7937 = vmatprep.mubr.bf16.mxu0 0
      %7938 = vmatmul.mubr.bf16.gmra.mrb[0].mxu0 %v7838
      %v7939 = vpop.f32.mrb[0].mxu0
      %v7940 = vadd.f32 %v7639, %v7939
      %v7941 = vpop.f32.mrb[0].mxu0
      %v7942 = vpop.f32.mrb[0].mxu0
      %v7943 = vadd.f32 %v7642, %v7942
      %v7944 = vpop.f32.mrb[0].mxu0
      %7945 = vmatprep.mubr.bf16.mxu0 0
      %7946 = vmatmul.mubr.bf16.gmra.mrb[0].mxu0 %v7841
      %v7947 = vpop.f32.mrb[0].mxu0
      %v7948 = vadd.f32 %v7647, %v7947
      %v7949 = vpop.f32.mrb[0].mxu0
      %v7950 = vpop.f32.mrb[0].mxu0
      %v7951 = vadd.f32 %v7650, %v7950
      %v7952 = vpop.f32.mrb[0].mxu0
      %7953 = vmatprep.mubr.bf16.mxu0 0
      %7954 = vmatmul.mubr.bf16.gmra.mrb[0].mxu0 %v7844
      %v7955 = vpop.f32.mrb[0].mxu0
      %v7956 = vadd.f32 %v7655, %v7955
      %v7957 = vpop.f32.mrb[0].mxu0
      %v7958 = vpop.f32.mrb[0].mxu0
      %v7959 = vadd.f32 %v7658, %v7958
      %v7960 = vpop.f32.mrb[0].mxu0
      %7961 = vmatprep.mubr.bf16.mxu0 0
      %7962 = vmatmul.mubr.bf16.gmra.mrb[0].mxu0 %v7847
      %v7963 = vpop.f32.mrb[0].mxu0
      %v7964 = vadd.f32 %v7663, %v7963
      %v7965 = vpop.f32.mrb[0].mxu0
      %v7966 = vpop.f32.mrb[0].mxu0
      %v7967 = vadd.f32 %v7666, %v7966
      %v7968 = vpop.f32.mrb[0].mxu0
      %7969 = vmatprep.mubr.bf16.mxu0 0
      %7970 = vmatmul.mubr.bf16.gmra.mrb[0].mxu0 %v7850
      %v7971 = vpop.f32.mrb[0].mxu0
      %v7972 = vadd.f32 %v7671, %v7971
      %v7973 = vpop.f32.mrb[0].mxu0
      %v7974 = vpop.f32.mrb[0].mxu0
      %v7975 = vadd.f32 %v7674, %v7974
      %v7976 = vpop.f32.mrb[0].mxu0
      %7977 = vmatprep.mubr.bf16.mxu0 0
      %7978 = vmatmul.mubr.bf16.gmra.mrb[0].mxu0 %v7853
      %v7979 = vpop.f32.mrb[0].mxu0
      %v7980 = vadd.f32 %v7679, %v7979
      %v7981 = vpop.f32.mrb[0].mxu0
      %v7982 = vpop.f32.mrb[0].mxu0
      %v7983 = vadd.f32 %v7682, %v7982
      %v7984 = vpop.f32.mrb[0].mxu0
      %7985 = vmatprep.mubr.bf16.mxu0 0
      %7986 = vmatmul.mubr.bf16.gmra.mrb[0].mxu0 %v7856
      %v7987 = vpop.f32.mrb[0].mxu0
      %v7988 = vadd.f32 %v7687, %v7987
      %v7989 = vpop.f32.mrb[0].mxu0
      %v7990 = vpop.f32.mrb[0].mxu0
      %v7991 = vadd.f32 %v7690, %v7990
      %v7992 = vpop.f32.mrb[0].mxu0
      %7993 = vmatprep.mubr.bf16.mxu0 0
      %7994 = vmatmul.mubr.bf16.gmra.mrb[0].mxu0 %v7859
      %v7995 = vpop.f32.mrb[0].mxu0
      %v7996 = vadd.f32 %v7695, %v7995
      %v7997 = vpop.f32.mrb[0].mxu0
      %v7998 = vpop.f32.mrb[0].mxu0
      %v7999 = vadd.f32 %v7698, %v7998
      %v8000 = vpop.f32.mrb[0].mxu0
      %8001 = vmatprep.mubr.bf16.mxu0 0
      %8002 = vmatmul.mubr.bf16.gmra.mrb[0].mxu0 %v7862
      %v8003 = vpop.f32.mrb[0].mxu0
      %v8004 = vadd.f32 %v7703, %v8003
      %v8005 = vpop.f32.mrb[0].mxu0
      %v8006 = vpop.f32.mrb[0].mxu0
      %v8007 = vadd.f32 %v7706, %v8006
      %v8008 = vpop.f32.mrb[0].mxu0
      %8009 = vmatprep.mubr.bf16.mxu0 0
      %8010 = vmatmul.mubr.bf16.gmra.mrb[0].mxu0 %v7865
      %v8011 = vpop.f32.mrb[0].mxu0
      %v8012 = vadd.f32 %v7711, %v8011
      %v8013 = vpop.f32.mrb[0].mxu0
      %v8014 = vpop.f32.mrb[0].mxu0
      %v8015 = vadd.f32 %v7714, %v8014
      %v8016 = vpop.f32.mrb[0].mxu0
      %8017 = vmatprep.mubr.bf16.mxu0 0
      %8018 = vmatmul.mubr.bf16.gmra.mrb[0].mxu0 %v7868
      %v8019 = vpop.f32.mrb[0].mxu0
      %v8020 = vadd.f32 %v7719, %v8019
      %v8021 = vpop.f32.mrb[0].mxu0
      %v8022 = vpop.f32.mrb[0].mxu0
      %v8023 = vadd.f32 %v7722, %v8022
      %v8024 = vpop.f32.mrb[0].mxu0
      %8025 = vmatprep.mubr.bf16.mxu0 0
      %8026 = vmatmul.mubr.bf16.gmra.mrb[0].mxu0 %v7871
      %v8027 = vpop.f32.mrb[0].mxu0
      %v8028 = vadd.f32 %v7727, %v8027
      %v8029 = vpop.f32.mrb[0].mxu0
      %v8030 = vpop.f32.mrb[0].mxu0
      %v8031 = vadd.f32 %v7730, %v8030
      %v8032 = vpop.f32.mrb[0].mxu0
      %8033 = vdwg.mxu0
      %v8034 = vld [vmem:[#allocation3] sm:$0xe]
      %v8035 = vld [vmem:[#allocation3 + $0xc] sm:$0xe]
      %v8036 = vld [vmem:[#allocation3 + $0x18] sm:$0xe]
      %v8037 = vld [vmem:[#allocation3 + $0x24] sm:$0xe]
      %v8038 = vld [vmem:[#allocation3 + $0x30] sm:$0xe]
      %v8039 = vld [vmem:[#allocation3 + $0x3c] sm:$0xe]
      %v8040 = vld [vmem:[#allocation3 + $0x48] sm:$0xe]
      %v8041 = vld [vmem:[#allocation3 + $0x54] sm:$0xe]
      %v8042 = vld [vmem:[#allocation3 + $0x60] sm:$0xe]
      %v8043 = vld [vmem:[#allocation3 + $0x6c] sm:$0xe]
      %v8044 = vld [vmem:[#allocation3 + $0x78] sm:$0xe]
      %v8045 = vld [vmem:[#allocation3 + $0x84] sm:$0xe]
      %v8046 = vld [vmem:[#allocation3 + $0x90] sm:$0xe]
      %v8047 = vld [vmem:[#allocation3 + $0x9c] sm:$0xe]
      %v8048 = vld [vmem:[#allocation3 + $0xa8] sm:$0xe]
      %v8049 = vld [vmem:[#allocation3 + $0xb4] sm:$0xe]
      %v8082 = vrot.slane %v8034, 5
      %v8083 = vrot.slane %v8082, 4
      %v8084 = vrot.slane %v7025, 5
      %v8085 = vsel %vm2037, %v8083, %v8084
      %v8086 = vrot.slane %v8084, 4
      %v8087 = vrot.slane %v7060, 5
      %v8088 = vsel %vm2037, %v8086, %v8087
      %v8089 = vrot.slane %v8035, 5
      %v8090 = vrot.slane %v8089, 4
      %v8091 = vrot.slane %v7027, 5
      %v8092 = vsel %vm2037, %v8090, %v8091
      %v8093 = vrot.slane %v8091, 4
      %v8094 = vrot.slane %v7061, 5
      %v8095 = vsel %vm2037, %v8093, %v8094
      %v8096 = vrot.slane %v8036, 5
      %v8097 = vrot.slane %v8096, 4
      %v8098 = vrot.slane %v7029, 5
      %v8099 = vsel %vm2037, %v8097, %v8098
      %v8100 = vrot.slane %v8098, 4
      %v8101 = vrot.slane %v7062, 5
      %v8102 = vsel %vm2037, %v8100, %v8101
      %v8103 = vrot.slane %v8037, 5
      %v8104 = vrot.slane %v8103, 4
      %v8105 = vrot.slane %v7031, 5
      %v8106 = vsel %vm2037, %v8104, %v8105
      %v8107 = vrot.slane %v8105, 4
      %v8108 = vrot.slane %v7063, 5
      %v8109 = vsel %vm2037, %v8107, %v8108
      %v8110 = vrot.slane %v8038, 5
      %v8111 = vrot.slane %v8110, 4
      %v8112 = vrot.slane %v7033, 5
      %v8113 = vsel %vm2037, %v8111, %v8112
      %v8114 = vrot.slane %v8112, 4
      %v8115 = vrot.slane %v7064, 5
      %v8116 = vsel %vm2037, %v8114, %v8115
      %v8117 = vrot.slane %v8039, 5
      %v8118 = vrot.slane %v8117, 4
      %v8119 = vrot.slane %v7035, 5
      %v8120 = vsel %vm2037, %v8118, %v8119
      %v8121 = vrot.slane %v8119, 4
      %v8122 = vrot.slane %v7065, 5
      %v8123 = vsel %vm2037, %v8121, %v8122
      %v8124 = vrot.slane %v8040, 5
      %v8125 = vrot.slane %v8124, 4
      %v8126 = vrot.slane %v7037, 5
      %v8127 = vsel %vm2037, %v8125, %v8126
      %v8128 = vrot.slane %v8126, 4
      %v8129 = vrot.slane %v7066, 5
      %v8130 = vsel %vm2037, %v8128, %v8129
      %v8131 = vrot.slane %v8041, 5
      %v8132 = vrot.slane %v8131, 4
      %v8133 = vrot.slane %v7039, 5
      %v8134 = vsel %vm2037, %v8132, %v8133
      %v8135 = vrot.slane %v8133, 4
      %v8136 = vrot.slane %v7067, 5
      %v8137 = vsel %vm2037, %v8135, %v8136
      %v8138 = vrot.slane %v8042, 5
      %v8139 = vrot.slane %v8138, 4
      %v8140 = vrot.slane %v7041, 5
      %v8141 = vsel %vm2037, %v8139, %v8140
      %v8142 = vrot.slane %v8140, 4
      %v8143 = vrot.slane %v7068, 5
      %v8144 = vsel %vm2037, %v8142, %v8143
      %v8145 = vrot.slane %v8043, 5
      %v8146 = vrot.slane %v8145, 4
      %v8147 = vrot.slane %v7043, 5
      %v8148 = vsel %vm2037, %v8146, %v8147
      %v8149 = vrot.slane %v8147, 4
      %v8150 = vrot.slane %v7069, 5
      %v8151 = vsel %vm2037, %v8149, %v8150
      %v8152 = vrot.slane %v8044, 5
      %v8153 = vrot.slane %v8152, 4
      %v8154 = vrot.slane %v7045, 5
      %v8155 = vsel %vm2037, %v8153, %v8154
      %v8156 = vrot.slane %v8154, 4
      %v8157 = vrot.slane %v7070, 5
      %v8158 = vsel %vm2037, %v8156, %v8157
      %v8159 = vrot.slane %v8045, 5
      %v8160 = vrot.slane %v8159, 4
      %v8161 = vrot.slane %v7047, 5
      %v8162 = vsel %vm2037, %v8160, %v8161
      %v8163 = vrot.slane %v8161, 4
      %v8164 = vrot.slane %v7071, 5
      %v8165 = vsel %vm2037, %v8163, %v8164
      %v8166 = vrot.slane %v8046, 5
      %v8167 = vrot.slane %v8166, 4
      %v8168 = vrot.slane %v7049, 5
      %v8169 = vsel %vm2037, %v8167, %v8168
      %v8170 = vrot.slane %v8168, 4
      %v8171 = vrot.slane %v7072, 5
      %v8172 = vsel %vm2037, %v8170, %v8171
      %v8173 = vrot.slane %v8047, 5
      %v8174 = vrot.slane %v8173, 4
      %v8175 = vrot.slane %v7051, 5
      %v8176 = vsel %vm2037, %v8174, %v8175
      %v8177 = vrot.slane %v8175, 4
      %v8178 = vrot.slane %v7073, 5
      %v8179 = vsel %vm2037, %v8177, %v8178
      %v8180 = vrot.slane %v8048, 5
      %v8181 = vrot.slane %v8180, 4
      %v8182 = vrot.slane %v7053, 5
      %v8183 = vsel %vm2037, %v8181, %v8182
      %v8184 = vrot.slane %v8182, 4
      %v8185 = vrot.slane %v7074, 5
      %v8186 = vsel %vm2037, %v8184, %v8185
      %v8187 = vrot.slane %v8049, 5
      %v8188 = vrot.slane %v8187, 4
      %v8189 = vrot.slane %v7055, 5
      %v8190 = vsel %vm2037, %v8188, %v8189
      %v8191 = vrot.slane %v8189, 4
      %v8192 = vrot.slane %v7075, 5
      %v8193 = vsel %vm2037, %v8191, %v8192
      %v8194 = vld [vmem:[%s6 + $0x20] sm:$0xf]
      %v8195 = vld [vmem:[%s6 + $0x24] sm:$0xf]
      %v8196 = vld [vmem:[%s6 + $0x28] sm:$0xf]
      %v8197 = vld [vmem:[%s6 + $0x2c] sm:$0xf]
      %v8198 = vunpack.c.l.b16 %v8085
      %v8199 = vunpack.c.l.b16 %v8088
      %v8200 = vunpack.c.l.b16 %v8092
      %v8201 = vunpack.c.l.b16 %v8095
      %v8202 = vunpack.c.l.b16 %v8099
      %v8203 = vunpack.c.l.b16 %v8102
      %v8204 = vunpack.c.l.b16 %v8106
      %v8205 = vunpack.c.l.b16 %v8109
      %v8206 = vunpack.c.l.b16 %v8113
      %v8207 = vunpack.c.l.b16 %v8116
      %v8208 = vunpack.c.l.b16 %v8120
      %v8209 = vunpack.c.l.b16 %v8123
      %v8210 = vunpack.c.l.b16 %v8127
      %v8211 = vunpack.c.l.b16 %v8130
      %v8212 = vunpack.c.l.b16 %v8134
      %v8213 = vunpack.c.l.b16 %v8137
      %v8214 = vunpack.c.l.b16 %v8141
      %v8215 = vunpack.c.l.b16 %v8144
      %v8216 = vunpack.c.l.b16 %v8148
      %v8217 = vunpack.c.l.b16 %v8151
      %v8218 = vunpack.c.l.b16 %v8155
      %v8219 = vunpack.c.l.b16 %v8158
      %v8220 = vunpack.c.l.b16 %v8162
      %v8221 = vunpack.c.l.b16 %v8165
      %v8222 = vunpack.c.l.b16 %v8169
      %v8223 = vunpack.c.l.b16 %v8172
      %v8224 = vunpack.c.l.b16 %v8176
      %v8225 = vunpack.c.l.b16 %v8179
      %v8226 = vunpack.c.l.b16 %v8183
      %v8227 = vunpack.c.l.b16 %v8186
      %v8228 = vunpack.c.l.b16 %v8190
      %v8229 = vunpack.c.l.b16 %v8193
      %v8230 = vpack.c.b16 %v8199, %v8198
      %v8231 = vpack.c.b16 %v8201, %v8200
      %v8232 = vpack.c.b16 %v8203, %v8202
      %v8233 = vpack.c.b16 %v8205, %v8204
      %v8234 = vpack.c.b16 %v8207, %v8206
      %v8235 = vpack.c.b16 %v8209, %v8208
      %v8236 = vpack.c.b16 %v8211, %v8210
      %v8237 = vpack.c.b16 %v8213, %v8212
      %v8238 = vpack.c.b16 %v8215, %v8214
      %v8239 = vpack.c.b16 %v8217, %v8216
      %v8240 = vpack.c.b16 %v8219, %v8218
      %v8241 = vpack.c.b16 %v8221, %v8220
      %v8242 = vpack.c.b16 %v8223, %v8222
      %v8243 = vpack.c.b16 %v8225, %v8224
      %v8244 = vpack.c.b16 %v8227, %v8226
      %v8245 = vpack.c.b16 %v8229, %v8228
      %v8250 = vunpack.c.l.b16 %v8194
      %v8251 = vunpack.c.l.b16 %v8195
      %v8252 = vunpack.c.l.b16 %v8196
      %v8253 = vunpack.c.l.b16 %v8197
      %v8254 = vpack.c.b16 %v8251, %v8250
      %v8255 = vpack.c.b16 %v8253, %v8252
      %v8259 = vsel %vm6781, %v8230, 0
      %v8262 = vsel %vm6781, %v8231, 0
      %v8265 = vsel %vm6781, %v8232, 0
      %v8268 = vsel %vm6781, %v8233, 0
      %v8271 = vsel %vm6781, %v8234, 0
      %v8274 = vsel %vm6781, %v8235, 0
      %v8277 = vsel %vm6781, %v8236, 0
      %v8280 = vsel %vm6781, %v8237, 0
      %v8283 = vsel %vm6781, %v8238, 0
      %v8286 = vsel %vm6781, %v8239, 0
      %v8289 = vsel %vm6781, %v8240, 0
      %v8292 = vsel %vm6781, %v8241, 0
      %v8295 = vsel %vm6781, %v8242, 0
      %v8298 = vsel %vm6781, %v8243, 0
      %v8301 = vsel %vm6781, %v8244, 0
      %v8304 = vsel %vm6781, %v8245, 0
      %8306 = vmatprep.subr.bf16.mxu0 0
      %8307 = vmatpush1.bf16.msra.mxu0 %v8254
      %8308 = vmatprep.subr.bf16.mxu0 0
      %8309 = vmatpush1.bf16.msra.mxu0 %v8255
      %8310 = vmatprep.subr.bf16.mxu0 0
      %8311 = vmatpush1.bf16.msra.mxu0 0
      %8312 = vmatprep.subr.bf16.mxu0 0
      %8313 = vmatpush1.bf16.msra.mxu0 0
      %8314 = vmatprep.subr.bf16.mxu0 0
      %8315 = vmatpush1.bf16.msra.mxu0 0
      %8316 = vmatprep.subr.bf16.mxu0 0
      %8317 = vmatpush1.bf16.msra.mxu0 0
      %8318 = vmatprep.subr.bf16.mxu0 0
      %8319 = vmatpush1.bf16.msra.mxu0 0
      %8320 = vmatprep.subr.bf16.mxu0 0
      %8321 = vmatpush1.bf16.msra.mxu0 0
      %8322 = vmatprep.subr.bf16.mxu0 0
      %8323 = vmatpush1.bf16.msra.mxu0 0
      %8324 = vmatprep.subr.bf16.mxu0 0
      %8325 = vmatpush1.bf16.msra.mxu0 0
      %8326 = vmatprep.subr.bf16.mxu0 0
      %8327 = vmatpush1.bf16.msra.mxu0 0
      %8328 = vmatprep.subr.bf16.mxu0 0
      %8329 = vmatpush1.bf16.msra.mxu0 0
      %8330 = vmatprep.subr.bf16.mxu0 0
      %8331 = vmatpush1.bf16.msra.mxu0 0
      %8332 = vmatprep.subr.bf16.mxu0 0
      %8333 = vmatpush1.bf16.msra.mxu0 0
      %8334 = vmatprep.subr.bf16.mxu0 0
      %8335 = vmatpush1.bf16.msra.mxu0 0
      %8336 = vmatprep.subr.bf16.mxu0 0
      %8337 = vmatpush1.bf16.msra.mxu0 0
      %8338 = vmatprep.mubr.bf16.mxu0 0
      %8339 = vmatmul.mubr.bf16.gmra.mrb[0].mxu0 %v8259
      %v8340 = vpop.f32.mrb[0].mxu0
      %v8341 = vadd.f32 0.0, %v8340
      %v8342 = vpop.f32.mrb[0].mxu0
      %v8343 = vpop.f32.mrb[0].mxu0
      %v8344 = vadd.f32 0.0, %v8343
      %v8345 = vpop.f32.mrb[0].mxu0
      %8346 = vmatprep.mubr.bf16.mxu0 0
      %8347 = vmatmul.mubr.bf16.gmra.mrb[0].mxu0 %v8262
      %v8348 = vpop.f32.mrb[0].mxu0
      %v8349 = vadd.f32 0.0, %v8348
      %v8350 = vpop.f32.mrb[0].mxu0
      %v8351 = vpop.f32.mrb[0].mxu0
      %v8352 = vadd.f32 0.0, %v8351
      %v8353 = vpop.f32.mrb[0].mxu0
      %8354 = vmatprep.mubr.bf16.mxu0 0
      %8355 = vmatmul.mubr.bf16.gmra.mrb[0].mxu0 %v8265
      %v8356 = vpop.f32.mrb[0].mxu0
      %v8357 = vadd.f32 0.0, %v8356
      %v8358 = vpop.f32.mrb[0].mxu0
      %v8359 = vpop.f32.mrb[0].mxu0
      %v8360 = vadd.f32 0.0, %v8359
      %v8361 = vpop.f32.mrb[0].mxu0
      %8362 = vmatprep.mubr.bf16.mxu0 0
      %8363 = vmatmul.mubr.bf16.gmra.mrb[0].mxu0 %v8268
      %v8364 = vpop.f32.mrb[0].mxu0
      %v8365 = vadd.f32 0.0, %v8364
      %v8366 = vpop.f32.mrb[0].mxu0
      %v8367 = vpop.f32.mrb[0].mxu0
      %v8368 = vadd.f32 0.0, %v8367
      %v8369 = vpop.f32.mrb[0].mxu0
      %8370 = vmatprep.mubr.bf16.mxu0 0
      %8371 = vmatmul.mubr.bf16.gmra.mrb[0].mxu0 %v8271
      %v8372 = vpop.f32.mrb[0].mxu0
      %v8373 = vadd.f32 0.0, %v8372
      %v8374 = vpop.f32.mrb[0].mxu0
      %v8375 = vpop.f32.mrb[0].mxu0
      %v8376 = vadd.f32 0.0, %v8375
      %v8377 = vpop.f32.mrb[0].mxu0
      %8378 = vmatprep.mubr.bf16.mxu0 0
      %8379 = vmatmul.mubr.bf16.gmra.mrb[0].mxu0 %v8274
      %v8380 = vpop.f32.mrb[0].mxu0
      %v8381 = vadd.f32 0.0, %v8380
      %v8382 = vpop.f32.mrb[0].mxu0
      %v8383 = vpop.f32.mrb[0].mxu0
      %v8384 = vadd.f32 0.0, %v8383
      %v8385 = vpop.f32.mrb[0].mxu0
      %8386 = vmatprep.mubr.bf16.mxu0 0
      %8387 = vmatmul.mubr.bf16.gmra.mrb[0].mxu0 %v8277
      %v8388 = vpop.f32.mrb[0].mxu0
      %v8389 = vadd.f32 0.0, %v8388
      %v8390 = vpop.f32.mrb[0].mxu0
      %v8391 = vpop.f32.mrb[0].mxu0
      %v8392 = vadd.f32 0.0, %v8391
      %v8393 = vpop.f32.mrb[0].mxu0
      %8394 = vmatprep.mubr.bf16.mxu0 0
      %8395 = vmatmul.mubr.bf16.gmra.mrb[0].mxu0 %v8280
      %v8396 = vpop.f32.mrb[0].mxu0
      %v8397 = vadd.f32 0.0, %v8396
      %v8398 = vpop.f32.mrb[0].mxu0
      %v8399 = vpop.f32.mrb[0].mxu0
      %v8400 = vadd.f32 0.0, %v8399
      %v8401 = vpop.f32.mrb[0].mxu0
      %8402 = vmatprep.mubr.bf16.mxu0 0
      %8403 = vmatmul.mubr.bf16.gmra.mrb[0].mxu0 %v8283
      %v8404 = vpop.f32.mrb[0].mxu0
      %v8405 = vadd.f32 0.0, %v8404
      %v8406 = vpop.f32.mrb[0].mxu0
      %v8407 = vpop.f32.mrb[0].mxu0
      %v8408 = vadd.f32 0.0, %v8407
      %v8409 = vpop.f32.mrb[0].mxu0
      %8410 = vmatprep.mubr.bf16.mxu0 0
      %8411 = vmatmul.mubr.bf16.gmra.mrb[0].mxu0 %v8286
      %v8412 = vpop.f32.mrb[0].mxu0
      %v8413 = vadd.f32 0.0, %v8412
      %v8414 = vpop.f32.mrb[0].mxu0
      %v8415 = vpop.f32.mrb[0].mxu0
      %v8416 = vadd.f32 0.0, %v8415
      %v8417 = vpop.f32.mrb[0].mxu0
      %8418 = vmatprep.mubr.bf16.mxu0 0
      %8419 = vmatmul.mubr.bf16.gmra.mrb[0].mxu0 %v8289
      %v8420 = vpop.f32.mrb[0].mxu0
      %v8421 = vadd.f32 0.0, %v8420
      %v8422 = vpop.f32.mrb[0].mxu0
      %v8423 = vpop.f32.mrb[0].mxu0
      %v8424 = vadd.f32 0.0, %v8423
      %v8425 = vpop.f32.mrb[0].mxu0
      %8426 = vmatprep.mubr.bf16.mxu0 0
      %8427 = vmatmul.mubr.bf16.gmra.mrb[0].mxu0 %v8292
      %v8428 = vpop.f32.mrb[0].mxu0
      %v8429 = vadd.f32 0.0, %v8428
      %v8430 = vpop.f32.mrb[0].mxu0
      %v8431 = vpop.f32.mrb[0].mxu0
      %v8432 = vadd.f32 0.0, %v8431
      %v8433 = vpop.f32.mrb[0].mxu0
      %8434 = vmatprep.mubr.bf16.mxu0 0
      %8435 = vmatmul.mubr.bf16.gmra.mrb[0].mxu0 %v8295
      %v8436 = vpop.f32.mrb[0].mxu0
      %v8437 = vadd.f32 0.0, %v8436
      %v8438 = vpop.f32.mrb[0].mxu0
      %v8439 = vpop.f32.mrb[0].mxu0
      %v8440 = vadd.f32 0.0, %v8439
      %v8441 = vpop.f32.mrb[0].mxu0
      %8442 = vmatprep.mubr.bf16.mxu0 0
      %8443 = vmatmul.mubr.bf16.gmra.mrb[0].mxu0 %v8298
      %v8444 = vpop.f32.mrb[0].mxu0
      %v8445 = vadd.f32 0.0, %v8444
      %v8446 = vpop.f32.mrb[0].mxu0
      %v8447 = vpop.f32.mrb[0].mxu0
      %v8448 = vadd.f32 0.0, %v8447
      %v8449 = vpop.f32.mrb[0].mxu0
      %8450 = vmatprep.mubr.bf16.mxu0 0
      %8451 = vmatmul.mubr.bf16.gmra.mrb[0].mxu0 %v8301
      %v8452 = vpop.f32.mrb[0].mxu0
      %v8453 = vadd.f32 0.0, %v8452
      %v8454 = vpop.f32.mrb[0].mxu0
      %v8455 = vpop.f32.mrb[0].mxu0
      %v8456 = vadd.f32 0.0, %v8455
      %v8457 = vpop.f32.mrb[0].mxu0
      %8458 = vmatprep.mubr.bf16.mxu0 0
      %8459 = vmatmul.mubr.bf16.gmra.mrb[0].mxu0 %v8304
      %v8460 = vpop.f32.mrb[0].mxu0
      %v8461 = vadd.f32 0.0, %v8460
      %v8462 = vpop.f32.mrb[0].mxu0
      %v8463 = vpop.f32.mrb[0].mxu0
      %v8464 = vadd.f32 0.0, %v8463
      %v8465 = vpop.f32.mrb[0].mxu0
      %8466 = vdwg.mxu0
      %v8467 = vadd.f32 %v7908, %v8341
      %v8468 = vadd.f32 %v7911, %v8344
      %v8469 = vadd.f32 %v7916, %v8349
      %v8470 = vadd.f32 %v7919, %v8352
      %v8471 = vadd.f32 %v7924, %v8357
      %v8472 = vadd.f32 %v7927, %v8360
      %v8473 = vadd.f32 %v7932, %v8365
      %v8474 = vadd.f32 %v7935, %v8368
      %v8475 = vadd.f32 %v7940, %v8373
      %v8476 = vadd.f32 %v7943, %v8376
      %v8477 = vadd.f32 %v7948, %v8381
      %v8478 = vadd.f32 %v7951, %v8384
      %v8479 = vadd.f32 %v7956, %v8389
      %v8480 = vadd.f32 %v7959, %v8392
      %v8481 = vadd.f32 %v7964, %v8397
      %v8482 = vadd.f32 %v7967, %v8400
      %v8483 = vadd.f32 %v7972, %v8405
      %v8484 = vadd.f32 %v7975, %v8408
      %v8485 = vadd.f32 %v7980, %v8413
      %v8486 = vadd.f32 %v7983, %v8416
      %v8487 = vadd.f32 %v7988, %v8421
      %v8488 = vadd.f32 %v7991, %v8424
      %v8489 = vadd.f32 %v7996, %v8429
      %v8490 = vadd.f32 %v7999, %v8432
      %v8491 = vadd.f32 %v8004, %v8437
      %v8492 = vadd.f32 %v8007, %v8440
      %v8493 = vadd.f32 %v8012, %v8445
      %v8494 = vadd.f32 %v8015, %v8448
      %v8495 = vadd.f32 %v8020, %v8453
      %v8496 = vadd.f32 %v8023, %v8456
      %v8497 = vadd.f32 %v8028, %v8461
      %v8498 = vadd.f32 %v8031, %v8464
      %v8499 = vld [vmem:[%s6220] sm:$0xf]
      %v8500 = vld [vmem:[%s6220 + $0x4] sm:$0xf]
      %v8501 = vld [vmem:[%s6220 + $0xc] sm:$0xf]
      %v8502 = vld [vmem:[%s6220 + $0x10] sm:$0xf]
      %v8503 = vld [vmem:[%s6220 + $0x18] sm:$0xf]
      %v8504 = vld [vmem:[%s6220 + $0x1c] sm:$0xf]
      %v8505 = vld [vmem:[%s6220 + $0x24] sm:$0xf]
      %v8506 = vld [vmem:[%s6220 + $0x28] sm:$0xf]
      %v8507 = vld [vmem:[%s6220 + $0x30] sm:$0xf]
      %v8508 = vld [vmem:[%s6220 + $0x34] sm:$0xf]
      %v8509 = vld [vmem:[%s6220 + $0x3c] sm:$0xf]
      %v8510 = vld [vmem:[%s6220 + $0x40] sm:$0xf]
      %v8511 = vld [vmem:[%s6220 + $0x48] sm:$0xf]
      %v8512 = vld [vmem:[%s6220 + $0x4c] sm:$0xf]
      %v8513 = vld [vmem:[%s6220 + $0x54] sm:$0xf]
      %v8514 = vld [vmem:[%s6220 + $0x58] sm:$0xf]
      %v8515 = vld [vmem:[%s6220 + $0x60] sm:$0xf]
      %v8516 = vld [vmem:[%s6220 + $0x64] sm:$0xf]
      %v8517 = vld [vmem:[%s6220 + $0x6c] sm:$0xf]
      %v8518 = vld [vmem:[%s6220 + $0x70] sm:$0xf]
      %v8519 = vld [vmem:[%s6220 + $0x78] sm:$0xf]
      %v8520 = vld [vmem:[%s6220 + $0x7c] sm:$0xf]
      %v8521 = vld [vmem:[%s6220 + $0x84] sm:$0xf]
      %v8522 = vld [vmem:[%s6220 + $0x88] sm:$0xf]
      %v8523 = vld [vmem:[%s6220 + $0x90] sm:$0xf]
      %v8524 = vld [vmem:[%s6220 + $0x94] sm:$0xf]
      %v8525 = vld [vmem:[%s6220 + $0x9c] sm:$0xf]
      %v8526 = vld [vmem:[%s6220 + $0xa0] sm:$0xf]
      %v8527 = vld [vmem:[%s6220 + $0xa8] sm:$0xf]
      %v8528 = vld [vmem:[%s6220 + $0xac] sm:$0xf]
      %v8529 = vld [vmem:[%s6220 + $0xb4] sm:$0xf]
      %v8530 = vld [vmem:[%s6220 + $0xb8] sm:$0xf]
      %v8531 = vld [vmem:[%s6 + $0x30] sm:$0xf]
      %v8532 = vld [vmem:[%s6 + $0x34] sm:$0xf]
      %v8533 = vld [vmem:[%s6 + $0x38] sm:$0xf]
      %v8534 = vld [vmem:[%s6 + $0x3c] sm:$0xf]
      %v8567 = vunpack.c.l.b16 %v8499
      %v8568 = vunpack.c.l.b16 %v8500
      %v8569 = vunpack.c.l.b16 %v8501
      %v8570 = vunpack.c.l.b16 %v8502
      %v8571 = vunpack.c.l.b16 %v8503
      %v8572 = vunpack.c.l.b16 %v8504
      %v8573 = vunpack.c.l.b16 %v8505
      %v8574 = vunpack.c.l.b16 %v8506
      %v8575 = vunpack.c.l.b16 %v8507
      %v8576 = vunpack.c.l.b16 %v8508
      %v8577 = vunpack.c.l.b16 %v8509
      %v8578 = vunpack.c.l.b16 %v8510
      %v8579 = vunpack.c.l.b16 %v8511
      %v8580 = vunpack.c.l.b16 %v8512
      %v8581 = vunpack.c.l.b16 %v8513
      %v8582 = vunpack.c.l.b16 %v8514
      %v8583 = vunpack.c.l.b16 %v8515
      %v8584 = vunpack.c.l.b16 %v8516
      %v8585 = vunpack.c.l.b16 %v8517
      %v8586 = vunpack.c.l.b16 %v8518
      %v8587 = vunpack.c.l.b16 %v8519
      %v8588 = vunpack.c.l.b16 %v8520
      %v8589 = vunpack.c.l.b16 %v8521
      %v8590 = vunpack.c.l.b16 %v8522
      %v8591 = vunpack.c.l.b16 %v8523
      %v8592 = vunpack.c.l.b16 %v8524
      %v8593 = vunpack.c.l.b16 %v8525
      %v8594 = vunpack.c.l.b16 %v8526
      %v8595 = vunpack.c.l.b16 %v8527
      %v8596 = vunpack.c.l.b16 %v8528
      %v8597 = vunpack.c.l.b16 %v8529
      %v8598 = vunpack.c.l.b16 %v8530
      %v8599 = vpack.c.b16 %v8568, %v8567
      %v8600 = vpack.c.b16 %v8570, %v8569
      %v8601 = vpack.c.b16 %v8572, %v8571
      %v8602 = vpack.c.b16 %v8574, %v8573
      %v8603 = vpack.c.b16 %v8576, %v8575
      %v8604 = vpack.c.b16 %v8578, %v8577
      %v8605 = vpack.c.b16 %v8580, %v8579
      %v8606 = vpack.c.b16 %v8582, %v8581
      %v8607 = vpack.c.b16 %v8584, %v8583
      %v8608 = vpack.c.b16 %v8586, %v8585
      %v8609 = vpack.c.b16 %v8588, %v8587
      %v8610 = vpack.c.b16 %v8590, %v8589
      %v8611 = vpack.c.b16 %v8592, %v8591
      %v8612 = vpack.c.b16 %v8594, %v8593
      %v8613 = vpack.c.b16 %v8596, %v8595
      %v8614 = vpack.c.b16 %v8598, %v8597
      %v8619 = vunpack.c.l.b16 %v8531
      %v8620 = vunpack.c.l.b16 %v8532
      %v8621 = vunpack.c.l.b16 %v8533
      %v8622 = vunpack.c.l.b16 %v8534
      %v8623 = vpack.c.b16 %v8620, %v8619
      %v8624 = vpack.c.b16 %v8622, %v8621
      %v8628 = vsel %vm6781, %v8599, 0
      %v8631 = vsel %vm6781, %v8600, 0
      %v8634 = vsel %vm6781, %v8601, 0
      %v8637 = vsel %vm6781, %v8602, 0
      %v8640 = vsel %vm6781, %v8603, 0
      %v8643 = vsel %vm6781, %v8604, 0
      %v8646 = vsel %vm6781, %v8605, 0
      %v8649 = vsel %vm6781, %v8606, 0
      %v8652 = vsel %vm6781, %v8607, 0
      %v8655 = vsel %vm6781, %v8608, 0
      %v8658 = vsel %vm6781, %v8609, 0
      %v8661 = vsel %vm6781, %v8610, 0
      %v8664 = vsel %vm6781, %v8611, 0
      %v8667 = vsel %vm6781, %v8612, 0
      %v8670 = vsel %vm6781, %v8613, 0
      %v8673 = vsel %vm6781, %v8614, 0
      %8675 = vmatprep.subr.bf16.mxu0 0
      %8676 = vmatpush1.bf16.msra.mxu0 %v8623
      %8677 = vmatprep.subr.bf16.mxu0 0
      %8678 = vmatpush1.bf16.msra.mxu0 %v8624
      %8679 = vmatprep.subr.bf16.mxu0 0
      %8680 = vmatpush1.bf16.msra.mxu0 0
      %8681 = vmatprep.subr.bf16.mxu0 0
      %8682 = vmatpush1.bf16.msra.mxu0 0
      %8683 = vmatprep.subr.bf16.mxu0 0
      %8684 = vmatpush1.bf16.msra.mxu0 0
      %8685 = vmatprep.subr.bf16.mxu0 0
      %8686 = vmatpush1.bf16.msra.mxu0 0
      %8687 = vmatprep.subr.bf16.mxu0 0
      %8688 = vmatpush1.bf16.msra.mxu0 0
      %8689 = vmatprep.subr.bf16.mxu0 0
      %8690 = vmatpush1.bf16.msra.mxu0 0
      %8691 = vmatprep.subr.bf16.mxu0 0
      %8692 = vmatpush1.bf16.msra.mxu0 0
      %8693 = vmatprep.subr.bf16.mxu0 0
      %8694 = vmatpush1.bf16.msra.mxu0 0
      %8695 = vmatprep.subr.bf16.mxu0 0
      %8696 = vmatpush1.bf16.msra.mxu0 0
      %8697 = vmatprep.subr.bf16.mxu0 0
      %8698 = vmatpush1.bf16.msra.mxu0 0
      %8699 = vmatprep.subr.bf16.mxu0 0
      %8700 = vmatpush1.bf16.msra.mxu0 0
      %8701 = vmatprep.subr.bf16.mxu0 0
      %8702 = vmatpush1.bf16.msra.mxu0 0
      %8703 = vmatprep.subr.bf16.mxu0 0
      %8704 = vmatpush1.bf16.msra.mxu0 0
      %8705 = vmatprep.subr.bf16.mxu0 0
      %8706 = vmatpush1.bf16.msra.mxu0 0
      %8707 = vmatprep.mubr.bf16.mxu0 0
      %8708 = vmatmul.mubr.bf16.gmra.mrb[0].mxu0 %v8628
      %v8709 = vpop.f32.mrb[0].mxu0
      %v8710 = vadd.f32 0.0, %v8709
      %v8711 = vpop.f32.mrb[0].mxu0
      %v8712 = vpop.f32.mrb[0].mxu0
      %v8713 = vadd.f32 0.0, %v8712
      %v8714 = vpop.f32.mrb[0].mxu0
      %8715 = vmatprep.mubr.bf16.mxu0 0
      %8716 = vmatmul.mubr.bf16.gmra.mrb[0].mxu0 %v8631
      %v8717 = vpop.f32.mrb[0].mxu0
      %v8718 = vadd.f32 0.0, %v8717
      %v8719 = vpop.f32.mrb[0].mxu0
      %v8720 = vpop.f32.mrb[0].mxu0
      %v8721 = vadd.f32 0.0, %v8720
      %v8722 = vpop.f32.mrb[0].mxu0
      %8723 = vmatprep.mubr.bf16.mxu0 0
      %8724 = vmatmul.mubr.bf16.gmra.mrb[0].mxu0 %v8634
      %v8725 = vpop.f32.mrb[0].mxu0
      %v8726 = vadd.f32 0.0, %v8725
      %v8727 = vpop.f32.mrb[0].mxu0
      %v8728 = vpop.f32.mrb[0].mxu0
      %v8729 = vadd.f32 0.0, %v8728
      %v8730 = vpop.f32.mrb[0].mxu0
      %8731 = vmatprep.mubr.bf16.mxu0 0
      %8732 = vmatmul.mubr.bf16.gmra.mrb[0].mxu0 %v8637
      %v8733 = vpop.f32.mrb[0].mxu0
      %v8734 = vadd.f32 0.0, %v8733
      %v8735 = vpop.f32.mrb[0].mxu0
      %v8736 = vpop.f32.mrb[0].mxu0
      %v8737 = vadd.f32 0.0, %v8736
      %v8738 = vpop.f32.mrb[0].mxu0
      %8739 = vmatprep.mubr.bf16.mxu0 0
      %8740 = vmatmul.mubr.bf16.gmra.mrb[0].mxu0 %v8640
      %v8741 = vpop.f32.mrb[0].mxu0
      %v8742 = vadd.f32 0.0, %v8741
      %v8743 = vpop.f32.mrb[0].mxu0
      %v8744 = vpop.f32.mrb[0].mxu0
      %v8745 = vadd.f32 0.0, %v8744
      %v8746 = vpop.f32.mrb[0].mxu0
      %8747 = vmatprep.mubr.bf16.mxu0 0
      %8748 = vmatmul.mubr.bf16.gmra.mrb[0].mxu0 %v8643
      %v8749 = vpop.f32.mrb[0].mxu0
      %v8750 = vadd.f32 0.0, %v8749
      %v8751 = vpop.f32.mrb[0].mxu0
      %v8752 = vpop.f32.mrb[0].mxu0
      %v8753 = vadd.f32 0.0, %v8752
      %v8754 = vpop.f32.mrb[0].mxu0
      %8755 = vmatprep.mubr.bf16.mxu0 0
      %8756 = vmatmul.mubr.bf16.gmra.mrb[0].mxu0 %v8646
      %v8757 = vpop.f32.mrb[0].mxu0
      %v8758 = vadd.f32 0.0, %v8757
      %v8759 = vpop.f32.mrb[0].mxu0
      %v8760 = vpop.f32.mrb[0].mxu0
      %v8761 = vadd.f32 0.0, %v8760
      %v8762 = vpop.f32.mrb[0].mxu0
      %8763 = vmatprep.mubr.bf16.mxu0 0
      %8764 = vmatmul.mubr.bf16.gmra.mrb[0].mxu0 %v8649
      %v8765 = vpop.f32.mrb[0].mxu0
      %v8766 = vadd.f32 0.0, %v8765
      %v8767 = vpop.f32.mrb[0].mxu0
      %v8768 = vpop.f32.mrb[0].mxu0
      %v8769 = vadd.f32 0.0, %v8768
      %v8770 = vpop.f32.mrb[0].mxu0
      %8771 = vmatprep.mubr.bf16.mxu0 0
      %8772 = vmatmul.mubr.bf16.gmra.mrb[0].mxu0 %v8652
      %v8773 = vpop.f32.mrb[0].mxu0
      %v8774 = vadd.f32 0.0, %v8773
      %v8775 = vpop.f32.mrb[0].mxu0
      %v8776 = vpop.f32.mrb[0].mxu0
      %v8777 = vadd.f32 0.0, %v8776
      %v8778 = vpop.f32.mrb[0].mxu0
      %8779 = vmatprep.mubr.bf16.mxu0 0
      %8780 = vmatmul.mubr.bf16.gmra.mrb[0].mxu0 %v8655
      %v8781 = vpop.f32.mrb[0].mxu0
      %v8782 = vadd.f32 0.0, %v8781
      %v8783 = vpop.f32.mrb[0].mxu0
      %v8784 = vpop.f32.mrb[0].mxu0
      %v8785 = vadd.f32 0.0, %v8784
      %v8786 = vpop.f32.mrb[0].mxu0
      %8787 = vmatprep.mubr.bf16.mxu0 0
      %8788 = vmatmul.mubr.bf16.gmra.mrb[0].mxu0 %v8658
      %v8789 = vpop.f32.mrb[0].mxu0
      %v8790 = vadd.f32 0.0, %v8789
      %v8791 = vpop.f32.mrb[0].mxu0
      %v8792 = vpop.f32.mrb[0].mxu0
      %v8793 = vadd.f32 0.0, %v8792
      %v8794 = vpop.f32.mrb[0].mxu0
      %8795 = vmatprep.mubr.bf16.mxu0 0
      %8796 = vmatmul.mubr.bf16.gmra.mrb[0].mxu0 %v8661
      %v8797 = vpop.f32.mrb[0].mxu0
      %v8798 = vadd.f32 0.0, %v8797
      %v8799 = vpop.f32.mrb[0].mxu0
      %v8800 = vpop.f32.mrb[0].mxu0
      %v8801 = vadd.f32 0.0, %v8800
      %v8802 = vpop.f32.mrb[0].mxu0
      %8803 = vmatprep.mubr.bf16.mxu0 0
      %8804 = vmatmul.mubr.bf16.gmra.mrb[0].mxu0 %v8664
      %v8805 = vpop.f32.mrb[0].mxu0
      %v8806 = vadd.f32 0.0, %v8805
      %v8807 = vpop.f32.mrb[0].mxu0
      %v8808 = vpop.f32.mrb[0].mxu0
      %v8809 = vadd.f32 0.0, %v8808
      %v8810 = vpop.f32.mrb[0].mxu0
      %8811 = vmatprep.mubr.bf16.mxu0 0
      %8812 = vmatmul.mubr.bf16.gmra.mrb[0].mxu0 %v8667
      %v8813 = vpop.f32.mrb[0].mxu0
      %v8814 = vadd.f32 0.0, %v8813
      %v8815 = vpop.f32.mrb[0].mxu0
      %v8816 = vpop.f32.mrb[0].mxu0
      %v8817 = vadd.f32 0.0, %v8816
      %v8818 = vpop.f32.mrb[0].mxu0
      %8819 = vmatprep.mubr.bf16.mxu0 0
      %8820 = vmatmul.mubr.bf16.gmra.mrb[0].mxu0 %v8670
      %v8821 = vpop.f32.mrb[0].mxu0
      %v8822 = vadd.f32 0.0, %v8821
      %v8823 = vpop.f32.mrb[0].mxu0
      %v8824 = vpop.f32.mrb[0].mxu0
      %v8825 = vadd.f32 0.0, %v8824
      %v8826 = vpop.f32.mrb[0].mxu0
      %8827 = vmatprep.mubr.bf16.mxu0 0
      %8828 = vmatmul.mubr.bf16.gmra.mrb[0].mxu0 %v8673
      %v8829 = vpop.f32.mrb[0].mxu0
      %v8830 = vadd.f32 0.0, %v8829
      %v8831 = vpop.f32.mrb[0].mxu0
      %v8832 = vpop.f32.mrb[0].mxu0
      %v8833 = vadd.f32 0.0, %v8832
      %v8834 = vpop.f32.mrb[0].mxu0
      %8835 = vdwg.mxu0
      %v8836 = vadd.f32 %v8467, %v8710
      %v8837 = vadd.f32 %v8468, %v8713
      %v8838 = vadd.f32 %v8469, %v8718
      %v8839 = vadd.f32 %v8470, %v8721
      %v8840 = vadd.f32 %v8471, %v8726
      %v8841 = vadd.f32 %v8472, %v8729
      %v8842 = vadd.f32 %v8473, %v8734
      %v8843 = vadd.f32 %v8474, %v8737
      %v8844 = vadd.f32 %v8475, %v8742
      %v8845 = vadd.f32 %v8476, %v8745
      %v8846 = vadd.f32 %v8477, %v8750
      %v8847 = vadd.f32 %v8478, %v8753
      %v8848 = vadd.f32 %v8479, %v8758
      %v8849 = vadd.f32 %v8480, %v8761
      %v8850 = vadd.f32 %v8481, %v8766
      %v8851 = vadd.f32 %v8482, %v8769
      %v8852 = vadd.f32 %v8483, %v8774
      %v8853 = vadd.f32 %v8484, %v8777
      %v8854 = vadd.f32 %v8485, %v8782
      %v8855 = vadd.f32 %v8486, %v8785
      %v8856 = vadd.f32 %v8487, %v8790
      %v8857 = vadd.f32 %v8488, %v8793
      %v8858 = vadd.f32 %v8489, %v8798
      %v8859 = vadd.f32 %v8490, %v8801
      %v8860 = vadd.f32 %v8491, %v8806
      %v8861 = vadd.f32 %v8492, %v8809
      %v8862 = vadd.f32 %v8493, %v8814
      %v8863 = vadd.f32 %v8494, %v8817
      %v8864 = vadd.f32 %v8495, %v8822
      %v8865 = vadd.f32 %v8496, %v8825
      %v8866 = vadd.f32 %v8497, %v8830
      %v8867 = vadd.f32 %v8498, %v8833
      %v8868 = vld [vmem:[%s6 + $0x40] sm:$0xf]
      %v8869 = vld [vmem:[%s6 + $0x44] sm:$0xf]
      %v8870 = vld [vmem:[%s6 + $0x48] sm:$0xf]
      %v8871 = vld [vmem:[%s6 + $0x4c] sm:$0xf]
      %v8876 = vunpack.c.l.b16 %v8868
      %v8877 = vunpack.c.l.b16 %v8869
      %v8878 = vunpack.c.l.b16 %v8870
      %v8879 = vunpack.c.l.b16 %v8871
      %v8880 = vpack.c.b16 %v8877, %v8876
      %v8881 = vpack.c.b16 %v8879, %v8878
      %8884 = vmatprep.subr.bf16.mxu0 0
      %8885 = vmatpush1.bf16.msra.mxu0 %v8880
      %8886 = vmatprep.subr.bf16.mxu0 0
      %8887 = vmatpush1.bf16.msra.mxu0 %v8881
      %8888 = vmatprep.subr.bf16.mxu0 0
      %8889 = vmatpush1.bf16.msra.mxu0 0
      %8890 = vmatprep.subr.bf16.mxu0 0
      %8891 = vmatpush1.bf16.msra.mxu0 0
      %8892 = vmatprep.subr.bf16.mxu0 0
      %8893 = vmatpush1.bf16.msra.mxu0 0
      %8894 = vmatprep.subr.bf16.mxu0 0
      %8895 = vmatpush1.bf16.msra.mxu0 0
      %8896 = vmatprep.subr.bf16.mxu0 0
      %8897 = vmatpush1.bf16.msra.mxu0 0
      %8898 = vmatprep.subr.bf16.mxu0 0
      %8899 = vmatpush1.bf16.msra.mxu0 0
      %8900 = vmatprep.subr.bf16.mxu0 0
      %8901 = vmatpush1.bf16.msra.mxu0 0
      %8902 = vmatprep.subr.bf16.mxu0 0
      %8903 = vmatpush1.bf16.msra.mxu0 0
      %8904 = vmatprep.subr.bf16.mxu0 0
      %8905 = vmatpush1.bf16.msra.mxu0 0
      %8906 = vmatprep.subr.bf16.mxu0 0
      %8907 = vmatpush1.bf16.msra.mxu0 0
      %8908 = vmatprep.subr.bf16.mxu0 0
      %8909 = vmatpush1.bf16.msra.mxu0 0
      %8910 = vmatprep.subr.bf16.mxu0 0
      %8911 = vmatpush1.bf16.msra.mxu0 0
      %8912 = vmatprep.subr.bf16.mxu0 0
      %8913 = vmatpush1.bf16.msra.mxu0 0
      %8914 = vmatprep.subr.bf16.mxu0 0
      %8915 = vmatpush1.bf16.msra.mxu0 0
      %8916 = vmatprep.mubr.bf16.mxu0 0
      %8917 = vmatmul.mubr.bf16.gmra.mrb[0].mxu0 %v6783
      %v8918 = vpop.f32.mrb[0].mxu0
      %v8919 = vadd.f32 0.0, %v8918
      %v8920 = vpop.f32.mrb[0].mxu0
      %v8921 = vpop.f32.mrb[0].mxu0
      %v8922 = vadd.f32 0.0, %v8921
      %v8923 = vpop.f32.mrb[0].mxu0
      %8924 = vmatprep.mubr.bf16.mxu0 0
      %8925 = vmatmul.mubr.bf16.gmra.mrb[0].mxu0 %v6786
      %v8926 = vpop.f32.mrb[0].mxu0
      %v8927 = vadd.f32 0.0, %v8926
      %v8928 = vpop.f32.mrb[0].mxu0
      %v8929 = vpop.f32.mrb[0].mxu0
      %v8930 = vadd.f32 0.0, %v8929
      %v8931 = vpop.f32.mrb[0].mxu0
      %8932 = vmatprep.mubr.bf16.mxu0 0
      %8933 = vmatmul.mubr.bf16.gmra.mrb[0].mxu0 %v6789
      %v8934 = vpop.f32.mrb[0].mxu0
      %v8935 = vadd.f32 0.0, %v8934
      %v8936 = vpop.f32.mrb[0].mxu0
      %v8937 = vpop.f32.mrb[0].mxu0
      %v8938 = vadd.f32 0.0, %v8937
      %v8939 = vpop.f32.mrb[0].mxu0
      %8940 = vmatprep.mubr.bf16.mxu0 0
      %8941 = vmatmul.mubr.bf16.gmra.mrb[0].mxu0 %v6792
      %v8942 = vpop.f32.mrb[0].mxu0
      %v8943 = vadd.f32 0.0, %v8942
      %v8944 = vpop.f32.mrb[0].mxu0
      %v8945 = vpop.f32.mrb[0].mxu0
      %v8946 = vadd.f32 0.0, %v8945
      %v8947 = vpop.f32.mrb[0].mxu0
      %8948 = vmatprep.mubr.bf16.mxu0 0
      %8949 = vmatmul.mubr.bf16.gmra.mrb[0].mxu0 %v6795
      %v8950 = vpop.f32.mrb[0].mxu0
      %v8951 = vadd.f32 0.0, %v8950
      %v8952 = vpop.f32.mrb[0].mxu0
      %v8953 = vpop.f32.mrb[0].mxu0
      %v8954 = vadd.f32 0.0, %v8953
      %v8955 = vpop.f32.mrb[0].mxu0
      %8956 = vmatprep.mubr.bf16.mxu0 0
      %8957 = vmatmul.mubr.bf16.gmra.mrb[0].mxu0 %v6798
      %v8958 = vpop.f32.mrb[0].mxu0
      %v8959 = vadd.f32 0.0, %v8958
      %v8960 = vpop.f32.mrb[0].mxu0
      %v8961 = vpop.f32.mrb[0].mxu0
      %v8962 = vadd.f32 0.0, %v8961
      %v8963 = vpop.f32.mrb[0].mxu0
      %8964 = vmatprep.mubr.bf16.mxu0 0
      %8965 = vmatmul.mubr.bf16.gmra.mrb[0].mxu0 %v6801
      %v8966 = vpop.f32.mrb[0].mxu0
      %v8967 = vadd.f32 0.0, %v8966
      %v8968 = vpop.f32.mrb[0].mxu0
      %v8969 = vpop.f32.mrb[0].mxu0
      %v8970 = vadd.f32 0.0, %v8969
      %v8971 = vpop.f32.mrb[0].mxu0
      %8972 = vmatprep.mubr.bf16.mxu0 0
      %8973 = vmatmul.mubr.bf16.gmra.mrb[0].mxu0 %v6804
      %v8974 = vpop.f32.mrb[0].mxu0
      %v8975 = vadd.f32 0.0, %v8974
      %v8976 = vpop.f32.mrb[0].mxu0
      %v8977 = vpop.f32.mrb[0].mxu0
      %v8978 = vadd.f32 0.0, %v8977
      %v8979 = vpop.f32.mrb[0].mxu0
      %8980 = vmatprep.mubr.bf16.mxu0 0
      %8981 = vmatmul.mubr.bf16.gmra.mrb[0].mxu0 %v6807
      %v8982 = vpop.f32.mrb[0].mxu0
      %v8983 = vadd.f32 0.0, %v8982
      %v8984 = vpop.f32.mrb[0].mxu0
      %v8985 = vpop.f32.mrb[0].mxu0
      %v8986 = vadd.f32 0.0, %v8985
      %v8987 = vpop.f32.mrb[0].mxu0
      %8988 = vmatprep.mubr.bf16.mxu0 0
      %8989 = vmatmul.mubr.bf16.gmra.mrb[0].mxu0 %v6810
      %v8990 = vpop.f32.mrb[0].mxu0
      %v8991 = vadd.f32 0.0, %v8990
      %v8992 = vpop.f32.mrb[0].mxu0
      %v8993 = vpop.f32.mrb[0].mxu0
      %v8994 = vadd.f32 0.0, %v8993
      %v8995 = vpop.f32.mrb[0].mxu0
      %8996 = vmatprep.mubr.bf16.mxu0 0
      %8997 = vmatmul.mubr.bf16.gmra.mrb[0].mxu0 %v6813
      %v8998 = vpop.f32.mrb[0].mxu0
      %v8999 = vadd.f32 0.0, %v8998
      %v9000 = vpop.f32.mrb[0].mxu0
      %v9001 = vpop.f32.mrb[0].mxu0
      %v9002 = vadd.f32 0.0, %v9001
      %v9003 = vpop.f32.mrb[0].mxu0
      %9004 = vmatprep.mubr.bf16.mxu0 0
      %9005 = vmatmul.mubr.bf16.gmra.mrb[0].mxu0 %v6816
      %v9006 = vpop.f32.mrb[0].mxu0
      %v9007 = vadd.f32 0.0, %v9006
      %v9008 = vpop.f32.mrb[0].mxu0
      %v9009 = vpop.f32.mrb[0].mxu0
      %v9010 = vadd.f32 0.0, %v9009
      %v9011 = vpop.f32.mrb[0].mxu0
      %9012 = vmatprep.mubr.bf16.mxu0 0
      %9013 = vmatmul.mubr.bf16.gmra.mrb[0].mxu0 %v6819
      %v9014 = vpop.f32.mrb[0].mxu0
      %v9015 = vadd.f32 0.0, %v9014
      %v9016 = vpop.f32.mrb[0].mxu0
      %v9017 = vpop.f32.mrb[0].mxu0
      %v9018 = vadd.f32 0.0, %v9017
      %v9019 = vpop.f32.mrb[0].mxu0
      %9020 = vmatprep.mubr.bf16.mxu0 0
      %9021 = vmatmul.mubr.bf16.gmra.mrb[0].mxu0 %v6822
      %v9022 = vpop.f32.mrb[0].mxu0
      %v9023 = vadd.f32 0.0, %v9022
      %v9024 = vpop.f32.mrb[0].mxu0
      %v9025 = vpop.f32.mrb[0].mxu0
      %v9026 = vadd.f32 0.0, %v9025
      %v9027 = vpop.f32.mrb[0].mxu0
      %9028 = vmatprep.mubr.bf16.mxu0 0
      %9029 = vmatmul.mubr.bf16.gmra.mrb[0].mxu0 %v6825
      %v9030 = vpop.f32.mrb[0].mxu0
      %v9031 = vadd.f32 0.0, %v9030
      %v9032 = vpop.f32.mrb[0].mxu0
      %v9033 = vpop.f32.mrb[0].mxu0
      %v9034 = vadd.f32 0.0, %v9033
      %v9035 = vpop.f32.mrb[0].mxu0
      %9036 = vmatprep.mubr.bf16.mxu0 0
      %9037 = vmatmul.mubr.bf16.gmra.mrb[0].mxu0 %v6828
      %v9038 = vpop.f32.mrb[0].mxu0
      %v9039 = vadd.f32 0.0, %v9038
      %v9040 = vpop.f32.mrb[0].mxu0
      %v9041 = vpop.f32.mrb[0].mxu0
      %v9042 = vadd.f32 0.0, %v9041
      %v9043 = vpop.f32.mrb[0].mxu0
      %9044 = vdwg.mxu0
      %v9045 = vadd.f32 %v8836, %v8919
      %v9046 = vadd.f32 %v8837, %v8922
      %v9047 = vadd.f32 %v8838, %v8927
      %v9048 = vadd.f32 %v8839, %v8930
      %v9049 = vadd.f32 %v8840, %v8935
      %v9050 = vadd.f32 %v8841, %v8938
      %v9051 = vadd.f32 %v8842, %v8943
      %v9052 = vadd.f32 %v8843, %v8946
      %v9053 = vadd.f32 %v8844, %v8951
      %v9054 = vadd.f32 %v8845, %v8954
      %v9055 = vadd.f32 %v8846, %v8959
      %v9056 = vadd.f32 %v8847, %v8962
      %v9057 = vadd.f32 %v8848, %v8967
      %v9058 = vadd.f32 %v8849, %v8970
      %v9059 = vadd.f32 %v8850, %v8975
      %v9060 = vadd.f32 %v8851, %v8978
      %v9061 = vadd.f32 %v8852, %v8983
      %v9062 = vadd.f32 %v8853, %v8986
      %v9063 = vadd.f32 %v8854, %v8991
      %v9064 = vadd.f32 %v8855, %v8994
      %v9065 = vadd.f32 %v8856, %v8999
      %v9066 = vadd.f32 %v8857, %v9002
      %v9067 = vadd.f32 %v8858, %v9007
      %v9068 = vadd.f32 %v8859, %v9010
      %v9069 = vadd.f32 %v8860, %v9015
      %v9070 = vadd.f32 %v8861, %v9018
      %v9071 = vadd.f32 %v8862, %v9023
      %v9072 = vadd.f32 %v8863, %v9026
      %v9073 = vadd.f32 %v8864, %v9031
      %v9074 = vadd.f32 %v8865, %v9034
      %v9075 = vadd.f32 %v8866, %v9039
      %v9076 = vadd.f32 %v8867, %v9042
      %v9077 = vld [vmem:[%s6220] sm:$0xe]
      %v9078 = vld [vmem:[%s6220 + $0x4] sm:$0xf]
      %v9079 = vld [vmem:[%s6220 + $0x8] sm:$0x1]
      %v9080 = vld [vmem:[%s6220 + $0xc] sm:$0xe]
      %v9081 = vld [vmem:[%s6220 + $0x10] sm:$0xf]
      %v9082 = vld [vmem:[%s6220 + $0x14] sm:$0x1]
      %v9083 = vld [vmem:[%s6220 + $0x18] sm:$0xe]
      %v9084 = vld [vmem:[%s6220 + $0x1c] sm:$0xf]
      %v9085 = vld [vmem:[%s6220 + $0x20] sm:$0x1]
      %v9086 = vld [vmem:[%s6220 + $0x24] sm:$0xe]
      %v9087 = vld [vmem:[%s6220 + $0x28] sm:$0xf]
      %v9088 = vld [vmem:[%s6220 + $0x2c] sm:$0x1]
      %v9089 = vld [vmem:[%s6220 + $0x30] sm:$0xe]
      %v9090 = vld [vmem:[%s6220 + $0x34] sm:$0xf]
      %v9091 = vld [vmem:[%s6220 + $0x38] sm:$0x1]
      %v9092 = vld [vmem:[%s6220 + $0x3c] sm:$0xe]
      %v9093 = vld [vmem:[%s6220 + $0x40] sm:$0xf]
      %v9094 = vld [vmem:[%s6220 + $0x44] sm:$0x1]
      %v9095 = vld [vmem:[%s6220 + $0x48] sm:$0xe]
      %v9096 = vld [vmem:[%s6220 + $0x4c] sm:$0xf]
      %v9097 = vld [vmem:[%s6220 + $0x50] sm:$0x1]
      %v9098 = vld [vmem:[%s6220 + $0x54] sm:$0xe]
      %v9099 = vld [vmem:[%s6220 + $0x58] sm:$0xf]
      %v9100 = vld [vmem:[%s6220 + $0x5c] sm:$0x1]
      %v9101 = vld [vmem:[%s6220 + $0x60] sm:$0xe]
      %v9102 = vld [vmem:[%s6220 + $0x64] sm:$0xf]
      %v9103 = vld [vmem:[%s6220 + $0x68] sm:$0x1]
      %v9104 = vld [vmem:[%s6220 + $0x6c] sm:$0xe]
      %v9105 = vld [vmem:[%s6220 + $0x70] sm:$0xf]
      %v9106 = vld [vmem:[%s6220 + $0x74] sm:$0x1]
      %v9107 = vld [vmem:[%s6220 + $0x78] sm:$0xe]
      %v9108 = vld [vmem:[%s6220 + $0x7c] sm:$0xf]
      %v9109 = vld [vmem:[%s6220 + $0x80] sm:$0x1]
      %v9110 = vld [vmem:[%s6220 + $0x84] sm:$0xe]
      %v9111 = vld [vmem:[%s6220 + $0x88] sm:$0xf]
      %v9112 = vld [vmem:[%s6220 + $0x8c] sm:$0x1]
      %v9113 = vld [vmem:[%s6220 + $0x90] sm:$0xe]
      %v9114 = vld [vmem:[%s6220 + $0x94] sm:$0xf]
      %v9115 = vld [vmem:[%s6220 + $0x98] sm:$0x1]
      %v9116 = vld [vmem:[%s6220 + $0x9c] sm:$0xe]
      %v9117 = vld [vmem:[%s6220 + $0xa0] sm:$0xf]
      %v9118 = vld [vmem:[%s6220 + $0xa4] sm:$0x1]
      %v9119 = vld [vmem:[%s6220 + $0xa8] sm:$0xe]
      %v9120 = vld [vmem:[%s6220 + $0xac] sm:$0xf]
      %v9121 = vld [vmem:[%s6220 + $0xb0] sm:$0x1]
      %v9122 = vld [vmem:[%s6220 + $0xb4] sm:$0xe]
      %v9123 = vld [vmem:[%s6220 + $0xb8] sm:$0xf]
      %v9124 = vld [vmem:[%s6220 + $0xbc] sm:$0x1]
      %v9173 = vrot.slane %v9077, 5
      %v9174 = vrot.slane %v9173, 4
      %v9175 = vrot.slane %v9078, 5
      %v9176 = vsel %vm2037, %v9174, %v9175
      %v9177 = vrot.slane %v9175, 4
      %v9178 = vrot.slane %v9079, 5
      %v9179 = vsel %vm2037, %v9177, %v9178
      %v9180 = vrot.slane %v9080, 5
      %v9181 = vrot.slane %v9180, 4
      %v9182 = vrot.slane %v9081, 5
      %v9183 = vsel %vm2037, %v9181, %v9182
      %v9184 = vrot.slane %v9182, 4
      %v9185 = vrot.slane %v9082, 5
      %v9186 = vsel %vm2037, %v9184, %v9185
      %v9187 = vrot.slane %v9083, 5
      %v9188 = vrot.slane %v9187, 4
      %v9189 = vrot.slane %v9084, 5
      %v9190 = vsel %vm2037, %v9188, %v9189
      %v9191 = vrot.slane %v9189, 4
      %v9192 = vrot.slane %v9085, 5
      %v9193 = vsel %vm2037, %v9191, %v9192
      %v9194 = vrot.slane %v9086, 5
      %v9195 = vrot.slane %v9194, 4
      %v9196 = vrot.slane %v9087, 5
      %v9197 = vsel %vm2037, %v9195, %v9196
      %v9198 = vrot.slane %v9196, 4
      %v9199 = vrot.slane %v9088, 5
      %v9200 = vsel %vm2037, %v9198, %v9199
      %v9201 = vrot.slane %v9089, 5
      %v9202 = vrot.slane %v9201, 4
      %v9203 = vrot.slane %v9090, 5
      %v9204 = vsel %vm2037, %v9202, %v9203
      %v9205 = vrot.slane %v9203, 4
      %v9206 = vrot.slane %v9091, 5
      %v9207 = vsel %vm2037, %v9205, %v9206
      %v9208 = vrot.slane %v9092, 5
      %v9209 = vrot.slane %v9208, 4
      %v9210 = vrot.slane %v9093, 5
      %v9211 = vsel %vm2037, %v9209, %v9210
      %v9212 = vrot.slane %v9210, 4
      %v9213 = vrot.slane %v9094, 5
      %v9214 = vsel %vm2037, %v9212, %v9213
      %v9215 = vrot.slane %v9095, 5
      %v9216 = vrot.slane %v9215, 4
      %v9217 = vrot.slane %v9096, 5
      %v9218 = vsel %vm2037, %v9216, %v9217
      %v9219 = vrot.slane %v9217, 4
      %v9220 = vrot.slane %v9097, 5
      %v9221 = vsel %vm2037, %v9219, %v9220
      %v9222 = vrot.slane %v9098, 5
      %v9223 = vrot.slane %v9222, 4
      %v9224 = vrot.slane %v9099, 5
      %v9225 = vsel %vm2037, %v9223, %v9224
      %v9226 = vrot.slane %v9224, 4
      %v9227 = vrot.slane %v9100, 5
      %v9228 = vsel %vm2037, %v9226, %v9227
      %v9229 = vrot.slane %v9101, 5
      %v9230 = vrot.slane %v9229, 4
      %v9231 = vrot.slane %v9102, 5
      %v9232 = vsel %vm2037, %v9230, %v9231
      %v9233 = vrot.slane %v9231, 4
      %v9234 = vrot.slane %v9103, 5
      %v9235 = vsel %vm2037, %v9233, %v9234
      %v9236 = vrot.slane %v9104, 5
      %v9237 = vrot.slane %v9236, 4
      %v9238 = vrot.slane %v9105, 5
      %v9239 = vsel %vm2037, %v9237, %v9238
      %v9240 = vrot.slane %v9238, 4
      %v9241 = vrot.slane %v9106, 5
      %v9242 = vsel %vm2037, %v9240, %v9241
      %v9243 = vrot.slane %v9107, 5
      %v9244 = vrot.slane %v9243, 4
      %v9245 = vrot.slane %v9108, 5
      %v9246 = vsel %vm2037, %v9244, %v9245
      %v9247 = vrot.slane %v9245, 4
      %v9248 = vrot.slane %v9109, 5
      %v9249 = vsel %vm2037, %v9247, %v9248
      %v9250 = vrot.slane %v9110, 5
      %v9251 = vrot.slane %v9250, 4
      %v9252 = vrot.slane %v9111, 5
      %v9253 = vsel %vm2037, %v9251, %v9252
      %v9254 = vrot.slane %v9252, 4
      %v9255 = vrot.slane %v9112, 5
      %v9256 = vsel %vm2037, %v9254, %v9255
      %v9257 = vrot.slane %v9113, 5
      %v9258 = vrot.slane %v9257, 4
      %v9259 = vrot.slane %v9114, 5
      %v9260 = vsel %vm2037, %v9258, %v9259
      %v9261 = vrot.slane %v9259, 4
      %v9262 = vrot.slane %v9115, 5
      %v9263 = vsel %vm2037, %v9261, %v9262
      %v9264 = vrot.slane %v9116, 5
      %v9265 = vrot.slane %v9264, 4
      %v9266 = vrot.slane %v9117, 5
      %v9267 = vsel %vm2037, %v9265, %v9266
      %v9268 = vrot.slane %v9266, 4
      %v9269 = vrot.slane %v9118, 5
      %v9270 = vsel %vm2037, %v9268, %v9269
      %v9271 = vrot.slane %v9119, 5
      %v9272 = vrot.slane %v9271, 4
      %v9273 = vrot.slane %v9120, 5
      %v9274 = vsel %vm2037, %v9272, %v9273
      %v9275 = vrot.slane %v9273, 4
      %v9276 = vrot.slane %v9121, 5
      %v9277 = vsel %vm2037, %v9275, %v9276
      %v9278 = vrot.slane %v9122, 5
      %v9279 = vrot.slane %v9278, 4
      %v9280 = vrot.slane %v9123, 5
      %v9281 = vsel %vm2037, %v9279, %v9280
      %v9282 = vrot.slane %v9280, 4
      %v9283 = vrot.slane %v9124, 5
      %v9284 = vsel %vm2037, %v9282, %v9283
      %v9285 = vld [vmem:[%s6 + $0x50] sm:$0xf]
      %v9286 = vld [vmem:[%s6 + $0x54] sm:$0xf]
      %v9287 = vld [vmem:[%s6 + $0x58] sm:$0xf]
      %v9288 = vld [vmem:[%s6 + $0x5c] sm:$0xf]
      %v9289 = vunpack.c.l.b16 %v9176
      %v9290 = vunpack.c.l.b16 %v9179
      %v9291 = vunpack.c.l.b16 %v9183
      %v9292 = vunpack.c.l.b16 %v9186
      %v9293 = vunpack.c.l.b16 %v9190
      %v9294 = vunpack.c.l.b16 %v9193
      %v9295 = vunpack.c.l.b16 %v9197
      %v9296 = vunpack.c.l.b16 %v9200
      %v9297 = vunpack.c.l.b16 %v9204
      %v9298 = vunpack.c.l.b16 %v9207
      %v9299 = vunpack.c.l.b16 %v9211
      %v9300 = vunpack.c.l.b16 %v9214
      %v9301 = vunpack.c.l.b16 %v9218
      %v9302 = vunpack.c.l.b16 %v9221
      %v9303 = vunpack.c.l.b16 %v9225
      %v9304 = vunpack.c.l.b16 %v9228
      %v9305 = vunpack.c.l.b16 %v9232
      %v9306 = vunpack.c.l.b16 %v9235
      %v9307 = vunpack.c.l.b16 %v9239
      %v9308 = vunpack.c.l.b16 %v9242
      %v9309 = vunpack.c.l.b16 %v9246
      %v9310 = vunpack.c.l.b16 %v9249
      %v9311 = vunpack.c.l.b16 %v9253
      %v9312 = vunpack.c.l.b16 %v9256
      %v9313 = vunpack.c.l.b16 %v9260
      %v9314 = vunpack.c.l.b16 %v9263
      %v9315 = vunpack.c.l.b16 %v9267
      %v9316 = vunpack.c.l.b16 %v9270
      %v9317 = vunpack.c.l.b16 %v9274
      %v9318 = vunpack.c.l.b16 %v9277
      %v9319 = vunpack.c.l.b16 %v9281
      %v9320 = vunpack.c.l.b16 %v9284
      %v9321 = vpack.c.b16 %v9290, %v9289
      %v9322 = vpack.c.b16 %v9292, %v9291
      %v9323 = vpack.c.b16 %v9294, %v9293
      %v9324 = vpack.c.b16 %v9296, %v9295
      %v9325 = vpack.c.b16 %v9298, %v9297
      %v9326 = vpack.c.b16 %v9300, %v9299
      %v9327 = vpack.c.b16 %v9302, %v9301
      %v9328 = vpack.c.b16 %v9304, %v9303
      %v9329 = vpack.c.b16 %v9306, %v9305
      %v9330 = vpack.c.b16 %v9308, %v9307
      %v9331 = vpack.c.b16 %v9310, %v9309
      %v9332 = vpack.c.b16 %v9312, %v9311
      %v9333 = vpack.c.b16 %v9314, %v9313
      %v9334 = vpack.c.b16 %v9316, %v9315
      %v9335 = vpack.c.b16 %v9318, %v9317
      %v9336 = vpack.c.b16 %v9320, %v9319
      %v9341 = vunpack.c.l.b16 %v9285
      %v9342 = vunpack.c.l.b16 %v9286
      %v9343 = vunpack.c.l.b16 %v9287
      %v9344 = vunpack.c.l.b16 %v9288
      %v9345 = vpack.c.b16 %v9342, %v9341
      %v9346 = vpack.c.b16 %v9344, %v9343
      %v9350 = vsel %vm6781, %v9321, 0
      %v9353 = vsel %vm6781, %v9322, 0
      %v9356 = vsel %vm6781, %v9323, 0
      %v9359 = vsel %vm6781, %v9324, 0
      %v9362 = vsel %vm6781, %v9325, 0
      %v9365 = vsel %vm6781, %v9326, 0
      %v9368 = vsel %vm6781, %v9327, 0
      %v9371 = vsel %vm6781, %v9328, 0
      %v9374 = vsel %vm6781, %v9329, 0
      %v9377 = vsel %vm6781, %v9330, 0
      %v9380 = vsel %vm6781, %v9331, 0
      %v9383 = vsel %vm6781, %v9332, 0
      %v9386 = vsel %vm6781, %v9333, 0
      %v9389 = vsel %vm6781, %v9334, 0
      %v9392 = vsel %vm6781, %v9335, 0
      %v9395 = vsel %vm6781, %v9336, 0
      %9397 = vmatprep.subr.bf16.mxu0 0
      %9398 = vmatpush1.bf16.msra.mxu0 %v9345
      %9399 = vmatprep.subr.bf16.mxu0 0
      %9400 = vmatpush1.bf16.msra.mxu0 %v9346
      %9401 = vmatprep.subr.bf16.mxu0 0
      %9402 = vmatpush1.bf16.msra.mxu0 0
      %9403 = vmatprep.subr.bf16.mxu0 0
      %9404 = vmatpush1.bf16.msra.mxu0 0
      %9405 = vmatprep.subr.bf16.mxu0 0
      %9406 = vmatpush1.bf16.msra.mxu0 0
      %9407 = vmatprep.subr.bf16.mxu0 0
      %9408 = vmatpush1.bf16.msra.mxu0 0
      %9409 = vmatprep.subr.bf16.mxu0 0
      %9410 = vmatpush1.bf16.msra.mxu0 0
      %9411 = vmatprep.subr.bf16.mxu0 0
      %9412 = vmatpush1.bf16.msra.mxu0 0
      %9413 = vmatprep.subr.bf16.mxu0 0
      %9414 = vmatpush1.bf16.msra.mxu0 0
      %9415 = vmatprep.subr.bf16.mxu0 0
      %9416 = vmatpush1.bf16.msra.mxu0 0
      %9417 = vmatprep.subr.bf16.mxu0 0
      %9418 = vmatpush1.bf16.msra.mxu0 0
      %9419 = vmatprep.subr.bf16.mxu0 0
      %9420 = vmatpush1.bf16.msra.mxu0 0
      %9421 = vmatprep.subr.bf16.mxu0 0
      %9422 = vmatpush1.bf16.msra.mxu0 0
      %9423 = vmatprep.subr.bf16.mxu0 0
      %9424 = vmatpush1.bf16.msra.mxu0 0
      %9425 = vmatprep.subr.bf16.mxu0 0
      %9426 = vmatpush1.bf16.msra.mxu0 0
      %9427 = vmatprep.subr.bf16.mxu0 0
      %9428 = vmatpush1.bf16.msra.mxu0 0
      %9429 = vmatprep.mubr.bf16.mxu0 0
      %9430 = vmatmul.mubr.bf16.gmra.mrb[0].mxu0 %v9350
      %v9431 = vpop.f32.mrb[0].mxu0
      %v9432 = vadd.f32 0.0, %v9431
      %v9433 = vpop.f32.mrb[0].mxu0
      %v9434 = vpop.f32.mrb[0].mxu0
      %v9435 = vadd.f32 0.0, %v9434
      %v9436 = vpop.f32.mrb[0].mxu0
      %9437 = vmatprep.mubr.bf16.mxu0 0
      %9438 = vmatmul.mubr.bf16.gmra.mrb[0].mxu0 %v9353
      %v9439 = vpop.f32.mrb[0].mxu0
      %v9440 = vadd.f32 0.0, %v9439
      %v9441 = vpop.f32.mrb[0].mxu0
      %v9442 = vpop.f32.mrb[0].mxu0
      %v9443 = vadd.f32 0.0, %v9442
      %v9444 = vpop.f32.mrb[0].mxu0
      %9445 = vmatprep.mubr.bf16.mxu0 0
      %9446 = vmatmul.mubr.bf16.gmra.mrb[0].mxu0 %v9356
      %v9447 = vpop.f32.mrb[0].mxu0
      %v9448 = vadd.f32 0.0, %v9447
      %v9449 = vpop.f32.mrb[0].mxu0
      %v9450 = vpop.f32.mrb[0].mxu0
      %v9451 = vadd.f32 0.0, %v9450
      %v9452 = vpop.f32.mrb[0].mxu0
      %9453 = vmatprep.mubr.bf16.mxu0 0
      %9454 = vmatmul.mubr.bf16.gmra.mrb[0].mxu0 %v9359
      %v9455 = vpop.f32.mrb[0].mxu0
      %v9456 = vadd.f32 0.0, %v9455
      %v9457 = vpop.f32.mrb[0].mxu0
      %v9458 = vpop.f32.mrb[0].mxu0
      %v9459 = vadd.f32 0.0, %v9458
      %v9460 = vpop.f32.mrb[0].mxu0
      %9461 = vmatprep.mubr.bf16.mxu0 0
      %9462 = vmatmul.mubr.bf16.gmra.mrb[0].mxu0 %v9362
      %v9463 = vpop.f32.mrb[0].mxu0
      %v9464 = vadd.f32 0.0, %v9463
      %v9465 = vpop.f32.mrb[0].mxu0
      %v9466 = vpop.f32.mrb[0].mxu0
      %v9467 = vadd.f32 0.0, %v9466
      %v9468 = vpop.f32.mrb[0].mxu0
      %9469 = vmatprep.mubr.bf16.mxu0 0
      %9470 = vmatmul.mubr.bf16.gmra.mrb[0].mxu0 %v9365
      %v9471 = vpop.f32.mrb[0].mxu0
      %v9472 = vadd.f32 0.0, %v9471
      %v9473 = vpop.f32.mrb[0].mxu0
      %v9474 = vpop.f32.mrb[0].mxu0
      %v9475 = vadd.f32 0.0, %v9474
      %v9476 = vpop.f32.mrb[0].mxu0
      %9477 = vmatprep.mubr.bf16.mxu0 0
      %9478 = vmatmul.mubr.bf16.gmra.mrb[0].mxu0 %v9368
      %v9479 = vpop.f32.mrb[0].mxu0
      %v9480 = vadd.f32 0.0, %v9479
      %v9481 = vpop.f32.mrb[0].mxu0
      %v9482 = vpop.f32.mrb[0].mxu0
      %v9483 = vadd.f32 0.0, %v9482
      %v9484 = vpop.f32.mrb[0].mxu0
      %9485 = vmatprep.mubr.bf16.mxu0 0
      %9486 = vmatmul.mubr.bf16.gmra.mrb[0].mxu0 %v9371
      %v9487 = vpop.f32.mrb[0].mxu0
      %v9488 = vadd.f32 0.0, %v9487
      %v9489 = vpop.f32.mrb[0].mxu0
      %v9490 = vpop.f32.mrb[0].mxu0
      %v9491 = vadd.f32 0.0, %v9490
      %v9492 = vpop.f32.mrb[0].mxu0
      %9493 = vmatprep.mubr.bf16.mxu0 0
      %9494 = vmatmul.mubr.bf16.gmra.mrb[0].mxu0 %v9374
      %v9495 = vpop.f32.mrb[0].mxu0
      %v9496 = vadd.f32 0.0, %v9495
      %v9497 = vpop.f32.mrb[0].mxu0
      %v9498 = vpop.f32.mrb[0].mxu0
      %v9499 = vadd.f32 0.0, %v9498
      %v9500 = vpop.f32.mrb[0].mxu0
      %9501 = vmatprep.mubr.bf16.mxu0 0
      %9502 = vmatmul.mubr.bf16.gmra.mrb[0].mxu0 %v9377
      %v9503 = vpop.f32.mrb[0].mxu0
      %v9504 = vadd.f32 0.0, %v9503
      %v9505 = vpop.f32.mrb[0].mxu0
      %v9506 = vpop.f32.mrb[0].mxu0
      %v9507 = vadd.f32 0.0, %v9506
      %v9508 = vpop.f32.mrb[0].mxu0
      %9509 = vmatprep.mubr.bf16.mxu0 0
      %9510 = vmatmul.mubr.bf16.gmra.mrb[0].mxu0 %v9380
      %v9511 = vpop.f32.mrb[0].mxu0
      %v9512 = vadd.f32 0.0, %v9511
      %v9513 = vpop.f32.mrb[0].mxu0
      %v9514 = vpop.f32.mrb[0].mxu0
      %v9515 = vadd.f32 0.0, %v9514
      %v9516 = vpop.f32.mrb[0].mxu0
      %9517 = vmatprep.mubr.bf16.mxu0 0
      %9518 = vmatmul.mubr.bf16.gmra.mrb[0].mxu0 %v9383
      %v9519 = vpop.f32.mrb[0].mxu0
      %v9520 = vadd.f32 0.0, %v9519
      %v9521 = vpop.f32.mrb[0].mxu0
      %v9522 = vpop.f32.mrb[0].mxu0
      %v9523 = vadd.f32 0.0, %v9522
      %v9524 = vpop.f32.mrb[0].mxu0
      %9525 = vmatprep.mubr.bf16.mxu0 0
      %9526 = vmatmul.mubr.bf16.gmra.mrb[0].mxu0 %v9386
      %v9527 = vpop.f32.mrb[0].mxu0
      %v9528 = vadd.f32 0.0, %v9527
      %v9529 = vpop.f32.mrb[0].mxu0
      %v9530 = vpop.f32.mrb[0].mxu0
      %v9531 = vadd.f32 0.0, %v9530
      %v9532 = vpop.f32.mrb[0].mxu0
      %9533 = vmatprep.mubr.bf16.mxu0 0
      %9534 = vmatmul.mubr.bf16.gmra.mrb[0].mxu0 %v9389
      %v9535 = vpop.f32.mrb[0].mxu0
      %v9536 = vadd.f32 0.0, %v9535
      %v9537 = vpop.f32.mrb[0].mxu0
      %v9538 = vpop.f32.mrb[0].mxu0
      %v9539 = vadd.f32 0.0, %v9538
      %v9540 = vpop.f32.mrb[0].mxu0
      %9541 = vmatprep.mubr.bf16.mxu0 0
      %9542 = vmatmul.mubr.bf16.gmra.mrb[0].mxu0 %v9392
      %v9543 = vpop.f32.mrb[0].mxu0
      %v9544 = vadd.f32 0.0, %v9543
      %v9545 = vpop.f32.mrb[0].mxu0
      %v9546 = vpop.f32.mrb[0].mxu0
      %v9547 = vadd.f32 0.0, %v9546
      %v9548 = vpop.f32.mrb[0].mxu0
      %9549 = vmatprep.mubr.bf16.mxu0 0
      %9550 = vmatmul.mubr.bf16.gmra.mrb[0].mxu0 %v9395
      %v9551 = vpop.f32.mrb[0].mxu0
      %v9552 = vadd.f32 0.0, %v9551
      %v9553 = vpop.f32.mrb[0].mxu0
      %v9554 = vpop.f32.mrb[0].mxu0
      %v9555 = vadd.f32 0.0, %v9554
      %v9556 = vpop.f32.mrb[0].mxu0
      %9557 = vdwg.mxu0
      %v9558 = vadd.f32 %v9045, %v9432
      %v9559 = vadd.f32 %v9046, %v9435
      %v9560 = vadd.f32 %v9047, %v9440
      %v9561 = vadd.f32 %v9048, %v9443
      %v9562 = vadd.f32 %v9049, %v9448
      %v9563 = vadd.f32 %v9050, %v9451
      %v9564 = vadd.f32 %v9051, %v9456
      %v9565 = vadd.f32 %v9052, %v9459
      %v9566 = vadd.f32 %v9053, %v9464
      %v9567 = vadd.f32 %v9054, %v9467
      %v9568 = vadd.f32 %v9055, %v9472
      %v9569 = vadd.f32 %v9056, %v9475
      %v9570 = vadd.f32 %v9057, %v9480
      %v9571 = vadd.f32 %v9058, %v9483
      %v9572 = vadd.f32 %v9059, %v9488
      %v9573 = vadd.f32 %v9060, %v9491
      %v9574 = vadd.f32 %v9061, %v9496
      %v9575 = vadd.f32 %v9062, %v9499
      %v9576 = vadd.f32 %v9063, %v9504
      %v9577 = vadd.f32 %v9064, %v9507
      %v9578 = vadd.f32 %v9065, %v9512
      %v9579 = vadd.f32 %v9066, %v9515
      %v9580 = vadd.f32 %v9067, %v9520
      %v9581 = vadd.f32 %v9068, %v9523
      %v9582 = vadd.f32 %v9069, %v9528
      %v9583 = vadd.f32 %v9070, %v9531
      %v9584 = vadd.f32 %v9071, %v9536
      %v9585 = vadd.f32 %v9072, %v9539
      %v9586 = vadd.f32 %v9073, %v9544
      %v9587 = vadd.f32 %v9074, %v9547
      %v9588 = vadd.f32 %v9075, %v9552
      %v9589 = vadd.f32 %v9076, %v9555
      %s9590 = scalar_lea.vmem [#allocation3], 24
      %v9591 = vld [vmem:[%s9590] sm:$0xf]
      %v9592 = vld [vmem:[%s9590 + $0x4] sm:$0xf]
      %v9593 = vld [vmem:[%s9590 + $0xc] sm:$0xf]
      %v9594 = vld [vmem:[%s9590 + $0x10] sm:$0xf]
      %v9595 = vld [vmem:[%s9590 + $0x18] sm:$0xf]
      %v9596 = vld [vmem:[%s9590 + $0x1c] sm:$0xf]
      %v9597 = vld [vmem:[%s9590 + $0x24] sm:$0xf]
      %v9598 = vld [vmem:[%s9590 + $0x28] sm:$0xf]
      %v9599 = vld [vmem:[%s9590 + $0x30] sm:$0xf]
      %v9600 = vld [vmem:[%s9590 + $0x34] sm:$0xf]
      %v9601 = vld [vmem:[%s9590 + $0x3c] sm:$0xf]
      %v9602 = vld [vmem:[%s9590 + $0x40] sm:$0xf]
      %v9603 = vld [vmem:[%s9590 + $0x48] sm:$0xf]
      %v9604 = vld [vmem:[%s9590 + $0x4c] sm:$0xf]
      %v9605 = vld [vmem:[%s9590 + $0x54] sm:$0xf]
      %v9606 = vld [vmem:[%s9590 + $0x58] sm:$0xf]
      %v9607 = vld [vmem:[%s9590 + $0x60] sm:$0xf]
      %v9608 = vld [vmem:[%s9590 + $0x64] sm:$0xf]
      %v9609 = vld [vmem:[%s9590 + $0x6c] sm:$0xf]
      %v9610 = vld [vmem:[%s9590 + $0x70] sm:$0xf]
      %v9611 = vld [vmem:[%s9590 + $0x78] sm:$0xf]
      %v9612 = vld [vmem:[%s9590 + $0x7c] sm:$0xf]
      %v9613 = vld [vmem:[%s9590 + $0x84] sm:$0xf]
      %v9614 = vld [vmem:[%s9590 + $0x88] sm:$0xf]
      %v9615 = vld [vmem:[%s9590 + $0x90] sm:$0xf]
      %v9616 = vld [vmem:[%s9590 + $0x94] sm:$0xf]
      %v9617 = vld [vmem:[%s9590 + $0x9c] sm:$0xf]
      %v9618 = vld [vmem:[%s9590 + $0xa0] sm:$0xf]
      %v9619 = vld [vmem:[%s9590 + $0xa8] sm:$0xf]
      %v9620 = vld [vmem:[%s9590 + $0xac] sm:$0xf]
      %v9621 = vld [vmem:[%s9590 + $0xb4] sm:$0xf]
      %v9622 = vld [vmem:[%s9590 + $0xb8] sm:$0xf]
      %v9623 = vld [vmem:[%s6 + $0x60] sm:$0xf]
      %v9624 = vld [vmem:[%s6 + $0x64] sm:$0xf]
      %v9625 = vld [vmem:[%s6 + $0x68] sm:$0xf]
      %v9626 = vld [vmem:[%s6 + $0x6c] sm:$0xf]
      %v9659 = vunpack.c.l.b16 %v9591
      %v9660 = vunpack.c.l.b16 %v9592
      %v9661 = vunpack.c.l.b16 %v9593
      %v9662 = vunpack.c.l.b16 %v9594
      %v9663 = vunpack.c.l.b16 %v9595
      %v9664 = vunpack.c.l.b16 %v9596
      %v9665 = vunpack.c.l.b16 %v9597
      %v9666 = vunpack.c.l.b16 %v9598
      %v9667 = vunpack.c.l.b16 %v9599
      %v9668 = vunpack.c.l.b16 %v9600
      %v9669 = vunpack.c.l.b16 %v9601
      %v9670 = vunpack.c.l.b16 %v9602
      %v9671 = vunpack.c.l.b16 %v9603
      %v9672 = vunpack.c.l.b16 %v9604
      %v9673 = vunpack.c.l.b16 %v9605
      %v9674 = vunpack.c.l.b16 %v9606
      %v9675 = vunpack.c.l.b16 %v9607
      %v9676 = vunpack.c.l.b16 %v9608
      %v9677 = vunpack.c.l.b16 %v9609
      %v9678 = vunpack.c.l.b16 %v9610
      %v9679 = vunpack.c.l.b16 %v9611
      %v9680 = vunpack.c.l.b16 %v9612
      %v9681 = vunpack.c.l.b16 %v9613
      %v9682 = vunpack.c.l.b16 %v9614
      %v9683 = vunpack.c.l.b16 %v9615
      %v9684 = vunpack.c.l.b16 %v9616
      %v9685 = vunpack.c.l.b16 %v9617
      %v9686 = vunpack.c.l.b16 %v9618
      %v9687 = vunpack.c.l.b16 %v9619
      %v9688 = vunpack.c.l.b16 %v9620
      %v9689 = vunpack.c.l.b16 %v9621
      %v9690 = vunpack.c.l.b16 %v9622
      %v9691 = vpack.c.b16 %v9660, %v9659
      %v9692 = vpack.c.b16 %v9662, %v9661
      %v9693 = vpack.c.b16 %v9664, %v9663
      %v9694 = vpack.c.b16 %v9666, %v9665
      %v9695 = vpack.c.b16 %v9668, %v9667
      %v9696 = vpack.c.b16 %v9670, %v9669
      %v9697 = vpack.c.b16 %v9672, %v9671
      %v9698 = vpack.c.b16 %v9674, %v9673
      %v9699 = vpack.c.b16 %v9676, %v9675
      %v9700 = vpack.c.b16 %v9678, %v9677
      %v9701 = vpack.c.b16 %v9680, %v9679
      %v9702 = vpack.c.b16 %v9682, %v9681
      %v9703 = vpack.c.b16 %v9684, %v9683
      %v9704 = vpack.c.b16 %v9686, %v9685
      %v9705 = vpack.c.b16 %v9688, %v9687
      %v9706 = vpack.c.b16 %v9690, %v9689
      %v9711 = vunpack.c.l.b16 %v9623
      %v9712 = vunpack.c.l.b16 %v9624
      %v9713 = vunpack.c.l.b16 %v9625
      %v9714 = vunpack.c.l.b16 %v9626
      %v9715 = vpack.c.b16 %v9712, %v9711
      %v9716 = vpack.c.b16 %v9714, %v9713
      %v9720 = vsel %vm6781, %v9691, 0
      %v9723 = vsel %vm6781, %v9692, 0
      %v9726 = vsel %vm6781, %v9693, 0
      %v9729 = vsel %vm6781, %v9694, 0
      %v9732 = vsel %vm6781, %v9695, 0
      %v9735 = vsel %vm6781, %v9696, 0
      %v9738 = vsel %vm6781, %v9697, 0
      %v9741 = vsel %vm6781, %v9698, 0
      %v9744 = vsel %vm6781, %v9699, 0
      %v9747 = vsel %vm6781, %v9700, 0
      %v9750 = vsel %vm6781, %v9701, 0
      %v9753 = vsel %vm6781, %v9702, 0
      %v9756 = vsel %vm6781, %v9703, 0
      %v9759 = vsel %vm6781, %v9704, 0
      %v9762 = vsel %vm6781, %v9705, 0
      %v9765 = vsel %vm6781, %v9706, 0
      %9767 = vmatprep.subr.bf16.mxu0 0
      %9768 = vmatpush1.bf16.msra.mxu0 %v9715
      %9769 = vmatprep.subr.bf16.mxu0 0
      %9770 = vmatpush1.bf16.msra.mxu0 %v9716
      %9771 = vmatprep.subr.bf16.mxu0 0
      %9772 = vmatpush1.bf16.msra.mxu0 0
      %9773 = vmatprep.subr.bf16.mxu0 0
      %9774 = vmatpush1.bf16.msra.mxu0 0
      %9775 = vmatprep.subr.bf16.mxu0 0
      %9776 = vmatpush1.bf16.msra.mxu0 0
      %9777 = vmatprep.subr.bf16.mxu0 0
      %9778 = vmatpush1.bf16.msra.mxu0 0
      %9779 = vmatprep.subr.bf16.mxu0 0
      %9780 = vmatpush1.bf16.msra.mxu0 0
      %9781 = vmatprep.subr.bf16.mxu0 0
      %9782 = vmatpush1.bf16.msra.mxu0 0
      %9783 = vmatprep.subr.bf16.mxu0 0
      %9784 = vmatpush1.bf16.msra.mxu0 0
      %9785 = vmatprep.subr.bf16.mxu0 0
      %9786 = vmatpush1.bf16.msra.mxu0 0
      %9787 = vmatprep.subr.bf16.mxu0 0
      %9788 = vmatpush1.bf16.msra.mxu0 0
      %9789 = vmatprep.subr.bf16.mxu0 0
      %9790 = vmatpush1.bf16.msra.mxu0 0
      %9791 = vmatprep.subr.bf16.mxu0 0
      %9792 = vmatpush1.bf16.msra.mxu0 0
      %9793 = vmatprep.subr.bf16.mxu0 0
      %9794 = vmatpush1.bf16.msra.mxu0 0
      %9795 = vmatprep.subr.bf16.mxu0 0
      %9796 = vmatpush1.bf16.msra.mxu0 0
      %9797 = vmatprep.subr.bf16.mxu0 0
      %9798 = vmatpush1.bf16.msra.mxu0 0
      %9799 = vmatprep.mubr.bf16.mxu0 0
      %9800 = vmatmul.mubr.bf16.gmra.mrb[0].mxu0 %v9720
      %v9801 = vpop.f32.mrb[0].mxu0
      %v9802 = vadd.f32 0.0, %v9801
      %v9803 = vpop.f32.mrb[0].mxu0
      %v9804 = vpop.f32.mrb[0].mxu0
      %v9805 = vadd.f32 0.0, %v9804
      %v9806 = vpop.f32.mrb[0].mxu0
      %9807 = vmatprep.mubr.bf16.mxu0 0
      %9808 = vmatmul.mubr.bf16.gmra.mrb[0].mxu0 %v9723
      %v9809 = vpop.f32.mrb[0].mxu0
      %v9810 = vadd.f32 0.0, %v9809
      %v9811 = vpop.f32.mrb[0].mxu0
      %v9812 = vpop.f32.mrb[0].mxu0
      %v9813 = vadd.f32 0.0, %v9812
      %v9814 = vpop.f32.mrb[0].mxu0
      %9815 = vmatprep.mubr.bf16.mxu0 0
      %9816 = vmatmul.mubr.bf16.gmra.mrb[0].mxu0 %v9726
      %v9817 = vpop.f32.mrb[0].mxu0
      %v9818 = vadd.f32 0.0, %v9817
      %v9819 = vpop.f32.mrb[0].mxu0
      %v9820 = vpop.f32.mrb[0].mxu0
      %v9821 = vadd.f32 0.0, %v9820
      %v9822 = vpop.f32.mrb[0].mxu0
      %9823 = vmatprep.mubr.bf16.mxu0 0
      %9824 = vmatmul.mubr.bf16.gmra.mrb[0].mxu0 %v9729
      %v9825 = vpop.f32.mrb[0].mxu0
      %v9826 = vadd.f32 0.0, %v9825
      %v9827 = vpop.f32.mrb[0].mxu0
      %v9828 = vpop.f32.mrb[0].mxu0
      %v9829 = vadd.f32 0.0, %v9828
      %v9830 = vpop.f32.mrb[0].mxu0
      %9831 = vmatprep.mubr.bf16.mxu0 0
      %9832 = vmatmul.mubr.bf16.gmra.mrb[0].mxu0 %v9732
      %v9833 = vpop.f32.mrb[0].mxu0
      %v9834 = vadd.f32 0.0, %v9833
      %v9835 = vpop.f32.mrb[0].mxu0
      %v9836 = vpop.f32.mrb[0].mxu0
      %v9837 = vadd.f32 0.0, %v9836
      %v9838 = vpop.f32.mrb[0].mxu0
      %9839 = vmatprep.mubr.bf16.mxu0 0
      %9840 = vmatmul.mubr.bf16.gmra.mrb[0].mxu0 %v9735
      %v9841 = vpop.f32.mrb[0].mxu0
      %v9842 = vadd.f32 0.0, %v9841
      %v9843 = vpop.f32.mrb[0].mxu0
      %v9844 = vpop.f32.mrb[0].mxu0
      %v9845 = vadd.f32 0.0, %v9844
      %v9846 = vpop.f32.mrb[0].mxu0
      %9847 = vmatprep.mubr.bf16.mxu0 0
      %9848 = vmatmul.mubr.bf16.gmra.mrb[0].mxu0 %v9738
      %v9849 = vpop.f32.mrb[0].mxu0
      %v9850 = vadd.f32 0.0, %v9849
      %v9851 = vpop.f32.mrb[0].mxu0
      %v9852 = vpop.f32.mrb[0].mxu0
      %v9853 = vadd.f32 0.0, %v9852
      %v9854 = vpop.f32.mrb[0].mxu0
      %9855 = vmatprep.mubr.bf16.mxu0 0
      %9856 = vmatmul.mubr.bf16.gmra.mrb[0].mxu0 %v9741
      %v9857 = vpop.f32.mrb[0].mxu0
      %v9858 = vadd.f32 0.0, %v9857
      %v9859 = vpop.f32.mrb[0].mxu0
      %v9860 = vpop.f32.mrb[0].mxu0
      %v9861 = vadd.f32 0.0, %v9860
      %v9862 = vpop.f32.mrb[0].mxu0
      %9863 = vmatprep.mubr.bf16.mxu0 0
      %9864 = vmatmul.mubr.bf16.gmra.mrb[0].mxu0 %v9744
      %v9865 = vpop.f32.mrb[0].mxu0
      %v9866 = vadd.f32 0.0, %v9865
      %v9867 = vpop.f32.mrb[0].mxu0
      %v9868 = vpop.f32.mrb[0].mxu0
      %v9869 = vadd.f32 0.0, %v9868
      %v9870 = vpop.f32.mrb[0].mxu0
      %9871 = vmatprep.mubr.bf16.mxu0 0
      %9872 = vmatmul.mubr.bf16.gmra.mrb[0].mxu0 %v9747
      %v9873 = vpop.f32.mrb[0].mxu0
      %v9874 = vadd.f32 0.0, %v9873
      %v9875 = vpop.f32.mrb[0].mxu0
      %v9876 = vpop.f32.mrb[0].mxu0
      %v9877 = vadd.f32 0.0, %v9876
      %v9878 = vpop.f32.mrb[0].mxu0
      %9879 = vmatprep.mubr.bf16.mxu0 0
      %9880 = vmatmul.mubr.bf16.gmra.mrb[0].mxu0 %v9750
      %v9881 = vpop.f32.mrb[0].mxu0
      %v9882 = vadd.f32 0.0, %v9881
      %v9883 = vpop.f32.mrb[0].mxu0
      %v9884 = vpop.f32.mrb[0].mxu0
      %v9885 = vadd.f32 0.0, %v9884
      %v9886 = vpop.f32.mrb[0].mxu0
      %9887 = vmatprep.mubr.bf16.mxu0 0
      %9888 = vmatmul.mubr.bf16.gmra.mrb[0].mxu0 %v9753
      %v9889 = vpop.f32.mrb[0].mxu0
      %v9890 = vadd.f32 0.0, %v9889
      %v9891 = vpop.f32.mrb[0].mxu0
      %v9892 = vpop.f32.mrb[0].mxu0
      %v9893 = vadd.f32 0.0, %v9892
      %v9894 = vpop.f32.mrb[0].mxu0
      %9895 = vmatprep.mubr.bf16.mxu0 0
      %9896 = vmatmul.mubr.bf16.gmra.mrb[0].mxu0 %v9756
      %v9897 = vpop.f32.mrb[0].mxu0
      %v9898 = vadd.f32 0.0, %v9897
      %v9899 = vpop.f32.mrb[0].mxu0
      %v9900 = vpop.f32.mrb[0].mxu0
      %v9901 = vadd.f32 0.0, %v9900
      %v9902 = vpop.f32.mrb[0].mxu0
      %9903 = vmatprep.mubr.bf16.mxu0 0
      %9904 = vmatmul.mubr.bf16.gmra.mrb[0].mxu0 %v9759
      %v9905 = vpop.f32.mrb[0].mxu0
      %v9906 = vadd.f32 0.0, %v9905
      %v9907 = vpop.f32.mrb[0].mxu0
      %v9908 = vpop.f32.mrb[0].mxu0
      %v9909 = vadd.f32 0.0, %v9908
      %v9910 = vpop.f32.mrb[0].mxu0
      %9911 = vmatprep.mubr.bf16.mxu0 0
      %9912 = vmatmul.mubr.bf16.gmra.mrb[0].mxu0 %v9762
      %v9913 = vpop.f32.mrb[0].mxu0
      %v9914 = vadd.f32 0.0, %v9913
      %v9915 = vpop.f32.mrb[0].mxu0
      %v9916 = vpop.f32.mrb[0].mxu0
      %v9917 = vadd.f32 0.0, %v9916
      %v9918 = vpop.f32.mrb[0].mxu0
      %9919 = vmatprep.mubr.bf16.mxu0 0
      %9920 = vmatmul.mubr.bf16.gmra.mrb[0].mxu0 %v9765
      %v9921 = vpop.f32.mrb[0].mxu0
      %v9922 = vadd.f32 0.0, %v9921
      %v9923 = vpop.f32.mrb[0].mxu0
      %v9924 = vpop.f32.mrb[0].mxu0
      %v9925 = vadd.f32 0.0, %v9924
      %v9926 = vpop.f32.mrb[0].mxu0
      %9927 = vdwg.mxu0
      %v9928 = vadd.f32 %v9558, %v9802
      %v9929 = vadd.f32 %v9559, %v9805
      %v9930 = vadd.f32 %v9560, %v9810
      %v9931 = vadd.f32 %v9561, %v9813
      %v9932 = vadd.f32 %v9562, %v9818
      %v9933 = vadd.f32 %v9563, %v9821
      %v9934 = vadd.f32 %v9564, %v9826
      %v9935 = vadd.f32 %v9565, %v9829
      %v9936 = vadd.f32 %v9566, %v9834
      %v9937 = vadd.f32 %v9567, %v9837
      %v9938 = vadd.f32 %v9568, %v9842
      %v9939 = vadd.f32 %v9569, %v9845
      %v9940 = vadd.f32 %v9570, %v9850
      %v9941 = vadd.f32 %v9571, %v9853
      %v9942 = vadd.f32 %v9572, %v9858
      %v9943 = vadd.f32 %v9573, %v9861
      %v9944 = vadd.f32 %v9574, %v9866
      %v9945 = vadd.f32 %v9575, %v9869
      %v9946 = vadd.f32 %v9576, %v9874
      %v9947 = vadd.f32 %v9577, %v9877
      %v9948 = vadd.f32 %v9578, %v9882
      %v9949 = vadd.f32 %v9579, %v9885
      %v9950 = vadd.f32 %v9580, %v9890
      %v9951 = vadd.f32 %v9581, %v9893
      %v9952 = vadd.f32 %v9582, %v9898
      %v9953 = vadd.f32 %v9583, %v9901
      %v9954 = vadd.f32 %v9584, %v9906
      %v9955 = vadd.f32 %v9585, %v9909
      %v9956 = vadd.f32 %v9586, %v9914
      %v9957 = vadd.f32 %v9587, %v9917
      %v9958 = vadd.f32 %v9588, %v9922
      %v9959 = vadd.f32 %v9589, %v9925
      %v9960 = vld [vmem:[%s9590] sm:$0xf]
      %v9961 = vld [vmem:[%s9590 + $0x4] sm:$0xf]
      %v9962 = vld [vmem:[%s9590 + $0x8] sm:$0x1]
      %v9963 = vld [vmem:[%s9590 + $0xc] sm:$0xf]
      %v9964 = vld [vmem:[%s9590 + $0x10] sm:$0xf]
      %v9965 = vld [vmem:[%s9590 + $0x14] sm:$0x1]
      %v9966 = vld [vmem:[%s9590 + $0x18] sm:$0xf]
      %v9967 = vld [vmem:[%s9590 + $0x1c] sm:$0xf]
      %v9968 = vld [vmem:[%s9590 + $0x20] sm:$0x1]
      %v9969 = vld [vmem:[%s9590 + $0x24] sm:$0xf]
      %v9970 = vld [vmem:[%s9590 + $0x28] sm:$0xf]
      %v9971 = vld [vmem:[%s9590 + $0x2c] sm:$0x1]
      %v9972 = vld [vmem:[%s9590 + $0x30] sm:$0xf]
      %v9973 = vld [vmem:[%s9590 + $0x34] sm:$0xf]
      %v9974 = vld [vmem:[%s9590 + $0x38] sm:$0x1]
      %v9975 = vld [vmem:[%s9590 + $0x3c] sm:$0xf]
      %v9976 = vld [vmem:[%s9590 + $0x40] sm:$0xf]
      %v9977 = vld [vmem:[%s9590 + $0x44] sm:$0x1]
      %v9978 = vld [vmem:[%s9590 + $0x48] sm:$0xf]
      %v9979 = vld [vmem:[%s9590 + $0x4c] sm:$0xf]
      %v9980 = vld [vmem:[%s9590 + $0x50] sm:$0x1]
      %v9981 = vld [vmem:[%s9590 + $0x54] sm:$0xf]
      %v9982 = vld [vmem:[%s9590 + $0x58] sm:$0xf]
      %v9983 = vld [vmem:[%s9590 + $0x5c] sm:$0x1]
      %v9984 = vld [vmem:[%s9590 + $0x60] sm:$0xf]
      %v9985 = vld [vmem:[%s9590 + $0x64] sm:$0xf]
      %v9986 = vld [vmem:[%s9590 + $0x68] sm:$0x1]
      %v9987 = vld [vmem:[%s9590 + $0x6c] sm:$0xf]
      %v9988 = vld [vmem:[%s9590 + $0x70] sm:$0xf]
      %v9989 = vld [vmem:[%s9590 + $0x74] sm:$0x1]
      %v9990 = vld [vmem:[%s9590 + $0x78] sm:$0xf]
      %v9991 = vld [vmem:[%s9590 + $0x7c] sm:$0xf]
      %v9992 = vld [vmem:[%s9590 + $0x80] sm:$0x1]
      %v9993 = vld [vmem:[%s9590 + $0x84] sm:$0xf]
      %v9994 = vld [vmem:[%s9590 + $0x88] sm:$0xf]
      %v9995 = vld [vmem:[%s9590 + $0x8c] sm:$0x1]
      %v9996 = vld [vmem:[%s9590 + $0x90] sm:$0xf]
      %v9997 = vld [vmem:[%s9590 + $0x94] sm:$0xf]
      %v9998 = vld [vmem:[%s9590 + $0x98] sm:$0x1]
      %v9999 = vld [vmem:[%s9590 + $0x9c] sm:$0xf]
      %v10000 = vld [vmem:[%s9590 + $0xa0] sm:$0xf]
      %v10001 = vld [vmem:[%s9590 + $0xa4] sm:$0x1]
      %v10002 = vld [vmem:[%s9590 + $0xa8] sm:$0xf]
      %v10003 = vld [vmem:[%s9590 + $0xac] sm:$0xf]
      %v10004 = vld [vmem:[%s9590 + $0xb0] sm:$0x1]
      %v10005 = vld [vmem:[%s9590 + $0xb4] sm:$0xf]
      %v10006 = vld [vmem:[%s9590 + $0xb8] sm:$0xf]
      %v10007 = vld [vmem:[%s9590 + $0xbc] sm:$0x1]
      %v10009 = vshrl.u32 %v9960, 16
      %v10011 = vrot.slane %v10009, 4
      %v10012 = vshll.u32 %v9960, 16
      %v10014 = vrot.slane %v10012, 5
      %v10015 = vor.u32 %v10011, %v10014
      %v10016 = vrot.slane %v10015, 4
      %v10018 = vshll.u32 %v9961, 16
      %v10020 = vrot.slane %v10018, 5
      %v10021 = vsel %vm999, %v10016, %v10020
      %v10022 = vshrl.u32 %v9961, 16
      %v10024 = vrot.slane %v10022, 4
      %v10025 = vor.u32 %v10024, %v10020
      %v10026 = vrot.slane %v10025, 4
      %v10028 = vshll.u32 %v9962, 16
      %v10030 = vrot.slane %v10028, 5
      %v10031 = vsel %vm999, %v10026, %v10030
      %v10033 = vshrl.u32 %v9963, 16
      %v10035 = vrot.slane %v10033, 4
      %v10036 = vshll.u32 %v9963, 16
      %v10038 = vrot.slane %v10036, 5
      %v10039 = vor.u32 %v10035, %v10038
      %v10040 = vrot.slane %v10039, 4
      %v10042 = vshll.u32 %v9964, 16
      %v10044 = vrot.slane %v10042, 5
      %v10045 = vsel %vm999, %v10040, %v10044
      %v10046 = vshrl.u32 %v9964, 16
      %v10048 = vrot.slane %v10046, 4
      %v10049 = vor.u32 %v10048, %v10044
      %v10050 = vrot.slane %v10049, 4
      %v10052 = vshll.u32 %v9965, 16
      %v10054 = vrot.slane %v10052, 5
      %v10055 = vsel %vm999, %v10050, %v10054
      %v10057 = vshrl.u32 %v9966, 16
      %v10059 = vrot.slane %v10057, 4
      %v10060 = vshll.u32 %v9966, 16
      %v10062 = vrot.slane %v10060, 5
      %v10063 = vor.u32 %v10059, %v10062
      %v10064 = vrot.slane %v10063, 4
      %v10066 = vshll.u32 %v9967, 16
      %v10068 = vrot.slane %v10066, 5
      %v10069 = vsel %vm999, %v10064, %v10068
      %v10070 = vshrl.u32 %v9967, 16
      %v10072 = vrot.slane %v10070, 4
      %v10073 = vor.u32 %v10072, %v10068
      %v10074 = vrot.slane %v10073, 4
      %v10076 = vshll.u32 %v9968, 16
      %v10078 = vrot.slane %v10076, 5
      %v10079 = vsel %vm999, %v10074, %v10078
      %v10081 = vshrl.u32 %v9969, 16
      %v10083 = vrot.slane %v10081, 4
      %v10084 = vshll.u32 %v9969, 16
      %v10086 = vrot.slane %v10084, 5
      %v10087 = vor.u32 %v10083, %v10086
      %v10088 = vrot.slane %v10087, 4
      %v10090 = vshll.u32 %v9970, 16
      %v10092 = vrot.slane %v10090, 5
      %v10093 = vsel %vm999, %v10088, %v10092
      %v10094 = vshrl.u32 %v9970, 16
      %v10096 = vrot.slane %v10094, 4
      %v10097 = vor.u32 %v10096, %v10092
      %v10098 = vrot.slane %v10097, 4
      %v10100 = vshll.u32 %v9971, 16
      %v10102 = vrot.slane %v10100, 5
      %v10103 = vsel %vm999, %v10098, %v10102
      %v10105 = vshrl.u32 %v9972, 16
      %v10107 = vrot.slane %v10105, 4
      %v10108 = vshll.u32 %v9972, 16
      %v10110 = vrot.slane %v10108, 5
      %v10111 = vor.u32 %v10107, %v10110
      %v10112 = vrot.slane %v10111, 4
      %v10114 = vshll.u32 %v9973, 16
      %v10116 = vrot.slane %v10114, 5
      %v10117 = vsel %vm999, %v10112, %v10116
      %v10118 = vshrl.u32 %v9973, 16
      %v10120 = vrot.slane %v10118, 4
      %v10121 = vor.u32 %v10120, %v10116
      %v10122 = vrot.slane %v10121, 4
      %v10124 = vshll.u32 %v9974, 16
      %v10126 = vrot.slane %v10124, 5
      %v10127 = vsel %vm999, %v10122, %v10126
      %v10129 = vshrl.u32 %v9975, 16
      %v10131 = vrot.slane %v10129, 4
      %v10132 = vshll.u32 %v9975, 16
      %v10134 = vrot.slane %v10132, 5
      %v10135 = vor.u32 %v10131, %v10134
      %v10136 = vrot.slane %v10135, 4
      %v10138 = vshll.u32 %v9976, 16
      %v10140 = vrot.slane %v10138, 5
      %v10141 = vsel %vm999, %v10136, %v10140
      %v10142 = vshrl.u32 %v9976, 16
      %v10144 = vrot.slane %v10142, 4
      %v10145 = vor.u32 %v10144, %v10140
      %v10146 = vrot.slane %v10145, 4
      %v10148 = vshll.u32 %v9977, 16
      %v10150 = vrot.slane %v10148, 5
      %v10151 = vsel %vm999, %v10146, %v10150
      %v10153 = vshrl.u32 %v9978, 16
      %v10155 = vrot.slane %v10153, 4
      %v10156 = vshll.u32 %v9978, 16
      %v10158 = vrot.slane %v10156, 5
      %v10159 = vor.u32 %v10155, %v10158
      %v10160 = vrot.slane %v10159, 4
      %v10162 = vshll.u32 %v9979, 16
      %v10164 = vrot.slane %v10162, 5
      %v10165 = vsel %vm999, %v10160, %v10164
      %v10166 = vshrl.u32 %v9979, 16
      %v10168 = vrot.slane %v10166, 4
      %v10169 = vor.u32 %v10168, %v10164
      %v10170 = vrot.slane %v10169, 4
      %v10172 = vshll.u32 %v9980, 16
      %v10174 = vrot.slane %v10172, 5
      %v10175 = vsel %vm999, %v10170, %v10174
      %v10177 = vshrl.u32 %v9981, 16
      %v10179 = vrot.slane %v10177, 4
      %v10180 = vshll.u32 %v9981, 16
      %v10182 = vrot.slane %v10180, 5
      %v10183 = vor.u32 %v10179, %v10182
      %v10184 = vrot.slane %v10183, 4
      %v10186 = vshll.u32 %v9982, 16
      %v10188 = vrot.slane %v10186, 5
      %v10189 = vsel %vm999, %v10184, %v10188
      %v10190 = vshrl.u32 %v9982, 16
      %v10192 = vrot.slane %v10190, 4
      %v10193 = vor.u32 %v10192, %v10188
      %v10194 = vrot.slane %v10193, 4
      %v10196 = vshll.u32 %v9983, 16
      %v10198 = vrot.slane %v10196, 5
      %v10199 = vsel %vm999, %v10194, %v10198
      %v10201 = vshrl.u32 %v9984, 16
      %v10203 = vrot.slane %v10201, 4
      %v10204 = vshll.u32 %v9984, 16
      %v10206 = vrot.slane %v10204, 5
      %v10207 = vor.u32 %v10203, %v10206
      %v10208 = vrot.slane %v10207, 4
      %v10210 = vshll.u32 %v9985, 16
      %v10212 = vrot.slane %v10210, 5
      %v10213 = vsel %vm999, %v10208, %v10212
      %v10214 = vshrl.u32 %v9985, 16
      %v10216 = vrot.slane %v10214, 4
      %v10217 = vor.u32 %v10216, %v10212
      %v10218 = vrot.slane %v10217, 4
      %v10220 = vshll.u32 %v9986, 16
      %v10222 = vrot.slane %v10220, 5
      %v10223 = vsel %vm999, %v10218, %v10222
      %v10225 = vshrl.u32 %v9987, 16
      %v10227 = vrot.slane %v10225, 4
      %v10228 = vshll.u32 %v9987, 16
      %v10230 = vrot.slane %v10228, 5
      %v10231 = vor.u32 %v10227, %v10230
      %v10232 = vrot.slane %v10231, 4
      %v10234 = vshll.u32 %v9988, 16
      %v10236 = vrot.slane %v10234, 5
      %v10237 = vsel %vm999, %v10232, %v10236
      %v10238 = vshrl.u32 %v9988, 16
      %v10240 = vrot.slane %v10238, 4
      %v10241 = vor.u32 %v10240, %v10236
      %v10242 = vrot.slane %v10241, 4
      %v10244 = vshll.u32 %v9989, 16
      %v10246 = vrot.slane %v10244, 5
      %v10247 = vsel %vm999, %v10242, %v10246
      %v10249 = vshrl.u32 %v9990, 16
      %v10251 = vrot.slane %v10249, 4
      %v10252 = vshll.u32 %v9990, 16
      %v10254 = vrot.slane %v10252, 5
      %v10255 = vor.u32 %v10251, %v10254
      %v10256 = vrot.slane %v10255, 4
      %v10258 = vshll.u32 %v9991, 16
      %v10260 = vrot.slane %v10258, 5
      %v10261 = vsel %vm999, %v10256, %v10260
      %v10262 = vshrl.u32 %v9991, 16
      %v10264 = vrot.slane %v10262, 4
      %v10265 = vor.u32 %v10264, %v10260
      %v10266 = vrot.slane %v10265, 4
      %v10268 = vshll.u32 %v9992, 16
      %v10270 = vrot.slane %v10268, 5
      %v10271 = vsel %vm999, %v10266, %v10270
      %v10273 = vshrl.u32 %v9993, 16
      %v10275 = vrot.slane %v10273, 4
      %v10276 = vshll.u32 %v9993, 16
      %v10278 = vrot.slane %v10276, 5
      %v10279 = vor.u32 %v10275, %v10278
      %v10280 = vrot.slane %v10279, 4
      %v10282 = vshll.u32 %v9994, 16
      %v10284 = vrot.slane %v10282, 5
      %v10285 = vsel %vm999, %v10280, %v10284
      %v10286 = vshrl.u32 %v9994, 16
      %v10288 = vrot.slane %v10286, 4
      %v10289 = vor.u32 %v10288, %v10284
      %v10290 = vrot.slane %v10289, 4
      %v10292 = vshll.u32 %v9995, 16
      %v10294 = vrot.slane %v10292, 5
      %v10295 = vsel %vm999, %v10290, %v10294
      %v10297 = vshrl.u32 %v9996, 16
      %v10299 = vrot.slane %v10297, 4
      %v10300 = vshll.u32 %v9996, 16
      %v10302 = vrot.slane %v10300, 5
      %v10303 = vor.u32 %v10299, %v10302
      %v10304 = vrot.slane %v10303, 4
      %v10306 = vshll.u32 %v9997, 16
      %v10308 = vrot.slane %v10306, 5
      %v10309 = vsel %vm999, %v10304, %v10308
      %v10310 = vshrl.u32 %v9997, 16
      %v10312 = vrot.slane %v10310, 4
      %v10313 = vor.u32 %v10312, %v10308
      %v10314 = vrot.slane %v10313, 4
      %v10316 = vshll.u32 %v9998, 16
      %v10318 = vrot.slane %v10316, 5
      %v10319 = vsel %vm999, %v10314, %v10318
      %v10321 = vshrl.u32 %v9999, 16
      %v10323 = vrot.slane %v10321, 4
      %v10324 = vshll.u32 %v9999, 16
      %v10326 = vrot.slane %v10324, 5
      %v10327 = vor.u32 %v10323, %v10326
      %v10328 = vrot.slane %v10327, 4
      %v10330 = vshll.u32 %v10000, 16
      %v10332 = vrot.slane %v10330, 5
      %v10333 = vsel %vm999, %v10328, %v10332
      %v10334 = vshrl.u32 %v10000, 16
      %v10336 = vrot.slane %v10334, 4
      %v10337 = vor.u32 %v10336, %v10332
      %v10338 = vrot.slane %v10337, 4
      %v10340 = vshll.u32 %v10001, 16
      %v10342 = vrot.slane %v10340, 5
      %v10343 = vsel %vm999, %v10338, %v10342
      %v10345 = vshrl.u32 %v10002, 16
      %v10347 = vrot.slane %v10345, 4
      %v10348 = vshll.u32 %v10002, 16
      %v10350 = vrot.slane %v10348, 5
      %v10351 = vor.u32 %v10347, %v10350
      %v10352 = vrot.slane %v10351, 4
      %v10354 = vshll.u32 %v10003, 16
      %v10356 = vrot.slane %v10354, 5
      %v10357 = vsel %vm999, %v10352, %v10356
      %v10358 = vshrl.u32 %v10003, 16
      %v10360 = vrot.slane %v10358, 4
      %v10361 = vor.u32 %v10360, %v10356
      %v10362 = vrot.slane %v10361, 4
      %v10364 = vshll.u32 %v10004, 16
      %v10366 = vrot.slane %v10364, 5
      %v10367 = vsel %vm999, %v10362, %v10366
      %v10369 = vshrl.u32 %v10005, 16
      %v10371 = vrot.slane %v10369, 4
      %v10372 = vshll.u32 %v10005, 16
      %v10374 = vrot.slane %v10372, 5
      %v10375 = vor.u32 %v10371, %v10374
      %v10376 = vrot.slane %v10375, 4
      %v10378 = vshll.u32 %v10006, 16
      %v10380 = vrot.slane %v10378, 5
      %v10381 = vsel %vm999, %v10376, %v10380
      %v10382 = vshrl.u32 %v10006, 16
      %v10384 = vrot.slane %v10382, 4
      %v10385 = vor.u32 %v10384, %v10380
      %v10386 = vrot.slane %v10385, 4
      %v10388 = vshll.u32 %v10007, 16
      %v10390 = vrot.slane %v10388, 5
      %v10391 = vsel %vm999, %v10386, %v10390
      %v10392 = vld [vmem:[%s6 + $0x70] sm:$0xf]
      %v10393 = vld [vmem:[%s6 + $0x74] sm:$0xf]
      %v10394 = vld [vmem:[%s6 + $0x78] sm:$0xf]
      %v10395 = vld [vmem:[%s6 + $0x7c] sm:$0xf]
      %v10396 = vunpack.c.l.b16 %v10021
      %v10397 = vunpack.c.l.b16 %v10031
      %v10398 = vunpack.c.l.b16 %v10045
      %v10399 = vunpack.c.l.b16 %v10055
      %v10400 = vunpack.c.l.b16 %v10069
      %v10401 = vunpack.c.l.b16 %v10079
      %v10402 = vunpack.c.l.b16 %v10093
      %v10403 = vunpack.c.l.b16 %v10103
      %v10404 = vunpack.c.l.b16 %v10117
      %v10405 = vunpack.c.l.b16 %v10127
      %v10406 = vunpack.c.l.b16 %v10141
      %v10407 = vunpack.c.l.b16 %v10151
      %v10408 = vunpack.c.l.b16 %v10165
      %v10409 = vunpack.c.l.b16 %v10175
      %v10410 = vunpack.c.l.b16 %v10189
      %v10411 = vunpack.c.l.b16 %v10199
      %v10412 = vunpack.c.l.b16 %v10213
      %v10413 = vunpack.c.l.b16 %v10223
      %v10414 = vunpack.c.l.b16 %v10237
      %v10415 = vunpack.c.l.b16 %v10247
      %v10416 = vunpack.c.l.b16 %v10261
      %v10417 = vunpack.c.l.b16 %v10271
      %v10418 = vunpack.c.l.b16 %v10285
      %v10419 = vunpack.c.l.b16 %v10295
      %v10420 = vunpack.c.l.b16 %v10309
      %v10421 = vunpack.c.l.b16 %v10319
      %v10422 = vunpack.c.l.b16 %v10333
      %v10423 = vunpack.c.l.b16 %v10343
      %v10424 = vunpack.c.l.b16 %v10357
      %v10425 = vunpack.c.l.b16 %v10367
      %v10426 = vunpack.c.l.b16 %v10381
      %v10427 = vunpack.c.l.b16 %v10391
      %v10428 = vpack.c.b16 %v10397, %v10396
      %v10429 = vpack.c.b16 %v10399, %v10398
      %v10430 = vpack.c.b16 %v10401, %v10400
      %v10431 = vpack.c.b16 %v10403, %v10402
      %v10432 = vpack.c.b16 %v10405, %v10404
      %v10433 = vpack.c.b16 %v10407, %v10406
      %v10434 = vpack.c.b16 %v10409, %v10408
      %v10435 = vpack.c.b16 %v10411, %v10410
      %v10436 = vpack.c.b16 %v10413, %v10412
      %v10437 = vpack.c.b16 %v10415, %v10414
      %v10438 = vpack.c.b16 %v10417, %v10416
      %v10439 = vpack.c.b16 %v10419, %v10418
      %v10440 = vpack.c.b16 %v10421, %v10420
      %v10441 = vpack.c.b16 %v10423, %v10422
      %v10442 = vpack.c.b16 %v10425, %v10424
      %v10443 = vpack.c.b16 %v10427, %v10426
      %v10448 = vunpack.c.l.b16 %v10392
      %v10449 = vunpack.c.l.b16 %v10393
      %v10450 = vunpack.c.l.b16 %v10394
      %v10451 = vunpack.c.l.b16 %v10395
      %v10452 = vpack.c.b16 %v10449, %v10448
      %v10453 = vpack.c.b16 %v10451, %v10450
      %v10457 = vsel %vm6781, %v10428, 0
      %v10460 = vsel %vm6781, %v10429, 0
      %v10463 = vsel %vm6781, %v10430, 0
      %v10466 = vsel %vm6781, %v10431, 0
      %v10469 = vsel %vm6781, %v10432, 0
      %v10472 = vsel %vm6781, %v10433, 0
      %v10475 = vsel %vm6781, %v10434, 0
      %v10478 = vsel %vm6781, %v10435, 0
      %v10481 = vsel %vm6781, %v10436, 0
      %v10484 = vsel %vm6781, %v10437, 0
      %v10487 = vsel %vm6781, %v10438, 0
      %v10490 = vsel %vm6781, %v10439, 0
      %v10493 = vsel %vm6781, %v10440, 0
      %v10496 = vsel %vm6781, %v10441, 0
      %v10499 = vsel %vm6781, %v10442, 0
      %v10502 = vsel %vm6781, %v10443, 0
      %10504 = vmatprep.subr.bf16.mxu0 0
      %10505 = vmatpush1.bf16.msra.mxu0 %v10452
      %10506 = vmatprep.subr.bf16.mxu0 0
      %10507 = vmatpush1.bf16.msra.mxu0 %v10453
      %10508 = vmatprep.subr.bf16.mxu0 0
      %10509 = vmatpush1.bf16.msra.mxu0 0
      %10510 = vmatprep.subr.bf16.mxu0 0
      %10511 = vmatpush1.bf16.msra.mxu0 0
      %10512 = vmatprep.subr.bf16.mxu0 0
      %10513 = vmatpush1.bf16.msra.mxu0 0
      %10514 = vmatprep.subr.bf16.mxu0 0
      %10515 = vmatpush1.bf16.msra.mxu0 0
      %10516 = vmatprep.subr.bf16.mxu0 0
      %10517 = vmatpush1.bf16.msra.mxu0 0
      %10518 = vmatprep.subr.bf16.mxu0 0
      %10519 = vmatpush1.bf16.msra.mxu0 0
      %10520 = vmatprep.subr.bf16.mxu0 0
      %10521 = vmatpush1.bf16.msra.mxu0 0
      %10522 = vmatprep.subr.bf16.mxu0 0
      %10523 = vmatpush1.bf16.msra.mxu0 0
      %10524 = vmatprep.subr.bf16.mxu0 0
      %10525 = vmatpush1.bf16.msra.mxu0 0
      %10526 = vmatprep.subr.bf16.mxu0 0
      %10527 = vmatpush1.bf16.msra.mxu0 0
      %10528 = vmatprep.subr.bf16.mxu0 0
      %10529 = vmatpush1.bf16.msra.mxu0 0
      %10530 = vmatprep.subr.bf16.mxu0 0
      %10531 = vmatpush1.bf16.msra.mxu0 0
      %10532 = vmatprep.subr.bf16.mxu0 0
      %10533 = vmatpush1.bf16.msra.mxu0 0
      %10534 = vmatprep.subr.bf16.mxu0 0
      %10535 = vmatpush1.bf16.msra.mxu0 0
      %10536 = vmatprep.mubr.bf16.mxu0 0
      %10537 = vmatmul.mubr.bf16.gmra.mrb[0].mxu0 %v10457
      %v10538 = vpop.f32.mrb[0].mxu0
      %v10539 = vadd.f32 0.0, %v10538
      %v10540 = vpop.f32.mrb[0].mxu0
      %v10541 = vpop.f32.mrb[0].mxu0
      %v10542 = vadd.f32 0.0, %v10541
      %v10543 = vpop.f32.mrb[0].mxu0
      %10544 = vmatprep.mubr.bf16.mxu0 0
      %10545 = vmatmul.mubr.bf16.gmra.mrb[0].mxu0 %v10460
      %v10546 = vpop.f32.mrb[0].mxu0
      %v10547 = vadd.f32 0.0, %v10546
      %v10548 = vpop.f32.mrb[0].mxu0
      %v10549 = vpop.f32.mrb[0].mxu0
      %v10550 = vadd.f32 0.0, %v10549
      %v10551 = vpop.f32.mrb[0].mxu0
      %10552 = vmatprep.mubr.bf16.mxu0 0
      %10553 = vmatmul.mubr.bf16.gmra.mrb[0].mxu0 %v10463
      %v10554 = vpop.f32.mrb[0].mxu0
      %v10555 = vadd.f32 0.0, %v10554
      %v10556 = vpop.f32.mrb[0].mxu0
      %v10557 = vpop.f32.mrb[0].mxu0
      %v10558 = vadd.f32 0.0, %v10557
      %v10559 = vpop.f32.mrb[0].mxu0
      %10560 = vmatprep.mubr.bf16.mxu0 0
      %10561 = vmatmul.mubr.bf16.gmra.mrb[0].mxu0 %v10466
      %v10562 = vpop.f32.mrb[0].mxu0
      %v10563 = vadd.f32 0.0, %v10562
      %v10564 = vpop.f32.mrb[0].mxu0
      %v10565 = vpop.f32.mrb[0].mxu0
      %v10566 = vadd.f32 0.0, %v10565
      %v10567 = vpop.f32.mrb[0].mxu0
      %10568 = vmatprep.mubr.bf16.mxu0 0
      %10569 = vmatmul.mubr.bf16.gmra.mrb[0].mxu0 %v10469
      %v10570 = vpop.f32.mrb[0].mxu0
      %v10571 = vadd.f32 0.0, %v10570
      %v10572 = vpop.f32.mrb[0].mxu0
      %v10573 = vpop.f32.mrb[0].mxu0
      %v10574 = vadd.f32 0.0, %v10573
      %v10575 = vpop.f32.mrb[0].mxu0
      %10576 = vmatprep.mubr.bf16.mxu0 0
      %10577 = vmatmul.mubr.bf16.gmra.mrb[0].mxu0 %v10472
      %v10578 = vpop.f32.mrb[0].mxu0
      %v10579 = vadd.f32 0.0, %v10578
      %v10580 = vpop.f32.mrb[0].mxu0
      %v10581 = vpop.f32.mrb[0].mxu0
      %v10582 = vadd.f32 0.0, %v10581
      %v10583 = vpop.f32.mrb[0].mxu0
      %10584 = vmatprep.mubr.bf16.mxu0 0
      %10585 = vmatmul.mubr.bf16.gmra.mrb[0].mxu0 %v10475
      %v10586 = vpop.f32.mrb[0].mxu0
      %v10587 = vadd.f32 0.0, %v10586
      %v10588 = vpop.f32.mrb[0].mxu0
      %v10589 = vpop.f32.mrb[0].mxu0
      %v10590 = vadd.f32 0.0, %v10589
      %v10591 = vpop.f32.mrb[0].mxu0
      %10592 = vmatprep.mubr.bf16.mxu0 0
      %10593 = vmatmul.mubr.bf16.gmra.mrb[0].mxu0 %v10478
      %v10594 = vpop.f32.mrb[0].mxu0
      %v10595 = vadd.f32 0.0, %v10594
      %v10596 = vpop.f32.mrb[0].mxu0
      %v10597 = vpop.f32.mrb[0].mxu0
      %v10598 = vadd.f32 0.0, %v10597
      %v10599 = vpop.f32.mrb[0].mxu0
      %10600 = vmatprep.mubr.bf16.mxu0 0
      %10601 = vmatmul.mubr.bf16.gmra.mrb[0].mxu0 %v10481
      %v10602 = vpop.f32.mrb[0].mxu0
      %v10603 = vadd.f32 0.0, %v10602
      %v10604 = vpop.f32.mrb[0].mxu0
      %v10605 = vpop.f32.mrb[0].mxu0
      %v10606 = vadd.f32 0.0, %v10605
      %v10607 = vpop.f32.mrb[0].mxu0
      %10608 = vmatprep.mubr.bf16.mxu0 0
      %10609 = vmatmul.mubr.bf16.gmra.mrb[0].mxu0 %v10484
      %v10610 = vpop.f32.mrb[0].mxu0
      %v10611 = vadd.f32 0.0, %v10610
      %v10612 = vpop.f32.mrb[0].mxu0
      %v10613 = vpop.f32.mrb[0].mxu0
      %v10614 = vadd.f32 0.0, %v10613
      %v10615 = vpop.f32.mrb[0].mxu0
      %10616 = vmatprep.mubr.bf16.mxu0 0
      %10617 = vmatmul.mubr.bf16.gmra.mrb[0].mxu0 %v10487
      %v10618 = vpop.f32.mrb[0].mxu0
      %v10619 = vadd.f32 0.0, %v10618
      %v10620 = vpop.f32.mrb[0].mxu0
      %v10621 = vpop.f32.mrb[0].mxu0
      %v10622 = vadd.f32 0.0, %v10621
      %v10623 = vpop.f32.mrb[0].mxu0
      %10624 = vmatprep.mubr.bf16.mxu0 0
      %10625 = vmatmul.mubr.bf16.gmra.mrb[0].mxu0 %v10490
      %v10626 = vpop.f32.mrb[0].mxu0
      %v10627 = vadd.f32 0.0, %v10626
      %v10628 = vpop.f32.mrb[0].mxu0
      %v10629 = vpop.f32.mrb[0].mxu0
      %v10630 = vadd.f32 0.0, %v10629
      %v10631 = vpop.f32.mrb[0].mxu0
      %10632 = vmatprep.mubr.bf16.mxu0 0
      %10633 = vmatmul.mubr.bf16.gmra.mrb[0].mxu0 %v10493
      %v10634 = vpop.f32.mrb[0].mxu0
      %v10635 = vadd.f32 0.0, %v10634
      %v10636 = vpop.f32.mrb[0].mxu0
      %v10637 = vpop.f32.mrb[0].mxu0
      %v10638 = vadd.f32 0.0, %v10637
      %v10639 = vpop.f32.mrb[0].mxu0
      %10640 = vmatprep.mubr.bf16.mxu0 0
      %10641 = vmatmul.mubr.bf16.gmra.mrb[0].mxu0 %v10496
      %v10642 = vpop.f32.mrb[0].mxu0
      %v10643 = vadd.f32 0.0, %v10642
      %v10644 = vpop.f32.mrb[0].mxu0
      %v10645 = vpop.f32.mrb[0].mxu0
      %v10646 = vadd.f32 0.0, %v10645
      %v10647 = vpop.f32.mrb[0].mxu0
      %10648 = vmatprep.mubr.bf16.mxu0 0
      %10649 = vmatmul.mubr.bf16.gmra.mrb[0].mxu0 %v10499
      %v10650 = vpop.f32.mrb[0].mxu0
      %v10651 = vadd.f32 0.0, %v10650
      %v10652 = vpop.f32.mrb[0].mxu0
      %v10653 = vpop.f32.mrb[0].mxu0
      %v10654 = vadd.f32 0.0, %v10653
      %v10655 = vpop.f32.mrb[0].mxu0
      %10656 = vmatprep.mubr.bf16.mxu0 0
      %10657 = vmatmul.mubr.bf16.gmra.mrb[0].mxu0 %v10502
      %v10658 = vpop.f32.mrb[0].mxu0
      %v10659 = vadd.f32 0.0, %v10658
      %v10660 = vpop.f32.mrb[0].mxu0
      %v10661 = vpop.f32.mrb[0].mxu0
      %v10662 = vadd.f32 0.0, %v10661
      %v10663 = vpop.f32.mrb[0].mxu0
      %10664 = vdwg.mxu0
      %v10665 = vadd.f32 %v9928, %v10539
      %v10666 = vadd.f32 %v9929, %v10542
      %v10667 = vadd.f32 %v9930, %v10547
      %v10668 = vadd.f32 %v9931, %v10550
      %v10669 = vadd.f32 %v9932, %v10555
      %v10670 = vadd.f32 %v9933, %v10558
      %v10671 = vadd.f32 %v9934, %v10563
      %v10672 = vadd.f32 %v9935, %v10566
      %v10673 = vadd.f32 %v9936, %v10571
      %v10674 = vadd.f32 %v9937, %v10574
      %v10675 = vadd.f32 %v9938, %v10579
      %v10676 = vadd.f32 %v9939, %v10582
      %v10677 = vadd.f32 %v9940, %v10587
      %v10678 = vadd.f32 %v9941, %v10590
      %v10679 = vadd.f32 %v9942, %v10595
      %v10680 = vadd.f32 %v9943, %v10598
      %v10681 = vadd.f32 %v9944, %v10603
      %v10682 = vadd.f32 %v9945, %v10606
      %v10683 = vadd.f32 %v9946, %v10611
      %v10684 = vadd.f32 %v9947, %v10614
      %v10685 = vadd.f32 %v9948, %v10619
      %v10686 = vadd.f32 %v9949, %v10622
      %v10687 = vadd.f32 %v9950, %v10627
      %v10688 = vadd.f32 %v9951, %v10630
      %v10689 = vadd.f32 %v9952, %v10635
      %v10690 = vadd.f32 %v9953, %v10638
      %v10691 = vadd.f32 %v9954, %v10643
      %v10692 = vadd.f32 %v9955, %v10646
      %v10693 = vadd.f32 %v9956, %v10651
      %v10694 = vadd.f32 %v9957, %v10654
      %v10695 = vadd.f32 %v9958, %v10659
      %v10696 = vadd.f32 %v9959, %v10662
      %v10697 = vld [vmem:[%s9590] sm:$0xe]
      %v10698 = vld [vmem:[%s9590 + $0xc] sm:$0xe]
      %v10699 = vld [vmem:[%s9590 + $0x18] sm:$0xe]
      %v10700 = vld [vmem:[%s9590 + $0x24] sm:$0xe]
      %v10701 = vld [vmem:[%s9590 + $0x30] sm:$0xe]
      %v10702 = vld [vmem:[%s9590 + $0x3c] sm:$0xe]
      %v10703 = vld [vmem:[%s9590 + $0x48] sm:$0xe]
      %v10704 = vld [vmem:[%s9590 + $0x54] sm:$0xe]
      %v10705 = vld [vmem:[%s9590 + $0x60] sm:$0xe]
      %v10706 = vld [vmem:[%s9590 + $0x6c] sm:$0xe]
      %v10707 = vld [vmem:[%s9590 + $0x78] sm:$0xe]
      %v10708 = vld [vmem:[%s9590 + $0x84] sm:$0xe]
      %v10709 = vld [vmem:[%s9590 + $0x90] sm:$0xe]
      %v10710 = vld [vmem:[%s9590 + $0x9c] sm:$0xe]
      %v10711 = vld [vmem:[%s9590 + $0xa8] sm:$0xe]
      %v10712 = vld [vmem:[%s9590 + $0xb4] sm:$0xe]
      %v10761 = vrot.slane %v10697, 5
      %v10762 = vrot.slane %v10761, 4
      %v10763 = vrot.slane %v9961, 5
      %v10764 = vsel %vm2037, %v10762, %v10763
      %v10765 = vrot.slane %v10763, 4
      %v10766 = vrot.slane %v9962, 5
      %v10767 = vsel %vm2037, %v10765, %v10766
      %v10768 = vrot.slane %v10698, 5
      %v10769 = vrot.slane %v10768, 4
      %v10770 = vrot.slane %v9964, 5
      %v10771 = vsel %vm2037, %v10769, %v10770
      %v10772 = vrot.slane %v10770, 4
      %v10773 = vrot.slane %v9965, 5
      %v10774 = vsel %vm2037, %v10772, %v10773
      %v10775 = vrot.slane %v10699, 5
      %v10776 = vrot.slane %v10775, 4
      %v10777 = vrot.slane %v9967, 5
      %v10778 = vsel %vm2037, %v10776, %v10777
      %v10779 = vrot.slane %v10777, 4
      %v10780 = vrot.slane %v9968, 5
      %v10781 = vsel %vm2037, %v10779, %v10780
      %v10782 = vrot.slane %v10700, 5
      %v10783 = vrot.slane %v10782, 4
      %v10784 = vrot.slane %v9970, 5
      %v10785 = vsel %vm2037, %v10783, %v10784
      %v10786 = vrot.slane %v10784, 4
      %v10787 = vrot.slane %v9971, 5
      %v10788 = vsel %vm2037, %v10786, %v10787
      %v10789 = vrot.slane %v10701, 5
      %v10790 = vrot.slane %v10789, 4
      %v10791 = vrot.slane %v9973, 5
      %v10792 = vsel %vm2037, %v10790, %v10791
      %v10793 = vrot.slane %v10791, 4
      %v10794 = vrot.slane %v9974, 5
      %v10795 = vsel %vm2037, %v10793, %v10794
      %v10796 = vrot.slane %v10702, 5
      %v10797 = vrot.slane %v10796, 4
      %v10798 = vrot.slane %v9976, 5
      %v10799 = vsel %vm2037, %v10797, %v10798
      %v10800 = vrot.slane %v10798, 4
      %v10801 = vrot.slane %v9977, 5
      %v10802 = vsel %vm2037, %v10800, %v10801
      %v10803 = vrot.slane %v10703, 5
      %v10804 = vrot.slane %v10803, 4
      %v10805 = vrot.slane %v9979, 5
      %v10806 = vsel %vm2037, %v10804, %v10805
      %v10807 = vrot.slane %v10805, 4
      %v10808 = vrot.slane %v9980, 5
      %v10809 = vsel %vm2037, %v10807, %v10808
      %v10810 = vrot.slane %v10704, 5
      %v10811 = vrot.slane %v10810, 4
      %v10812 = vrot.slane %v9982, 5
      %v10813 = vsel %vm2037, %v10811, %v10812
      %v10814 = vrot.slane %v10812, 4
      %v10815 = vrot.slane %v9983, 5
      %v10816 = vsel %vm2037, %v10814, %v10815
      %v10817 = vrot.slane %v10705, 5
      %v10818 = vrot.slane %v10817, 4
      %v10819 = vrot.slane %v9985, 5
      %v10820 = vsel %vm2037, %v10818, %v10819
      %v10821 = vrot.slane %v10819, 4
      %v10822 = vrot.slane %v9986, 5
      %v10823 = vsel %vm2037, %v10821, %v10822
      %v10824 = vrot.slane %v10706, 5
      %v10825 = vrot.slane %v10824, 4
      %v10826 = vrot.slane %v9988, 5
      %v10827 = vsel %vm2037, %v10825, %v10826
      %v10828 = vrot.slane %v10826, 4
      %v10829 = vrot.slane %v9989, 5
      %v10830 = vsel %vm2037, %v10828, %v10829
      %v10831 = vrot.slane %v10707, 5
      %v10832 = vrot.slane %v10831, 4
      %v10833 = vrot.slane %v9991, 5
      %v10834 = vsel %vm2037, %v10832, %v10833
      %v10835 = vrot.slane %v10833, 4
      %v10836 = vrot.slane %v9992, 5
      %v10837 = vsel %vm2037, %v10835, %v10836
      %v10838 = vrot.slane %v10708, 5
      %v10839 = vrot.slane %v10838, 4
      %v10840 = vrot.slane %v9994, 5
      %v10841 = vsel %vm2037, %v10839, %v10840
      %v10842 = vrot.slane %v10840, 4
      %v10843 = vrot.slane %v9995, 5
      %v10844 = vsel %vm2037, %v10842, %v10843
      %v10845 = vrot.slane %v10709, 5
      %v10846 = vrot.slane %v10845, 4
      %v10847 = vrot.slane %v9997, 5
      %v10848 = vsel %vm2037, %v10846, %v10847
      %v10849 = vrot.slane %v10847, 4
      %v10850 = vrot.slane %v9998, 5
      %v10851 = vsel %vm2037, %v10849, %v10850
      %v10852 = vrot.slane %v10710, 5
      %v10853 = vrot.slane %v10852, 4
      %v10854 = vrot.slane %v10000, 5
      %v10855 = vsel %vm2037, %v10853, %v10854
      %v10856 = vrot.slane %v10854, 4
      %v10857 = vrot.slane %v10001, 5
      %v10858 = vsel %vm2037, %v10856, %v10857
      %v10859 = vrot.slane %v10711, 5
      %v10860 = vrot.slane %v10859, 4
      %v10861 = vrot.slane %v10003, 5
      %v10862 = vsel %vm2037, %v10860, %v10861
      %v10863 = vrot.slane %v10861, 4
      %v10864 = vrot.slane %v10004, 5
      %v10865 = vsel %vm2037, %v10863, %v10864
      %v10866 = vrot.slane %v10712, 5
      %v10867 = vrot.slane %v10866, 4
      %v10868 = vrot.slane %v10006, 5
      %v10869 = vsel %vm2037, %v10867, %v10868
      %v10870 = vrot.slane %v10868, 4
      %v10871 = vrot.slane %v10007, 5
      %v10872 = vsel %vm2037, %v10870, %v10871
      %v10873 = vld [vmem:[%s6 + $0x80] sm:$0xf]
      %v10874 = vld [vmem:[%s6 + $0x84] sm:$0xf]
      %v10875 = vld [vmem:[%s6 + $0x88] sm:$0xf]
      %v10876 = vld [vmem:[%s6 + $0x8c] sm:$0xf]
      %v10877 = vunpack.c.l.b16 %v10764
      %v10878 = vunpack.c.l.b16 %v10767
      %v10879 = vunpack.c.l.b16 %v10771
      %v10880 = vunpack.c.l.b16 %v10774
      %v10881 = vunpack.c.l.b16 %v10778
      %v10882 = vunpack.c.l.b16 %v10781
      %v10883 = vunpack.c.l.b16 %v10785
      %v10884 = vunpack.c.l.b16 %v10788
      %v10885 = vunpack.c.l.b16 %v10792
      %v10886 = vunpack.c.l.b16 %v10795
      %v10887 = vunpack.c.l.b16 %v10799
      %v10888 = vunpack.c.l.b16 %v10802
      %v10889 = vunpack.c.l.b16 %v10806
      %v10890 = vunpack.c.l.b16 %v10809
      %v10891 = vunpack.c.l.b16 %v10813
      %v10892 = vunpack.c.l.b16 %v10816
      %v10893 = vunpack.c.l.b16 %v10820
      %v10894 = vunpack.c.l.b16 %v10823
      %v10895 = vunpack.c.l.b16 %v10827
      %v10896 = vunpack.c.l.b16 %v10830
      %v10897 = vunpack.c.l.b16 %v10834
      %v10898 = vunpack.c.l.b16 %v10837
      %v10899 = vunpack.c.l.b16 %v10841
      %v10900 = vunpack.c.l.b16 %v10844
      %v10901 = vunpack.c.l.b16 %v10848
      %v10902 = vunpack.c.l.b16 %v10851
      %v10903 = vunpack.c.l.b16 %v10855
      %v10904 = vunpack.c.l.b16 %v10858
      %v10905 = vunpack.c.l.b16 %v10862
      %v10906 = vunpack.c.l.b16 %v10865
      %v10907 = vunpack.c.l.b16 %v10869
      %v10908 = vunpack.c.l.b16 %v10872
      %v10909 = vpack.c.b16 %v10878, %v10877
      %v10910 = vpack.c.b16 %v10880, %v10879
      %v10911 = vpack.c.b16 %v10882, %v10881
      %v10912 = vpack.c.b16 %v10884, %v10883
      %v10913 = vpack.c.b16 %v10886, %v10885
      %v10914 = vpack.c.b16 %v10888, %v10887
      %v10915 = vpack.c.b16 %v10890, %v10889
      %v10916 = vpack.c.b16 %v10892, %v10891
      %v10917 = vpack.c.b16 %v10894, %v10893
      %v10918 = vpack.c.b16 %v10896, %v10895
      %v10919 = vpack.c.b16 %v10898, %v10897
      %v10920 = vpack.c.b16 %v10900, %v10899
      %v10921 = vpack.c.b16 %v10902, %v10901
      %v10922 = vpack.c.b16 %v10904, %v10903
      %v10923 = vpack.c.b16 %v10906, %v10905
      %v10924 = vpack.c.b16 %v10908, %v10907
      %v10929 = vunpack.c.l.b16 %v10873
      %v10930 = vunpack.c.l.b16 %v10874
      %v10931 = vunpack.c.l.b16 %v10875
      %v10932 = vunpack.c.l.b16 %v10876
      %v10933 = vpack.c.b16 %v10930, %v10929
      %v10934 = vpack.c.b16 %v10932, %v10931
      %v10938 = vsel %vm6781, %v10909, 0
      %v10941 = vsel %vm6781, %v10910, 0
      %v10944 = vsel %vm6781, %v10911, 0
      %v10947 = vsel %vm6781, %v10912, 0
      %v10950 = vsel %vm6781, %v10913, 0
      %v10953 = vsel %vm6781, %v10914, 0
      %v10956 = vsel %vm6781, %v10915, 0
      %v10959 = vsel %vm6781, %v10916, 0
      %v10962 = vsel %vm6781, %v10917, 0
      %v10965 = vsel %vm6781, %v10918, 0
      %v10968 = vsel %vm6781, %v10919, 0
      %v10971 = vsel %vm6781, %v10920, 0
      %v10974 = vsel %vm6781, %v10921, 0
      %v10977 = vsel %vm6781, %v10922, 0
      %v10980 = vsel %vm6781, %v10923, 0
      %v10983 = vsel %vm6781, %v10924, 0
      %10985 = vmatprep.subr.bf16.mxu0 0
      %10986 = vmatpush1.bf16.msra.mxu0 %v10933
      %10987 = vmatprep.subr.bf16.mxu0 0
      %10988 = vmatpush1.bf16.msra.mxu0 %v10934
      %10989 = vmatprep.subr.bf16.mxu0 0
      %10990 = vmatpush1.bf16.msra.mxu0 0
      %10991 = vmatprep.subr.bf16.mxu0 0
      %10992 = vmatpush1.bf16.msra.mxu0 0
      %10993 = vmatprep.subr.bf16.mxu0 0
      %10994 = vmatpush1.bf16.msra.mxu0 0
      %10995 = vmatprep.subr.bf16.mxu0 0
      %10996 = vmatpush1.bf16.msra.mxu0 0
      %10997 = vmatprep.subr.bf16.mxu0 0
      %10998 = vmatpush1.bf16.msra.mxu0 0
      %10999 = vmatprep.subr.bf16.mxu0 0
      %11000 = vmatpush1.bf16.msra.mxu0 0
      %11001 = vmatprep.subr.bf16.mxu0 0
      %11002 = vmatpush1.bf16.msra.mxu0 0
      %11003 = vmatprep.subr.bf16.mxu0 0
      %11004 = vmatpush1.bf16.msra.mxu0 0
      %11005 = vmatprep.subr.bf16.mxu0 0
      %11006 = vmatpush1.bf16.msra.mxu0 0
      %11007 = vmatprep.subr.bf16.mxu0 0
      %11008 = vmatpush1.bf16.msra.mxu0 0
      %11009 = vmatprep.subr.bf16.mxu0 0
      %11010 = vmatpush1.bf16.msra.mxu0 0
      %11011 = vmatprep.subr.bf16.mxu0 0
      %11012 = vmatpush1.bf16.msra.mxu0 0
      %11013 = vmatprep.subr.bf16.mxu0 0
      %11014 = vmatpush1.bf16.msra.mxu0 0
      %11015 = vmatprep.subr.bf16.mxu0 0
      %11016 = vmatpush1.bf16.msra.mxu0 0
      %11017 = vmatprep.mubr.bf16.mxu0 0
      %11018 = vmatmul.mubr.bf16.gmra.mrb[0].mxu0 %v10938
      %v11019 = vpop.f32.mrb[0].mxu0
      %v11020 = vadd.f32 0.0, %v11019
      %v11021 = vpop.f32.mrb[0].mxu0
      %v11022 = vpop.f32.mrb[0].mxu0
      %v11023 = vadd.f32 0.0, %v11022
      %v11024 = vpop.f32.mrb[0].mxu0
      %11025 = vmatprep.mubr.bf16.mxu0 0
      %11026 = vmatmul.mubr.bf16.gmra.mrb[0].mxu0 %v10941
      %v11027 = vpop.f32.mrb[0].mxu0
      %v11028 = vadd.f32 0.0, %v11027
      %v11029 = vpop.f32.mrb[0].mxu0
      %v11030 = vpop.f32.mrb[0].mxu0
      %v11031 = vadd.f32 0.0, %v11030
      %v11032 = vpop.f32.mrb[0].mxu0
      %11033 = vmatprep.mubr.bf16.mxu0 0
      %11034 = vmatmul.mubr.bf16.gmra.mrb[0].mxu0 %v10944
      %v11035 = vpop.f32.mrb[0].mxu0
      %v11036 = vadd.f32 0.0, %v11035
      %v11037 = vpop.f32.mrb[0].mxu0
      %v11038 = vpop.f32.mrb[0].mxu0
      %v11039 = vadd.f32 0.0, %v11038
      %v11040 = vpop.f32.mrb[0].mxu0
      %11041 = vmatprep.mubr.bf16.mxu0 0
      %11042 = vmatmul.mubr.bf16.gmra.mrb[0].mxu0 %v10947
      %v11043 = vpop.f32.mrb[0].mxu0
      %v11044 = vadd.f32 0.0, %v11043
      %v11045 = vpop.f32.mrb[0].mxu0
      %v11046 = vpop.f32.mrb[0].mxu0
      %v11047 = vadd.f32 0.0, %v11046
      %v11048 = vpop.f32.mrb[0].mxu0
      %11049 = vmatprep.mubr.bf16.mxu0 0
      %11050 = vmatmul.mubr.bf16.gmra.mrb[0].mxu0 %v10950
      %v11051 = vpop.f32.mrb[0].mxu0
      %v11052 = vadd.f32 0.0, %v11051
      %v11053 = vpop.f32.mrb[0].mxu0
      %v11054 = vpop.f32.mrb[0].mxu0
      %v11055 = vadd.f32 0.0, %v11054
      %v11056 = vpop.f32.mrb[0].mxu0
      %11057 = vmatprep.mubr.bf16.mxu0 0
      %11058 = vmatmul.mubr.bf16.gmra.mrb[0].mxu0 %v10953
      %v11059 = vpop.f32.mrb[0].mxu0
      %v11060 = vadd.f32 0.0, %v11059
      %v11061 = vpop.f32.mrb[0].mxu0
      %v11062 = vpop.f32.mrb[0].mxu0
      %v11063 = vadd.f32 0.0, %v11062
      %v11064 = vpop.f32.mrb[0].mxu0
      %11065 = vmatprep.mubr.bf16.mxu0 0
      %11066 = vmatmul.mubr.bf16.gmra.mrb[0].mxu0 %v10956
      %v11067 = vpop.f32.mrb[0].mxu0
      %v11068 = vadd.f32 0.0, %v11067
      %v11069 = vpop.f32.mrb[0].mxu0
      %v11070 = vpop.f32.mrb[0].mxu0
      %v11071 = vadd.f32 0.0, %v11070
      %v11072 = vpop.f32.mrb[0].mxu0
      %11073 = vmatprep.mubr.bf16.mxu0 0
      %11074 = vmatmul.mubr.bf16.gmra.mrb[0].mxu0 %v10959
      %v11075 = vpop.f32.mrb[0].mxu0
      %v11076 = vadd.f32 0.0, %v11075
      %v11077 = vpop.f32.mrb[0].mxu0
      %v11078 = vpop.f32.mrb[0].mxu0
      %v11079 = vadd.f32 0.0, %v11078
      %v11080 = vpop.f32.mrb[0].mxu0
      %11081 = vmatprep.mubr.bf16.mxu0 0
      %11082 = vmatmul.mubr.bf16.gmra.mrb[0].mxu0 %v10962
      %v11083 = vpop.f32.mrb[0].mxu0
      %v11084 = vadd.f32 0.0, %v11083
      %v11085 = vpop.f32.mrb[0].mxu0
      %v11086 = vpop.f32.mrb[0].mxu0
      %v11087 = vadd.f32 0.0, %v11086
      %v11088 = vpop.f32.mrb[0].mxu0
      %11089 = vmatprep.mubr.bf16.mxu0 0
      %11090 = vmatmul.mubr.bf16.gmra.mrb[0].mxu0 %v10965
      %v11091 = vpop.f32.mrb[0].mxu0
      %v11092 = vadd.f32 0.0, %v11091
      %v11093 = vpop.f32.mrb[0].mxu0
      %v11094 = vpop.f32.mrb[0].mxu0
      %v11095 = vadd.f32 0.0, %v11094
      %v11096 = vpop.f32.mrb[0].mxu0
      %11097 = vmatprep.mubr.bf16.mxu0 0
      %11098 = vmatmul.mubr.bf16.gmra.mrb[0].mxu0 %v10968
      %v11099 = vpop.f32.mrb[0].mxu0
      %v11100 = vadd.f32 0.0, %v11099
      %v11101 = vpop.f32.mrb[0].mxu0
      %v11102 = vpop.f32.mrb[0].mxu0
      %v11103 = vadd.f32 0.0, %v11102
      %v11104 = vpop.f32.mrb[0].mxu0
      %11105 = vmatprep.mubr.bf16.mxu0 0
      %11106 = vmatmul.mubr.bf16.gmra.mrb[0].mxu0 %v10971
      %v11107 = vpop.f32.mrb[0].mxu0
      %v11108 = vadd.f32 0.0, %v11107
      %v11109 = vpop.f32.mrb[0].mxu0
      %v11110 = vpop.f32.mrb[0].mxu0
      %v11111 = vadd.f32 0.0, %v11110
      %v11112 = vpop.f32.mrb[0].mxu0
      %11113 = vmatprep.mubr.bf16.mxu0 0
      %11114 = vmatmul.mubr.bf16.gmra.mrb[0].mxu0 %v10974
      %v11115 = vpop.f32.mrb[0].mxu0
      %v11116 = vadd.f32 0.0, %v11115
      %v11117 = vpop.f32.mrb[0].mxu0
      %v11118 = vpop.f32.mrb[0].mxu0
      %v11119 = vadd.f32 0.0, %v11118
      %v11120 = vpop.f32.mrb[0].mxu0
      %11121 = vmatprep.mubr.bf16.mxu0 0
      %11122 = vmatmul.mubr.bf16.gmra.mrb[0].mxu0 %v10977
      %v11123 = vpop.f32.mrb[0].mxu0
      %v11124 = vadd.f32 0.0, %v11123
      %v11125 = vpop.f32.mrb[0].mxu0
      %v11126 = vpop.f32.mrb[0].mxu0
      %v11127 = vadd.f32 0.0, %v11126
      %v11128 = vpop.f32.mrb[0].mxu0
      %11129 = vmatprep.mubr.bf16.mxu0 0
      %11130 = vmatmul.mubr.bf16.gmra.mrb[0].mxu0 %v10980
      %v11131 = vpop.f32.mrb[0].mxu0
      %v11132 = vadd.f32 0.0, %v11131
      %v11133 = vpop.f32.mrb[0].mxu0
      %v11134 = vpop.f32.mrb[0].mxu0
      %v11135 = vadd.f32 0.0, %v11134
      %v11136 = vpop.f32.mrb[0].mxu0
      %11137 = vmatprep.mubr.bf16.mxu0 0
      %11138 = vmatmul.mubr.bf16.gmra.mrb[0].mxu0 %v10983
      %v11139 = vpop.f32.mrb[0].mxu0
      %v11140 = vadd.f32 0.0, %v11139
      %v11141 = vpop.f32.mrb[0].mxu0
      %v11142 = vpop.f32.mrb[0].mxu0
      %v11143 = vadd.f32 0.0, %v11142
      %v11144 = vpop.f32.mrb[0].mxu0
      %11145 = vdwg.mxu0
      %v11146 = vadd.f32 %v10665, %v11020
      %v11147 = vadd.f32 %v10666, %v11023
      %v11148 = vadd.f32 %v10667, %v11028
      %v11149 = vadd.f32 %v10668, %v11031
      %v11150 = vadd.f32 %v10669, %v11036
      %v11151 = vadd.f32 %v10670, %v11039
      %v11152 = vadd.f32 %v10671, %v11044
      %v11153 = vadd.f32 %v10672, %v11047
      %v11154 = vadd.f32 %v10673, %v11052
      %v11155 = vadd.f32 %v10674, %v11055
      %v11156 = vadd.f32 %v10675, %v11060
      %v11157 = vadd.f32 %v10676, %v11063
      %v11158 = vadd.f32 %v10677, %v11068
      %v11159 = vadd.f32 %v10678, %v11071
      %v11160 = vadd.f32 %v10679, %v11076
      %v11161 = vadd.f32 %v10680, %v11079
      %v11162 = vadd.f32 %v10681, %v11084
      %v11163 = vadd.f32 %v10682, %v11087
      %v11164 = vadd.f32 %v10683, %v11092
      %v11165 = vadd.f32 %v10684, %v11095
      %v11166 = vadd.f32 %v10685, %v11100
      %v11167 = vadd.f32 %v10686, %v11103
      %v11168 = vadd.f32 %v10687, %v11108
      %v11169 = vadd.f32 %v10688, %v11111
      %v11170 = vadd.f32 %v10689, %v11116
      %v11171 = vadd.f32 %v10690, %v11119
      %v11172 = vadd.f32 %v10691, %v11124
      %v11173 = vadd.f32 %v10692, %v11127
      %v11174 = vadd.f32 %v10693, %v11132
      %v11175 = vadd.f32 %v10694, %v11135
      %v11176 = vadd.f32 %v10695, %v11140
      %v11177 = vadd.f32 %v10696, %v11143
      %v11178 = vld [vmem:[%s7] sm:$0x1]
      %v11180 = vlaneseq
      %v11181 = vshrl.u32 %v11180, 7
      %v11182 = vsub.s32 0, %v11181
      %v11183 = vrot.slane %v11178, %v11182
      %v11185 = vmul.f32 %v11146, %v11183
      %v11186 = vmul.f32 %v11147, %v11183
      %v11187 = vmul.f32 %v11148, %v11183
      %v11188 = vmul.f32 %v11149, %v11183
      %v11189 = vmul.f32 %v11150, %v11183
      %v11190 = vmul.f32 %v11151, %v11183
      %v11191 = vmul.f32 %v11152, %v11183
      %v11192 = vmul.f32 %v11153, %v11183
      %v11193 = vmul.f32 %v11154, %v11183
      %v11194 = vmul.f32 %v11155, %v11183
      %v11195 = vmul.f32 %v11156, %v11183
      %v11196 = vmul.f32 %v11157, %v11183
      %v11197 = vmul.f32 %v11158, %v11183
      %v11198 = vmul.f32 %v11159, %v11183
      %v11199 = vmul.f32 %v11160, %v11183
      %v11200 = vmul.f32 %v11161, %v11183
      %v11201 = vmul.f32 %v11162, %v11183
      %v11202 = vmul.f32 %v11163, %v11183
      %v11203 = vmul.f32 %v11164, %v11183
      %v11204 = vmul.f32 %v11165, %v11183
      %v11205 = vmul.f32 %v11166, %v11183
      %v11206 = vmul.f32 %v11167, %v11183
      %v11207 = vmul.f32 %v11168, %v11183
      %v11208 = vmul.f32 %v11169, %v11183
      %v11209 = vmul.f32 %v11170, %v11183
      %v11210 = vmul.f32 %v11171, %v11183
      %v11211 = vmul.f32 %v11172, %v11183
      %v11212 = vmul.f32 %v11173, %v11183
      %v11213 = vmul.f32 %v11174, %v11183
      %v11214 = vmul.f32 %v11175, %v11183
      %v11215 = vmul.f32 %v11176, %v11183
      %v11216 = vmul.f32 %v11177, %v11183
      %v11217 = vld [vmem:[%s8] sm:$0x1]
      %v11219 = vlaneseq
      %v11220 = vshrl.u32 %v11219, 7
      %v11221 = vsub.s32 0, %v11220
      %v11222 = vrot.slane %v11217, %v11221
      %v11224 = vadd.f32 %v11185, %v11222
      %v11225 = vadd.f32 %v11186, %v11222
      %v11226 = vadd.f32 %v11187, %v11222
      %v11227 = vadd.f32 %v11188, %v11222
      %v11228 = vadd.f32 %v11189, %v11222
      %v11229 = vadd.f32 %v11190, %v11222
      %v11230 = vadd.f32 %v11191, %v11222
      %v11231 = vadd.f32 %v11192, %v11222
      %v11232 = vadd.f32 %v11193, %v11222
      %v11233 = vadd.f32 %v11194, %v11222
      %v11234 = vadd.f32 %v11195, %v11222
      %v11235 = vadd.f32 %v11196, %v11222
      %v11236 = vadd.f32 %v11197, %v11222
      %v11237 = vadd.f32 %v11198, %v11222
      %v11238 = vadd.f32 %v11199, %v11222
      %v11239 = vadd.f32 %v11200, %v11222
      %v11240 = vadd.f32 %v11201, %v11222
      %v11241 = vadd.f32 %v11202, %v11222
      %v11242 = vadd.f32 %v11203, %v11222
      %v11243 = vadd.f32 %v11204, %v11222
      %v11244 = vadd.f32 %v11205, %v11222
      %v11245 = vadd.f32 %v11206, %v11222
      %v11246 = vadd.f32 %v11207, %v11222
      %v11247 = vadd.f32 %v11208, %v11222
      %v11248 = vadd.f32 %v11209, %v11222
      %v11249 = vadd.f32 %v11210, %v11222
      %v11250 = vadd.f32 %v11211, %v11222
      %v11251 = vadd.f32 %v11212, %v11222
      %v11252 = vadd.f32 %v11213, %v11222
      %v11253 = vadd.f32 %v11214, %v11222
      %v11254 = vadd.f32 %v11215, %v11222
      %v11255 = vadd.f32 %v11216, %v11222
      %v11256 = vmul.f32 %v11224, 0.01
      %v11257 = vmul.f32 %v11225, 0.01
      %v11258 = vmul.f32 %v11226, 0.01
      %v11259 = vmul.f32 %v11227, 0.01
      %v11260 = vmul.f32 %v11228, 0.01
      %v11261 = vmul.f32 %v11229, 0.01
      %v11262 = vmul.f32 %v11230, 0.01
      %v11263 = vmul.f32 %v11231, 0.01
      %v11264 = vmul.f32 %v11232, 0.01
      %v11265 = vmul.f32 %v11233, 0.01
      %v11266 = vmul.f32 %v11234, 0.01
      %v11267 = vmul.f32 %v11235, 0.01
      %v11268 = vmul.f32 %v11236, 0.01
      %v11269 = vmul.f32 %v11237, 0.01
      %v11270 = vmul.f32 %v11238, 0.01
      %v11271 = vmul.f32 %v11239, 0.01
      %v11272 = vmul.f32 %v11240, 0.01
      %v11273 = vmul.f32 %v11241, 0.01
      %v11274 = vmul.f32 %v11242, 0.01
      %v11275 = vmul.f32 %v11243, 0.01
      %v11276 = vmul.f32 %v11244, 0.01
      %v11277 = vmul.f32 %v11245, 0.01
      %v11278 = vmul.f32 %v11246, 0.01
      %v11279 = vmul.f32 %v11247, 0.01
      %v11280 = vmul.f32 %v11248, 0.01
      %v11281 = vmul.f32 %v11249, 0.01
      %v11282 = vmul.f32 %v11250, 0.01
      %v11283 = vmul.f32 %v11251, 0.01
      %v11284 = vmul.f32 %v11252, 0.01
      %v11285 = vmul.f32 %v11253, 0.01
      %v11286 = vmul.f32 %v11254, 0.01
      %v11287 = vmul.f32 %v11255, 0.01
      %v11288 = vmax.f32 %v11224, %v11256
      %v11289 = vmax.f32 %v11225, %v11257
      %v11290 = vmax.f32 %v11226, %v11258
      %v11291 = vmax.f32 %v11227, %v11259
      %v11292 = vmax.f32 %v11228, %v11260
      %v11293 = vmax.f32 %v11229, %v11261
      %v11294 = vmax.f32 %v11230, %v11262
      %v11295 = vmax.f32 %v11231, %v11263
      %v11296 = vmax.f32 %v11232, %v11264
      %v11297 = vmax.f32 %v11233, %v11265
      %v11298 = vmax.f32 %v11234, %v11266
      %v11299 = vmax.f32 %v11235, %v11267
      %v11300 = vmax.f32 %v11236, %v11268
      %v11301 = vmax.f32 %v11237, %v11269
      %v11302 = vmax.f32 %v11238, %v11270
      %v11303 = vmax.f32 %v11239, %v11271
      %v11304 = vmax.f32 %v11240, %v11272
      %v11305 = vmax.f32 %v11241, %v11273
      %v11306 = vmax.f32 %v11242, %v11274
      %v11307 = vmax.f32 %v11243, %v11275
      %v11308 = vmax.f32 %v11244, %v11276
      %v11309 = vmax.f32 %v11245, %v11277
      %v11310 = vmax.f32 %v11246, %v11278
      %v11311 = vmax.f32 %v11247, %v11279
      %v11312 = vmax.f32 %v11248, %v11280
      %v11313 = vmax.f32 %v11249, %v11281
      %v11314 = vmax.f32 %v11250, %v11282
      %v11315 = vmax.f32 %v11251, %v11283
      %v11316 = vmax.f32 %v11252, %v11284
      %v11317 = vmax.f32 %v11253, %v11285
      %v11318 = vmax.f32 %v11254, %v11286
      %v11319 = vmax.f32 %v11255, %v11287
      %v11320 = vpack.c.bf16 %v11289, %v11288
      %v11321 = vpack.c.bf16 %v11291, %v11290
      %v11322 = vpack.c.bf16 %v11293, %v11292
      %v11323 = vpack.c.bf16 %v11295, %v11294
      %v11324 = vpack.c.bf16 %v11297, %v11296
      %v11325 = vpack.c.bf16 %v11299, %v11298
      %v11326 = vpack.c.bf16 %v11301, %v11300
      %v11327 = vpack.c.bf16 %v11303, %v11302
      %v11328 = vpack.c.bf16 %v11305, %v11304
      %v11329 = vpack.c.bf16 %v11307, %v11306
      %v11330 = vpack.c.bf16 %v11309, %v11308
      %v11331 = vpack.c.bf16 %v11311, %v11310
      %v11332 = vpack.c.bf16 %v11313, %v11312
      %v11333 = vpack.c.bf16 %v11315, %v11314
      %v11334 = vpack.c.bf16 %v11317, %v11316
      %v11335 = vpack.c.bf16 %v11319, %v11318
      %v11336 = vld [vmem:[%s9] sm:$0xf]
      %v11337 = vld [vmem:[%s9 + $0x4] sm:$0x1]
      %v11338 = vld [vmem:[%s10] sm:$0x1]
      %v11340 = vlaneseq
      %v11341 = vshrl.u32 %v11340, 7
      %v11342 = vsub.s32 0, %v11341
      %v11343 = vrot.slane %v11338, %v11342
      %v11347 = vunpack.c.l.b16 %v11336
      %v11348 = vunpack.c.l.b16 %v11337
      %v11349 = vpack.c.b16 %v11348, %v11347
      %vm11350 = vcmask 80896
      %v11352 = vsel %vm11350, %v11320, 0
      %v11355 = vsel %vm11350, %v11321, 0
      %v11358 = vsel %vm11350, %v11322, 0
      %v11361 = vsel %vm11350, %v11323, 0
      %v11364 = vsel %vm11350, %v11324, 0
      %v11367 = vsel %vm11350, %v11325, 0
      %v11370 = vsel %vm11350, %v11326, 0
      %v11373 = vsel %vm11350, %v11327, 0
      %v11376 = vsel %vm11350, %v11328, 0
      %v11379 = vsel %vm11350, %v11329, 0
      %v11382 = vsel %vm11350, %v11330, 0
      %v11385 = vsel %vm11350, %v11331, 0
      %v11388 = vsel %vm11350, %v11332, 0
      %v11391 = vsel %vm11350, %v11333, 0
      %v11394 = vsel %vm11350, %v11334, 0
      %v11397 = vsel %vm11350, %v11335, 0
      %vm11399 = vcmask 1044480
      %v11401 = vsel %vm11399, %v11349, 0
      %11403 = vmatprep.subr.bf16.mxu0 0
      %11404 = vmatpush1.bf16.msra.mxu0 %v11401
      %11405 = vmatprep.subr.bf16.mxu0 0
      %11406 = vmatpush1.bf16.msra.mxu0 0
      %11407 = vmatprep.subr.bf16.mxu0 0
      %11408 = vmatpush1.bf16.msra.mxu0 0
      %11409 = vmatprep.subr.bf16.mxu0 0
      %11410 = vmatpush1.bf16.msra.mxu0 0
      %11411 = vmatprep.subr.bf16.mxu0 0
      %11412 = vmatpush1.bf16.msra.mxu0 0
      %11413 = vmatprep.subr.bf16.mxu0 0
      %11414 = vmatpush1.bf16.msra.mxu0 0
      %11415 = vmatprep.subr.bf16.mxu0 0
      %11416 = vmatpush1.bf16.msra.mxu0 0
      %11417 = vmatprep.subr.bf16.mxu0 0
      %11418 = vmatpush1.bf16.msra.mxu0 0
      %11419 = vmatprep.subr.bf16.mxu0 0
      %11420 = vmatpush1.bf16.msra.mxu0 0
      %11421 = vmatprep.subr.bf16.mxu0 0
      %11422 = vmatpush1.bf16.msra.mxu0 0
      %11423 = vmatprep.subr.bf16.mxu0 0
      %11424 = vmatpush1.bf16.msra.mxu0 0
      %11425 = vmatprep.subr.bf16.mxu0 0
      %11426 = vmatpush1.bf16.msra.mxu0 0
      %11427 = vmatprep.subr.bf16.mxu0 0
      %11428 = vmatpush1.bf16.msra.mxu0 0
      %11429 = vmatprep.subr.bf16.mxu0 0
      %11430 = vmatpush1.bf16.msra.mxu0 0
      %11431 = vmatprep.subr.bf16.mxu0 0
      %11432 = vmatpush1.bf16.msra.mxu0 0
      %11433 = vmatprep.subr.bf16.mxu0 0
      %11434 = vmatpush1.bf16.msra.mxu0 0
      %11435 = vmatprep.mubr.bf16.mxu0 0
      %11436 = vmatmul.mubr.bf16.gmra.mrb[0].mxu0 %v11352
      %v11437 = vpop.f32.mrb[0].mxu0
      %v11438 = vadd.f32 %v11343, %v11437
      %v11439 = vpop.f32.mrb[0].mxu0
      %v11440 = vpop.f32.mrb[0].mxu0
      %v11441 = vadd.f32 %v11343, %v11440
      %v11442 = vpop.f32.mrb[0].mxu0
      %11443 = vmatprep.mubr.bf16.mxu0 0
      %11444 = vmatmul.mubr.bf16.gmra.mrb[0].mxu0 %v11355
      %v11445 = vpop.f32.mrb[0].mxu0
      %v11446 = vadd.f32 %v11343, %v11445
      %v11447 = vpop.f32.mrb[0].mxu0
      %v11448 = vpop.f32.mrb[0].mxu0
      %v11449 = vadd.f32 %v11343, %v11448
      %v11450 = vpop.f32.mrb[0].mxu0
      %11451 = vmatprep.mubr.bf16.mxu0 0
      %11452 = vmatmul.mubr.bf16.gmra.mrb[0].mxu0 %v11358
      %v11453 = vpop.f32.mrb[0].mxu0
      %v11454 = vadd.f32 %v11343, %v11453
      %v11455 = vpop.f32.mrb[0].mxu0
      %v11456 = vpop.f32.mrb[0].mxu0
      %v11457 = vadd.f32 %v11343, %v11456
      %v11458 = vpop.f32.mrb[0].mxu0
      %11459 = vmatprep.mubr.bf16.mxu0 0
      %11460 = vmatmul.mubr.bf16.gmra.mrb[0].mxu0 %v11361
      %v11461 = vpop.f32.mrb[0].mxu0
      %v11462 = vadd.f32 %v11343, %v11461
      %v11463 = vpop.f32.mrb[0].mxu0
      %v11464 = vpop.f32.mrb[0].mxu0
      %v11465 = vadd.f32 %v11343, %v11464
      %v11466 = vpop.f32.mrb[0].mxu0
      %11467 = vmatprep.mubr.bf16.mxu0 0
      %11468 = vmatmul.mubr.bf16.gmra.mrb[0].mxu0 %v11364
      %v11469 = vpop.f32.mrb[0].mxu0
      %v11470 = vadd.f32 %v11343, %v11469
      %v11471 = vpop.f32.mrb[0].mxu0
      %v11472 = vpop.f32.mrb[0].mxu0
      %v11473 = vadd.f32 %v11343, %v11472
      %v11474 = vpop.f32.mrb[0].mxu0
      %11475 = vmatprep.mubr.bf16.mxu0 0
      %11476 = vmatmul.mubr.bf16.gmra.mrb[0].mxu0 %v11367
      %v11477 = vpop.f32.mrb[0].mxu0
      %v11478 = vadd.f32 %v11343, %v11477
      %v11479 = vpop.f32.mrb[0].mxu0
      %v11480 = vpop.f32.mrb[0].mxu0
      %v11481 = vadd.f32 %v11343, %v11480
      %v11482 = vpop.f32.mrb[0].mxu0
      %11483 = vmatprep.mubr.bf16.mxu0 0
      %11484 = vmatmul.mubr.bf16.gmra.mrb[0].mxu0 %v11370
      %v11485 = vpop.f32.mrb[0].mxu0
      %v11486 = vadd.f32 %v11343, %v11485
      %v11487 = vpop.f32.mrb[0].mxu0
      %v11488 = vpop.f32.mrb[0].mxu0
      %v11489 = vadd.f32 %v11343, %v11488
      %v11490 = vpop.f32.mrb[0].mxu0
      %11491 = vmatprep.mubr.bf16.mxu0 0
      %11492 = vmatmul.mubr.bf16.gmra.mrb[0].mxu0 %v11373
      %v11493 = vpop.f32.mrb[0].mxu0
      %v11494 = vadd.f32 %v11343, %v11493
      %v11495 = vpop.f32.mrb[0].mxu0
      %v11496 = vpop.f32.mrb[0].mxu0
      %v11497 = vadd.f32 %v11343, %v11496
      %v11498 = vpop.f32.mrb[0].mxu0
      %11499 = vmatprep.mubr.bf16.mxu0 0
      %11500 = vmatmul.mubr.bf16.gmra.mrb[0].mxu0 %v11376
      %v11501 = vpop.f32.mrb[0].mxu0
      %v11502 = vadd.f32 %v11343, %v11501
      %v11503 = vpop.f32.mrb[0].mxu0
      %v11504 = vpop.f32.mrb[0].mxu0
      %v11505 = vadd.f32 %v11343, %v11504
      %v11506 = vpop.f32.mrb[0].mxu0
      %11507 = vmatprep.mubr.bf16.mxu0 0
      %11508 = vmatmul.mubr.bf16.gmra.mrb[0].mxu0 %v11379
      %v11509 = vpop.f32.mrb[0].mxu0
      %v11510 = vadd.f32 %v11343, %v11509
      %v11511 = vpop.f32.mrb[0].mxu0
      %v11512 = vpop.f32.mrb[0].mxu0
      %v11513 = vadd.f32 %v11343, %v11512
      %v11514 = vpop.f32.mrb[0].mxu0
      %11515 = vmatprep.mubr.bf16.mxu0 0
      %11516 = vmatmul.mubr.bf16.gmra.mrb[0].mxu0 %v11382
      %v11517 = vpop.f32.mrb[0].mxu0
      %v11518 = vadd.f32 %v11343, %v11517
      %v11519 = vpop.f32.mrb[0].mxu0
      %v11520 = vpop.f32.mrb[0].mxu0
      %v11521 = vadd.f32 %v11343, %v11520
      %v11522 = vpop.f32.mrb[0].mxu0
      %11523 = vmatprep.mubr.bf16.mxu0 0
      %11524 = vmatmul.mubr.bf16.gmra.mrb[0].mxu0 %v11385
      %v11525 = vpop.f32.mrb[0].mxu0
      %v11526 = vadd.f32 %v11343, %v11525
      %v11527 = vpop.f32.mrb[0].mxu0
      %v11528 = vpop.f32.mrb[0].mxu0
      %v11529 = vadd.f32 %v11343, %v11528
      %v11530 = vpop.f32.mrb[0].mxu0
      %11531 = vmatprep.mubr.bf16.mxu0 0
      %11532 = vmatmul.mubr.bf16.gmra.mrb[0].mxu0 %v11388
      %v11533 = vpop.f32.mrb[0].mxu0
      %v11534 = vadd.f32 %v11343, %v11533
      %v11535 = vpop.f32.mrb[0].mxu0
      %v11536 = vpop.f32.mrb[0].mxu0
      %v11537 = vadd.f32 %v11343, %v11536
      %v11538 = vpop.f32.mrb[0].mxu0
      %11539 = vmatprep.mubr.bf16.mxu0 0
      %11540 = vmatmul.mubr.bf16.gmra.mrb[0].mxu0 %v11391
      %v11541 = vpop.f32.mrb[0].mxu0
      %v11542 = vadd.f32 %v11343, %v11541
      %v11543 = vpop.f32.mrb[0].mxu0
      %v11544 = vpop.f32.mrb[0].mxu0
      %v11545 = vadd.f32 %v11343, %v11544
      %v11546 = vpop.f32.mrb[0].mxu0
      %11547 = vmatprep.mubr.bf16.mxu0 0
      %11548 = vmatmul.mubr.bf16.gmra.mrb[0].mxu0 %v11394
      %v11549 = vpop.f32.mrb[0].mxu0
      %v11550 = vadd.f32 %v11343, %v11549
      %v11551 = vpop.f32.mrb[0].mxu0
      %v11552 = vpop.f32.mrb[0].mxu0
      %v11553 = vadd.f32 %v11343, %v11552
      %v11554 = vpop.f32.mrb[0].mxu0
      %11555 = vmatprep.mubr.bf16.mxu0 0
      %11556 = vmatmul.mubr.bf16.gmra.mrb[0].mxu0 %v11397
      %v11557 = vpop.f32.mrb[0].mxu0
      %v11558 = vadd.f32 %v11343, %v11557
      %v11559 = vpop.f32.mrb[0].mxu0
      %v11560 = vpop.f32.mrb[0].mxu0
      %v11561 = vadd.f32 %v11343, %v11560
      %v11562 = vpop.f32.mrb[0].mxu0
      %11563 = vdwg.mxu0
      %v11564 = vsel %vm11350, %v11438, 0.0
      %v11565 = vsel %vm11350, %v11441, 0.0
      %v11566 = vadd.f32 %v11564, %v11565
      %v11567 = vsel %vm11350, %v11446, 0.0
      %v11568 = vadd.f32 %v11566, %v11567
      %v11569 = vsel %vm11350, %v11449, 0.0
      %v11570 = vadd.f32 %v11568, %v11569
      %v11571 = vsel %vm11350, %v11454, 0.0
      %v11572 = vadd.f32 %v11570, %v11571
      %v11573 = vsel %vm11350, %v11457, 0.0
      %v11574 = vadd.f32 %v11572, %v11573
      %v11575 = vsel %vm11350, %v11462, 0.0
      %v11576 = vadd.f32 %v11574, %v11575
      %v11577 = vsel %vm11350, %v11465, 0.0
      %v11578 = vadd.f32 %v11576, %v11577
      %v11579 = vsel %vm11350, %v11470, 0.0
      %v11580 = vadd.f32 %v11578, %v11579
      %v11581 = vsel %vm11350, %v11473, 0.0
      %v11582 = vadd.f32 %v11580, %v11581
      %v11583 = vsel %vm11350, %v11478, 0.0
      %v11584 = vadd.f32 %v11582, %v11583
      %v11585 = vsel %vm11350, %v11481, 0.0
      %v11586 = vadd.f32 %v11584, %v11585
      %v11587 = vsel %vm11350, %v11486, 0.0
      %v11588 = vadd.f32 %v11586, %v11587
      %v11589 = vsel %vm11350, %v11489, 0.0
      %v11590 = vadd.f32 %v11588, %v11589
      %v11591 = vsel %vm11350, %v11494, 0.0
      %v11592 = vadd.f32 %v11590, %v11591
      %v11593 = vsel %vm11350, %v11497, 0.0
      %v11594 = vadd.f32 %v11592, %v11593
      %v11595 = vsel %vm11350, %v11502, 0.0
      %v11596 = vadd.f32 %v11594, %v11595
      %v11597 = vsel %vm11350, %v11505, 0.0
      %v11598 = vadd.f32 %v11596, %v11597
      %v11599 = vsel %vm11350, %v11510, 0.0
      %v11600 = vadd.f32 %v11598, %v11599
      %v11601 = vsel %vm11350, %v11513, 0.0
      %v11602 = vadd.f32 %v11600, %v11601
      %v11603 = vsel %vm11350, %v11518, 0.0
      %v11604 = vadd.f32 %v11602, %v11603
      %v11605 = vsel %vm11350, %v11521, 0.0
      %v11606 = vadd.f32 %v11604, %v11605
      %v11607 = vsel %vm11350, %v11526, 0.0
      %v11608 = vadd.f32 %v11606, %v11607
      %v11609 = vsel %vm11350, %v11529, 0.0
      %v11610 = vadd.f32 %v11608, %v11609
      %v11611 = vsel %vm11350, %v11534, 0.0
      %v11612 = vadd.f32 %v11610, %v11611
      %v11613 = vsel %vm11350, %v11537, 0.0
      %v11614 = vadd.f32 %v11612, %v11613
      %v11615 = vsel %vm11350, %v11542, 0.0
      %v11616 = vadd.f32 %v11614, %v11615
      %v11617 = vsel %vm11350, %v11545, 0.0
      %v11618 = vadd.f32 %v11616, %v11617
      %v11619 = vsel %vm11350, %v11550, 0.0
      %v11620 = vadd.f32 %v11618, %v11619
      %v11621 = vsel %vm11350, %v11553, 0.0
      %v11622 = vadd.f32 %v11620, %v11621
      %v11623 = vsel %vm11350, %v11558, 0.0
      %v11624 = vadd.f32 %v11622, %v11623
      %v11625 = vsel %vm11350, %v11561, 0.0
      %v11626 = vadd.f32 %v11624, %v11625
      %v11627 = vrot.slane %v11626, 4
      %v11628 = vadd.f32 %v11626, %v11627
      %v11629 = vrot.slane %v11628, 2
      %v11630 = vadd.f32 %v11628, %v11629
      %v11631 = vrot.slane %v11630, 1
      %v11632 = vadd.f32 %v11630, %v11631
      %v11633 = vrcp.pop 256.0
      %v11634 = vmul.f32 %v11632, %v11633
      %v11635 = vld [vmem:[%s11] sm:$0x1]
      %v11636 = vmul.f32 %v11634, %v11635
      %vm11637 = vcmask 73728
      %v11638 = vsel %vm11637, %v11636, 0.0
      %11639 = vadd.xlane.f32.xlu0 %v11638
      %v11640 = vpop.xlane.xlu0 %11639
      %v11641 = vld [vmem:[#allocation4] sm:$0x1]
      %v11642 = vadd.f32 %v11640, %v11641
      %v11643 = vsub.f32 0.0, %v11642
      %v11644 = vmul.f32 %v11643, 1.442695
      %v11645 = vpow.pop %v11644
      %v11646 = vadd.f32 %v11645, 1.0
      %v11647 = vrcp.pop %v11646
      %v11648 = vmul.f32 1.0, %v11647
      %vm11649 = vcmask 0
      %11650 = vst.msk [vmem:[%s478] sm:$0x1] %vm11649, %v11648
      %p11651 = scmp.lt.s32.totalorder %s28, 1
      %s11652 = scalar_select %p11651, %s28, 1
      %s11653 = smul.addr %s11652, 32
      %s11654 = smul.addr %s11653, 8
      %s11655 = scalar_lea.vmem %s13, %s11654
      %p11656 = scmp.lt.s32.totalorder %s28, 1
      %s11657 = scalar_select %p11656, %s28, 1
      %s11658 = scalar_lea.vmem %s14, %s11657
      // Predicated region
      $region73: #{tpu_custom_call.1} parent=71 // pred_check
        %p11659 = pneg %p324
      $region74: #{tpu_custom_call.1} parent=71 // pred_check_branch
        %11661 = sbr.rel (%p11659) target = $region76
      $region75: #{tpu_custom_call.1} parent=71 // pred_region
        _
      $region76: #{tpu_custom_call.1} parent=71 // pred_fallthru
        _
      // Predicated region
      $region77: #{tpu_custom_call.1} parent=71 // pred_check
        %p11662 = pneg %p350
      $region78: #{tpu_custom_call.1} parent=71 // pred_check_branch
        %11664 = sbr.rel (%p11662) target = $region80
      $region79: #{tpu_custom_call.1} parent=71 // pred_region
        _
      $region80: #{tpu_custom_call.1} parent=71 // pred_fallthru
        _
    $region72: #{tpu_custom_call.1} parent=5 // pred_fallthru
      _
    %p11665 = scmp.le.s32.totalorder 2, %s23
    // Predicated region
    $region81: #{tpu_custom_call.1} parent=5 // pred_check
      %p11666 = pneg %p11665
    $region82: #{tpu_custom_call.1} parent=5 // pred_check_branch
      %11668 = sbr.rel (%p11666) target = $region84
    $region83: #{tpu_custom_call.1} parent=5 // pred_region
      %s11669 = ssub.s32 %s23, 2
      // Predicated region
      $region85: #{tpu_custom_call.1} parent=83 // pred_check
        %p11670 = pneg %p330
      $region86: #{tpu_custom_call.1} parent=83 // pred_check_branch
        %11672 = sbr.rel (%p11670) target = $region88
      $region87: #{tpu_custom_call.1} parent=83 // pred_region
        %p11673 = scmp.lt.s32.totalorder %s29, 1
        %s11674 = scalar_select %p11673, %s29, 1
        %s11675 = smul.addr %s11674, 32
        %s11676 = smul.addr %s11675, 8
        %s11677 = scalar_lea.vmem %s13, %s11676
      $region88: #{tpu_custom_call.1} parent=83 // pred_fallthru
        _
      // Predicated region
      $region89: #{tpu_custom_call.1} parent=83 // pred_check
        %p11678 = pneg %p356
      $region90: #{tpu_custom_call.1} parent=83 // pred_check_branch
        %11680 = sbr.rel (%p11678) target = $region92
      $region91: #{tpu_custom_call.1} parent=83 // pred_region
        %p11681 = scmp.lt.s32.totalorder %s29, 1
        %s11682 = scalar_select %p11681, %s29, 1
        %s11683 = scalar_lea.vmem %s14, %s11682
      $region92: #{tpu_custom_call.1} parent=83 // pred_fallthru
        _
    $region84: #{tpu_custom_call.1} parent=5 // pred_fallthru
      _
  $region6: #{tpu_custom_call.1} parent=0 // loop_footer
    %s27 = sadd.s32 1, %s23
  $region7: #{tpu_custom_call.1} parent=0 // loop_footer_branch
    %22 = sbr.rel target = $region3
  $region8: #{tpu_custom_call.1} parent=0 // loop_exit
    _

</llo_original>
